<compile_context>
chip_gen: v6e
topology: v6e:2x2x1
jax: 0.10.0
libtpu: 0.0.40
codegen_flags: <defaults>
</compile_context>

<pallas_src>
import functools

import jax
import jax.numpy as jnp
from jax import lax
from jax.experimental import pallas as pl
from jax.experimental.pallas import tpu as pltpu


_VMEM_LIMIT = 32 * 1024 * 1024


def _round_up(x, m):
    return ((x + m - 1) // m) * m


def _pick_tile_rows(k_dim):
    # ~2 MiB of bf16 patch rows per block: DMAs big enough for >=85% of the
    # HBM roofline, while 2x double-buffered inputs + the resident weight stay
    # well inside the 32 MiB scoped-VMEM limit.  Clamp to [512, 2048] rows and
    # keep a multiple of 8 (sublane granule).
    t = (2 * 1024 * 1024) // max(2 * k_dim, 1)
    t = max(512, min(2048, t))
    return (t // 8) * 8


def _conv_layer_kernel(p_ref, w_ref, sc_ref, y_ref, *stat_refs,
                       fold_prev, act, do_bn, oc_is_one):
    """One row-tile: [folded prev BN scale + LeakyReLU] -> conv matmul -> act/stats."""
    if fold_prev:
        # Previous layer's BatchNorm: the batch mean was already subtracted in
        # the wrapper, so spatial zero-padding is exactly 0 here; apply the
        # per-channel 1/sqrt(var+eps) scale and the deferred LeakyReLU(0.2).
        x = p_ref[...].astype(jnp.float32) * sc_ref[...]      # (T, K) * (1, K)
        x = jnp.where(x > 0, x, 0.2 * x)
    else:
        x = p_ref[...]

    if oc_is_one:
        # Final OC == 1 conv: VPU multiply + XLU lane reduction (an MXU matmul
        # would waste 127/128 result lanes).
        w = w_ref[...].astype(jnp.float32)                     # (1, K)
        y = jnp.sum(x.astype(jnp.float32) * w, axis=-1, keepdims=True)
    else:
        y = jnp.dot(x.astype(jnp.bfloat16), w_ref[...],        # bf16 MXU matmul,
                    preferred_element_type=jnp.float32)        # f32 accumulator

    if do_bn:
        # This layer feeds a BatchNorm: emit per-tile partial sums so *global*
        # batch statistics can be reduced outside and folded into the next
        # layer's kernel.  Zero-padded tail rows of the patch matrix give
        # exactly-zero conv rows, so they do not perturb the sums.
        sum_ref, sq_ref = stat_refs
        oc = y.shape[-1]
        psum = jnp.sum(y, axis=0, keepdims=True)               # (1, OC)
        psq = jnp.sum(y * y, axis=0, keepdims=True)            # (1, OC)
        sum_ref[...] = jnp.broadcast_to(psum[None], (1, 8, oc))
        sq_ref[...] = jnp.broadcast_to(psq[None], (1, 8, oc))
    elif act == "leaky":
        y = jnp.where(y > 0, y, 0.2 * y)                       # LeakyReLU(0.2)
    elif act == "sigmoid":
        y = 1.0 / (1.0 + jnp.exp(-y))                          # Sigmoid (exact)

    y_ref[...] = y.astype(y_ref.dtype)


def conv_layer(x_nhwc, wmat, lay, pending, out_dtype):
    kh, kw, stride, pad = lay["kh"], lay["kw"], lay["stride"], lay["pad"]
    ic, oc, do_bn, act = lay["ic"], lay["oc"], lay["do_bn"], lay["act"]
    n, h, w_, c = x_nhwc.shape
    assert c == ic

    fold_prev = pending is not None
    if fold_prev:
        scale, mean = pending
        # Center by the batch mean BEFORE spatial zero-padding so padded
        # positions equal 0 in the BN+LeakyReLU domain (PyTorch pads the
        # already-normalized activation).  This elementwise op fuses into the
        # XLA im2col gather below; scale + LeakyReLU run inside the kernel.
        x_nhwc = (x_nhwc.astype(jnp.float32) - mean).astype(jnp.bfloat16)

    # --- im2col glue (bf16, patch column order = (kh, kw, ic)) ---
    # TODO(synk): build the im2col row-tiles inside the kernel from the padded
    # NHWC activation (memory_space=pl.ANY + manual DMA) so the KH*KW-fold
    # patch matrix is never materialized in HBM.
    xp = jnp.pad(x_nhwc, ((0, 0), (pad, pad), (pad, pad), (0, 0)))
    oh = (h + 2 * pad - kh) // stride + 1
    ow = (w_ + 2 * pad - kw) // stride + 1
    cols = []
    for i in range(kh):
        for j in range(kw):
            cols.append(xp[:, i:i + stride * oh:stride, j:j + stride * ow:stride, :])
    patches = jnp.stack(cols, axis=3)                          # (N, OH, OW, KH*KW, C)
    r = n * oh * ow
    k_dim = kh * kw * ic
    patches = patches.reshape(r, k_dim).astype(jnp.bfloat16)   # (R, K)

    # Folded BN scale of the previous layer, tiled over the (kh, kw, ic)
    # column order of the patch matrix.
    if fold_prev:
        scale_k = jnp.tile(scale, kh * kw).reshape(1, k_dim).astype(jnp.float32)
    else:
        scale_k = jnp.ones((1, k_dim), jnp.float32)

    # --- row tiling ---
    tile = min(_pick_tile_rows(k_dim), _round_up(r, 8))
    r_pad = _round_up(r, tile)
    if r_pad != r:
        patches = jnp.pad(patches, ((0, r_pad - r), (0, 0)))
    num_tiles = r_pad // tile
    oc_is_one = oc == 1

    in_specs = [
        pl.BlockSpec((tile, k_dim), lambda i: (i, 0)),         # row-tiled patches
        pl.BlockSpec(wmat.shape, lambda i: (0, 0)),            # resident weight
        pl.BlockSpec((1, k_dim), lambda i: (0, 0)),            # folded BN scale
    ]
    out_shapes = [jax.ShapeDtypeStruct((r_pad, oc), out_dtype)]
    out_specs = [pl.BlockSpec((tile, oc), lambda i: (i, 0))]
    if do_bn:
        out_shapes += [jax.ShapeDtypeStruct((num_tiles, 8, oc), jnp.float32)] * 2
        out_specs += [pl.BlockSpec((1, 8, oc), lambda i: (i, 0, 0))] * 2

    kern = functools.partial(
        _conv_layer_kernel, fold_prev=fold_prev, act=act, do_bn=do_bn,
        oc_is_one=oc_is_one)

    outs = pl.pallas_call(
        kern,
        grid=(num_tiles,),
        in_specs=in_specs,
        out_specs=tuple(out_specs),
        out_shape=tuple(out_shapes),
        compiler_params=pltpu.CompilerParams(
            dimension_semantics=("parallel",),
            vmem_limit_bytes=_VMEM_LIMIT),
    )(patches, wmat, scale_k)

    y = outs[0][:r].reshape(n, oh, ow, oc)

    if do_bn:
        tot = jnp.sum(outs[1][:, 0, :], axis=0)                # (OC,)
        tot_sq = jnp.sum(outs[2][:, 0, :], axis=0)             # (OC,)
        mean = tot / r
        var = jnp.maximum(tot_sq / r - mean * mean, 0.0)       # biased batch var
        scale = lax.rsqrt(var + 1e-5)                          # PyTorch eps
        new_pending = (scale, mean)                            # BN(x)=(x-mean)*scale
    else:
        new_pending = None
    return y, new_pending


def make_params(key, nc, ndf, n_extra_layers_d):
    """DCGAN-style init (N(0, 0.02)); weights pre-reshaped to (K, OC) bf16."""
    cfg_raw = [
        # (oc, ic, kh, kw, stride, pad, batchnorm, activation)
        (ndf,     nc,      4, 4, 2, 1, False, "leaky"),
        (ndf * 2, ndf,     4, 4, 2, 1, True,  "leaky"),
        (ndf * 4, ndf * 2, 4, 4, 2, 1, True,  "leaky"),
        (ndf * 8, ndf * 4, 4, 4, 2, 1, True,  "leaky"),
    ]
    for _ in range(n_extra_layers_d):
        cfg_raw.append((ndf * 8, ndf * 8, 3, 3, 1, 1, True, "leaky"))
    cfg_raw.append((1, ndf * 8, 4, 4, 1, 0, False, "sigmoid"))

    weights, cfg = [], []
    for idx, (oc, ic, kh, kw, stride, pad, bn, act) in enumerate(cfg_raw):
        k = jax.random.fold_in(key, idx)
        w = 0.02 * jax.random.normal(k, (oc, ic, kh, kw), jnp.float32)
        wmat = jnp.transpose(w, (2, 3, 1, 0)).reshape(kh * kw * ic, oc)
        if oc == 1:
            wmat = wmat.T                                      # (1, K) for VPU path
        weights.append(wmat.astype(jnp.bfloat16))
        cfg.append(dict(oc=oc, ic=ic, kh=kh, kw=kw, stride=stride, pad=pad,
                        do_bn=bn, act=act))
    return weights, cfg


def netD_forward(x_nchw, weights, cfg):
    # NCHW (PyTorch input) -> NHWC; intermediates travel in bf16.
    x = jnp.transpose(x_nchw, (0, 2, 3, 1)).astype(jnp.bfloat16)
    pending = None
    n_layers = len(cfg)
    for idx, (wmat, lay) in enumerate(zip(weights, cfg)):
        out_dtype = jnp.float32 if idx == n_layers - 1 else jnp.bfloat16
        x, pending = conv_layer(x, wmat, lay, pending, out_dtype)
    if pending is not None:     # safety net; this net always ends conv+sigmoid
        scale, mean = pending
        x = (x.astype(jnp.float32) - mean) * scale
        x = jnp.where(x > 0, x, 0.2 * x)
    x = jnp.transpose(x, (0, 3, 1, 2))                         # back to NCHW
    return x.reshape(-1, 1).astype(jnp.float32)                # .view(-1, 1)


if __name__ == "__main__":
    # Small but shape-consistent configuration: the four stride-2 4x4 convs plus
    # the final 4x4 valid conv require a 64x64 input to end at 1x1 spatial.
    batch, nc, ndf, n_extra_layers_d = 2, 3, 8, 1
    key = jax.random.PRNGKey(0)
    k_x, k_w = jax.random.split(key)

    x = jax.random.normal(k_x, (batch, nc, 64, 64), jnp.float32)   # NCHW
    weights, cfg = make_params(k_w, nc, ndf, n_extra_layers_d)

    fwd = jax.jit(functools.partial(netD_forward, cfg=cfg))
    out = jax.block_until_ready(fwd(x, weights))

    assert out.shape == (batch, 1), out.shape
    assert bool(jnp.all(jnp.isfinite(out)))
    assert bool(jnp.all((out >= 0.0) & (out <= 1.0)))  # sigmoid range
    print("KERNEL_OK")
</pallas_src>

<mosaic_0001>
module attributes {stable_mosaic.version = 11 : i64} {
  func.func @_conv_layer_kernel(%arg0: i32, %arg1: memref<2048x48xbf16, #tpu.memory_space<vmem>>, %arg2: memref<48x8xbf16, #tpu.memory_space<vmem>>, %arg3: memref<1x48xf32, #tpu.memory_space<vmem>>, %arg4: memref<2048x8xbf16, #tpu.memory_space<vmem>>) attributes {dimension_semantics = [#tpu.dimension_semantics<parallel>], iteration_bounds = array<i64: 1>, scalar_prefetch = 0 : i64, scratch_operands = 0 : i64, tpu.core_type = #tpu.core_type<tc>, window_params = [{transform_indices = @transform_0, window_bounds = array<i64: 2048, 48>}, {pipeline_mode = #tpu.pipeline_mode<synchronous>, transform_indices = @transform_1, window_bounds = array<i64: 48, 8>}, {pipeline_mode = #tpu.pipeline_mode<synchronous>, transform_indices = @transform_2, window_bounds = array<i64: 1, 48>}, {transform_indices = @transform_3, window_bounds = array<i64: 2048, 8>}]} {
    %c0 = arith.constant 0 : index
    %c0_0 = arith.constant 0 : index
    %0 = vector.load %arg1[%c0, %c0_0] : memref<2048x48xbf16, #tpu.memory_space<vmem>>, vector<2048x48xbf16>
    %c0_1 = arith.constant 0 : index
    %c0_2 = arith.constant 0 : index
    %1 = vector.load %arg2[%c0_1, %c0_2] : memref<48x8xbf16, #tpu.memory_space<vmem>>, vector<48x8xbf16>
    %cst = arith.constant dense<0.000000e+00> : vector<2048x8xf32>
    %2 = tpu.matmul %0, %1, %cst {dimension_numbers = #tpu.dot_dimension_numbers<[1], [0], [0], [1], [0, 0, 1, 1], [], []>} : vector<2048x48xbf16>, vector<48x8xbf16>, vector<2048x8xf32> -> vector<2048x8xf32>
    %cst_3 = arith.constant 0.000000e+00 : f32
    %3 = vector.broadcast %cst_3 : f32 to vector<2048x8xf32>
    %4 = arith.cmpf ogt, %2, %3 : vector<2048x8xf32>
    %cst_4 = arith.constant 2.000000e-01 : f32
    %5 = vector.broadcast %cst_4 : f32 to vector<2048x8xf32>
    %6 = arith.mulf %5, %2 : vector<2048x8xf32>
    %7 = arith.select %4, %2, %6 : vector<2048x8xi1>, vector<2048x8xf32>
    %8 = arith.truncf %7 : vector<2048x8xf32> to vector<2048x8xbf16>
    %c0_5 = arith.constant 0 : index
    %c0_6 = arith.constant 0 : index
    %9 = vector.load %arg4[%c0_5, %c0_6] : memref<2048x8xbf16, #tpu.memory_space<vmem>>, vector<2048x8xbf16>
    tpu.vector_store %arg4[%c0_5, %c0_6], %8 {strides = array<i32>} : memref<2048x8xbf16, #tpu.memory_space<vmem>>, vector<2048x8xbf16>,
    return
  }
  func.func @transform_0(%arg0: i32) -> (i32, i32) {
    %c0_i32 = arith.constant 0 : i32
    %c0_i32_0 = arith.constant 0 : i32
    return %arg0, %c0_i32 : i32, i32
  }
  func.func @transform_1(%arg0: i32) -> (i32, i32) {
    %c0_i32 = arith.constant 0 : i32
    %c0_i32_0 = arith.constant 0 : i32
    %c0_i32_1 = arith.constant 0 : i32
    return %c0_i32, %c0_i32_0 : i32, i32
  }
  func.func @transform_2(%arg0: i32) -> (i32, i32) {
    %c0_i32 = arith.constant 0 : i32
    %c0_i32_0 = arith.constant 0 : i32
    %c0_i32_1 = arith.constant 0 : i32
    return %c0_i32, %c0_i32_0 : i32, i32
  }
  func.func @transform_3(%arg0: i32) -> (i32, i32) {
    %c0_i32 = arith.constant 0 : i32
    %c0_i32_0 = arith.constant 0 : i32
    return %arg0, %c0_i32 : i32, i32
  }
}

module attributes {stable_mosaic.version = 11 : i64} {
  func.func @_conv_layer_kernel(%arg0: i32, %arg1: memref<512x128xbf16, #tpu.memory_space<vmem>>, %arg2: memref<128x16xbf16, #tpu.memory_space<vmem>>, %arg3: memref<1x128xf32, #tpu.memory_space<vmem>>, %arg4: memref<512x16xbf16, #tpu.memory_space<vmem>>, %arg5: memref<1x8x16xf32, #tpu.memory_space<vmem>>, %arg6: memref<1x8x16xf32, #tpu.memory_space<vmem>>) attributes {dimension_semantics = [#tpu.dimension_semantics<parallel>], iteration_bounds = array<i64: 1>, scalar_prefetch = 0 : i64, scratch_operands = 0 : i64, tpu.core_type = #tpu.core_type<tc>, window_params = [{transform_indices = @transform_0, window_bounds = array<i64: 512, 128>}, {pipeline_mode = #tpu.pipeline_mode<synchronous>, transform_indices = @transform_1, window_bounds = array<i64: 128, 16>}, {pipeline_mode = #tpu.pipeline_mode<synchronous>, transform_indices = @transform_2, window_bounds = array<i64: 1, 128>}, {transform_indices = @transform_3, window_bounds = array<i64: 512, 16>}, {transform_indices = @transform_4, window_bounds = array<i64: 1, 8, 16>}, {transform_indices = @transform_5, window_bounds = array<i64: 1, 8, 16>}]} {
    %c0 = arith.constant 0 : index
    %c0_0 = arith.constant 0 : index
    %0 = vector.load %arg1[%c0, %c0_0] : memref<512x128xbf16, #tpu.memory_space<vmem>>, vector<512x128xbf16>
    %c0_1 = arith.constant 0 : index
    %c0_2 = arith.constant 0 : index
    %1 = vector.load %arg2[%c0_1, %c0_2] : memref<128x16xbf16, #tpu.memory_space<vmem>>, vector<128x16xbf16>
    %cst = arith.constant dense<0.000000e+00> : vector<512x16xf32>
    %2 = tpu.matmul %0, %1, %cst {dimension_numbers = #tpu.dot_dimension_numbers<[1], [0], [0], [1], [0, 0, 1, 1], [], []>} : vector<512x128xbf16>, vector<128x16xbf16>, vector<512x16xf32> -> vector<512x16xf32>
    %cst_3 = arith.constant dense<0.000000e+00> : vector<16xf32>
    %3 = vector.multi_reduction <add>, %2, %cst_3 [0] : vector<512x16xf32> to vector<16xf32>
    %4 = vector.shape_cast %3 : vector<16xf32> to vector<1x16xf32>
    %5 = arith.mulf %2, %2 : vector<512x16xf32>
    %cst_4 = arith.constant dense<0.000000e+00> : vector<16xf32>
    %6 = vector.multi_reduction <add>, %5, %cst_4 [0] : vector<512x16xf32> to vector<16xf32>
    %7 = vector.shape_cast %6 : vector<16xf32> to vector<1x16xf32>
    %8 = vector.shape_cast %4 : vector<1x16xf32> to vector<1x1x16xf32>
    %9 = vector.shape_cast %8 : vector<1x1x16xf32> to vector<1x1x16xf32>
    %10 = vector.broadcast %9 : vector<1x1x16xf32> to vector<1x8x16xf32>
    %c0_5 = arith.constant 0 : index
    %c0_6 = arith.constant 0 : index
    %c0_7 = arith.constant 0 : index
    %11 = vector.load %arg5[%c0_5, %c0_6, %c0_7] : memref<1x8x16xf32, #tpu.memory_space<vmem>>, vector<1x8x16xf32>
    tpu.vector_store %arg5[%c0_5, %c0_6, %c0_7], %10 {strides = array<i32>} : memref<1x8x16xf32, #tpu.memory_space<vmem>>, vector<1x8x16xf32>,
    %12 = vector.shape_cast %7 : vector<1x16xf32> to vector<1x1x16xf32>
    %13 = vector.shape_cast %12 : vector<1x1x16xf32> to vector<1x1x16xf32>
    %14 = vector.broadcast %13 : vector<1x1x16xf32> to vector<1x8x16xf32>
    %c0_8 = arith.constant 0 : index
    %c0_9 = arith.constant 0 : index
    %c0_10 = arith.constant 0 : index
    %15 = vector.load %arg6[%c0_8, %c0_9, %c0_10] : memref<1x8x16xf32, #tpu.memory_space<vmem>>, vector<1x8x16xf32>
    tpu.vector_store %arg6[%c0_8, %c0_9, %c0_10], %14 {strides = array<i32>} : memref<1x8x16xf32, #tpu.memory_space<vmem>>, vector<1x8x16xf32>,
    %16 = arith.truncf %2 : vector<512x16xf32> to vector<512x16xbf16>
    %c0_11 = arith.constant 0 : index
    %c0_12 = arith.constant 0 : index
    %17 = vector.load %arg4[%c0_11, %c0_12] : memref<512x16xbf16, #tpu.memory_space<vmem>>, vector<512x16xbf16>
    tpu.vector_store %arg4[%c0_11, %c0_12], %16 {strides = array<i32>} : memref<512x16xbf16, #tpu.memory_space<vmem>>, vector<512x16xbf16>,
    return
  }
  func.func @transform_0(%arg0: i32) -> (i32, i32) {
    %c0_i32 = arith.constant 0 : i32
    %c0_i32_0 = arith.constant 0 : i32
    return %arg0, %c0_i32 : i32, i32
  }
  func.func @transform_1(%arg0: i32) -> (i32, i32) {
    %c0_i32 = arith.constant 0 : i32
    %c0_i32_0 = arith.constant 0 : i32
    %c0_i32_1 = arith.constant 0 : i32
    return %c0_i32, %c0_i32_0 : i32, i32
  }
  func.func @transform_2(%arg0: i32) -> (i32, i32) {
    %c0_i32 = arith.constant 0 : i32
    %c0_i32_0 = arith.constant 0 : i32
    %c0_i32_1 = arith.constant 0 : i32
    return %c0_i32, %c0_i32_0 : i32, i32
  }
  func.func @transform_3(%arg0: i32) -> (i32, i32) {
    %c0_i32 = arith.constant 0 : i32
    %c0_i32_0 = arith.constant 0 : i32
    return %arg0, %c0_i32 : i32, i32
  }
  func.func @transform_4(%arg0: i32) -> (i32, i32, i32) {
    %c0_i32 = arith.constant 0 : i32
    %c0_i32_0 = arith.constant 0 : i32
    %c0_i32_1 = arith.constant 0 : i32
    return %arg0, %c0_i32, %c0_i32_0 : i32, i32, i32
  }
  func.func @transform_5(%arg0: i32) -> (i32, i32, i32) {
    %c0_i32 = arith.constant 0 : i32
    %c0_i32_0 = arith.constant 0 : i32
    %c0_i32_1 = arith.constant 0 : i32
    return %arg0, %c0_i32, %c0_i32_0 : i32, i32, i32
  }
}

module attributes {stable_mosaic.version = 11 : i64} {
  func.func @_conv_layer_kernel(%arg0: i32, %arg1: memref<128x256xbf16, #tpu.memory_space<vmem>>, %arg2: memref<256x32xbf16, #tpu.memory_space<vmem>>, %arg3: memref<1x256xf32, #tpu.memory_space<vmem>>, %arg4: memref<128x32xbf16, #tpu.memory_space<vmem>>, %arg5: memref<1x8x32xf32, #tpu.memory_space<vmem>>, %arg6: memref<1x8x32xf32, #tpu.memory_space<vmem>>) attributes {dimension_semantics = [#tpu.dimension_semantics<parallel>], iteration_bounds = array<i64: 1>, scalar_prefetch = 0 : i64, scratch_operands = 0 : i64, tpu.core_type = #tpu.core_type<tc>, window_params = [{transform_indices = @transform_0, window_bounds = array<i64: 128, 256>}, {pipeline_mode = #tpu.pipeline_mode<synchronous>, transform_indices = @transform_1, window_bounds = array<i64: 256, 32>}, {pipeline_mode = #tpu.pipeline_mode<synchronous>, transform_indices = @transform_2, window_bounds = array<i64: 1, 256>}, {transform_indices = @transform_3, window_bounds = array<i64: 128, 32>}, {transform_indices = @transform_4, window_bounds = array<i64: 1, 8, 32>}, {transform_indices = @transform_5, window_bounds = array<i64: 1, 8, 32>}]} {
    %c0 = arith.constant 0 : index
    %c0_0 = arith.constant 0 : index
    %0 = vector.load %arg1[%c0, %c0_0] : memref<128x256xbf16, #tpu.memory_space<vmem>>, vector<128x256xbf16>
    %1 = arith.extf %0 : vector<128x256xbf16> to vector<128x256xf32>
    %c0_1 = arith.constant 0 : index
    %c0_2 = arith.constant 0 : index
    %2 = vector.load %arg3[%c0_1, %c0_2] : memref<1x256xf32, #tpu.memory_space<vmem>>, vector<1x256xf32>
    %3 = vector.broadcast %2 : vector<1x256xf32> to vector<128x256xf32>
    %4 = arith.mulf %1, %3 : vector<128x256xf32>
    %cst = arith.constant 0.000000e+00 : f32
    %5 = vector.broadcast %cst : f32 to vector<128x256xf32>
    %6 = arith.cmpf ogt, %4, %5 : vector<128x256xf32>
    %cst_3 = arith.constant 2.000000e-01 : f32
    %7 = vector.broadcast %cst_3 : f32 to vector<128x256xf32>
    %8 = arith.mulf %7, %4 : vector<128x256xf32>
    %9 = arith.select %6, %4, %8 : vector<128x256xi1>, vector<128x256xf32>
    %10 = arith.truncf %9 : vector<128x256xf32> to vector<128x256xbf16>
    %c0_4 = arith.constant 0 : index
    %c0_5 = arith.constant 0 : index
    %11 = vector.load %arg2[%c0_4, %c0_5] : memref<256x32xbf16, #tpu.memory_space<vmem>>, vector<256x32xbf16>
    %cst_6 = arith.constant dense<0.000000e+00> : vector<128x32xf32>
    %12 = tpu.matmul %10, %11, %cst_6 {dimension_numbers = #tpu.dot_dimension_numbers<[1], [0], [0], [1], [0, 0, 1, 1], [], []>} : vector<128x256xbf16>, vector<256x32xbf16>, vector<128x32xf32> -> vector<128x32xf32>
    %cst_7 = arith.constant dense<0.000000e+00> : vector<32xf32>
    %13 = vector.multi_reduction <add>, %12, %cst_7 [0] : vector<128x32xf32> to vector<32xf32>
    %14 = vector.shape_cast %13 : vector<32xf32> to vector<1x32xf32>
    %15 = arith.mulf %12, %12 : vector<128x32xf32>
    %cst_8 = arith.constant dense<0.000000e+00> : vector<32xf32>
    %16 = vector.multi_reduction <add>, %15, %cst_8 [0] : vector<128x32xf32> to vector<32xf32>
    %17 = vector.shape_cast %16 : vector<32xf32> to vector<1x32xf32>
    %18 = vector.shape_cast %14 : vector<1x32xf32> to vector<1x1x32xf32>
    %19 = vector.shape_cast %18 : vector<1x1x32xf32> to vector<1x1x32xf32>
    %20 = vector.broadcast %19 : vector<1x1x32xf32> to vector<1x8x32xf32>
    %c0_9 = arith.constant 0 : index
    %c0_10 = arith.constant 0 : index
    %c0_11 = arith.constant 0 : index
    %21 = vector.load %arg5[%c0_9, %c0_10, %c0_11] : memref<1x8x32xf32, #tpu.memory_space<vmem>>, vector<1x8x32xf32>
    tpu.vector_store %arg5[%c0_9, %c0_10, %c0_11], %20 {strides = array<i32>} : memref<1x8x32xf32, #tpu.memory_space<vmem>>, vector<1x8x32xf32>,
    %22 = vector.shape_cast %17 : vector<1x32xf32> to vector<1x1x32xf32>
    %23 = vector.shape_cast %22 : vector<1x1x32xf32> to vector<1x1x32xf32>
    %24 = vector.broadcast %23 : vector<1x1x32xf32> to vector<1x8x32xf32>
    %c0_12 = arith.constant 0 : index
    %c0_13 = arith.constant 0 : index
    %c0_14 = arith.constant 0 : index
    %25 = vector.load %arg6[%c0_12, %c0_13, %c0_14] : memref<1x8x32xf32, #tpu.memory_space<vmem>>, vector<1x8x32xf32>
    tpu.vector_store %arg6[%c0_12, %c0_13, %c0_14], %24 {strides = array<i32>} : memref<1x8x32xf32, #tpu.memory_space<vmem>>, vector<1x8x32xf32>,
    %26 = arith.truncf %12 : vector<128x32xf32> to vector<128x32xbf16>
    %c0_15 = arith.constant 0 : index
    %c0_16 = arith.constant 0 : index
    %27 = vector.load %arg4[%c0_15, %c0_16] : memref<128x32xbf16, #tpu.memory_space<vmem>>, vector<128x32xbf16>
    tpu.vector_store %arg4[%c0_15, %c0_16], %26 {strides = array<i32>} : memref<128x32xbf16, #tpu.memory_space<vmem>>, vector<128x32xbf16>,
    return
  }
  func.func @transform_0(%arg0: i32) -> (i32, i32) {
    %c0_i32 = arith.constant 0 : i32
    %c0_i32_0 = arith.constant 0 : i32
    return %arg0, %c0_i32 : i32, i32
  }
  func.func @transform_1(%arg0: i32) -> (i32, i32) {
    %c0_i32 = arith.constant 0 : i32
    %c0_i32_0 = arith.constant 0 : i32
    %c0_i32_1 = arith.constant 0 : i32
    return %c0_i32, %c0_i32_0 : i32, i32
  }
  func.func @transform_2(%arg0: i32) -> (i32, i32) {
    %c0_i32 = arith.constant 0 : i32
    %c0_i32_0 = arith.constant 0 : i32
    %c0_i32_1 = arith.constant 0 : i32
    return %c0_i32, %c0_i32_0 : i32, i32
  }
  func.func @transform_3(%arg0: i32) -> (i32, i32) {
    %c0_i32 = arith.constant 0 : i32
    %c0_i32_0 = arith.constant 0 : i32
    return %arg0, %c0_i32 : i32, i32
  }
  func.func @transform_4(%arg0: i32) -> (i32, i32, i32) {
    %c0_i32 = arith.constant 0 : i32
    %c0_i32_0 = arith.constant 0 : i32
    %c0_i32_1 = arith.constant 0 : i32
    return %arg0, %c0_i32, %c0_i32_0 : i32, i32, i32
  }
  func.func @transform_5(%arg0: i32) -> (i32, i32, i32) {
    %c0_i32 = arith.constant 0 : i32
    %c0_i32_0 = arith.constant 0 : i32
    %c0_i32_1 = arith.constant 0 : i32
    return %arg0, %c0_i32, %c0_i32_0 : i32, i32, i32
  }
}

module attributes {stable_mosaic.version = 11 : i64} {
  func.func @_conv_layer_kernel(%arg0: i32, %arg1: memref<32x512xbf16, #tpu.memory_space<vmem>>, %arg2: memref<512x64xbf16, #tpu.memory_space<vmem>>, %arg3: memref<1x512xf32, #tpu.memory_space<vmem>>, %arg4: memref<32x64xbf16, #tpu.memory_space<vmem>>, %arg5: memref<1x8x64xf32, #tpu.memory_space<vmem>>, %arg6: memref<1x8x64xf32, #tpu.memory_space<vmem>>) attributes {dimension_semantics = [#tpu.dimension_semantics<parallel>], iteration_bounds = array<i64: 1>, scalar_prefetch = 0 : i64, scratch_operands = 0 : i64, tpu.core_type = #tpu.core_type<tc>, window_params = [{transform_indices = @transform_0, window_bounds = array<i64: 32, 512>}, {pipeline_mode = #tpu.pipeline_mode<synchronous>, transform_indices = @transform_1, window_bounds = array<i64: 512, 64>}, {pipeline_mode = #tpu.pipeline_mode<synchronous>, transform_indices = @transform_2, window_bounds = array<i64: 1, 512>}, {transform_indices = @transform_3, window_bounds = array<i64: 32, 64>}, {transform_indices = @transform_4, window_bounds = array<i64: 1, 8, 64>}, {transform_indices = @transform_5, window_bounds = array<i64: 1, 8, 64>}]} {
    %c0 = arith.constant 0 : index
    %c0_0 = arith.constant 0 : index
    %0 = vector.load %arg1[%c0, %c0_0] : memref<32x512xbf16, #tpu.memory_space<vmem>>, vector<32x512xbf16>
    %1 = arith.extf %0 : vector<32x512xbf16> to vector<32x512xf32>
    %c0_1 = arith.constant 0 : index
    %c0_2 = arith.constant 0 : index
    %2 = vector.load %arg3[%c0_1, %c0_2] : memref<1x512xf32, #tpu.memory_space<vmem>>, vector<1x512xf32>
    %3 = vector.broadcast %2 : vector<1x512xf32> to vector<32x512xf32>
    %4 = arith.mulf %1, %3 : vector<32x512xf32>
    %cst = arith.constant 0.000000e+00 : f32
    %5 = vector.broadcast %cst : f32 to vector<32x512xf32>
    %6 = arith.cmpf ogt, %4, %5 : vector<32x512xf32>
    %cst_3 = arith.constant 2.000000e-01 : f32
    %7 = vector.broadcast %cst_3 : f32 to vector<32x512xf32>
    %8 = arith.mulf %7, %4 : vector<32x512xf32>
    %9 = arith.select %6, %4, %8 : vector<32x512xi1>, vector<32x512xf32>
    %10 = arith.truncf %9 : vector<32x512xf32> to vector<32x512xbf16>
    %c0_4 = arith.constant 0 : index
    %c0_5 = arith.constant 0 : index
    %11 = vector.load %arg2[%c0_4, %c0_5] : memref<512x64xbf16, #tpu.memory_space<vmem>>, vector<512x64xbf16>
    %cst_6 = arith.constant dense<0.000000e+00> : vector<32x64xf32>
    %12 = tpu.matmul %10, %11, %cst_6 {dimension_numbers = #tpu.dot_dimension_numbers<[1], [0], [0], [1], [0, 0, 1, 1], [], []>} : vector<32x512xbf16>, vector<512x64xbf16>, vector<32x64xf32> -> vector<32x64xf32>
    %cst_7 = arith.constant dense<0.000000e+00> : vector<64xf32>
    %13 = vector.multi_reduction <add>, %12, %cst_7 [0] : vector<32x64xf32> to vector<64xf32>
    %14 = vector.shape_cast %13 : vector<64xf32> to vector<1x64xf32>
    %15 = arith.mulf %12, %12 : vector<32x64xf32>
    %cst_8 = arith.constant dense<0.000000e+00> : vector<64xf32>
    %16 = vector.multi_reduction <add>, %15, %cst_8 [0] : vector<32x64xf32> to vector<64xf32>
    %17 = vector.shape_cast %16 : vector<64xf32> to vector<1x64xf32>
    %18 = vector.shape_cast %14 : vector<1x64xf32> to vector<1x1x64xf32>
    %19 = vector.shape_cast %18 : vector<1x1x64xf32> to vector<1x1x64xf32>
    %20 = vector.broadcast %19 : vector<1x1x64xf32> to vector<1x8x64xf32>
    %c0_9 = arith.constant 0 : index
    %c0_10 = arith.constant 0 : index
    %c0_11 = arith.constant 0 : index
    %21 = vector.load %arg5[%c0_9, %c0_10, %c0_11] : memref<1x8x64xf32, #tpu.memory_space<vmem>>, vector<1x8x64xf32>
    tpu.vector_store %arg5[%c0_9, %c0_10, %c0_11], %20 {strides = array<i32>} : memref<1x8x64xf32, #tpu.memory_space<vmem>>, vector<1x8x64xf32>,
    %22 = vector.shape_cast %17 : vector<1x64xf32> to vector<1x1x64xf32>
    %23 = vector.shape_cast %22 : vector<1x1x64xf32> to vector<1x1x64xf32>
    %24 = vector.broadcast %23 : vector<1x1x64xf32> to vector<1x8x64xf32>
    %c0_12 = arith.constant 0 : index
    %c0_13 = arith.constant 0 : index
    %c0_14 = arith.constant 0 : index
    %25 = vector.load %arg6[%c0_12, %c0_13, %c0_14] : memref<1x8x64xf32, #tpu.memory_space<vmem>>, vector<1x8x64xf32>
    tpu.vector_store %arg6[%c0_12, %c0_13, %c0_14], %24 {strides = array<i32>} : memref<1x8x64xf32, #tpu.memory_space<vmem>>, vector<1x8x64xf32>,
    %26 = arith.truncf %12 : vector<32x64xf32> to vector<32x64xbf16>
    %c0_15 = arith.constant 0 : index
    %c0_16 = arith.constant 0 : index
    %27 = vector.load %arg4[%c0_15, %c0_16] : memref<32x64xbf16, #tpu.memory_space<vmem>>, vector<32x64xbf16>
    tpu.vector_store %arg4[%c0_15, %c0_16], %26 {strides = array<i32>} : memref<32x64xbf16, #tpu.memory_space<vmem>>, vector<32x64xbf16>,
    return
  }
  func.func @transform_0(%arg0: i32) -> (i32, i32) {
    %c0_i32 = arith.constant 0 : i32
    %c0_i32_0 = arith.constant 0 : i32
    return %arg0, %c0_i32 : i32, i32
  }
  func.func @transform_1(%arg0: i32) -> (i32, i32) {
    %c0_i32 = arith.constant 0 : i32
    %c0_i32_0 = arith.constant 0 : i32
    %c0_i32_1 = arith.constant 0 : i32
    return %c0_i32, %c0_i32_0 : i32, i32
  }
  func.func @transform_2(%arg0: i32) -> (i32, i32) {
    %c0_i32 = arith.constant 0 : i32
    %c0_i32_0 = arith.constant 0 : i32
    %c0_i32_1 = arith.constant 0 : i32
    return %c0_i32, %c0_i32_0 : i32, i32
  }
  func.func @transform_3(%arg0: i32) -> (i32, i32) {
    %c0_i32 = arith.constant 0 : i32
    %c0_i32_0 = arith.constant 0 : i32
    return %arg0, %c0_i32 : i32, i32
  }
  func.func @transform_4(%arg0: i32) -> (i32, i32, i32) {
    %c0_i32 = arith.constant 0 : i32
    %c0_i32_0 = arith.constant 0 : i32
    %c0_i32_1 = arith.constant 0 : i32
    return %arg0, %c0_i32, %c0_i32_0 : i32, i32, i32
  }
  func.func @transform_5(%arg0: i32) -> (i32, i32, i32) {
    %c0_i32 = arith.constant 0 : i32
    %c0_i32_0 = arith.constant 0 : i32
    %c0_i32_1 = arith.constant 0 : i32
    return %arg0, %c0_i32, %c0_i32_0 : i32, i32, i32
  }
}

module attributes {stable_mosaic.version = 11 : i64} {
  func.func @_conv_layer_kernel(%arg0: i32, %arg1: memref<32x576xbf16, #tpu.memory_space<vmem>>, %arg2: memref<576x64xbf16, #tpu.memory_space<vmem>>, %arg3: memref<1x576xf32, #tpu.memory_space<vmem>>, %arg4: memref<32x64xbf16, #tpu.memory_space<vmem>>, %arg5: memref<1x8x64xf32, #tpu.memory_space<vmem>>, %arg6: memref<1x8x64xf32, #tpu.memory_space<vmem>>) attributes {dimension_semantics = [#tpu.dimension_semantics<parallel>], iteration_bounds = array<i64: 1>, scalar_prefetch = 0 : i64, scratch_operands = 0 : i64, tpu.core_type = #tpu.core_type<tc>, window_params = [{transform_indices = @transform_0, window_bounds = array<i64: 32, 576>}, {pipeline_mode = #tpu.pipeline_mode<synchronous>, transform_indices = @transform_1, window_bounds = array<i64: 576, 64>}, {pipeline_mode = #tpu.pipeline_mode<synchronous>, transform_indices = @transform_2, window_bounds = array<i64: 1, 576>}, {transform_indices = @transform_3, window_bounds = array<i64: 32, 64>}, {transform_indices = @transform_4, window_bounds = array<i64: 1, 8, 64>}, {transform_indices = @transform_5, window_bounds = array<i64: 1, 8, 64>}]} {
    %c0 = arith.constant 0 : index
    %c0_0 = arith.constant 0 : index
    %0 = vector.load %arg1[%c0, %c0_0] : memref<32x576xbf16, #tpu.memory_space<vmem>>, vector<32x576xbf16>
    %1 = arith.extf %0 : vector<32x576xbf16> to vector<32x576xf32>
    %c0_1 = arith.constant 0 : index
    %c0_2 = arith.constant 0 : index
    %2 = vector.load %arg3[%c0_1, %c0_2] : memref<1x576xf32, #tpu.memory_space<vmem>>, vector<1x576xf32>
    %3 = vector.broadcast %2 : vector<1x576xf32> to vector<32x576xf32>
    %4 = arith.mulf %1, %3 : vector<32x576xf32>
    %cst = arith.constant 0.000000e+00 : f32
    %5 = vector.broadcast %cst : f32 to vector<32x576xf32>
    %6 = arith.cmpf ogt, %4, %5 : vector<32x576xf32>
    %cst_3 = arith.constant 2.000000e-01 : f32
    %7 = vector.broadcast %cst_3 : f32 to vector<32x576xf32>
    %8 = arith.mulf %7, %4 : vector<32x576xf32>
    %9 = arith.select %6, %4, %8 : vector<32x576xi1>, vector<32x576xf32>
    %10 = arith.truncf %9 : vector<32x576xf32> to vector<32x576xbf16>
    %c0_4 = arith.constant 0 : index
    %c0_5 = arith.constant 0 : index
    %11 = vector.load %arg2[%c0_4, %c0_5] : memref<576x64xbf16, #tpu.memory_space<vmem>>, vector<576x64xbf16>
    %cst_6 = arith.constant dense<0.000000e+00> : vector<32x64xf32>
    %12 = tpu.matmul %10, %11, %cst_6 {dimension_numbers = #tpu.dot_dimension_numbers<[1], [0], [0], [1], [0, 0, 1, 1], [], []>} : vector<32x576xbf16>, vector<576x64xbf16>, vector<32x64xf32> -> vector<32x64xf32>
    %cst_7 = arith.constant dense<0.000000e+00> : vector<64xf32>
    %13 = vector.multi_reduction <add>, %12, %cst_7 [0] : vector<32x64xf32> to vector<64xf32>
    %14 = vector.shape_cast %13 : vector<64xf32> to vector<1x64xf32>
    %15 = arith.mulf %12, %12 : vector<32x64xf32>
    %cst_8 = arith.constant dense<0.000000e+00> : vector<64xf32>
    %16 = vector.multi_reduction <add>, %15, %cst_8 [0] : vector<32x64xf32> to vector<64xf32>
    %17 = vector.shape_cast %16 : vector<64xf32> to vector<1x64xf32>
    %18 = vector.shape_cast %14 : vector<1x64xf32> to vector<1x1x64xf32>
    %19 = vector.shape_cast %18 : vector<1x1x64xf32> to vector<1x1x64xf32>
    %20 = vector.broadcast %19 : vector<1x1x64xf32> to vector<1x8x64xf32>
    %c0_9 = arith.constant 0 : index
    %c0_10 = arith.constant 0 : index
    %c0_11 = arith.constant 0 : index
    %21 = vector.load %arg5[%c0_9, %c0_10, %c0_11] : memref<1x8x64xf32, #tpu.memory_space<vmem>>, vector<1x8x64xf32>
    tpu.vector_store %arg5[%c0_9, %c0_10, %c0_11], %20 {strides = array<i32>} : memref<1x8x64xf32, #tpu.memory_space<vmem>>, vector<1x8x64xf32>,
    %22 = vector.shape_cast %17 : vector<1x64xf32> to vector<1x1x64xf32>
    %23 = vector.shape_cast %22 : vector<1x1x64xf32> to vector<1x1x64xf32>
    %24 = vector.broadcast %23 : vector<1x1x64xf32> to vector<1x8x64xf32>
    %c0_12 = arith.constant 0 : index
    %c0_13 = arith.constant 0 : index
    %c0_14 = arith.constant 0 : index
    %25 = vector.load %arg6[%c0_12, %c0_13, %c0_14] : memref<1x8x64xf32, #tpu.memory_space<vmem>>, vector<1x8x64xf32>
    tpu.vector_store %arg6[%c0_12, %c0_13, %c0_14], %24 {strides = array<i32>} : memref<1x8x64xf32, #tpu.memory_space<vmem>>, vector<1x8x64xf32>,
    %26 = arith.truncf %12 : vector<32x64xf32> to vector<32x64xbf16>
    %c0_15 = arith.constant 0 : index
    %c0_16 = arith.constant 0 : index
    %27 = vector.load %arg4[%c0_15, %c0_16] : memref<32x64xbf16, #tpu.memory_space<vmem>>, vector<32x64xbf16>
    tpu.vector_store %arg4[%c0_15, %c0_16], %26 {strides = array<i32>} : memref<32x64xbf16, #tpu.memory_space<vmem>>, vector<32x64xbf16>,
    return
  }
  func.func @transform_0(%arg0: i32) -> (i32, i32) {
    %c0_i32 = arith.constant 0 : i32
    %c0_i32_0 = arith.constant 0 : i32
    return %arg0, %c0_i32 : i32, i32
  }
  func.func @transform_1(%arg0: i32) -> (i32, i32) {
    %c0_i32 = arith.constant 0 : i32
    %c0_i32_0 = arith.constant 0 : i32
    %c0_i32_1 = arith.constant 0 : i32
    return %c0_i32, %c0_i32_0 : i32, i32
  }
  func.func @transform_2(%arg0: i32) -> (i32, i32) {
    %c0_i32 = arith.constant 0 : i32
    %c0_i32_0 = arith.constant 0 : i32
    %c0_i32_1 = arith.constant 0 : i32
    return %c0_i32, %c0_i32_0 : i32, i32
  }
  func.func @transform_3(%arg0: i32) -> (i32, i32) {
    %c0_i32 = arith.constant 0 : i32
    %c0_i32_0 = arith.constant 0 : i32
    return %arg0, %c0_i32 : i32, i32
  }
  func.func @transform_4(%arg0: i32) -> (i32, i32, i32) {
    %c0_i32 = arith.constant 0 : i32
    %c0_i32_0 = arith.constant 0 : i32
    %c0_i32_1 = arith.constant 0 : i32
    return %arg0, %c0_i32, %c0_i32_0 : i32, i32, i32
  }
  func.func @transform_5(%arg0: i32) -> (i32, i32, i32) {
    %c0_i32 = arith.constant 0 : i32
    %c0_i32_0 = arith.constant 0 : i32
    %c0_i32_1 = arith.constant 0 : i32
    return %arg0, %c0_i32, %c0_i32_0 : i32, i32, i32
  }
}

module attributes {stable_mosaic.version = 11 : i64} {
  func.func @_conv_layer_kernel(%arg0: i32, %arg1: memref<8x1024xbf16, #tpu.memory_space<vmem>>, %arg2: memref<1x1024xbf16, #tpu.memory_space<vmem>>, %arg3: memref<1x1024xf32, #tpu.memory_space<vmem>>, %arg4: memref<8x1xf32, #tpu.memory_space<vmem>>) attributes {dimension_semantics = [#tpu.dimension_semantics<parallel>], iteration_bounds = array<i64: 1>, scalar_prefetch = 0 : i64, scratch_operands = 0 : i64, tpu.core_type = #tpu.core_type<tc>, window_params = [{transform_indices = @transform_0, window_bounds = array<i64: 8, 1024>}, {pipeline_mode = #tpu.pipeline_mode<synchronous>, transform_indices = @transform_1, window_bounds = array<i64: 1, 1024>}, {pipeline_mode = #tpu.pipeline_mode<synchronous>, transform_indices = @transform_2, window_bounds = array<i64: 1, 1024>}, {transform_indices = @transform_3, window_bounds = array<i64: 8, 1>}]} {
    %c0 = arith.constant 0 : index
    %c0_0 = arith.constant 0 : index
    %0 = vector.load %arg1[%c0, %c0_0] : memref<8x1024xbf16, #tpu.memory_space<vmem>>, vector<8x1024xbf16>
    %1 = arith.extf %0 : vector<8x1024xbf16> to vector<8x1024xf32>
    %c0_1 = arith.constant 0 : index
    %c0_2 = arith.constant 0 : index
    %2 = vector.load %arg3[%c0_1, %c0_2] : memref<1x1024xf32, #tpu.memory_space<vmem>>, vector<1x1024xf32>
    %3 = vector.broadcast %2 : vector<1x1024xf32> to vector<8x1024xf32>
    %4 = arith.mulf %1, %3 : vector<8x1024xf32>
    %cst = arith.constant 0.000000e+00 : f32
    %5 = vector.broadcast %cst : f32 to vector<8x1024xf32>
    %6 = arith.cmpf ogt, %4, %5 : vector<8x1024xf32>
    %cst_3 = arith.constant 2.000000e-01 : f32
    %7 = vector.broadcast %cst_3 : f32 to vector<8x1024xf32>
    %8 = arith.mulf %7, %4 : vector<8x1024xf32>
    %9 = arith.select %6, %4, %8 : vector<8x1024xi1>, vector<8x1024xf32>
    %c0_4 = arith.constant 0 : index
    %c0_5 = arith.constant 0 : index
    %10 = vector.load %arg2[%c0_4, %c0_5] : memref<1x1024xbf16, #tpu.memory_space<vmem>>, vector<1x1024xbf16>
    %11 = arith.extf %10 : vector<1x1024xbf16> to vector<1x1024xf32>
    %12 = vector.broadcast %11 : vector<1x1024xf32> to vector<8x1024xf32>
    %13 = arith.mulf %9, %12 : vector<8x1024xf32>
    %cst_6 = arith.constant dense<0.000000e+00> : vector<8xf32>
    %14 = vector.multi_reduction <add>, %13, %cst_6 [1] : vector<8x1024xf32> to vector<8xf32>
    %15 = vector.shape_cast %14 : vector<8xf32> to vector<8x1xf32>
    %cst_7 = arith.constant 0.000000e+00 : f32
    %16 = vector.broadcast %cst_7 : f32 to vector<8x1xf32>
    %17 = arith.subf %16, %15 : vector<8x1xf32>
    %18 = math.exp %17 : vector<8x1xf32>
    %cst_8 = arith.constant 1.000000e+00 : f32
    %19 = vector.broadcast %cst_8 : f32 to vector<8x1xf32>
    %20 = arith.addf %19, %18 : vector<8x1xf32>
    %cst_9 = arith.constant 1.000000e+00 : f32
    %21 = vector.broadcast %cst_9 : f32 to vector<8x1xf32>
    %22 = arith.divf %21, %20 : vector<8x1xf32>
    %c0_10 = arith.constant 0 : index
    %c0_11 = arith.constant 0 : index
    %23 = vector.load %arg4[%c0_10, %c0_11] : memref<8x1xf32, #tpu.memory_space<vmem>>, vector<8x1xf32>
    tpu.vector_store %arg4[%c0_10, %c0_11], %22 {strides = array<i32>} : memref<8x1xf32, #tpu.memory_space<vmem>>, vector<8x1xf32>,
    return
  }
  func.func @transform_0(%arg0: i32) -> (i32, i32) {
    %c0_i32 = arith.constant 0 : i32
    %c0_i32_0 = arith.constant 0 : i32
    return %arg0, %c0_i32 : i32, i32
  }
  func.func @transform_1(%arg0: i32) -> (i32, i32) {
    %c0_i32 = arith.constant 0 : i32
    %c0_i32_0 = arith.constant 0 : i32
    %c0_i32_1 = arith.constant 0 : i32
    return %c0_i32, %c0_i32_0 : i32, i32
  }
  func.func @transform_2(%arg0: i32) -> (i32, i32) {
    %c0_i32 = arith.constant 0 : i32
    %c0_i32_0 = arith.constant 0 : i32
    %c0_i32_1 = arith.constant 0 : i32
    return %c0_i32, %c0_i32_0 : i32, i32
  }
  func.func @transform_3(%arg0: i32) -> (i32, i32) {
    %c0_i32 = arith.constant 0 : i32
    %c0_i32_0 = arith.constant 0 : i32
    return %arg0, %c0_i32 : i32, i32
  }
}

</mosaic_0001>

<llo_original>
// kernel: netD_forward.6
$region0: #{netD_forward.6}
  #allocation0 [shape = 'u32[]', space=smem, size = 0x4, offset = 0x4, fixed_abs, tag = 'smem constant byte address 0x4 - core index']
  #allocation1 [shape = 'u32[144,128]{1,0:T(1,128)}', space=vmem, size = 0x12000, scoped, tag = 'internal scratch']
  %s0 = inlined_call_operand.vmem [shape: bf16[2048,48], index: 0, kind: input, shape index: {}]
  %s1 = inlined_call_operand.vmem [shape: bf16[48,8], index: 1, kind: input, shape index: {}]
  %s2 = inlined_call_operand.vmem [shape: f32[1,48], index: 2, kind: input, shape index: {}]
  %s3 = inlined_call_operand.vmem [shape: bf16[2048,8], index: 3, kind: output, shape index: {}]
  %s4 = sld [smem:[#allocation0]]
  $region22: #{netD_forward.6} parent=0
    _
  %s6 = ssub.s32 1, %s4
  %s7 = scalar_select 0, %s6, %s4
  // Predicated region
  $region2: #{netD_forward.6} parent=0 // pred_check
    _
  $region3: #{netD_forward.6} parent=0 // pred_check_branch
    %9 = sbr.rel (0) target = $region5
  $region4: #{netD_forward.6} parent=0 // pred_region
    _
  $region5: #{netD_forward.6} parent=0 // pred_fallthru
    _
  // Predicated region
  $region6: #{netD_forward.6} parent=0 // pred_check
    _
  $region7: #{netD_forward.6} parent=0 // pred_check_branch
    %11 = sbr.rel (0) target = $region9
  $region8: #{netD_forward.6} parent=0 // pred_region
    _
  $region9: #{netD_forward.6} parent=0 // pred_fallthru
    _
  // Predicated region
  $region10: #{netD_forward.6} parent=0 // pred_check
    _
  $region11: #{netD_forward.6} parent=0 // pred_check_branch
    %13 = sbr.rel (0) target = $region13
  $region12: #{netD_forward.6} parent=0 // pred_region
    _
  $region13: #{netD_forward.6} parent=0 // pred_fallthru
    _
  %v15 = vld [vmem:[%s0] sm:$0xf]
  %v16 = vld [vmem:[%s0 + $0x4] sm:$0xf]
  %v17 = vld [vmem:[%s0 + $0x8] sm:$0xf]
  %v18 = vld [vmem:[%s0 + $0xc] sm:$0xf]
  %v19 = vld [vmem:[%s0 + $0x10] sm:$0xf]
  %v20 = vld [vmem:[%s0 + $0x14] sm:$0xf]
  %v21 = vld [vmem:[%s0 + $0x18] sm:$0xf]
  %v22 = vld [vmem:[%s0 + $0x1c] sm:$0xf]
  %v23 = vld [vmem:[%s0 + $0x20] sm:$0xf]
  %v24 = vld [vmem:[%s0 + $0x24] sm:$0xf]
  %v25 = vld [vmem:[%s0 + $0x28] sm:$0xf]
  %v26 = vld [vmem:[%s0 + $0x2c] sm:$0xf]
  %v27 = vld [vmem:[%s0 + $0x30] sm:$0xf]
  %v28 = vld [vmem:[%s0 + $0x34] sm:$0xf]
  %v29 = vld [vmem:[%s0 + $0x38] sm:$0xf]
  %v30 = vld [vmem:[%s0 + $0x3c] sm:$0xf]
  %v31 = vld [vmem:[%s0 + $0x40] sm:$0xf]
  %v32 = vld [vmem:[%s0 + $0x44] sm:$0xf]
  %v33 = vld [vmem:[%s0 + $0x48] sm:$0xf]
  %v34 = vld [vmem:[%s0 + $0x4c] sm:$0xf]
  %v35 = vld [vmem:[%s0 + $0x50] sm:$0xf]
  %v36 = vld [vmem:[%s0 + $0x54] sm:$0xf]
  %v37 = vld [vmem:[%s0 + $0x58] sm:$0xf]
  %v38 = vld [vmem:[%s0 + $0x5c] sm:$0xf]
  %v39 = vld [vmem:[%s0 + $0x60] sm:$0xf]
  %v40 = vld [vmem:[%s0 + $0x64] sm:$0xf]
  %v41 = vld [vmem:[%s0 + $0x68] sm:$0xf]
  %v42 = vld [vmem:[%s0 + $0x6c] sm:$0xf]
  %v43 = vld [vmem:[%s0 + $0x70] sm:$0xf]
  %v44 = vld [vmem:[%s0 + $0x74] sm:$0xf]
  %v45 = vld [vmem:[%s0 + $0x78] sm:$0xf]
  %v46 = vld [vmem:[%s0 + $0x7c] sm:$0xf]
  %v47 = vld [vmem:[%s0 + $0x80] sm:$0xf]
  %v48 = vld [vmem:[%s0 + $0x84] sm:$0xf]
  %v49 = vld [vmem:[%s0 + $0x88] sm:$0xf]
  %v50 = vld [vmem:[%s0 + $0x8c] sm:$0xf]
  %v51 = vld [vmem:[%s0 + $0x90] sm:$0xf]
  %v52 = vld [vmem:[%s0 + $0x94] sm:$0xf]
  %v53 = vld [vmem:[%s0 + $0x98] sm:$0xf]
  %v54 = vld [vmem:[%s0 + $0x9c] sm:$0xf]
  %v55 = vld [vmem:[%s0 + $0xa0] sm:$0xf]
  %v56 = vld [vmem:[%s0 + $0xa4] sm:$0xf]
  %v57 = vld [vmem:[%s0 + $0xa8] sm:$0xf]
  %v58 = vld [vmem:[%s0 + $0xac] sm:$0xf]
  %v59 = vld [vmem:[%s0 + $0xb0] sm:$0xf]
  %v60 = vld [vmem:[%s0 + $0xb4] sm:$0xf]
  %v61 = vld [vmem:[%s0 + $0xb8] sm:$0xf]
  %v62 = vld [vmem:[%s0 + $0xbc] sm:$0xf]
  %v63 = vld [vmem:[%s0 + $0xc0] sm:$0xf]
  %v64 = vld [vmem:[%s0 + $0xc4] sm:$0xf]
  %v65 = vld [vmem:[%s0 + $0xc8] sm:$0xf]
  %v66 = vld [vmem:[%s0 + $0xcc] sm:$0xf]
  %v67 = vld [vmem:[%s0 + $0xd0] sm:$0xf]
  %v68 = vld [vmem:[%s0 + $0xd4] sm:$0xf]
  %v69 = vld [vmem:[%s0 + $0xd8] sm:$0xf]
  %v70 = vld [vmem:[%s0 + $0xdc] sm:$0xf]
  %v71 = vld [vmem:[%s0 + $0xe0] sm:$0xf]
  %v72 = vld [vmem:[%s0 + $0xe4] sm:$0xf]
  %v73 = vld [vmem:[%s0 + $0xe8] sm:$0xf]
  %v74 = vld [vmem:[%s0 + $0xec] sm:$0xf]
  %v75 = vld [vmem:[%s0 + $0xf0] sm:$0xf]
  %v76 = vld [vmem:[%s0 + $0xf4] sm:$0xf]
  %v77 = vld [vmem:[%s0 + $0xf8] sm:$0xf]
  %v78 = vld [vmem:[%s0 + $0xfc] sm:$0xf]
  %v79 = vld [vmem:[%s0 + $0x100] sm:$0xf]
  %v80 = vld [vmem:[%s0 + $0x104] sm:$0xf]
  %v81 = vld [vmem:[%s0 + $0x108] sm:$0xf]
  %v82 = vld [vmem:[%s0 + $0x10c] sm:$0xf]
  %v83 = vld [vmem:[%s0 + $0x110] sm:$0xf]
  %v84 = vld [vmem:[%s0 + $0x114] sm:$0xf]
  %v85 = vld [vmem:[%s0 + $0x118] sm:$0xf]
  %v86 = vld [vmem:[%s0 + $0x11c] sm:$0xf]
  %v87 = vld [vmem:[%s0 + $0x120] sm:$0xf]
  %v88 = vld [vmem:[%s0 + $0x124] sm:$0xf]
  %v89 = vld [vmem:[%s0 + $0x128] sm:$0xf]
  %v90 = vld [vmem:[%s0 + $0x12c] sm:$0xf]
  %v91 = vld [vmem:[%s0 + $0x130] sm:$0xf]
  %v92 = vld [vmem:[%s0 + $0x134] sm:$0xf]
  %v93 = vld [vmem:[%s0 + $0x138] sm:$0xf]
  %v94 = vld [vmem:[%s0 + $0x13c] sm:$0xf]
  %v95 = vld [vmem:[%s0 + $0x140] sm:$0xf]
  %v96 = vld [vmem:[%s0 + $0x144] sm:$0xf]
  %v97 = vld [vmem:[%s0 + $0x148] sm:$0xf]
  %v98 = vld [vmem:[%s0 + $0x14c] sm:$0xf]
  %v99 = vld [vmem:[%s0 + $0x150] sm:$0xf]
  %v100 = vld [vmem:[%s0 + $0x154] sm:$0xf]
  %v101 = vld [vmem:[%s0 + $0x158] sm:$0xf]
  %v102 = vld [vmem:[%s0 + $0x15c] sm:$0xf]
  %v103 = vld [vmem:[%s0 + $0x160] sm:$0xf]
  %v104 = vld [vmem:[%s0 + $0x164] sm:$0xf]
  %v105 = vld [vmem:[%s0 + $0x168] sm:$0xf]
  %v106 = vld [vmem:[%s0 + $0x16c] sm:$0xf]
  %v107 = vld [vmem:[%s0 + $0x170] sm:$0xf]
  %v108 = vld [vmem:[%s0 + $0x174] sm:$0xf]
  %v109 = vld [vmem:[%s0 + $0x178] sm:$0xf]
  %v110 = vld [vmem:[%s0 + $0x17c] sm:$0xf]
  %v111 = vld [vmem:[%s0 + $0x180] sm:$0xf]
  %v112 = vld [vmem:[%s0 + $0x184] sm:$0xf]
  %v113 = vld [vmem:[%s0 + $0x188] sm:$0xf]
  %v114 = vld [vmem:[%s0 + $0x18c] sm:$0xf]
  %v115 = vld [vmem:[%s0 + $0x190] sm:$0xf]
  %v116 = vld [vmem:[%s0 + $0x194] sm:$0xf]
  %v117 = vld [vmem:[%s0 + $0x198] sm:$0xf]
  %v118 = vld [vmem:[%s0 + $0x19c] sm:$0xf]
  %v119 = vld [vmem:[%s0 + $0x1a0] sm:$0xf]
  %v120 = vld [vmem:[%s0 + $0x1a4] sm:$0xf]
  %v121 = vld [vmem:[%s0 + $0x1a8] sm:$0xf]
  %v122 = vld [vmem:[%s0 + $0x1ac] sm:$0xf]
  %v123 = vld [vmem:[%s0 + $0x1b0] sm:$0xf]
  %v124 = vld [vmem:[%s0 + $0x1b4] sm:$0xf]
  %v125 = vld [vmem:[%s0 + $0x1b8] sm:$0xf]
  %v126 = vld [vmem:[%s0 + $0x1bc] sm:$0xf]
  %v127 = vld [vmem:[%s0 + $0x1c0] sm:$0xf]
  %v128 = vld [vmem:[%s0 + $0x1c4] sm:$0xf]
  %v129 = vld [vmem:[%s0 + $0x1c8] sm:$0xf]
  %v130 = vld [vmem:[%s0 + $0x1cc] sm:$0xf]
  %v131 = vld [vmem:[%s0 + $0x1d0] sm:$0xf]
  %v132 = vld [vmem:[%s0 + $0x1d4] sm:$0xf]
  %v133 = vld [vmem:[%s0 + $0x1d8] sm:$0xf]
  %v134 = vld [vmem:[%s0 + $0x1dc] sm:$0xf]
  %v135 = vld [vmem:[%s0 + $0x1e0] sm:$0xf]
  %v136 = vld [vmem:[%s0 + $0x1e4] sm:$0xf]
  %v137 = vld [vmem:[%s0 + $0x1e8] sm:$0xf]
  %v138 = vld [vmem:[%s0 + $0x1ec] sm:$0xf]
  %v139 = vld [vmem:[%s0 + $0x1f0] sm:$0xf]
  %v140 = vld [vmem:[%s0 + $0x1f4] sm:$0xf]
  %v141 = vld [vmem:[%s0 + $0x1f8] sm:$0xf]
  %v142 = vld [vmem:[%s0 + $0x1fc] sm:$0xf]
  %v143 = vld [vmem:[%s0 + $0x200] sm:$0xf]
  %v144 = vld [vmem:[%s0 + $0x204] sm:$0xf]
  %v145 = vld [vmem:[%s0 + $0x208] sm:$0xf]
  %v146 = vld [vmem:[%s0 + $0x20c] sm:$0xf]
  %v147 = vld [vmem:[%s0 + $0x210] sm:$0xf]
  %v148 = vld [vmem:[%s0 + $0x214] sm:$0xf]
  %v149 = vld [vmem:[%s0 + $0x218] sm:$0xf]
  %v150 = vld [vmem:[%s0 + $0x21c] sm:$0xf]
  %v151 = vld [vmem:[%s0 + $0x220] sm:$0xf]
  %v152 = vld [vmem:[%s0 + $0x224] sm:$0xf]
  %v153 = vld [vmem:[%s0 + $0x228] sm:$0xf]
  %v154 = vld [vmem:[%s0 + $0x22c] sm:$0xf]
  %v155 = vld [vmem:[%s0 + $0x230] sm:$0xf]
  %v156 = vld [vmem:[%s0 + $0x234] sm:$0xf]
  %v157 = vld [vmem:[%s0 + $0x238] sm:$0xf]
  %v158 = vld [vmem:[%s0 + $0x23c] sm:$0xf]
  %v159 = vld [vmem:[%s0 + $0x240] sm:$0xf]
  %v160 = vld [vmem:[%s0 + $0x244] sm:$0xf]
  %v161 = vld [vmem:[%s0 + $0x248] sm:$0xf]
  %v162 = vld [vmem:[%s0 + $0x24c] sm:$0xf]
  %v163 = vld [vmem:[%s0 + $0x250] sm:$0xf]
  %v164 = vld [vmem:[%s0 + $0x254] sm:$0xf]
  %v165 = vld [vmem:[%s0 + $0x258] sm:$0xf]
  %v166 = vld [vmem:[%s0 + $0x25c] sm:$0xf]
  %v167 = vld [vmem:[%s0 + $0x260] sm:$0xf]
  %v168 = vld [vmem:[%s0 + $0x264] sm:$0xf]
  %v169 = vld [vmem:[%s0 + $0x268] sm:$0xf]
  %v170 = vld [vmem:[%s0 + $0x26c] sm:$0xf]
  %v171 = vld [vmem:[%s0 + $0x270] sm:$0xf]
  %v172 = vld [vmem:[%s0 + $0x274] sm:$0xf]
  %v173 = vld [vmem:[%s0 + $0x278] sm:$0xf]
  %v174 = vld [vmem:[%s0 + $0x27c] sm:$0xf]
  %v175 = vld [vmem:[%s0 + $0x280] sm:$0xf]
  %v176 = vld [vmem:[%s0 + $0x284] sm:$0xf]
  %v177 = vld [vmem:[%s0 + $0x288] sm:$0xf]
  %v178 = vld [vmem:[%s0 + $0x28c] sm:$0xf]
  %v179 = vld [vmem:[%s0 + $0x290] sm:$0xf]
  %v180 = vld [vmem:[%s0 + $0x294] sm:$0xf]
  %v181 = vld [vmem:[%s0 + $0x298] sm:$0xf]
  %v182 = vld [vmem:[%s0 + $0x29c] sm:$0xf]
  %v183 = vld [vmem:[%s0 + $0x2a0] sm:$0xf]
  %v184 = vld [vmem:[%s0 + $0x2a4] sm:$0xf]
  %v185 = vld [vmem:[%s0 + $0x2a8] sm:$0xf]
  %v186 = vld [vmem:[%s0 + $0x2ac] sm:$0xf]
  %v187 = vld [vmem:[%s0 + $0x2b0] sm:$0xf]
  %v188 = vld [vmem:[%s0 + $0x2b4] sm:$0xf]
  %v189 = vld [vmem:[%s0 + $0x2b8] sm:$0xf]
  %v190 = vld [vmem:[%s0 + $0x2bc] sm:$0xf]
  %v191 = vld [vmem:[%s0 + $0x2c0] sm:$0xf]
  %v192 = vld [vmem:[%s0 + $0x2c4] sm:$0xf]
  %v193 = vld [vmem:[%s0 + $0x2c8] sm:$0xf]
  %v194 = vld [vmem:[%s0 + $0x2cc] sm:$0xf]
  %v195 = vld [vmem:[%s0 + $0x2d0] sm:$0xf]
  %v196 = vld [vmem:[%s0 + $0x2d4] sm:$0xf]
  %v197 = vld [vmem:[%s0 + $0x2d8] sm:$0xf]
  %v198 = vld [vmem:[%s0 + $0x2dc] sm:$0xf]
  %v199 = vld [vmem:[%s0 + $0x2e0] sm:$0xf]
  %v200 = vld [vmem:[%s0 + $0x2e4] sm:$0xf]
  %v201 = vld [vmem:[%s0 + $0x2e8] sm:$0xf]
  %v202 = vld [vmem:[%s0 + $0x2ec] sm:$0xf]
  %v203 = vld [vmem:[%s0 + $0x2f0] sm:$0xf]
  %v204 = vld [vmem:[%s0 + $0x2f4] sm:$0xf]
  %v205 = vld [vmem:[%s0 + $0x2f8] sm:$0xf]
  %v206 = vld [vmem:[%s0 + $0x2fc] sm:$0xf]
  %v207 = vld [vmem:[%s0 + $0x300] sm:$0xf]
  %v208 = vld [vmem:[%s0 + $0x304] sm:$0xf]
  %v209 = vld [vmem:[%s0 + $0x308] sm:$0xf]
  %v210 = vld [vmem:[%s0 + $0x30c] sm:$0xf]
  %v211 = vld [vmem:[%s0 + $0x310] sm:$0xf]
  %v212 = vld [vmem:[%s0 + $0x314] sm:$0xf]
  %v213 = vld [vmem:[%s0 + $0x318] sm:$0xf]
  %v214 = vld [vmem:[%s0 + $0x31c] sm:$0xf]
  %v215 = vld [vmem:[%s0 + $0x320] sm:$0xf]
  %v216 = vld [vmem:[%s0 + $0x324] sm:$0xf]
  %v217 = vld [vmem:[%s0 + $0x328] sm:$0xf]
  %v218 = vld [vmem:[%s0 + $0x32c] sm:$0xf]
  %v219 = vld [vmem:[%s0 + $0x330] sm:$0xf]
  %v220 = vld [vmem:[%s0 + $0x334] sm:$0xf]
  %v221 = vld [vmem:[%s0 + $0x338] sm:$0xf]
  %v222 = vld [vmem:[%s0 + $0x33c] sm:$0xf]
  %v223 = vld [vmem:[%s0 + $0x340] sm:$0xf]
  %v224 = vld [vmem:[%s0 + $0x344] sm:$0xf]
  %v225 = vld [vmem:[%s0 + $0x348] sm:$0xf]
  %v226 = vld [vmem:[%s0 + $0x34c] sm:$0xf]
  %v227 = vld [vmem:[%s0 + $0x350] sm:$0xf]
  %v228 = vld [vmem:[%s0 + $0x354] sm:$0xf]
  %v229 = vld [vmem:[%s0 + $0x358] sm:$0xf]
  %v230 = vld [vmem:[%s0 + $0x35c] sm:$0xf]
  %v231 = vld [vmem:[%s0 + $0x360] sm:$0xf]
  %v232 = vld [vmem:[%s0 + $0x364] sm:$0xf]
  %v233 = vld [vmem:[%s0 + $0x368] sm:$0xf]
  %v234 = vld [vmem:[%s0 + $0x36c] sm:$0xf]
  %v235 = vld [vmem:[%s0 + $0x370] sm:$0xf]
  %v236 = vld [vmem:[%s0 + $0x374] sm:$0xf]
  %v237 = vld [vmem:[%s0 + $0x378] sm:$0xf]
  %v238 = vld [vmem:[%s0 + $0x37c] sm:$0xf]
  %v239 = vld [vmem:[%s0 + $0x380] sm:$0xf]
  %v240 = vld [vmem:[%s0 + $0x384] sm:$0xf]
  %v241 = vld [vmem:[%s0 + $0x388] sm:$0xf]
  %v242 = vld [vmem:[%s0 + $0x38c] sm:$0xf]
  %v243 = vld [vmem:[%s0 + $0x390] sm:$0xf]
  %v244 = vld [vmem:[%s0 + $0x394] sm:$0xf]
  %v245 = vld [vmem:[%s0 + $0x398] sm:$0xf]
  %v246 = vld [vmem:[%s0 + $0x39c] sm:$0xf]
  %v247 = vld [vmem:[%s0 + $0x3a0] sm:$0xf]
  %v248 = vld [vmem:[%s0 + $0x3a4] sm:$0xf]
  %v249 = vld [vmem:[%s0 + $0x3a8] sm:$0xf]
  %v250 = vld [vmem:[%s0 + $0x3ac] sm:$0xf]
  %v251 = vld [vmem:[%s0 + $0x3b0] sm:$0xf]
  %v252 = vld [vmem:[%s0 + $0x3b4] sm:$0xf]
  %v253 = vld [vmem:[%s0 + $0x3b8] sm:$0xf]
  %v254 = vld [vmem:[%s0 + $0x3bc] sm:$0xf]
  %v255 = vld [vmem:[%s0 + $0x3c0] sm:$0xf]
  %v256 = vld [vmem:[%s0 + $0x3c4] sm:$0xf]
  %v257 = vld [vmem:[%s0 + $0x3c8] sm:$0xf]
  %v258 = vld [vmem:[%s0 + $0x3cc] sm:$0xf]
  %v259 = vld [vmem:[%s0 + $0x3d0] sm:$0xf]
  %v260 = vld [vmem:[%s0 + $0x3d4] sm:$0xf]
  %v261 = vld [vmem:[%s0 + $0x3d8] sm:$0xf]
  %v262 = vld [vmem:[%s0 + $0x3dc] sm:$0xf]
  %v263 = vld [vmem:[%s0 + $0x3e0] sm:$0xf]
  %v264 = vld [vmem:[%s0 + $0x3e4] sm:$0xf]
  %v265 = vld [vmem:[%s0 + $0x3e8] sm:$0xf]
  %v266 = vld [vmem:[%s0 + $0x3ec] sm:$0xf]
  %v267 = vld [vmem:[%s0 + $0x3f0] sm:$0xf]
  %v268 = vld [vmem:[%s0 + $0x3f4] sm:$0xf]
  %v269 = vld [vmem:[%s0 + $0x3f8] sm:$0xf]
  %v270 = vld [vmem:[%s0 + $0x3fc] sm:$0xf]
  %v271 = vld [vmem:[%s1] sm:$0xf]
  %v272 = vld [vmem:[%s1 + $0x4] sm:$0xf]
  %v273 = vld [vmem:[%s1 + $0x8] sm:$0xf]
  %v274 = vld [vmem:[%s1 + $0xc] sm:$0xf]
  %v275 = vld [vmem:[%s1 + $0x10] sm:$0xf]
  %v276 = vld [vmem:[%s1 + $0x14] sm:$0xf]
  %v533 = vunpack.c.l.b16 %v15
  %v534 = vunpack.c.l.b16 %v16
  %v535 = vunpack.c.l.b16 %v17
  %v536 = vunpack.c.l.b16 %v18
  %v537 = vunpack.c.l.b16 %v19
  %v538 = vunpack.c.l.b16 %v20
  %v539 = vunpack.c.l.b16 %v21
  %v540 = vunpack.c.l.b16 %v22
  %v541 = vunpack.c.l.b16 %v23
  %v542 = vunpack.c.l.b16 %v24
  %v543 = vunpack.c.l.b16 %v25
  %v544 = vunpack.c.l.b16 %v26
  %v545 = vunpack.c.l.b16 %v27
  %v546 = vunpack.c.l.b16 %v28
  %v547 = vunpack.c.l.b16 %v29
  %v548 = vunpack.c.l.b16 %v30
  %v549 = vunpack.c.l.b16 %v31
  %v550 = vunpack.c.l.b16 %v32
  %v551 = vunpack.c.l.b16 %v33
  %v552 = vunpack.c.l.b16 %v34
  %v553 = vunpack.c.l.b16 %v35
  %v554 = vunpack.c.l.b16 %v36
  %v555 = vunpack.c.l.b16 %v37
  %v556 = vunpack.c.l.b16 %v38
  %v557 = vunpack.c.l.b16 %v39
  %v558 = vunpack.c.l.b16 %v40
  %v559 = vunpack.c.l.b16 %v41
  %v560 = vunpack.c.l.b16 %v42
  %v561 = vunpack.c.l.b16 %v43
  %v562 = vunpack.c.l.b16 %v44
  %v563 = vunpack.c.l.b16 %v45
  %v564 = vunpack.c.l.b16 %v46
  %v565 = vunpack.c.l.b16 %v47
  %v566 = vunpack.c.l.b16 %v48
  %v567 = vunpack.c.l.b16 %v49
  %v568 = vunpack.c.l.b16 %v50
  %v569 = vunpack.c.l.b16 %v51
  %v570 = vunpack.c.l.b16 %v52
  %v571 = vunpack.c.l.b16 %v53
  %v572 = vunpack.c.l.b16 %v54
  %v573 = vunpack.c.l.b16 %v55
  %v574 = vunpack.c.l.b16 %v56
  %v575 = vunpack.c.l.b16 %v57
  %v576 = vunpack.c.l.b16 %v58
  %v577 = vunpack.c.l.b16 %v59
  %v578 = vunpack.c.l.b16 %v60
  %v579 = vunpack.c.l.b16 %v61
  %v580 = vunpack.c.l.b16 %v62
  %v581 = vunpack.c.l.b16 %v63
  %v582 = vunpack.c.l.b16 %v64
  %v583 = vunpack.c.l.b16 %v65
  %v584 = vunpack.c.l.b16 %v66
  %v585 = vunpack.c.l.b16 %v67
  %v586 = vunpack.c.l.b16 %v68
  %v587 = vunpack.c.l.b16 %v69
  %v588 = vunpack.c.l.b16 %v70
  %v589 = vunpack.c.l.b16 %v71
  %v590 = vunpack.c.l.b16 %v72
  %v591 = vunpack.c.l.b16 %v73
  %v592 = vunpack.c.l.b16 %v74
  %v593 = vunpack.c.l.b16 %v75
  %v594 = vunpack.c.l.b16 %v76
  %v595 = vunpack.c.l.b16 %v77
  %v596 = vunpack.c.l.b16 %v78
  %v597 = vunpack.c.l.b16 %v79
  %v598 = vunpack.c.l.b16 %v80
  %v599 = vunpack.c.l.b16 %v81
  %v600 = vunpack.c.l.b16 %v82
  %v601 = vunpack.c.l.b16 %v83
  %v602 = vunpack.c.l.b16 %v84
  %v603 = vunpack.c.l.b16 %v85
  %v604 = vunpack.c.l.b16 %v86
  %v605 = vunpack.c.l.b16 %v87
  %v606 = vunpack.c.l.b16 %v88
  %v607 = vunpack.c.l.b16 %v89
  %v608 = vunpack.c.l.b16 %v90
  %v609 = vunpack.c.l.b16 %v91
  %v610 = vunpack.c.l.b16 %v92
  %v611 = vunpack.c.l.b16 %v93
  %v612 = vunpack.c.l.b16 %v94
  %v613 = vunpack.c.l.b16 %v95
  %v614 = vunpack.c.l.b16 %v96
  %v615 = vunpack.c.l.b16 %v97
  %v616 = vunpack.c.l.b16 %v98
  %v617 = vunpack.c.l.b16 %v99
  %v618 = vunpack.c.l.b16 %v100
  %v619 = vunpack.c.l.b16 %v101
  %v620 = vunpack.c.l.b16 %v102
  %v621 = vunpack.c.l.b16 %v103
  %v622 = vunpack.c.l.b16 %v104
  %v623 = vunpack.c.l.b16 %v105
  %v624 = vunpack.c.l.b16 %v106
  %v625 = vunpack.c.l.b16 %v107
  %v626 = vunpack.c.l.b16 %v108
  %v627 = vunpack.c.l.b16 %v109
  %v628 = vunpack.c.l.b16 %v110
  %v629 = vunpack.c.l.b16 %v111
  %v630 = vunpack.c.l.b16 %v112
  %v631 = vunpack.c.l.b16 %v113
  %v632 = vunpack.c.l.b16 %v114
  %v633 = vunpack.c.l.b16 %v115
  %v634 = vunpack.c.l.b16 %v116
  %v635 = vunpack.c.l.b16 %v117
  %v636 = vunpack.c.l.b16 %v118
  %v637 = vunpack.c.l.b16 %v119
  %v638 = vunpack.c.l.b16 %v120
  %v639 = vunpack.c.l.b16 %v121
  %v640 = vunpack.c.l.b16 %v122
  %v641 = vunpack.c.l.b16 %v123
  %v642 = vunpack.c.l.b16 %v124
  %v643 = vunpack.c.l.b16 %v125
  %v644 = vunpack.c.l.b16 %v126
  %v645 = vunpack.c.l.b16 %v127
  %v646 = vunpack.c.l.b16 %v128
  %v647 = vunpack.c.l.b16 %v129
  %v648 = vunpack.c.l.b16 %v130
  %v649 = vunpack.c.l.b16 %v131
  %v650 = vunpack.c.l.b16 %v132
  %v651 = vunpack.c.l.b16 %v133
  %v652 = vunpack.c.l.b16 %v134
  %v653 = vunpack.c.l.b16 %v135
  %v654 = vunpack.c.l.b16 %v136
  %v655 = vunpack.c.l.b16 %v137
  %v656 = vunpack.c.l.b16 %v138
  %v657 = vunpack.c.l.b16 %v139
  %v658 = vunpack.c.l.b16 %v140
  %v659 = vunpack.c.l.b16 %v141
  %v660 = vunpack.c.l.b16 %v142
  %v661 = vunpack.c.l.b16 %v143
  %v662 = vunpack.c.l.b16 %v144
  %v663 = vunpack.c.l.b16 %v145
  %v664 = vunpack.c.l.b16 %v146
  %v665 = vunpack.c.l.b16 %v147
  %v666 = vunpack.c.l.b16 %v148
  %v667 = vunpack.c.l.b16 %v149
  %v668 = vunpack.c.l.b16 %v150
  %v669 = vunpack.c.l.b16 %v151
  %v670 = vunpack.c.l.b16 %v152
  %v671 = vunpack.c.l.b16 %v153
  %v672 = vunpack.c.l.b16 %v154
  %v673 = vunpack.c.l.b16 %v155
  %v674 = vunpack.c.l.b16 %v156
  %v675 = vunpack.c.l.b16 %v157
  %v676 = vunpack.c.l.b16 %v158
  %v677 = vunpack.c.l.b16 %v159
  %v678 = vunpack.c.l.b16 %v160
  %v679 = vunpack.c.l.b16 %v161
  %v680 = vunpack.c.l.b16 %v162
  %v681 = vunpack.c.l.b16 %v163
  %v682 = vunpack.c.l.b16 %v164
  %v683 = vunpack.c.l.b16 %v165
  %v684 = vunpack.c.l.b16 %v166
  %v685 = vunpack.c.l.b16 %v167
  %v686 = vunpack.c.l.b16 %v168
  %v687 = vunpack.c.l.b16 %v169
  %v688 = vunpack.c.l.b16 %v170
  %v689 = vunpack.c.l.b16 %v171
  %v690 = vunpack.c.l.b16 %v172
  %v691 = vunpack.c.l.b16 %v173
  %v692 = vunpack.c.l.b16 %v174
  %v693 = vunpack.c.l.b16 %v175
  %v694 = vunpack.c.l.b16 %v176
  %v695 = vunpack.c.l.b16 %v177
  %v696 = vunpack.c.l.b16 %v178
  %v697 = vunpack.c.l.b16 %v179
  %v698 = vunpack.c.l.b16 %v180
  %v699 = vunpack.c.l.b16 %v181
  %v700 = vunpack.c.l.b16 %v182
  %v701 = vunpack.c.l.b16 %v183
  %v702 = vunpack.c.l.b16 %v184
  %v703 = vunpack.c.l.b16 %v185
  %v704 = vunpack.c.l.b16 %v186
  %v705 = vunpack.c.l.b16 %v187
  %v706 = vunpack.c.l.b16 %v188
  %v707 = vunpack.c.l.b16 %v189
  %v708 = vunpack.c.l.b16 %v190
  %v709 = vunpack.c.l.b16 %v191
  %v710 = vunpack.c.l.b16 %v192
  %v711 = vunpack.c.l.b16 %v193
  %v712 = vunpack.c.l.b16 %v194
  %v713 = vunpack.c.l.b16 %v195
  %v714 = vunpack.c.l.b16 %v196
  %v715 = vunpack.c.l.b16 %v197
  %v716 = vunpack.c.l.b16 %v198
  %v717 = vunpack.c.l.b16 %v199
  %v718 = vunpack.c.l.b16 %v200
  %v719 = vunpack.c.l.b16 %v201
  %v720 = vunpack.c.l.b16 %v202
  %v721 = vunpack.c.l.b16 %v203
  %v722 = vunpack.c.l.b16 %v204
  %v723 = vunpack.c.l.b16 %v205
  %v724 = vunpack.c.l.b16 %v206
  %v725 = vunpack.c.l.b16 %v207
  %v726 = vunpack.c.l.b16 %v208
  %v727 = vunpack.c.l.b16 %v209
  %v728 = vunpack.c.l.b16 %v210
  %v729 = vunpack.c.l.b16 %v211
  %v730 = vunpack.c.l.b16 %v212
  %v731 = vunpack.c.l.b16 %v213
  %v732 = vunpack.c.l.b16 %v214
  %v733 = vunpack.c.l.b16 %v215
  %v734 = vunpack.c.l.b16 %v216
  %v735 = vunpack.c.l.b16 %v217
  %v736 = vunpack.c.l.b16 %v218
  %v737 = vunpack.c.l.b16 %v219
  %v738 = vunpack.c.l.b16 %v220
  %v739 = vunpack.c.l.b16 %v221
  %v740 = vunpack.c.l.b16 %v222
  %v741 = vunpack.c.l.b16 %v223
  %v742 = vunpack.c.l.b16 %v224
  %v743 = vunpack.c.l.b16 %v225
  %v744 = vunpack.c.l.b16 %v226
  %v745 = vunpack.c.l.b16 %v227
  %v746 = vunpack.c.l.b16 %v228
  %v747 = vunpack.c.l.b16 %v229
  %v748 = vunpack.c.l.b16 %v230
  %v749 = vunpack.c.l.b16 %v231
  %v750 = vunpack.c.l.b16 %v232
  %v751 = vunpack.c.l.b16 %v233
  %v752 = vunpack.c.l.b16 %v234
  %v753 = vunpack.c.l.b16 %v235
  %v754 = vunpack.c.l.b16 %v236
  %v755 = vunpack.c.l.b16 %v237
  %v756 = vunpack.c.l.b16 %v238
  %v757 = vunpack.c.l.b16 %v239
  %v758 = vunpack.c.l.b16 %v240
  %v759 = vunpack.c.l.b16 %v241
  %v760 = vunpack.c.l.b16 %v242
  %v761 = vunpack.c.l.b16 %v243
  %v762 = vunpack.c.l.b16 %v244
  %v763 = vunpack.c.l.b16 %v245
  %v764 = vunpack.c.l.b16 %v246
  %v765 = vunpack.c.l.b16 %v247
  %v766 = vunpack.c.l.b16 %v248
  %v767 = vunpack.c.l.b16 %v249
  %v768 = vunpack.c.l.b16 %v250
  %v769 = vunpack.c.l.b16 %v251
  %v770 = vunpack.c.l.b16 %v252
  %v771 = vunpack.c.l.b16 %v253
  %v772 = vunpack.c.l.b16 %v254
  %v773 = vunpack.c.l.b16 %v255
  %v774 = vunpack.c.l.b16 %v256
  %v775 = vunpack.c.l.b16 %v257
  %v776 = vunpack.c.l.b16 %v258
  %v777 = vunpack.c.l.b16 %v259
  %v778 = vunpack.c.l.b16 %v260
  %v779 = vunpack.c.l.b16 %v261
  %v780 = vunpack.c.l.b16 %v262
  %v781 = vunpack.c.l.b16 %v263
  %v782 = vunpack.c.l.b16 %v264
  %v783 = vunpack.c.l.b16 %v265
  %v784 = vunpack.c.l.b16 %v266
  %v785 = vunpack.c.l.b16 %v267
  %v786 = vunpack.c.l.b16 %v268
  %v787 = vunpack.c.l.b16 %v269
  %v788 = vunpack.c.l.b16 %v270
  %v789 = vpack.c.b16 %v534, %v533
  %v790 = vpack.c.b16 %v536, %v535
  %v791 = vpack.c.b16 %v538, %v537
  %v792 = vpack.c.b16 %v540, %v539
  %v793 = vpack.c.b16 %v542, %v541
  %v794 = vpack.c.b16 %v544, %v543
  %v795 = vpack.c.b16 %v546, %v545
  %v796 = vpack.c.b16 %v548, %v547
  %v797 = vpack.c.b16 %v550, %v549
  %v798 = vpack.c.b16 %v552, %v551
  %v799 = vpack.c.b16 %v554, %v553
  %v800 = vpack.c.b16 %v556, %v555
  %v801 = vpack.c.b16 %v558, %v557
  %v802 = vpack.c.b16 %v560, %v559
  %v803 = vpack.c.b16 %v562, %v561
  %v804 = vpack.c.b16 %v564, %v563
  %v805 = vpack.c.b16 %v566, %v565
  %v806 = vpack.c.b16 %v568, %v567
  %v807 = vpack.c.b16 %v570, %v569
  %v808 = vpack.c.b16 %v572, %v571
  %v809 = vpack.c.b16 %v574, %v573
  %v810 = vpack.c.b16 %v576, %v575
  %v811 = vpack.c.b16 %v578, %v577
  %v812 = vpack.c.b16 %v580, %v579
  %v813 = vpack.c.b16 %v582, %v581
  %v814 = vpack.c.b16 %v584, %v583
  %v815 = vpack.c.b16 %v586, %v585
  %v816 = vpack.c.b16 %v588, %v587
  %v817 = vpack.c.b16 %v590, %v589
  %v818 = vpack.c.b16 %v592, %v591
  %v819 = vpack.c.b16 %v594, %v593
  %v820 = vpack.c.b16 %v596, %v595
  %v821 = vpack.c.b16 %v598, %v597
  %v822 = vpack.c.b16 %v600, %v599
  %v823 = vpack.c.b16 %v602, %v601
  %v824 = vpack.c.b16 %v604, %v603
  %v825 = vpack.c.b16 %v606, %v605
  %v826 = vpack.c.b16 %v608, %v607
  %v827 = vpack.c.b16 %v610, %v609
  %v828 = vpack.c.b16 %v612, %v611
  %v829 = vpack.c.b16 %v614, %v613
  %v830 = vpack.c.b16 %v616, %v615
  %v831 = vpack.c.b16 %v618, %v617
  %v832 = vpack.c.b16 %v620, %v619
  %v833 = vpack.c.b16 %v622, %v621
  %v834 = vpack.c.b16 %v624, %v623
  %v835 = vpack.c.b16 %v626, %v625
  %v836 = vpack.c.b16 %v628, %v627
  %v837 = vpack.c.b16 %v630, %v629
  %v838 = vpack.c.b16 %v632, %v631
  %v839 = vpack.c.b16 %v634, %v633
  %v840 = vpack.c.b16 %v636, %v635
  %v841 = vpack.c.b16 %v638, %v637
  %v842 = vpack.c.b16 %v640, %v639
  %v843 = vpack.c.b16 %v642, %v641
  %v844 = vpack.c.b16 %v644, %v643
  %v845 = vpack.c.b16 %v646, %v645
  %v846 = vpack.c.b16 %v648, %v647
  %v847 = vpack.c.b16 %v650, %v649
  %v848 = vpack.c.b16 %v652, %v651
  %v849 = vpack.c.b16 %v654, %v653
  %v850 = vpack.c.b16 %v656, %v655
  %v851 = vpack.c.b16 %v658, %v657
  %v852 = vpack.c.b16 %v660, %v659
  %v853 = vpack.c.b16 %v662, %v661
  %v854 = vpack.c.b16 %v664, %v663
  %v855 = vpack.c.b16 %v666, %v665
  %v856 = vpack.c.b16 %v668, %v667
  %v857 = vpack.c.b16 %v670, %v669
  %v858 = vpack.c.b16 %v672, %v671
  %v859 = vpack.c.b16 %v674, %v673
  %v860 = vpack.c.b16 %v676, %v675
  %v861 = vpack.c.b16 %v678, %v677
  %v862 = vpack.c.b16 %v680, %v679
  %v863 = vpack.c.b16 %v682, %v681
  %v864 = vpack.c.b16 %v684, %v683
  %v865 = vpack.c.b16 %v686, %v685
  %v866 = vpack.c.b16 %v688, %v687
  %v867 = vpack.c.b16 %v690, %v689
  %v868 = vpack.c.b16 %v692, %v691
  %v869 = vpack.c.b16 %v694, %v693
  %v870 = vpack.c.b16 %v696, %v695
  %v871 = vpack.c.b16 %v698, %v697
  %v872 = vpack.c.b16 %v700, %v699
  %v873 = vpack.c.b16 %v702, %v701
  %v874 = vpack.c.b16 %v704, %v703
  %v875 = vpack.c.b16 %v706, %v705
  %v876 = vpack.c.b16 %v708, %v707
  %v877 = vpack.c.b16 %v710, %v709
  %v878 = vpack.c.b16 %v712, %v711
  %v879 = vpack.c.b16 %v714, %v713
  %v880 = vpack.c.b16 %v716, %v715
  %v881 = vpack.c.b16 %v718, %v717
  %v882 = vpack.c.b16 %v720, %v719
  %v883 = vpack.c.b16 %v722, %v721
  %v884 = vpack.c.b16 %v724, %v723
  %v885 = vpack.c.b16 %v726, %v725
  %v886 = vpack.c.b16 %v728, %v727
  %v887 = vpack.c.b16 %v730, %v729
  %v888 = vpack.c.b16 %v732, %v731
  %v889 = vpack.c.b16 %v734, %v733
  %v890 = vpack.c.b16 %v736, %v735
  %v891 = vpack.c.b16 %v738, %v737
  %v892 = vpack.c.b16 %v740, %v739
  %v893 = vpack.c.b16 %v742, %v741
  %v894 = vpack.c.b16 %v744, %v743
  %v895 = vpack.c.b16 %v746, %v745
  %v896 = vpack.c.b16 %v748, %v747
  %v897 = vpack.c.b16 %v750, %v749
  %v898 = vpack.c.b16 %v752, %v751
  %v899 = vpack.c.b16 %v754, %v753
  %v900 = vpack.c.b16 %v756, %v755
  %v901 = vpack.c.b16 %v758, %v757
  %v902 = vpack.c.b16 %v760, %v759
  %v903 = vpack.c.b16 %v762, %v761
  %v904 = vpack.c.b16 %v764, %v763
  %v905 = vpack.c.b16 %v766, %v765
  %v906 = vpack.c.b16 %v768, %v767
  %v907 = vpack.c.b16 %v770, %v769
  %v908 = vpack.c.b16 %v772, %v771
  %v909 = vpack.c.b16 %v774, %v773
  %v910 = vpack.c.b16 %v776, %v775
  %v911 = vpack.c.b16 %v778, %v777
  %v912 = vpack.c.b16 %v780, %v779
  %v913 = vpack.c.b16 %v782, %v781
  %v914 = vpack.c.b16 %v784, %v783
  %v915 = vpack.c.b16 %v786, %v785
  %v916 = vpack.c.b16 %v788, %v787
  %v923 = vunpack.c.l.b16 %v271
  %v924 = vunpack.c.l.b16 %v272
  %v925 = vunpack.c.l.b16 %v273
  %v926 = vunpack.c.l.b16 %v274
  %v927 = vunpack.c.l.b16 %v275
  %v928 = vunpack.c.l.b16 %v276
  %v929 = vpack.c.b16 %v924, %v923
  %v930 = vpack.c.b16 %v926, %v925
  %v931 = vpack.c.b16 %v928, %v927
  %vm935 = vcmask 392192
  %v937 = vsel %vm935, %v789, 0
  %v940 = vsel %vm935, %v790, 0
  %v943 = vsel %vm935, %v791, 0
  %v946 = vsel %vm935, %v792, 0
  %v949 = vsel %vm935, %v793, 0
  %v952 = vsel %vm935, %v794, 0
  %v955 = vsel %vm935, %v795, 0
  %v958 = vsel %vm935, %v796, 0
  %v961 = vsel %vm935, %v797, 0
  %v964 = vsel %vm935, %v798, 0
  %v967 = vsel %vm935, %v799, 0
  %v970 = vsel %vm935, %v800, 0
  %v973 = vsel %vm935, %v801, 0
  %v976 = vsel %vm935, %v802, 0
  %v979 = vsel %vm935, %v803, 0
  %v982 = vsel %vm935, %v804, 0
  %v985 = vsel %vm935, %v805, 0
  %v988 = vsel %vm935, %v806, 0
  %v991 = vsel %vm935, %v807, 0
  %v994 = vsel %vm935, %v808, 0
  %v997 = vsel %vm935, %v809, 0
  %v1000 = vsel %vm935, %v810, 0
  %v1003 = vsel %vm935, %v811, 0
  %v1006 = vsel %vm935, %v812, 0
  %v1009 = vsel %vm935, %v813, 0
  %v1012 = vsel %vm935, %v814, 0
  %v1015 = vsel %vm935, %v815, 0
  %v1018 = vsel %vm935, %v816, 0
  %v1021 = vsel %vm935, %v817, 0
  %v1024 = vsel %vm935, %v818, 0
  %v1027 = vsel %vm935, %v819, 0
  %v1030 = vsel %vm935, %v820, 0
  %v1033 = vsel %vm935, %v821, 0
  %v1036 = vsel %vm935, %v822, 0
  %v1039 = vsel %vm935, %v823, 0
  %v1042 = vsel %vm935, %v824, 0
  %v1045 = vsel %vm935, %v825, 0
  %v1048 = vsel %vm935, %v826, 0
  %v1051 = vsel %vm935, %v827, 0
  %v1054 = vsel %vm935, %v828, 0
  %v1057 = vsel %vm935, %v829, 0
  %v1060 = vsel %vm935, %v830, 0
  %v1063 = vsel %vm935, %v831, 0
  %v1066 = vsel %vm935, %v832, 0
  %v1069 = vsel %vm935, %v833, 0
  %v1072 = vsel %vm935, %v834, 0
  %v1075 = vsel %vm935, %v835, 0
  %v1078 = vsel %vm935, %v836, 0
  %v1081 = vsel %vm935, %v837, 0
  %v1084 = vsel %vm935, %v838, 0
  %v1087 = vsel %vm935, %v839, 0
  %v1090 = vsel %vm935, %v840, 0
  %v1093 = vsel %vm935, %v841, 0
  %v1096 = vsel %vm935, %v842, 0
  %v1099 = vsel %vm935, %v843, 0
  %v1102 = vsel %vm935, %v844, 0
  %v1105 = vsel %vm935, %v845, 0
  %v1108 = vsel %vm935, %v846, 0
  %v1111 = vsel %vm935, %v847, 0
  %v1114 = vsel %vm935, %v848, 0
  %v1117 = vsel %vm935, %v849, 0
  %v1120 = vsel %vm935, %v850, 0
  %v1123 = vsel %vm935, %v851, 0
  %v1126 = vsel %vm935, %v852, 0
  %v1129 = vsel %vm935, %v853, 0
  %v1132 = vsel %vm935, %v854, 0
  %v1135 = vsel %vm935, %v855, 0
  %v1138 = vsel %vm935, %v856, 0
  %v1141 = vsel %vm935, %v857, 0
  %v1144 = vsel %vm935, %v858, 0
  %v1147 = vsel %vm935, %v859, 0
  %v1150 = vsel %vm935, %v860, 0
  %v1153 = vsel %vm935, %v861, 0
  %v1156 = vsel %vm935, %v862, 0
  %v1159 = vsel %vm935, %v863, 0
  %v1162 = vsel %vm935, %v864, 0
  %v1165 = vsel %vm935, %v865, 0
  %v1168 = vsel %vm935, %v866, 0
  %v1171 = vsel %vm935, %v867, 0
  %v1174 = vsel %vm935, %v868, 0
  %v1177 = vsel %vm935, %v869, 0
  %v1180 = vsel %vm935, %v870, 0
  %v1183 = vsel %vm935, %v871, 0
  %v1186 = vsel %vm935, %v872, 0
  %v1189 = vsel %vm935, %v873, 0
  %v1192 = vsel %vm935, %v874, 0
  %v1195 = vsel %vm935, %v875, 0
  %v1198 = vsel %vm935, %v876, 0
  %v1201 = vsel %vm935, %v877, 0
  %v1204 = vsel %vm935, %v878, 0
  %v1207 = vsel %vm935, %v879, 0
  %v1210 = vsel %vm935, %v880, 0
  %v1213 = vsel %vm935, %v881, 0
  %v1216 = vsel %vm935, %v882, 0
  %v1219 = vsel %vm935, %v883, 0
  %v1222 = vsel %vm935, %v884, 0
  %v1225 = vsel %vm935, %v885, 0
  %v1228 = vsel %vm935, %v886, 0
  %v1231 = vsel %vm935, %v887, 0
  %v1234 = vsel %vm935, %v888, 0
  %v1237 = vsel %vm935, %v889, 0
  %v1240 = vsel %vm935, %v890, 0
  %v1243 = vsel %vm935, %v891, 0
  %v1246 = vsel %vm935, %v892, 0
  %v1249 = vsel %vm935, %v893, 0
  %v1252 = vsel %vm935, %v894, 0
  %v1255 = vsel %vm935, %v895, 0
  %v1258 = vsel %vm935, %v896, 0
  %v1261 = vsel %vm935, %v897, 0
  %v1264 = vsel %vm935, %v898, 0
  %v1267 = vsel %vm935, %v899, 0
  %v1270 = vsel %vm935, %v900, 0
  %v1273 = vsel %vm935, %v901, 0
  %v1276 = vsel %vm935, %v902, 0
  %v1279 = vsel %vm935, %v903, 0
  %v1282 = vsel %vm935, %v904, 0
  %v1285 = vsel %vm935, %v905, 0
  %v1288 = vsel %vm935, %v906, 0
  %v1291 = vsel %vm935, %v907, 0
  %v1294 = vsel %vm935, %v908, 0
  %v1297 = vsel %vm935, %v909, 0
  %v1300 = vsel %vm935, %v910, 0
  %v1303 = vsel %vm935, %v911, 0
  %v1306 = vsel %vm935, %v912, 0
  %v1309 = vsel %vm935, %v913, 0
  %v1312 = vsel %vm935, %v914, 0
  %v1315 = vsel %vm935, %v915, 0
  %v1318 = vsel %vm935, %v916, 0
  %1320 = vmatprep.subr.bf16.mxu0 0
  %1321 = vmatpush1.bf16.msra.mxu0 0
  %1322 = vmatprep.subr.bf16.mxu0 0
  %1323 = vmatpush1.bf16.msra.mxu0 0
  %1324 = vmatprep.subr.bf16.mxu0 0
  %1325 = vmatpush1.bf16.msra.mxu0 0
  %1326 = vmatprep.subr.bf16.mxu0 0
  %1327 = vmatpush1.bf16.msra.mxu0 0
  %1328 = vmatprep.subr.bf16.mxu0 0
  %1329 = vmatpush1.bf16.msra.mxu0 0
  %1330 = vmatprep.subr.bf16.mxu0 0
  %1331 = vmatpush1.bf16.msra.mxu0 %v931
  %1332 = vmatprep.subr.bf16.mxu0 0
  %1333 = vmatpush1.bf16.msra.mxu0 %v930
  %1334 = vmatprep.subr.bf16.mxu0 0
  %1335 = vmatpush1.bf16.msra.mxu0 %v929
  %1336 = vmatprep.subr.bf16.mxu0 0
  %1337 = vmatpush2.bf16.msra.mxu0 0
  %1338 = vmatprep.subr.bf16.mxu0 0
  %1339 = vmatpush2.bf16.msra.mxu0 0
  %1340 = vmatprep.subr.bf16.mxu0 0
  %1341 = vmatpush2.bf16.msra.mxu0 0
  %1342 = vmatprep.subr.bf16.mxu0 0
  %1343 = vmatpush2.bf16.msra.mxu0 0
  %1344 = vmatprep.subr.bf16.mxu0 0
  %1345 = vmatpush2.bf16.msra.mxu0 0
  %1346 = vmatprep.subr.bf16.mxu0 0
  %1347 = vmatpush2.bf16.msra.mxu0 0
  %1348 = vmatprep.subr.bf16.mxu0 0
  %1349 = vmatpush2.bf16.msra.mxu0 0
  %1350 = vmatprep.subr.bf16.mxu0 0
  %1351 = vmatpush2.bf16.msra.mxu0 0
  %1352 = vmatprep.mubr.bf16.mxu0 0
  %1353 = vmatmul.mubr.bf16.gmra.mxu0 %v937
  %v1354 = vpop.f32.mrf.mxu0
  %v1355 = vadd.f32 0.0, %v1354
  %v1356 = vpop.f32.mrf.mxu0
  %v1357 = vpop.f32.mrf.mxu0
  %v1358 = vadd.f32 0.0, %v1357
  %v1359 = vpop.f32.mrf.mxu0
  %1360 = vmatprep.mubr.bf16.mxu0 0
  %1361 = vmatmul.mubr.bf16.gmra.mxu0 %v940
  %v1362 = vpop.f32.mrf.mxu0
  %v1363 = vadd.f32 0.0, %v1362
  %v1364 = vpop.f32.mrf.mxu0
  %v1365 = vpop.f32.mrf.mxu0
  %v1366 = vadd.f32 0.0, %v1365
  %v1367 = vpop.f32.mrf.mxu0
  %1368 = vmatprep.mubr.bf16.mxu0 0
  %1369 = vmatmul.mubr.bf16.gmra.mxu0 %v943
  %v1370 = vpop.f32.mrf.mxu0
  %v1371 = vadd.f32 0.0, %v1370
  %v1372 = vpop.f32.mrf.mxu0
  %v1373 = vpop.f32.mrf.mxu0
  %v1374 = vadd.f32 0.0, %v1373
  %v1375 = vpop.f32.mrf.mxu0
  %1376 = vmatprep.mubr.bf16.mxu0 0
  %1377 = vmatmul.mubr.bf16.gmra.mxu0 %v946
  %v1378 = vpop.f32.mrf.mxu0
  %v1379 = vadd.f32 0.0, %v1378
  %v1380 = vpop.f32.mrf.mxu0
  %v1381 = vpop.f32.mrf.mxu0
  %v1382 = vadd.f32 0.0, %v1381
  %v1383 = vpop.f32.mrf.mxu0
  %1384 = vmatprep.mubr.bf16.mxu0 0
  %1385 = vmatmul.mubr.bf16.gmra.mxu0 %v949
  %v1386 = vpop.f32.mrf.mxu0
  %v1387 = vadd.f32 0.0, %v1386
  %v1388 = vpop.f32.mrf.mxu0
  %v1389 = vpop.f32.mrf.mxu0
  %v1390 = vadd.f32 0.0, %v1389
  %v1391 = vpop.f32.mrf.mxu0
  %1392 = vmatprep.mubr.bf16.mxu0 0
  %1393 = vmatmul.mubr.bf16.gmra.mxu0 %v952
  %v1394 = vpop.f32.mrf.mxu0
  %v1395 = vadd.f32 0.0, %v1394
  %v1396 = vpop.f32.mrf.mxu0
  %v1397 = vpop.f32.mrf.mxu0
  %v1398 = vadd.f32 0.0, %v1397
  %v1399 = vpop.f32.mrf.mxu0
  %1400 = vmatprep.mubr.bf16.mxu0 0
  %1401 = vmatmul.mubr.bf16.gmra.mxu0 %v955
  %v1402 = vpop.f32.mrf.mxu0
  %v1403 = vadd.f32 0.0, %v1402
  %v1404 = vpop.f32.mrf.mxu0
  %v1405 = vpop.f32.mrf.mxu0
  %v1406 = vadd.f32 0.0, %v1405
  %v1407 = vpop.f32.mrf.mxu0
  %1408 = vmatprep.mubr.bf16.mxu0 0
  %1409 = vmatmul.mubr.bf16.gmra.mxu0 %v958
  %v1410 = vpop.f32.mrf.mxu0
  %v1411 = vadd.f32 0.0, %v1410
  %v1412 = vpop.f32.mrf.mxu0
  %v1413 = vpop.f32.mrf.mxu0
  %v1414 = vadd.f32 0.0, %v1413
  %v1415 = vpop.f32.mrf.mxu0
  %1416 = vmatprep.mubr.bf16.mxu0 0
  %1417 = vmatmul.mubr.bf16.gmra.mxu0 %v961
  %v1418 = vpop.f32.mrf.mxu0
  %v1419 = vadd.f32 0.0, %v1418
  %v1420 = vpop.f32.mrf.mxu0
  %v1421 = vpop.f32.mrf.mxu0
  %v1422 = vadd.f32 0.0, %v1421
  %v1423 = vpop.f32.mrf.mxu0
  %1424 = vmatprep.mubr.bf16.mxu0 0
  %1425 = vmatmul.mubr.bf16.gmra.mxu0 %v964
  %v1426 = vpop.f32.mrf.mxu0
  %v1427 = vadd.f32 0.0, %v1426
  %v1428 = vpop.f32.mrf.mxu0
  %v1429 = vpop.f32.mrf.mxu0
  %v1430 = vadd.f32 0.0, %v1429
  %v1431 = vpop.f32.mrf.mxu0
  %1432 = vmatprep.mubr.bf16.mxu0 0
  %1433 = vmatmul.mubr.bf16.gmra.mxu0 %v967
  %v1434 = vpop.f32.mrf.mxu0
  %v1435 = vadd.f32 0.0, %v1434
  %v1436 = vpop.f32.mrf.mxu0
  %v1437 = vpop.f32.mrf.mxu0
  %v1438 = vadd.f32 0.0, %v1437
  %v1439 = vpop.f32.mrf.mxu0
  %1440 = vmatprep.mubr.bf16.mxu0 0
  %1441 = vmatmul.mubr.bf16.gmra.mxu0 %v970
  %v1442 = vpop.f32.mrf.mxu0
  %v1443 = vadd.f32 0.0, %v1442
  %v1444 = vpop.f32.mrf.mxu0
  %v1445 = vpop.f32.mrf.mxu0
  %v1446 = vadd.f32 0.0, %v1445
  %v1447 = vpop.f32.mrf.mxu0
  %1448 = vmatprep.mubr.bf16.mxu0 0
  %1449 = vmatmul.mubr.bf16.gmra.mxu0 %v973
  %v1450 = vpop.f32.mrf.mxu0
  %v1451 = vadd.f32 0.0, %v1450
  %v1452 = vpop.f32.mrf.mxu0
  %v1453 = vpop.f32.mrf.mxu0
  %v1454 = vadd.f32 0.0, %v1453
  %v1455 = vpop.f32.mrf.mxu0
  %1456 = vmatprep.mubr.bf16.mxu0 0
  %1457 = vmatmul.mubr.bf16.gmra.mxu0 %v976
  %v1458 = vpop.f32.mrf.mxu0
  %v1459 = vadd.f32 0.0, %v1458
  %v1460 = vpop.f32.mrf.mxu0
  %v1461 = vpop.f32.mrf.mxu0
  %v1462 = vadd.f32 0.0, %v1461
  %v1463 = vpop.f32.mrf.mxu0
  %1464 = vmatprep.mubr.bf16.mxu0 0
  %1465 = vmatmul.mubr.bf16.gmra.mxu0 %v979
  %v1466 = vpop.f32.mrf.mxu0
  %v1467 = vadd.f32 0.0, %v1466
  %v1468 = vpop.f32.mrf.mxu0
  %v1469 = vpop.f32.mrf.mxu0
  %v1470 = vadd.f32 0.0, %v1469
  %v1471 = vpop.f32.mrf.mxu0
  %1472 = vmatprep.mubr.bf16.mxu0 0
  %1473 = vmatmul.mubr.bf16.gmra.mxu0 %v982
  %v1474 = vpop.f32.mrf.mxu0
  %v1475 = vadd.f32 0.0, %v1474
  %v1476 = vpop.f32.mrf.mxu0
  %v1477 = vpop.f32.mrf.mxu0
  %v1478 = vadd.f32 0.0, %v1477
  %v1479 = vpop.f32.mrf.mxu0
  %1480 = vmatprep.mubr.bf16.mxu0 0
  %1481 = vmatmul.mubr.bf16.gmra.mxu0 %v985
  %v1482 = vpop.f32.mrf.mxu0
  %v1483 = vadd.f32 0.0, %v1482
  %v1484 = vpop.f32.mrf.mxu0
  %v1485 = vpop.f32.mrf.mxu0
  %v1486 = vadd.f32 0.0, %v1485
  %v1487 = vpop.f32.mrf.mxu0
  %1488 = vmatprep.mubr.bf16.mxu0 0
  %1489 = vmatmul.mubr.bf16.gmra.mxu0 %v988
  %v1490 = vpop.f32.mrf.mxu0
  %v1491 = vadd.f32 0.0, %v1490
  %v1492 = vpop.f32.mrf.mxu0
  %v1493 = vpop.f32.mrf.mxu0
  %v1494 = vadd.f32 0.0, %v1493
  %v1495 = vpop.f32.mrf.mxu0
  %1496 = vmatprep.mubr.bf16.mxu0 0
  %1497 = vmatmul.mubr.bf16.gmra.mxu0 %v991
  %v1498 = vpop.f32.mrf.mxu0
  %v1499 = vadd.f32 0.0, %v1498
  %v1500 = vpop.f32.mrf.mxu0
  %v1501 = vpop.f32.mrf.mxu0
  %v1502 = vadd.f32 0.0, %v1501
  %v1503 = vpop.f32.mrf.mxu0
  %1504 = vmatprep.mubr.bf16.mxu0 0
  %1505 = vmatmul.mubr.bf16.gmra.mxu0 %v994
  %v1506 = vpop.f32.mrf.mxu0
  %v1507 = vadd.f32 0.0, %v1506
  %v1508 = vpop.f32.mrf.mxu0
  %v1509 = vpop.f32.mrf.mxu0
  %v1510 = vadd.f32 0.0, %v1509
  %v1511 = vpop.f32.mrf.mxu0
  %1512 = vmatprep.mubr.bf16.mxu0 0
  %1513 = vmatmul.mubr.bf16.gmra.mxu0 %v997
  %v1514 = vpop.f32.mrf.mxu0
  %v1515 = vadd.f32 0.0, %v1514
  %v1516 = vpop.f32.mrf.mxu0
  %v1517 = vpop.f32.mrf.mxu0
  %v1518 = vadd.f32 0.0, %v1517
  %v1519 = vpop.f32.mrf.mxu0
  %1520 = vmatprep.mubr.bf16.mxu0 0
  %1521 = vmatmul.mubr.bf16.gmra.mxu0 %v1000
  %v1522 = vpop.f32.mrf.mxu0
  %v1523 = vadd.f32 0.0, %v1522
  %v1524 = vpop.f32.mrf.mxu0
  %v1525 = vpop.f32.mrf.mxu0
  %v1526 = vadd.f32 0.0, %v1525
  %v1527 = vpop.f32.mrf.mxu0
  %1528 = vmatprep.mubr.bf16.mxu0 0
  %1529 = vmatmul.mubr.bf16.gmra.mxu0 %v1003
  %v1530 = vpop.f32.mrf.mxu0
  %v1531 = vadd.f32 0.0, %v1530
  %v1532 = vpop.f32.mrf.mxu0
  %v1533 = vpop.f32.mrf.mxu0
  %v1534 = vadd.f32 0.0, %v1533
  %v1535 = vpop.f32.mrf.mxu0
  %1536 = vmatprep.mubr.bf16.mxu0 0
  %1537 = vmatmul.mubr.bf16.gmra.mxu0 %v1006
  %v1538 = vpop.f32.mrf.mxu0
  %v1539 = vadd.f32 0.0, %v1538
  %v1540 = vpop.f32.mrf.mxu0
  %v1541 = vpop.f32.mrf.mxu0
  %v1542 = vadd.f32 0.0, %v1541
  %v1543 = vpop.f32.mrf.mxu0
  %1544 = vmatprep.mubr.bf16.mxu0 0
  %1545 = vmatmul.mubr.bf16.gmra.mxu0 %v1009
  %v1546 = vpop.f32.mrf.mxu0
  %v1547 = vadd.f32 0.0, %v1546
  %v1548 = vpop.f32.mrf.mxu0
  %v1549 = vpop.f32.mrf.mxu0
  %v1550 = vadd.f32 0.0, %v1549
  %v1551 = vpop.f32.mrf.mxu0
  %1552 = vmatprep.mubr.bf16.mxu0 0
  %1553 = vmatmul.mubr.bf16.gmra.mxu0 %v1012
  %v1554 = vpop.f32.mrf.mxu0
  %v1555 = vadd.f32 0.0, %v1554
  %v1556 = vpop.f32.mrf.mxu0
  %v1557 = vpop.f32.mrf.mxu0
  %v1558 = vadd.f32 0.0, %v1557
  %v1559 = vpop.f32.mrf.mxu0
  %1560 = vmatprep.mubr.bf16.mxu0 0
  %1561 = vmatmul.mubr.bf16.gmra.mxu0 %v1015
  %v1562 = vpop.f32.mrf.mxu0
  %v1563 = vadd.f32 0.0, %v1562
  %v1564 = vpop.f32.mrf.mxu0
  %v1565 = vpop.f32.mrf.mxu0
  %v1566 = vadd.f32 0.0, %v1565
  %v1567 = vpop.f32.mrf.mxu0
  %1568 = vmatprep.mubr.bf16.mxu0 0
  %1569 = vmatmul.mubr.bf16.gmra.mxu0 %v1018
  %v1570 = vpop.f32.mrf.mxu0
  %v1571 = vadd.f32 0.0, %v1570
  %v1572 = vpop.f32.mrf.mxu0
  %v1573 = vpop.f32.mrf.mxu0
  %v1574 = vadd.f32 0.0, %v1573
  %v1575 = vpop.f32.mrf.mxu0
  %1576 = vmatprep.mubr.bf16.mxu0 0
  %1577 = vmatmul.mubr.bf16.gmra.mxu0 %v1021
  %v1578 = vpop.f32.mrf.mxu0
  %v1579 = vadd.f32 0.0, %v1578
  %v1580 = vpop.f32.mrf.mxu0
  %v1581 = vpop.f32.mrf.mxu0
  %v1582 = vadd.f32 0.0, %v1581
  %v1583 = vpop.f32.mrf.mxu0
  %1584 = vmatprep.mubr.bf16.mxu0 0
  %1585 = vmatmul.mubr.bf16.gmra.mxu0 %v1024
  %v1586 = vpop.f32.mrf.mxu0
  %v1587 = vadd.f32 0.0, %v1586
  %v1588 = vpop.f32.mrf.mxu0
  %v1589 = vpop.f32.mrf.mxu0
  %v1590 = vadd.f32 0.0, %v1589
  %v1591 = vpop.f32.mrf.mxu0
  %1592 = vmatprep.mubr.bf16.mxu0 0
  %1593 = vmatmul.mubr.bf16.gmra.mxu0 %v1027
  %v1594 = vpop.f32.mrf.mxu0
  %v1595 = vadd.f32 0.0, %v1594
  %v1596 = vpop.f32.mrf.mxu0
  %v1597 = vpop.f32.mrf.mxu0
  %v1598 = vadd.f32 0.0, %v1597
  %v1599 = vpop.f32.mrf.mxu0
  %1600 = vmatprep.mubr.bf16.mxu0 0
  %1601 = vmatmul.mubr.bf16.gmra.mxu0 %v1030
  %v1602 = vpop.f32.mrf.mxu0
  %v1603 = vadd.f32 0.0, %v1602
  %v1604 = vpop.f32.mrf.mxu0
  %v1605 = vpop.f32.mrf.mxu0
  %v1606 = vadd.f32 0.0, %v1605
  %v1607 = vpop.f32.mrf.mxu0
  %1608 = vmatprep.mubr.bf16.mxu0 0
  %1609 = vmatmul.mubr.bf16.gmra.mxu0 %v1033
  %v1610 = vpop.f32.mrf.mxu0
  %v1611 = vadd.f32 0.0, %v1610
  %v1612 = vpop.f32.mrf.mxu0
  %v1613 = vpop.f32.mrf.mxu0
  %v1614 = vadd.f32 0.0, %v1613
  %v1615 = vpop.f32.mrf.mxu0
  %1616 = vmatprep.mubr.bf16.mxu0 0
  %1617 = vmatmul.mubr.bf16.gmra.mxu0 %v1036
  %v1618 = vpop.f32.mrf.mxu0
  %v1619 = vadd.f32 0.0, %v1618
  %v1620 = vpop.f32.mrf.mxu0
  %v1621 = vpop.f32.mrf.mxu0
  %v1622 = vadd.f32 0.0, %v1621
  %v1623 = vpop.f32.mrf.mxu0
  %1624 = vmatprep.mubr.bf16.mxu0 0
  %1625 = vmatmul.mubr.bf16.gmra.mxu0 %v1039
  %v1626 = vpop.f32.mrf.mxu0
  %v1627 = vadd.f32 0.0, %v1626
  %v1628 = vpop.f32.mrf.mxu0
  %v1629 = vpop.f32.mrf.mxu0
  %v1630 = vadd.f32 0.0, %v1629
  %v1631 = vpop.f32.mrf.mxu0
  %1632 = vmatprep.mubr.bf16.mxu0 0
  %1633 = vmatmul.mubr.bf16.gmra.mxu0 %v1042
  %v1634 = vpop.f32.mrf.mxu0
  %v1635 = vadd.f32 0.0, %v1634
  %v1636 = vpop.f32.mrf.mxu0
  %v1637 = vpop.f32.mrf.mxu0
  %v1638 = vadd.f32 0.0, %v1637
  %v1639 = vpop.f32.mrf.mxu0
  %1640 = vmatprep.mubr.bf16.mxu0 0
  %1641 = vmatmul.mubr.bf16.gmra.mxu0 %v1045
  %v1642 = vpop.f32.mrf.mxu0
  %v1643 = vadd.f32 0.0, %v1642
  %v1644 = vpop.f32.mrf.mxu0
  %v1645 = vpop.f32.mrf.mxu0
  %v1646 = vadd.f32 0.0, %v1645
  %v1647 = vpop.f32.mrf.mxu0
  %1648 = vmatprep.mubr.bf16.mxu0 0
  %1649 = vmatmul.mubr.bf16.gmra.mxu0 %v1048
  %v1650 = vpop.f32.mrf.mxu0
  %v1651 = vadd.f32 0.0, %v1650
  %v1652 = vpop.f32.mrf.mxu0
  %v1653 = vpop.f32.mrf.mxu0
  %v1654 = vadd.f32 0.0, %v1653
  %v1655 = vpop.f32.mrf.mxu0
  %1656 = vmatprep.mubr.bf16.mxu0 0
  %1657 = vmatmul.mubr.bf16.gmra.mxu0 %v1051
  %v1658 = vpop.f32.mrf.mxu0
  %v1659 = vadd.f32 0.0, %v1658
  %v1660 = vpop.f32.mrf.mxu0
  %v1661 = vpop.f32.mrf.mxu0
  %v1662 = vadd.f32 0.0, %v1661
  %v1663 = vpop.f32.mrf.mxu0
  %1664 = vmatprep.mubr.bf16.mxu0 0
  %1665 = vmatmul.mubr.bf16.gmra.mxu0 %v1054
  %v1666 = vpop.f32.mrf.mxu0
  %v1667 = vadd.f32 0.0, %v1666
  %v1668 = vpop.f32.mrf.mxu0
  %v1669 = vpop.f32.mrf.mxu0
  %v1670 = vadd.f32 0.0, %v1669
  %v1671 = vpop.f32.mrf.mxu0
  %1672 = vmatprep.mubr.bf16.mxu0 0
  %1673 = vmatmul.mubr.bf16.gmra.mxu0 %v1057
  %v1674 = vpop.f32.mrf.mxu0
  %v1675 = vadd.f32 0.0, %v1674
  %v1676 = vpop.f32.mrf.mxu0
  %v1677 = vpop.f32.mrf.mxu0
  %v1678 = vadd.f32 0.0, %v1677
  %v1679 = vpop.f32.mrf.mxu0
  %1680 = vmatprep.mubr.bf16.mxu0 0
  %1681 = vmatmul.mubr.bf16.gmra.mxu0 %v1060
  %v1682 = vpop.f32.mrf.mxu0
  %v1683 = vadd.f32 0.0, %v1682
  %v1684 = vpop.f32.mrf.mxu0
  %v1685 = vpop.f32.mrf.mxu0
  %v1686 = vadd.f32 0.0, %v1685
  %v1687 = vpop.f32.mrf.mxu0
  %1688 = vmatprep.mubr.bf16.mxu0 0
  %1689 = vmatmul.mubr.bf16.gmra.mxu0 %v1063
  %v1690 = vpop.f32.mrf.mxu0
  %v1691 = vadd.f32 0.0, %v1690
  %v1692 = vpop.f32.mrf.mxu0
  %v1693 = vpop.f32.mrf.mxu0
  %v1694 = vadd.f32 0.0, %v1693
  %v1695 = vpop.f32.mrf.mxu0
  %1696 = vmatprep.mubr.bf16.mxu0 0
  %1697 = vmatmul.mubr.bf16.gmra.mxu0 %v1066
  %v1698 = vpop.f32.mrf.mxu0
  %v1699 = vadd.f32 0.0, %v1698
  %v1700 = vpop.f32.mrf.mxu0
  %v1701 = vpop.f32.mrf.mxu0
  %v1702 = vadd.f32 0.0, %v1701
  %v1703 = vpop.f32.mrf.mxu0
  %1704 = vmatprep.mubr.bf16.mxu0 0
  %1705 = vmatmul.mubr.bf16.gmra.mxu0 %v1069
  %v1706 = vpop.f32.mrf.mxu0
  %v1707 = vadd.f32 0.0, %v1706
  %v1708 = vpop.f32.mrf.mxu0
  %v1709 = vpop.f32.mrf.mxu0
  %v1710 = vadd.f32 0.0, %v1709
  %v1711 = vpop.f32.mrf.mxu0
  %1712 = vmatprep.mubr.bf16.mxu0 0
  %1713 = vmatmul.mubr.bf16.gmra.mxu0 %v1072
  %v1714 = vpop.f32.mrf.mxu0
  %v1715 = vadd.f32 0.0, %v1714
  %v1716 = vpop.f32.mrf.mxu0
  %v1717 = vpop.f32.mrf.mxu0
  %v1718 = vadd.f32 0.0, %v1717
  %v1719 = vpop.f32.mrf.mxu0
  %1720 = vmatprep.mubr.bf16.mxu0 0
  %1721 = vmatmul.mubr.bf16.gmra.mxu0 %v1075
  %v1722 = vpop.f32.mrf.mxu0
  %v1723 = vadd.f32 0.0, %v1722
  %v1724 = vpop.f32.mrf.mxu0
  %v1725 = vpop.f32.mrf.mxu0
  %v1726 = vadd.f32 0.0, %v1725
  %v1727 = vpop.f32.mrf.mxu0
  %1728 = vmatprep.mubr.bf16.mxu0 0
  %1729 = vmatmul.mubr.bf16.gmra.mxu0 %v1078
  %v1730 = vpop.f32.mrf.mxu0
  %v1731 = vadd.f32 0.0, %v1730
  %v1732 = vpop.f32.mrf.mxu0
  %v1733 = vpop.f32.mrf.mxu0
  %v1734 = vadd.f32 0.0, %v1733
  %v1735 = vpop.f32.mrf.mxu0
  %1736 = vmatprep.mubr.bf16.mxu0 0
  %1737 = vmatmul.mubr.bf16.gmra.mxu0 %v1081
  %v1738 = vpop.f32.mrf.mxu0
  %v1739 = vadd.f32 0.0, %v1738
  %v1740 = vpop.f32.mrf.mxu0
  %v1741 = vpop.f32.mrf.mxu0
  %v1742 = vadd.f32 0.0, %v1741
  %v1743 = vpop.f32.mrf.mxu0
  %1744 = vmatprep.mubr.bf16.mxu0 0
  %1745 = vmatmul.mubr.bf16.gmra.mxu0 %v1084
  %v1746 = vpop.f32.mrf.mxu0
  %v1747 = vadd.f32 0.0, %v1746
  %v1748 = vpop.f32.mrf.mxu0
  %v1749 = vpop.f32.mrf.mxu0
  %v1750 = vadd.f32 0.0, %v1749
  %v1751 = vpop.f32.mrf.mxu0
  %1752 = vmatprep.mubr.bf16.mxu0 0
  %1753 = vmatmul.mubr.bf16.gmra.mxu0 %v1087
  %v1754 = vpop.f32.mrf.mxu0
  %v1755 = vadd.f32 0.0, %v1754
  %v1756 = vpop.f32.mrf.mxu0
  %v1757 = vpop.f32.mrf.mxu0
  %v1758 = vadd.f32 0.0, %v1757
  %v1759 = vpop.f32.mrf.mxu0
  %1760 = vmatprep.mubr.bf16.mxu0 0
  %1761 = vmatmul.mubr.bf16.gmra.mxu0 %v1090
  %v1762 = vpop.f32.mrf.mxu0
  %v1763 = vadd.f32 0.0, %v1762
  %v1764 = vpop.f32.mrf.mxu0
  %v1765 = vpop.f32.mrf.mxu0
  %v1766 = vadd.f32 0.0, %v1765
  %v1767 = vpop.f32.mrf.mxu0
  %1768 = vmatprep.mubr.bf16.mxu0 0
  %1769 = vmatmul.mubr.bf16.gmra.mxu0 %v1093
  %v1770 = vpop.f32.mrf.mxu0
  %v1771 = vadd.f32 0.0, %v1770
  %v1772 = vpop.f32.mrf.mxu0
  %v1773 = vpop.f32.mrf.mxu0
  %v1774 = vadd.f32 0.0, %v1773
  %v1775 = vpop.f32.mrf.mxu0
  %1776 = vmatprep.mubr.bf16.mxu0 0
  %1777 = vmatmul.mubr.bf16.gmra.mxu0 %v1096
  %v1778 = vpop.f32.mrf.mxu0
  %v1779 = vadd.f32 0.0, %v1778
  %v1780 = vpop.f32.mrf.mxu0
  %v1781 = vpop.f32.mrf.mxu0
  %v1782 = vadd.f32 0.0, %v1781
  %v1783 = vpop.f32.mrf.mxu0
  %1784 = vmatprep.mubr.bf16.mxu0 0
  %1785 = vmatmul.mubr.bf16.gmra.mxu0 %v1099
  %v1786 = vpop.f32.mrf.mxu0
  %v1787 = vadd.f32 0.0, %v1786
  %v1788 = vpop.f32.mrf.mxu0
  %v1789 = vpop.f32.mrf.mxu0
  %v1790 = vadd.f32 0.0, %v1789
  %v1791 = vpop.f32.mrf.mxu0
  %1792 = vmatprep.mubr.bf16.mxu0 0
  %1793 = vmatmul.mubr.bf16.gmra.mxu0 %v1102
  %v1794 = vpop.f32.mrf.mxu0
  %v1795 = vadd.f32 0.0, %v1794
  %v1796 = vpop.f32.mrf.mxu0
  %v1797 = vpop.f32.mrf.mxu0
  %v1798 = vadd.f32 0.0, %v1797
  %v1799 = vpop.f32.mrf.mxu0
  %1800 = vmatprep.mubr.bf16.mxu0 0
  %1801 = vmatmul.mubr.bf16.gmra.mxu0 %v1105
  %v1802 = vpop.f32.mrf.mxu0
  %v1803 = vadd.f32 0.0, %v1802
  %v1804 = vpop.f32.mrf.mxu0
  %v1805 = vpop.f32.mrf.mxu0
  %v1806 = vadd.f32 0.0, %v1805
  %v1807 = vpop.f32.mrf.mxu0
  %1808 = vmatprep.mubr.bf16.mxu0 0
  %1809 = vmatmul.mubr.bf16.gmra.mxu0 %v1108
  %v1810 = vpop.f32.mrf.mxu0
  %v1811 = vadd.f32 0.0, %v1810
  %v1812 = vpop.f32.mrf.mxu0
  %v1813 = vpop.f32.mrf.mxu0
  %v1814 = vadd.f32 0.0, %v1813
  %v1815 = vpop.f32.mrf.mxu0
  %1816 = vmatprep.mubr.bf16.mxu0 0
  %1817 = vmatmul.mubr.bf16.gmra.mxu0 %v1111
  %v1818 = vpop.f32.mrf.mxu0
  %v1819 = vadd.f32 0.0, %v1818
  %v1820 = vpop.f32.mrf.mxu0
  %v1821 = vpop.f32.mrf.mxu0
  %v1822 = vadd.f32 0.0, %v1821
  %v1823 = vpop.f32.mrf.mxu0
  %1824 = vmatprep.mubr.bf16.mxu0 0
  %1825 = vmatmul.mubr.bf16.gmra.mxu0 %v1114
  %v1826 = vpop.f32.mrf.mxu0
  %v1827 = vadd.f32 0.0, %v1826
  %v1828 = vpop.f32.mrf.mxu0
  %v1829 = vpop.f32.mrf.mxu0
  %v1830 = vadd.f32 0.0, %v1829
  %v1831 = vpop.f32.mrf.mxu0
  %1832 = vmatprep.mubr.bf16.mxu0 0
  %1833 = vmatmul.mubr.bf16.gmra.mxu0 %v1117
  %v1834 = vpop.f32.mrf.mxu0
  %v1835 = vadd.f32 0.0, %v1834
  %v1836 = vpop.f32.mrf.mxu0
  %v1837 = vpop.f32.mrf.mxu0
  %v1838 = vadd.f32 0.0, %v1837
  %v1839 = vpop.f32.mrf.mxu0
  %1840 = vmatprep.mubr.bf16.mxu0 0
  %1841 = vmatmul.mubr.bf16.gmra.mxu0 %v1120
  %v1842 = vpop.f32.mrf.mxu0
  %v1843 = vadd.f32 0.0, %v1842
  %v1844 = vpop.f32.mrf.mxu0
  %v1845 = vpop.f32.mrf.mxu0
  %v1846 = vadd.f32 0.0, %v1845
  %v1847 = vpop.f32.mrf.mxu0
  %1848 = vmatprep.mubr.bf16.mxu0 0
  %1849 = vmatmul.mubr.bf16.gmra.mxu0 %v1123
  %v1850 = vpop.f32.mrf.mxu0
  %v1851 = vadd.f32 0.0, %v1850
  %v1852 = vpop.f32.mrf.mxu0
  %v1853 = vpop.f32.mrf.mxu0
  %v1854 = vadd.f32 0.0, %v1853
  %v1855 = vpop.f32.mrf.mxu0
  %1856 = vmatprep.mubr.bf16.mxu0 0
  %1857 = vmatmul.mubr.bf16.gmra.mxu0 %v1126
  %v1858 = vpop.f32.mrf.mxu0
  %v1859 = vadd.f32 0.0, %v1858
  %v1860 = vpop.f32.mrf.mxu0
  %v1861 = vpop.f32.mrf.mxu0
  %v1862 = vadd.f32 0.0, %v1861
  %v1863 = vpop.f32.mrf.mxu0
  %1864 = vmatprep.mubr.bf16.mxu0 0
  %1865 = vmatmul.mubr.bf16.gmra.mxu0 %v1129
  %v1866 = vpop.f32.mrf.mxu0
  %v1867 = vadd.f32 0.0, %v1866
  %v1868 = vpop.f32.mrf.mxu0
  %v1869 = vpop.f32.mrf.mxu0
  %v1870 = vadd.f32 0.0, %v1869
  %v1871 = vpop.f32.mrf.mxu0
  %1872 = vmatprep.mubr.bf16.mxu0 0
  %1873 = vmatmul.mubr.bf16.gmra.mxu0 %v1132
  %v1874 = vpop.f32.mrf.mxu0
  %v1875 = vadd.f32 0.0, %v1874
  %v1876 = vpop.f32.mrf.mxu0
  %v1877 = vpop.f32.mrf.mxu0
  %v1878 = vadd.f32 0.0, %v1877
  %v1879 = vpop.f32.mrf.mxu0
  %1880 = vmatprep.mubr.bf16.mxu0 0
  %1881 = vmatmul.mubr.bf16.gmra.mxu0 %v1135
  %v1882 = vpop.f32.mrf.mxu0
  %v1883 = vadd.f32 0.0, %v1882
  %v1884 = vpop.f32.mrf.mxu0
  %v1885 = vpop.f32.mrf.mxu0
  %v1886 = vadd.f32 0.0, %v1885
  %v1887 = vpop.f32.mrf.mxu0
  %1888 = vmatprep.mubr.bf16.mxu0 0
  %1889 = vmatmul.mubr.bf16.gmra.mxu0 %v1138
  %v1890 = vpop.f32.mrf.mxu0
  %v1891 = vadd.f32 0.0, %v1890
  %v1892 = vpop.f32.mrf.mxu0
  %v1893 = vpop.f32.mrf.mxu0
  %v1894 = vadd.f32 0.0, %v1893
  %v1895 = vpop.f32.mrf.mxu0
  %1896 = vmatprep.mubr.bf16.mxu0 0
  %1897 = vmatmul.mubr.bf16.gmra.mxu0 %v1141
  %v1898 = vpop.f32.mrf.mxu0
  %v1899 = vadd.f32 0.0, %v1898
  %v1900 = vpop.f32.mrf.mxu0
  %v1901 = vpop.f32.mrf.mxu0
  %v1902 = vadd.f32 0.0, %v1901
  %v1903 = vpop.f32.mrf.mxu0
  %1904 = vmatprep.mubr.bf16.mxu0 0
  %1905 = vmatmul.mubr.bf16.gmra.mxu0 %v1144
  %v1906 = vpop.f32.mrf.mxu0
  %v1907 = vadd.f32 0.0, %v1906
  %v1908 = vpop.f32.mrf.mxu0
  %v1909 = vpop.f32.mrf.mxu0
  %v1910 = vadd.f32 0.0, %v1909
  %v1911 = vpop.f32.mrf.mxu0
  %1912 = vmatprep.mubr.bf16.mxu0 0
  %1913 = vmatmul.mubr.bf16.gmra.mxu0 %v1147
  %v1914 = vpop.f32.mrf.mxu0
  %v1915 = vadd.f32 0.0, %v1914
  %v1916 = vpop.f32.mrf.mxu0
  %v1917 = vpop.f32.mrf.mxu0
  %v1918 = vadd.f32 0.0, %v1917
  %v1919 = vpop.f32.mrf.mxu0
  %1920 = vmatprep.mubr.bf16.mxu0 0
  %1921 = vmatmul.mubr.bf16.gmra.mxu0 %v1150
  %v1922 = vpop.f32.mrf.mxu0
  %v1923 = vadd.f32 0.0, %v1922
  %v1924 = vpop.f32.mrf.mxu0
  %v1925 = vpop.f32.mrf.mxu0
  %v1926 = vadd.f32 0.0, %v1925
  %v1927 = vpop.f32.mrf.mxu0
  %1928 = vmatprep.mubr.bf16.mxu0 0
  %1929 = vmatmul.mubr.bf16.gmra.mxu0 %v1153
  %v1930 = vpop.f32.mrf.mxu0
  %v1931 = vadd.f32 0.0, %v1930
  %v1932 = vpop.f32.mrf.mxu0
  %v1933 = vpop.f32.mrf.mxu0
  %v1934 = vadd.f32 0.0, %v1933
  %v1935 = vpop.f32.mrf.mxu0
  %1936 = vmatprep.mubr.bf16.mxu0 0
  %1937 = vmatmul.mubr.bf16.gmra.mxu0 %v1156
  %v1938 = vpop.f32.mrf.mxu0
  %v1939 = vadd.f32 0.0, %v1938
  %v1940 = vpop.f32.mrf.mxu0
  %v1941 = vpop.f32.mrf.mxu0
  %v1942 = vadd.f32 0.0, %v1941
  %v1943 = vpop.f32.mrf.mxu0
  %1944 = vmatprep.mubr.bf16.mxu0 0
  %1945 = vmatmul.mubr.bf16.gmra.mxu0 %v1159
  %v1946 = vpop.f32.mrf.mxu0
  %v1947 = vadd.f32 0.0, %v1946
  %v1948 = vpop.f32.mrf.mxu0
  %v1949 = vpop.f32.mrf.mxu0
  %v1950 = vadd.f32 0.0, %v1949
  %v1951 = vpop.f32.mrf.mxu0
  %1952 = vmatprep.mubr.bf16.mxu0 0
  %1953 = vmatmul.mubr.bf16.gmra.mxu0 %v1162
  %v1954 = vpop.f32.mrf.mxu0
  %v1955 = vadd.f32 0.0, %v1954
  %v1956 = vpop.f32.mrf.mxu0
  %v1957 = vpop.f32.mrf.mxu0
  %v1958 = vadd.f32 0.0, %v1957
  %v1959 = vpop.f32.mrf.mxu0
  %1960 = vmatprep.mubr.bf16.mxu0 0
  %1961 = vmatmul.mubr.bf16.gmra.mxu0 %v1165
  %v1962 = vpop.f32.mrf.mxu0
  %v1963 = vadd.f32 0.0, %v1962
  %v1964 = vpop.f32.mrf.mxu0
  %v1965 = vpop.f32.mrf.mxu0
  %v1966 = vadd.f32 0.0, %v1965
  %v1967 = vpop.f32.mrf.mxu0
  %1968 = vmatprep.mubr.bf16.mxu0 0
  %1969 = vmatmul.mubr.bf16.gmra.mxu0 %v1168
  %v1970 = vpop.f32.mrf.mxu0
  %v1971 = vadd.f32 0.0, %v1970
  %v1972 = vpop.f32.mrf.mxu0
  %v1973 = vpop.f32.mrf.mxu0
  %v1974 = vadd.f32 0.0, %v1973
  %v1975 = vpop.f32.mrf.mxu0
  %1976 = vmatprep.mubr.bf16.mxu0 0
  %1977 = vmatmul.mubr.bf16.gmra.mxu0 %v1171
  %v1978 = vpop.f32.mrf.mxu0
  %v1979 = vadd.f32 0.0, %v1978
  %v1980 = vpop.f32.mrf.mxu0
  %v1981 = vpop.f32.mrf.mxu0
  %v1982 = vadd.f32 0.0, %v1981
  %v1983 = vpop.f32.mrf.mxu0
  %1984 = vmatprep.mubr.bf16.mxu0 0
  %1985 = vmatmul.mubr.bf16.gmra.mxu0 %v1174
  %v1986 = vpop.f32.mrf.mxu0
  %v1987 = vadd.f32 0.0, %v1986
  %v1988 = vpop.f32.mrf.mxu0
  %v1989 = vpop.f32.mrf.mxu0
  %v1990 = vadd.f32 0.0, %v1989
  %v1991 = vpop.f32.mrf.mxu0
  %1992 = vmatprep.mubr.bf16.mxu0 0
  %1993 = vmatmul.mubr.bf16.gmra.mxu0 %v1177
  %v1994 = vpop.f32.mrf.mxu0
  %v1995 = vadd.f32 0.0, %v1994
  %v1996 = vpop.f32.mrf.mxu0
  %v1997 = vpop.f32.mrf.mxu0
  %v1998 = vadd.f32 0.0, %v1997
  %v1999 = vpop.f32.mrf.mxu0
  %2000 = vmatprep.mubr.bf16.mxu0 0
  %2001 = vmatmul.mubr.bf16.gmra.mxu0 %v1180
  %v2002 = vpop.f32.mrf.mxu0
  %v2003 = vadd.f32 0.0, %v2002
  %v2004 = vpop.f32.mrf.mxu0
  %v2005 = vpop.f32.mrf.mxu0
  %v2006 = vadd.f32 0.0, %v2005
  %v2007 = vpop.f32.mrf.mxu0
  %2008 = vmatprep.mubr.bf16.mxu0 0
  %2009 = vmatmul.mubr.bf16.gmra.mxu0 %v1183
  %v2010 = vpop.f32.mrf.mxu0
  %v2011 = vadd.f32 0.0, %v2010
  %v2012 = vpop.f32.mrf.mxu0
  %v2013 = vpop.f32.mrf.mxu0
  %v2014 = vadd.f32 0.0, %v2013
  %v2015 = vpop.f32.mrf.mxu0
  %2016 = vmatprep.mubr.bf16.mxu0 0
  %2017 = vmatmul.mubr.bf16.gmra.mxu0 %v1186
  %v2018 = vpop.f32.mrf.mxu0
  %v2019 = vadd.f32 0.0, %v2018
  %v2020 = vpop.f32.mrf.mxu0
  %v2021 = vpop.f32.mrf.mxu0
  %v2022 = vadd.f32 0.0, %v2021
  %v2023 = vpop.f32.mrf.mxu0
  %2024 = vmatprep.mubr.bf16.mxu0 0
  %2025 = vmatmul.mubr.bf16.gmra.mxu0 %v1189
  %v2026 = vpop.f32.mrf.mxu0
  %v2027 = vadd.f32 0.0, %v2026
  %v2028 = vpop.f32.mrf.mxu0
  %v2029 = vpop.f32.mrf.mxu0
  %v2030 = vadd.f32 0.0, %v2029
  %v2031 = vpop.f32.mrf.mxu0
  %2032 = vmatprep.mubr.bf16.mxu0 0
  %2033 = vmatmul.mubr.bf16.gmra.mxu0 %v1192
  %v2034 = vpop.f32.mrf.mxu0
  %v2035 = vadd.f32 0.0, %v2034
  %v2036 = vpop.f32.mrf.mxu0
  %v2037 = vpop.f32.mrf.mxu0
  %v2038 = vadd.f32 0.0, %v2037
  %v2039 = vpop.f32.mrf.mxu0
  %2040 = vmatprep.mubr.bf16.mxu0 0
  %2041 = vmatmul.mubr.bf16.gmra.mxu0 %v1195
  %v2042 = vpop.f32.mrf.mxu0
  %v2043 = vadd.f32 0.0, %v2042
  %v2044 = vpop.f32.mrf.mxu0
  %v2045 = vpop.f32.mrf.mxu0
  %v2046 = vadd.f32 0.0, %v2045
  %v2047 = vpop.f32.mrf.mxu0
  %2048 = vmatprep.mubr.bf16.mxu0 0
  %2049 = vmatmul.mubr.bf16.gmra.mxu0 %v1198
  %v2050 = vpop.f32.mrf.mxu0
  %v2051 = vadd.f32 0.0, %v2050
  %v2052 = vpop.f32.mrf.mxu0
  %v2053 = vpop.f32.mrf.mxu0
  %v2054 = vadd.f32 0.0, %v2053
  %v2055 = vpop.f32.mrf.mxu0
  %2056 = vmatprep.mubr.bf16.mxu0 0
  %2057 = vmatmul.mubr.bf16.gmra.mxu0 %v1201
  %v2058 = vpop.f32.mrf.mxu0
  %v2059 = vadd.f32 0.0, %v2058
  %v2060 = vpop.f32.mrf.mxu0
  %v2061 = vpop.f32.mrf.mxu0
  %v2062 = vadd.f32 0.0, %v2061
  %v2063 = vpop.f32.mrf.mxu0
  %2064 = vmatprep.mubr.bf16.mxu0 0
  %2065 = vmatmul.mubr.bf16.gmra.mxu0 %v1204
  %v2066 = vpop.f32.mrf.mxu0
  %v2067 = vadd.f32 0.0, %v2066
  %v2068 = vpop.f32.mrf.mxu0
  %v2069 = vpop.f32.mrf.mxu0
  %v2070 = vadd.f32 0.0, %v2069
  %v2071 = vpop.f32.mrf.mxu0
  %2072 = vmatprep.mubr.bf16.mxu0 0
  %2073 = vmatmul.mubr.bf16.gmra.mxu0 %v1207
  %v2074 = vpop.f32.mrf.mxu0
  %v2075 = vadd.f32 0.0, %v2074
  %v2076 = vpop.f32.mrf.mxu0
  %v2077 = vpop.f32.mrf.mxu0
  %v2078 = vadd.f32 0.0, %v2077
  %v2079 = vpop.f32.mrf.mxu0
  %2080 = vmatprep.mubr.bf16.mxu0 0
  %2081 = vmatmul.mubr.bf16.gmra.mxu0 %v1210
  %v2082 = vpop.f32.mrf.mxu0
  %v2083 = vadd.f32 0.0, %v2082
  %v2084 = vpop.f32.mrf.mxu0
  %v2085 = vpop.f32.mrf.mxu0
  %v2086 = vadd.f32 0.0, %v2085
  %v2087 = vpop.f32.mrf.mxu0
  %2088 = vmatprep.mubr.bf16.mxu0 0
  %2089 = vmatmul.mubr.bf16.gmra.mxu0 %v1213
  %v2090 = vpop.f32.mrf.mxu0
  %v2091 = vadd.f32 0.0, %v2090
  %v2092 = vpop.f32.mrf.mxu0
  %v2093 = vpop.f32.mrf.mxu0
  %v2094 = vadd.f32 0.0, %v2093
  %v2095 = vpop.f32.mrf.mxu0
  %2096 = vmatprep.mubr.bf16.mxu0 0
  %2097 = vmatmul.mubr.bf16.gmra.mxu0 %v1216
  %v2098 = vpop.f32.mrf.mxu0
  %v2099 = vadd.f32 0.0, %v2098
  %v2100 = vpop.f32.mrf.mxu0
  %v2101 = vpop.f32.mrf.mxu0
  %v2102 = vadd.f32 0.0, %v2101
  %v2103 = vpop.f32.mrf.mxu0
  %2104 = vmatprep.mubr.bf16.mxu0 0
  %2105 = vmatmul.mubr.bf16.gmra.mxu0 %v1219
  %v2106 = vpop.f32.mrf.mxu0
  %v2107 = vadd.f32 0.0, %v2106
  %v2108 = vpop.f32.mrf.mxu0
  %v2109 = vpop.f32.mrf.mxu0
  %v2110 = vadd.f32 0.0, %v2109
  %v2111 = vpop.f32.mrf.mxu0
  %2112 = vmatprep.mubr.bf16.mxu0 0
  %2113 = vmatmul.mubr.bf16.gmra.mxu0 %v1222
  %v2114 = vpop.f32.mrf.mxu0
  %v2115 = vadd.f32 0.0, %v2114
  %v2116 = vpop.f32.mrf.mxu0
  %v2117 = vpop.f32.mrf.mxu0
  %v2118 = vadd.f32 0.0, %v2117
  %v2119 = vpop.f32.mrf.mxu0
  %2120 = vmatprep.mubr.bf16.mxu0 0
  %2121 = vmatmul.mubr.bf16.gmra.mxu0 %v1225
  %v2122 = vpop.f32.mrf.mxu0
  %v2123 = vadd.f32 0.0, %v2122
  %v2124 = vpop.f32.mrf.mxu0
  %v2125 = vpop.f32.mrf.mxu0
  %v2126 = vadd.f32 0.0, %v2125
  %v2127 = vpop.f32.mrf.mxu0
  %2128 = vmatprep.mubr.bf16.mxu0 0
  %2129 = vmatmul.mubr.bf16.gmra.mxu0 %v1228
  %v2130 = vpop.f32.mrf.mxu0
  %v2131 = vadd.f32 0.0, %v2130
  %v2132 = vpop.f32.mrf.mxu0
  %v2133 = vpop.f32.mrf.mxu0
  %v2134 = vadd.f32 0.0, %v2133
  %v2135 = vpop.f32.mrf.mxu0
  %2136 = vmatprep.mubr.bf16.mxu0 0
  %2137 = vmatmul.mubr.bf16.gmra.mxu0 %v1231
  %v2138 = vpop.f32.mrf.mxu0
  %v2139 = vadd.f32 0.0, %v2138
  %v2140 = vpop.f32.mrf.mxu0
  %v2141 = vpop.f32.mrf.mxu0
  %v2142 = vadd.f32 0.0, %v2141
  %v2143 = vpop.f32.mrf.mxu0
  %2144 = vmatprep.mubr.bf16.mxu0 0
  %2145 = vmatmul.mubr.bf16.gmra.mxu0 %v1234
  %v2146 = vpop.f32.mrf.mxu0
  %v2147 = vadd.f32 0.0, %v2146
  %v2148 = vpop.f32.mrf.mxu0
  %v2149 = vpop.f32.mrf.mxu0
  %v2150 = vadd.f32 0.0, %v2149
  %v2151 = vpop.f32.mrf.mxu0
  %2152 = vmatprep.mubr.bf16.mxu0 0
  %2153 = vmatmul.mubr.bf16.gmra.mxu0 %v1237
  %v2154 = vpop.f32.mrf.mxu0
  %v2155 = vadd.f32 0.0, %v2154
  %v2156 = vpop.f32.mrf.mxu0
  %v2157 = vpop.f32.mrf.mxu0
  %v2158 = vadd.f32 0.0, %v2157
  %v2159 = vpop.f32.mrf.mxu0
  %2160 = vmatprep.mubr.bf16.mxu0 0
  %2161 = vmatmul.mubr.bf16.gmra.mxu0 %v1240
  %v2162 = vpop.f32.mrf.mxu0
  %v2163 = vadd.f32 0.0, %v2162
  %v2164 = vpop.f32.mrf.mxu0
  %v2165 = vpop.f32.mrf.mxu0
  %v2166 = vadd.f32 0.0, %v2165
  %v2167 = vpop.f32.mrf.mxu0
  %2168 = vmatprep.mubr.bf16.mxu0 0
  %2169 = vmatmul.mubr.bf16.gmra.mxu0 %v1243
  %v2170 = vpop.f32.mrf.mxu0
  %v2171 = vadd.f32 0.0, %v2170
  %v2172 = vpop.f32.mrf.mxu0
  %v2173 = vpop.f32.mrf.mxu0
  %v2174 = vadd.f32 0.0, %v2173
  %v2175 = vpop.f32.mrf.mxu0
  %2176 = vmatprep.mubr.bf16.mxu0 0
  %2177 = vmatmul.mubr.bf16.gmra.mxu0 %v1246
  %v2178 = vpop.f32.mrf.mxu0
  %v2179 = vadd.f32 0.0, %v2178
  %v2180 = vpop.f32.mrf.mxu0
  %v2181 = vpop.f32.mrf.mxu0
  %v2182 = vadd.f32 0.0, %v2181
  %v2183 = vpop.f32.mrf.mxu0
  %2184 = vmatprep.mubr.bf16.mxu0 0
  %2185 = vmatmul.mubr.bf16.gmra.mxu0 %v1249
  %v2186 = vpop.f32.mrf.mxu0
  %v2187 = vadd.f32 0.0, %v2186
  %v2188 = vpop.f32.mrf.mxu0
  %v2189 = vpop.f32.mrf.mxu0
  %v2190 = vadd.f32 0.0, %v2189
  %v2191 = vpop.f32.mrf.mxu0
  %2192 = vmatprep.mubr.bf16.mxu0 0
  %2193 = vmatmul.mubr.bf16.gmra.mxu0 %v1252
  %v2194 = vpop.f32.mrf.mxu0
  %v2195 = vadd.f32 0.0, %v2194
  %v2196 = vpop.f32.mrf.mxu0
  %v2197 = vpop.f32.mrf.mxu0
  %v2198 = vadd.f32 0.0, %v2197
  %v2199 = vpop.f32.mrf.mxu0
  %2200 = vmatprep.mubr.bf16.mxu0 0
  %2201 = vmatmul.mubr.bf16.gmra.mxu0 %v1255
  %v2202 = vpop.f32.mrf.mxu0
  %v2203 = vadd.f32 0.0, %v2202
  %v2204 = vpop.f32.mrf.mxu0
  %v2205 = vpop.f32.mrf.mxu0
  %v2206 = vadd.f32 0.0, %v2205
  %v2207 = vpop.f32.mrf.mxu0
  %2208 = vmatprep.mubr.bf16.mxu0 0
  %2209 = vmatmul.mubr.bf16.gmra.mxu0 %v1258
  %v2210 = vpop.f32.mrf.mxu0
  %v2211 = vadd.f32 0.0, %v2210
  %v2212 = vpop.f32.mrf.mxu0
  %v2213 = vpop.f32.mrf.mxu0
  %v2214 = vadd.f32 0.0, %v2213
  %v2215 = vpop.f32.mrf.mxu0
  %2216 = vmatprep.mubr.bf16.mxu0 0
  %2217 = vmatmul.mubr.bf16.gmra.mxu0 %v1261
  %v2218 = vpop.f32.mrf.mxu0
  %v2219 = vadd.f32 0.0, %v2218
  %v2220 = vpop.f32.mrf.mxu0
  %v2221 = vpop.f32.mrf.mxu0
  %v2222 = vadd.f32 0.0, %v2221
  %v2223 = vpop.f32.mrf.mxu0
  %2224 = vmatprep.mubr.bf16.mxu0 0
  %2225 = vmatmul.mubr.bf16.gmra.mxu0 %v1264
  %v2226 = vpop.f32.mrf.mxu0
  %v2227 = vadd.f32 0.0, %v2226
  %v2228 = vpop.f32.mrf.mxu0
  %v2229 = vpop.f32.mrf.mxu0
  %v2230 = vadd.f32 0.0, %v2229
  %v2231 = vpop.f32.mrf.mxu0
  %2232 = vmatprep.mubr.bf16.mxu0 0
  %2233 = vmatmul.mubr.bf16.gmra.mxu0 %v1267
  %v2234 = vpop.f32.mrf.mxu0
  %v2235 = vadd.f32 0.0, %v2234
  %v2236 = vpop.f32.mrf.mxu0
  %v2237 = vpop.f32.mrf.mxu0
  %v2238 = vadd.f32 0.0, %v2237
  %v2239 = vpop.f32.mrf.mxu0
  %2240 = vmatprep.mubr.bf16.mxu0 0
  %2241 = vmatmul.mubr.bf16.gmra.mxu0 %v1270
  %v2242 = vpop.f32.mrf.mxu0
  %v2243 = vadd.f32 0.0, %v2242
  %v2244 = vpop.f32.mrf.mxu0
  %v2245 = vpop.f32.mrf.mxu0
  %v2246 = vadd.f32 0.0, %v2245
  %v2247 = vpop.f32.mrf.mxu0
  %2248 = vmatprep.mubr.bf16.mxu0 0
  %2249 = vmatmul.mubr.bf16.gmra.mxu0 %v1273
  %v2250 = vpop.f32.mrf.mxu0
  %v2251 = vadd.f32 0.0, %v2250
  %v2252 = vpop.f32.mrf.mxu0
  %v2253 = vpop.f32.mrf.mxu0
  %v2254 = vadd.f32 0.0, %v2253
  %v2255 = vpop.f32.mrf.mxu0
  %2256 = vmatprep.mubr.bf16.mxu0 0
  %2257 = vmatmul.mubr.bf16.gmra.mxu0 %v1276
  %v2258 = vpop.f32.mrf.mxu0
  %v2259 = vadd.f32 0.0, %v2258
  %v2260 = vpop.f32.mrf.mxu0
  %v2261 = vpop.f32.mrf.mxu0
  %v2262 = vadd.f32 0.0, %v2261
  %v2263 = vpop.f32.mrf.mxu0
  %2264 = vmatprep.mubr.bf16.mxu0 0
  %2265 = vmatmul.mubr.bf16.gmra.mxu0 %v1279
  %v2266 = vpop.f32.mrf.mxu0
  %v2267 = vadd.f32 0.0, %v2266
  %v2268 = vpop.f32.mrf.mxu0
  %v2269 = vpop.f32.mrf.mxu0
  %v2270 = vadd.f32 0.0, %v2269
  %v2271 = vpop.f32.mrf.mxu0
  %2272 = vmatprep.mubr.bf16.mxu0 0
  %2273 = vmatmul.mubr.bf16.gmra.mxu0 %v1282
  %v2274 = vpop.f32.mrf.mxu0
  %v2275 = vadd.f32 0.0, %v2274
  %v2276 = vpop.f32.mrf.mxu0
  %v2277 = vpop.f32.mrf.mxu0
  %v2278 = vadd.f32 0.0, %v2277
  %v2279 = vpop.f32.mrf.mxu0
  %2280 = vmatprep.mubr.bf16.mxu0 0
  %2281 = vmatmul.mubr.bf16.gmra.mxu0 %v1285
  %v2282 = vpop.f32.mrf.mxu0
  %v2283 = vadd.f32 0.0, %v2282
  %v2284 = vpop.f32.mrf.mxu0
  %v2285 = vpop.f32.mrf.mxu0
  %v2286 = vadd.f32 0.0, %v2285
  %v2287 = vpop.f32.mrf.mxu0
  %2288 = vmatprep.mubr.bf16.mxu0 0
  %2289 = vmatmul.mubr.bf16.gmra.mxu0 %v1288
  %v2290 = vpop.f32.mrf.mxu0
  %v2291 = vadd.f32 0.0, %v2290
  %v2292 = vpop.f32.mrf.mxu0
  %v2293 = vpop.f32.mrf.mxu0
  %v2294 = vadd.f32 0.0, %v2293
  %v2295 = vpop.f32.mrf.mxu0
  %2296 = vmatprep.mubr.bf16.mxu0 0
  %2297 = vmatmul.mubr.bf16.gmra.mxu0 %v1291
  %v2298 = vpop.f32.mrf.mxu0
  %v2299 = vadd.f32 0.0, %v2298
  %v2300 = vpop.f32.mrf.mxu0
  %v2301 = vpop.f32.mrf.mxu0
  %v2302 = vadd.f32 0.0, %v2301
  %v2303 = vpop.f32.mrf.mxu0
  %2304 = vmatprep.mubr.bf16.mxu0 0
  %2305 = vmatmul.mubr.bf16.gmra.mxu0 %v1294
  %v2306 = vpop.f32.mrf.mxu0
  %v2307 = vadd.f32 0.0, %v2306
  %v2308 = vpop.f32.mrf.mxu0
  %v2309 = vpop.f32.mrf.mxu0
  %v2310 = vadd.f32 0.0, %v2309
  %v2311 = vpop.f32.mrf.mxu0
  %2312 = vmatprep.mubr.bf16.mxu0 0
  %2313 = vmatmul.mubr.bf16.gmra.mxu0 %v1297
  %v2314 = vpop.f32.mrf.mxu0
  %v2315 = vadd.f32 0.0, %v2314
  %v2316 = vpop.f32.mrf.mxu0
  %v2317 = vpop.f32.mrf.mxu0
  %v2318 = vadd.f32 0.0, %v2317
  %v2319 = vpop.f32.mrf.mxu0
  %2320 = vmatprep.mubr.bf16.mxu0 0
  %2321 = vmatmul.mubr.bf16.gmra.mxu0 %v1300
  %v2322 = vpop.f32.mrf.mxu0
  %v2323 = vadd.f32 0.0, %v2322
  %v2324 = vpop.f32.mrf.mxu0
  %v2325 = vpop.f32.mrf.mxu0
  %v2326 = vadd.f32 0.0, %v2325
  %v2327 = vpop.f32.mrf.mxu0
  %2328 = vmatprep.mubr.bf16.mxu0 0
  %2329 = vmatmul.mubr.bf16.gmra.mxu0 %v1303
  %v2330 = vpop.f32.mrf.mxu0
  %v2331 = vadd.f32 0.0, %v2330
  %v2332 = vpop.f32.mrf.mxu0
  %v2333 = vpop.f32.mrf.mxu0
  %v2334 = vadd.f32 0.0, %v2333
  %v2335 = vpop.f32.mrf.mxu0
  %2336 = vmatprep.mubr.bf16.mxu0 0
  %2337 = vmatmul.mubr.bf16.gmra.mxu0 %v1306
  %v2338 = vpop.f32.mrf.mxu0
  %v2339 = vadd.f32 0.0, %v2338
  %v2340 = vpop.f32.mrf.mxu0
  %v2341 = vpop.f32.mrf.mxu0
  %v2342 = vadd.f32 0.0, %v2341
  %v2343 = vpop.f32.mrf.mxu0
  %2344 = vmatprep.mubr.bf16.mxu0 0
  %2345 = vmatmul.mubr.bf16.gmra.mxu0 %v1309
  %v2346 = vpop.f32.mrf.mxu0
  %v2347 = vadd.f32 0.0, %v2346
  %v2348 = vpop.f32.mrf.mxu0
  %v2349 = vpop.f32.mrf.mxu0
  %v2350 = vadd.f32 0.0, %v2349
  %v2351 = vpop.f32.mrf.mxu0
  %2352 = vmatprep.mubr.bf16.mxu0 0
  %2353 = vmatmul.mubr.bf16.gmra.mxu0 %v1312
  %v2354 = vpop.f32.mrf.mxu0
  %v2355 = vadd.f32 0.0, %v2354
  %v2356 = vpop.f32.mrf.mxu0
  %v2357 = vpop.f32.mrf.mxu0
  %v2358 = vadd.f32 0.0, %v2357
  %v2359 = vpop.f32.mrf.mxu0
  %2360 = vmatprep.mubr.bf16.mxu0 0
  %2361 = vmatmul.mubr.bf16.gmra.mxu0 %v1315
  %v2362 = vpop.f32.mrf.mxu0
  %v2363 = vadd.f32 0.0, %v2362
  %v2364 = vpop.f32.mrf.mxu0
  %v2365 = vpop.f32.mrf.mxu0
  %v2366 = vadd.f32 0.0, %v2365
  %v2367 = vpop.f32.mrf.mxu0
  %2368 = vmatprep.mubr.bf16.mxu0 0
  %2369 = vmatmul.mubr.bf16.gmra.mxu0 %v1318
  %v2370 = vpop.f32.mrf.mxu0
  %v2371 = vadd.f32 0.0, %v2370
  %v2372 = vpop.f32.mrf.mxu0
  %v2373 = vpop.f32.mrf.mxu0
  %v2374 = vadd.f32 0.0, %v2373
  %v2375 = vpop.f32.mrf.mxu0
  %2376 = vdwg.mxu0
  %vm2377 = vcmp.gt.f32.partialorder %v1355, 0.0
  %vm2378 = vcmp.gt.f32.partialorder %v1358, 0.0
  %vm2379 = vcmp.gt.f32.partialorder %v1363, 0.0
  %vm2380 = vcmp.gt.f32.partialorder %v1366, 0.0
  %vm2381 = vcmp.gt.f32.partialorder %v1371, 0.0
  %vm2382 = vcmp.gt.f32.partialorder %v1374, 0.0
  %vm2383 = vcmp.gt.f32.partialorder %v1379, 0.0
  %vm2384 = vcmp.gt.f32.partialorder %v1382, 0.0
  %vm2385 = vcmp.gt.f32.partialorder %v1387, 0.0
  %vm2386 = vcmp.gt.f32.partialorder %v1390, 0.0
  %vm2387 = vcmp.gt.f32.partialorder %v1395, 0.0
  %vm2388 = vcmp.gt.f32.partialorder %v1398, 0.0
  %vm2389 = vcmp.gt.f32.partialorder %v1403, 0.0
  %vm2390 = vcmp.gt.f32.partialorder %v1406, 0.0
  %vm2391 = vcmp.gt.f32.partialorder %v1411, 0.0
  %vm2392 = vcmp.gt.f32.partialorder %v1414, 0.0
  %vm2393 = vcmp.gt.f32.partialorder %v1419, 0.0
  %vm2394 = vcmp.gt.f32.partialorder %v1422, 0.0
  %vm2395 = vcmp.gt.f32.partialorder %v1427, 0.0
  %vm2396 = vcmp.gt.f32.partialorder %v1430, 0.0
  %vm2397 = vcmp.gt.f32.partialorder %v1435, 0.0
  %vm2398 = vcmp.gt.f32.partialorder %v1438, 0.0
  %vm2399 = vcmp.gt.f32.partialorder %v1443, 0.0
  %vm2400 = vcmp.gt.f32.partialorder %v1446, 0.0
  %vm2401 = vcmp.gt.f32.partialorder %v1451, 0.0
  %vm2402 = vcmp.gt.f32.partialorder %v1454, 0.0
  %vm2403 = vcmp.gt.f32.partialorder %v1459, 0.0
  %vm2404 = vcmp.gt.f32.partialorder %v1462, 0.0
  %vm2405 = vcmp.gt.f32.partialorder %v1467, 0.0
  %vm2406 = vcmp.gt.f32.partialorder %v1470, 0.0
  %vm2407 = vcmp.gt.f32.partialorder %v1475, 0.0
  %vm2408 = vcmp.gt.f32.partialorder %v1478, 0.0
  %vm2409 = vcmp.gt.f32.partialorder %v1483, 0.0
  %vm2410 = vcmp.gt.f32.partialorder %v1486, 0.0
  %vm2411 = vcmp.gt.f32.partialorder %v1491, 0.0
  %vm2412 = vcmp.gt.f32.partialorder %v1494, 0.0
  %vm2413 = vcmp.gt.f32.partialorder %v1499, 0.0
  %vm2414 = vcmp.gt.f32.partialorder %v1502, 0.0
  %vm2415 = vcmp.gt.f32.partialorder %v1507, 0.0
  %vm2416 = vcmp.gt.f32.partialorder %v1510, 0.0
  %vm2417 = vcmp.gt.f32.partialorder %v1515, 0.0
  %vm2418 = vcmp.gt.f32.partialorder %v1518, 0.0
  %vm2419 = vcmp.gt.f32.partialorder %v1523, 0.0
  %vm2420 = vcmp.gt.f32.partialorder %v1526, 0.0
  %vm2421 = vcmp.gt.f32.partialorder %v1531, 0.0
  %vm2422 = vcmp.gt.f32.partialorder %v1534, 0.0
  %vm2423 = vcmp.gt.f32.partialorder %v1539, 0.0
  %vm2424 = vcmp.gt.f32.partialorder %v1542, 0.0
  %vm2425 = vcmp.gt.f32.partialorder %v1547, 0.0
  %vm2426 = vcmp.gt.f32.partialorder %v1550, 0.0
  %vm2427 = vcmp.gt.f32.partialorder %v1555, 0.0
  %vm2428 = vcmp.gt.f32.partialorder %v1558, 0.0
  %vm2429 = vcmp.gt.f32.partialorder %v1563, 0.0
  %vm2430 = vcmp.gt.f32.partialorder %v1566, 0.0
  %vm2431 = vcmp.gt.f32.partialorder %v1571, 0.0
  %vm2432 = vcmp.gt.f32.partialorder %v1574, 0.0
  %vm2433 = vcmp.gt.f32.partialorder %v1579, 0.0
  %vm2434 = vcmp.gt.f32.partialorder %v1582, 0.0
  %vm2435 = vcmp.gt.f32.partialorder %v1587, 0.0
  %vm2436 = vcmp.gt.f32.partialorder %v1590, 0.0
  %vm2437 = vcmp.gt.f32.partialorder %v1595, 0.0
  %vm2438 = vcmp.gt.f32.partialorder %v1598, 0.0
  %vm2439 = vcmp.gt.f32.partialorder %v1603, 0.0
  %vm2440 = vcmp.gt.f32.partialorder %v1606, 0.0
  %vm2441 = vcmp.gt.f32.partialorder %v1611, 0.0
  %vm2442 = vcmp.gt.f32.partialorder %v1614, 0.0
  %vm2443 = vcmp.gt.f32.partialorder %v1619, 0.0
  %vm2444 = vcmp.gt.f32.partialorder %v1622, 0.0
  %vm2445 = vcmp.gt.f32.partialorder %v1627, 0.0
  %vm2446 = vcmp.gt.f32.partialorder %v1630, 0.0
  %vm2447 = vcmp.gt.f32.partialorder %v1635, 0.0
  %vm2448 = vcmp.gt.f32.partialorder %v1638, 0.0
  %vm2449 = vcmp.gt.f32.partialorder %v1643, 0.0
  %vm2450 = vcmp.gt.f32.partialorder %v1646, 0.0
  %vm2451 = vcmp.gt.f32.partialorder %v1651, 0.0
  %vm2452 = vcmp.gt.f32.partialorder %v1654, 0.0
  %vm2453 = vcmp.gt.f32.partialorder %v1659, 0.0
  %vm2454 = vcmp.gt.f32.partialorder %v1662, 0.0
  %vm2455 = vcmp.gt.f32.partialorder %v1667, 0.0
  %vm2456 = vcmp.gt.f32.partialorder %v1670, 0.0
  %vm2457 = vcmp.gt.f32.partialorder %v1675, 0.0
  %vm2458 = vcmp.gt.f32.partialorder %v1678, 0.0
  %vm2459 = vcmp.gt.f32.partialorder %v1683, 0.0
  %vm2460 = vcmp.gt.f32.partialorder %v1686, 0.0
  %vm2461 = vcmp.gt.f32.partialorder %v1691, 0.0
  %vm2462 = vcmp.gt.f32.partialorder %v1694, 0.0
  %vm2463 = vcmp.gt.f32.partialorder %v1699, 0.0
  %vm2464 = vcmp.gt.f32.partialorder %v1702, 0.0
  %vm2465 = vcmp.gt.f32.partialorder %v1707, 0.0
  %vm2466 = vcmp.gt.f32.partialorder %v1710, 0.0
  %vm2467 = vcmp.gt.f32.partialorder %v1715, 0.0
  %vm2468 = vcmp.gt.f32.partialorder %v1718, 0.0
  %vm2469 = vcmp.gt.f32.partialorder %v1723, 0.0
  %vm2470 = vcmp.gt.f32.partialorder %v1726, 0.0
  %vm2471 = vcmp.gt.f32.partialorder %v1731, 0.0
  %vm2472 = vcmp.gt.f32.partialorder %v1734, 0.0
  %vm2473 = vcmp.gt.f32.partialorder %v1739, 0.0
  %vm2474 = vcmp.gt.f32.partialorder %v1742, 0.0
  %vm2475 = vcmp.gt.f32.partialorder %v1747, 0.0
  %vm2476 = vcmp.gt.f32.partialorder %v1750, 0.0
  %vm2477 = vcmp.gt.f32.partialorder %v1755, 0.0
  %vm2478 = vcmp.gt.f32.partialorder %v1758, 0.0
  %vm2479 = vcmp.gt.f32.partialorder %v1763, 0.0
  %vm2480 = vcmp.gt.f32.partialorder %v1766, 0.0
  %vm2481 = vcmp.gt.f32.partialorder %v1771, 0.0
  %vm2482 = vcmp.gt.f32.partialorder %v1774, 0.0
  %vm2483 = vcmp.gt.f32.partialorder %v1779, 0.0
  %vm2484 = vcmp.gt.f32.partialorder %v1782, 0.0
  %vm2485 = vcmp.gt.f32.partialorder %v1787, 0.0
  %vm2486 = vcmp.gt.f32.partialorder %v1790, 0.0
  %vm2487 = vcmp.gt.f32.partialorder %v1795, 0.0
  %vm2488 = vcmp.gt.f32.partialorder %v1798, 0.0
  %vm2489 = vcmp.gt.f32.partialorder %v1803, 0.0
  %vm2490 = vcmp.gt.f32.partialorder %v1806, 0.0
  %vm2491 = vcmp.gt.f32.partialorder %v1811, 0.0
  %vm2492 = vcmp.gt.f32.partialorder %v1814, 0.0
  %vm2493 = vcmp.gt.f32.partialorder %v1819, 0.0
  %vm2494 = vcmp.gt.f32.partialorder %v1822, 0.0
  %vm2495 = vcmp.gt.f32.partialorder %v1827, 0.0
  %vm2496 = vcmp.gt.f32.partialorder %v1830, 0.0
  %vm2497 = vcmp.gt.f32.partialorder %v1835, 0.0
  %vm2498 = vcmp.gt.f32.partialorder %v1838, 0.0
  %vm2499 = vcmp.gt.f32.partialorder %v1843, 0.0
  %vm2500 = vcmp.gt.f32.partialorder %v1846, 0.0
  %vm2501 = vcmp.gt.f32.partialorder %v1851, 0.0
  %vm2502 = vcmp.gt.f32.partialorder %v1854, 0.0
  %vm2503 = vcmp.gt.f32.partialorder %v1859, 0.0
  %vm2504 = vcmp.gt.f32.partialorder %v1862, 0.0
  %vm2505 = vcmp.gt.f32.partialorder %v1867, 0.0
  %vm2506 = vcmp.gt.f32.partialorder %v1870, 0.0
  %vm2507 = vcmp.gt.f32.partialorder %v1875, 0.0
  %vm2508 = vcmp.gt.f32.partialorder %v1878, 0.0
  %vm2509 = vcmp.gt.f32.partialorder %v1883, 0.0
  %vm2510 = vcmp.gt.f32.partialorder %v1886, 0.0
  %vm2511 = vcmp.gt.f32.partialorder %v1891, 0.0
  %vm2512 = vcmp.gt.f32.partialorder %v1894, 0.0
  %vm2513 = vcmp.gt.f32.partialorder %v1899, 0.0
  %vm2514 = vcmp.gt.f32.partialorder %v1902, 0.0
  %vm2515 = vcmp.gt.f32.partialorder %v1907, 0.0
  %vm2516 = vcmp.gt.f32.partialorder %v1910, 0.0
  %vm2517 = vcmp.gt.f32.partialorder %v1915, 0.0
  %vm2518 = vcmp.gt.f32.partialorder %v1918, 0.0
  %vm2519 = vcmp.gt.f32.partialorder %v1923, 0.0
  %vm2520 = vcmp.gt.f32.partialorder %v1926, 0.0
  %vm2521 = vcmp.gt.f32.partialorder %v1931, 0.0
  %vm2522 = vcmp.gt.f32.partialorder %v1934, 0.0
  %vm2523 = vcmp.gt.f32.partialorder %v1939, 0.0
  %vm2524 = vcmp.gt.f32.partialorder %v1942, 0.0
  %vm2525 = vcmp.gt.f32.partialorder %v1947, 0.0
  %vm2526 = vcmp.gt.f32.partialorder %v1950, 0.0
  %vm2527 = vcmp.gt.f32.partialorder %v1955, 0.0
  %vm2528 = vcmp.gt.f32.partialorder %v1958, 0.0
  %vm2529 = vcmp.gt.f32.partialorder %v1963, 0.0
  %vm2530 = vcmp.gt.f32.partialorder %v1966, 0.0
  %vm2531 = vcmp.gt.f32.partialorder %v1971, 0.0
  %vm2532 = vcmp.gt.f32.partialorder %v1974, 0.0
  %vm2533 = vcmp.gt.f32.partialorder %v1979, 0.0
  %vm2534 = vcmp.gt.f32.partialorder %v1982, 0.0
  %vm2535 = vcmp.gt.f32.partialorder %v1987, 0.0
  %vm2536 = vcmp.gt.f32.partialorder %v1990, 0.0
  %vm2537 = vcmp.gt.f32.partialorder %v1995, 0.0
  %vm2538 = vcmp.gt.f32.partialorder %v1998, 0.0
  %vm2539 = vcmp.gt.f32.partialorder %v2003, 0.0
  %vm2540 = vcmp.gt.f32.partialorder %v2006, 0.0
  %vm2541 = vcmp.gt.f32.partialorder %v2011, 0.0
  %vm2542 = vcmp.gt.f32.partialorder %v2014, 0.0
  %vm2543 = vcmp.gt.f32.partialorder %v2019, 0.0
  %vm2544 = vcmp.gt.f32.partialorder %v2022, 0.0
  %vm2545 = vcmp.gt.f32.partialorder %v2027, 0.0
  %vm2546 = vcmp.gt.f32.partialorder %v2030, 0.0
  %vm2547 = vcmp.gt.f32.partialorder %v2035, 0.0
  %vm2548 = vcmp.gt.f32.partialorder %v2038, 0.0
  %vm2549 = vcmp.gt.f32.partialorder %v2043, 0.0
  %vm2550 = vcmp.gt.f32.partialorder %v2046, 0.0
  %vm2551 = vcmp.gt.f32.partialorder %v2051, 0.0
  %vm2552 = vcmp.gt.f32.partialorder %v2054, 0.0
  %vm2553 = vcmp.gt.f32.partialorder %v2059, 0.0
  %vm2554 = vcmp.gt.f32.partialorder %v2062, 0.0
  %vm2555 = vcmp.gt.f32.partialorder %v2067, 0.0
  %vm2556 = vcmp.gt.f32.partialorder %v2070, 0.0
  %vm2557 = vcmp.gt.f32.partialorder %v2075, 0.0
  %vm2558 = vcmp.gt.f32.partialorder %v2078, 0.0
  %vm2559 = vcmp.gt.f32.partialorder %v2083, 0.0
  %vm2560 = vcmp.gt.f32.partialorder %v2086, 0.0
  %vm2561 = vcmp.gt.f32.partialorder %v2091, 0.0
  %vm2562 = vcmp.gt.f32.partialorder %v2094, 0.0
  %vm2563 = vcmp.gt.f32.partialorder %v2099, 0.0
  %vm2564 = vcmp.gt.f32.partialorder %v2102, 0.0
  %vm2565 = vcmp.gt.f32.partialorder %v2107, 0.0
  %vm2566 = vcmp.gt.f32.partialorder %v2110, 0.0
  %vm2567 = vcmp.gt.f32.partialorder %v2115, 0.0
  %vm2568 = vcmp.gt.f32.partialorder %v2118, 0.0
  %vm2569 = vcmp.gt.f32.partialorder %v2123, 0.0
  %vm2570 = vcmp.gt.f32.partialorder %v2126, 0.0
  %vm2571 = vcmp.gt.f32.partialorder %v2131, 0.0
  %vm2572 = vcmp.gt.f32.partialorder %v2134, 0.0
  %vm2573 = vcmp.gt.f32.partialorder %v2139, 0.0
  %vm2574 = vcmp.gt.f32.partialorder %v2142, 0.0
  %vm2575 = vcmp.gt.f32.partialorder %v2147, 0.0
  %vm2576 = vcmp.gt.f32.partialorder %v2150, 0.0
  %vm2577 = vcmp.gt.f32.partialorder %v2155, 0.0
  %vm2578 = vcmp.gt.f32.partialorder %v2158, 0.0
  %vm2579 = vcmp.gt.f32.partialorder %v2163, 0.0
  %vm2580 = vcmp.gt.f32.partialorder %v2166, 0.0
  %vm2581 = vcmp.gt.f32.partialorder %v2171, 0.0
  %vm2582 = vcmp.gt.f32.partialorder %v2174, 0.0
  %vm2583 = vcmp.gt.f32.partialorder %v2179, 0.0
  %vm2584 = vcmp.gt.f32.partialorder %v2182, 0.0
  %vm2585 = vcmp.gt.f32.partialorder %v2187, 0.0
  %vm2586 = vcmp.gt.f32.partialorder %v2190, 0.0
  %vm2587 = vcmp.gt.f32.partialorder %v2195, 0.0
  %vm2588 = vcmp.gt.f32.partialorder %v2198, 0.0
  %vm2589 = vcmp.gt.f32.partialorder %v2203, 0.0
  %vm2590 = vcmp.gt.f32.partialorder %v2206, 0.0
  %vm2591 = vcmp.gt.f32.partialorder %v2211, 0.0
  %vm2592 = vcmp.gt.f32.partialorder %v2214, 0.0
  %vm2593 = vcmp.gt.f32.partialorder %v2219, 0.0
  %vm2594 = vcmp.gt.f32.partialorder %v2222, 0.0
  %vm2595 = vcmp.gt.f32.partialorder %v2227, 0.0
  %vm2596 = vcmp.gt.f32.partialorder %v2230, 0.0
  %vm2597 = vcmp.gt.f32.partialorder %v2235, 0.0
  %vm2598 = vcmp.gt.f32.partialorder %v2238, 0.0
  %vm2599 = vcmp.gt.f32.partialorder %v2243, 0.0
  %vm2600 = vcmp.gt.f32.partialorder %v2246, 0.0
  %vm2601 = vcmp.gt.f32.partialorder %v2251, 0.0
  %vm2602 = vcmp.gt.f32.partialorder %v2254, 0.0
  %vm2603 = vcmp.gt.f32.partialorder %v2259, 0.0
  %vm2604 = vcmp.gt.f32.partialorder %v2262, 0.0
  %vm2605 = vcmp.gt.f32.partialorder %v2267, 0.0
  %vm2606 = vcmp.gt.f32.partialorder %v2270, 0.0
  %vm2607 = vcmp.gt.f32.partialorder %v2275, 0.0
  %vm2608 = vcmp.gt.f32.partialorder %v2278, 0.0
  %vm2609 = vcmp.gt.f32.partialorder %v2283, 0.0
  %vm2610 = vcmp.gt.f32.partialorder %v2286, 0.0
  %vm2611 = vcmp.gt.f32.partialorder %v2291, 0.0
  %vm2612 = vcmp.gt.f32.partialorder %v2294, 0.0
  %vm2613 = vcmp.gt.f32.partialorder %v2299, 0.0
  %vm2614 = vcmp.gt.f32.partialorder %v2302, 0.0
  %vm2615 = vcmp.gt.f32.partialorder %v2307, 0.0
  %vm2616 = vcmp.gt.f32.partialorder %v2310, 0.0
  %vm2617 = vcmp.gt.f32.partialorder %v2315, 0.0
  %vm2618 = vcmp.gt.f32.partialorder %v2318, 0.0
  %vm2619 = vcmp.gt.f32.partialorder %v2323, 0.0
  %vm2620 = vcmp.gt.f32.partialorder %v2326, 0.0
  %vm2621 = vcmp.gt.f32.partialorder %v2331, 0.0
  %vm2622 = vcmp.gt.f32.partialorder %v2334, 0.0
  %vm2623 = vcmp.gt.f32.partialorder %v2339, 0.0
  %vm2624 = vcmp.gt.f32.partialorder %v2342, 0.0
  %vm2625 = vcmp.gt.f32.partialorder %v2347, 0.0
  %vm2626 = vcmp.gt.f32.partialorder %v2350, 0.0
  %vm2627 = vcmp.gt.f32.partialorder %v2355, 0.0
  %vm2628 = vcmp.gt.f32.partialorder %v2358, 0.0
  %vm2629 = vcmp.gt.f32.partialorder %v2363, 0.0
  %vm2630 = vcmp.gt.f32.partialorder %v2366, 0.0
  %vm2631 = vcmp.gt.f32.partialorder %v2371, 0.0
  %vm2632 = vcmp.gt.f32.partialorder %v2374, 0.0
  %v2633 = vmul.f32 %v1355, 0.2
  %v2634 = vmul.f32 %v1358, 0.2
  %v2635 = vmul.f32 %v1363, 0.2
  %v2636 = vmul.f32 %v1366, 0.2
  %v2637 = vmul.f32 %v1371, 0.2
  %v2638 = vmul.f32 %v1374, 0.2
  %v2639 = vmul.f32 %v1379, 0.2
  %v2640 = vmul.f32 %v1382, 0.2
  %v2641 = vmul.f32 %v1387, 0.2
  %v2642 = vmul.f32 %v1390, 0.2
  %v2643 = vmul.f32 %v1395, 0.2
  %v2644 = vmul.f32 %v1398, 0.2
  %v2645 = vmul.f32 %v1403, 0.2
  %v2646 = vmul.f32 %v1406, 0.2
  %v2647 = vmul.f32 %v1411, 0.2
  %v2648 = vmul.f32 %v1414, 0.2
  %v2649 = vmul.f32 %v1419, 0.2
  %v2650 = vmul.f32 %v1422, 0.2
  %v2651 = vmul.f32 %v1427, 0.2
  %v2652 = vmul.f32 %v1430, 0.2
  %v2653 = vmul.f32 %v1435, 0.2
  %v2654 = vmul.f32 %v1438, 0.2
  %v2655 = vmul.f32 %v1443, 0.2
  %v2656 = vmul.f32 %v1446, 0.2
  %v2657 = vmul.f32 %v1451, 0.2
  %v2658 = vmul.f32 %v1454, 0.2
  %v2659 = vmul.f32 %v1459, 0.2
  %v2660 = vmul.f32 %v1462, 0.2
  %v2661 = vmul.f32 %v1467, 0.2
  %v2662 = vmul.f32 %v1470, 0.2
  %v2663 = vmul.f32 %v1475, 0.2
  %v2664 = vmul.f32 %v1478, 0.2
  %v2665 = vmul.f32 %v1483, 0.2
  %v2666 = vmul.f32 %v1486, 0.2
  %v2667 = vmul.f32 %v1491, 0.2
  %v2668 = vmul.f32 %v1494, 0.2
  %v2669 = vmul.f32 %v1499, 0.2
  %v2670 = vmul.f32 %v1502, 0.2
  %v2671 = vmul.f32 %v1507, 0.2
  %v2672 = vmul.f32 %v1510, 0.2
  %v2673 = vmul.f32 %v1515, 0.2
  %v2674 = vmul.f32 %v1518, 0.2
  %v2675 = vmul.f32 %v1523, 0.2
  %v2676 = vmul.f32 %v1526, 0.2
  %v2677 = vmul.f32 %v1531, 0.2
  %v2678 = vmul.f32 %v1534, 0.2
  %v2679 = vmul.f32 %v1539, 0.2
  %v2680 = vmul.f32 %v1542, 0.2
  %v2681 = vmul.f32 %v1547, 0.2
  %v2682 = vmul.f32 %v1550, 0.2
  %v2683 = vmul.f32 %v1555, 0.2
  %v2684 = vmul.f32 %v1558, 0.2
  %v2685 = vmul.f32 %v1563, 0.2
  %v2686 = vmul.f32 %v1566, 0.2
  %v2687 = vmul.f32 %v1571, 0.2
  %v2688 = vmul.f32 %v1574, 0.2
  %v2689 = vmul.f32 %v1579, 0.2
  %v2690 = vmul.f32 %v1582, 0.2
  %v2691 = vmul.f32 %v1587, 0.2
  %v2692 = vmul.f32 %v1590, 0.2
  %v2693 = vmul.f32 %v1595, 0.2
  %v2694 = vmul.f32 %v1598, 0.2
  %v2695 = vmul.f32 %v1603, 0.2
  %v2696 = vmul.f32 %v1606, 0.2
  %v2697 = vmul.f32 %v1611, 0.2
  %v2698 = vmul.f32 %v1614, 0.2
  %v2699 = vmul.f32 %v1619, 0.2
  %v2700 = vmul.f32 %v1622, 0.2
  %v2701 = vmul.f32 %v1627, 0.2
  %v2702 = vmul.f32 %v1630, 0.2
  %v2703 = vmul.f32 %v1635, 0.2
  %v2704 = vmul.f32 %v1638, 0.2
  %v2705 = vmul.f32 %v1643, 0.2
  %v2706 = vmul.f32 %v1646, 0.2
  %v2707 = vmul.f32 %v1651, 0.2
  %v2708 = vmul.f32 %v1654, 0.2
  %v2709 = vmul.f32 %v1659, 0.2
  %v2710 = vmul.f32 %v1662, 0.2
  %v2711 = vmul.f32 %v1667, 0.2
  %v2712 = vmul.f32 %v1670, 0.2
  %v2713 = vmul.f32 %v1675, 0.2
  %v2714 = vmul.f32 %v1678, 0.2
  %v2715 = vmul.f32 %v1683, 0.2
  %v2716 = vmul.f32 %v1686, 0.2
  %v2717 = vmul.f32 %v1691, 0.2
  %v2718 = vmul.f32 %v1694, 0.2
  %v2719 = vmul.f32 %v1699, 0.2
  %v2720 = vmul.f32 %v1702, 0.2
  %v2721 = vmul.f32 %v1707, 0.2
  %v2722 = vmul.f32 %v1710, 0.2
  %v2723 = vmul.f32 %v1715, 0.2
  %v2724 = vmul.f32 %v1718, 0.2
  %v2725 = vmul.f32 %v1723, 0.2
  %v2726 = vmul.f32 %v1726, 0.2
  %v2727 = vmul.f32 %v1731, 0.2
  %v2728 = vmul.f32 %v1734, 0.2
  %v2729 = vmul.f32 %v1739, 0.2
  %v2730 = vmul.f32 %v1742, 0.2
  %v2731 = vmul.f32 %v1747, 0.2
  %v2732 = vmul.f32 %v1750, 0.2
  %v2733 = vmul.f32 %v1755, 0.2
  %v2734 = vmul.f32 %v1758, 0.2
  %v2735 = vmul.f32 %v1763, 0.2
  %v2736 = vmul.f32 %v1766, 0.2
  %v2737 = vmul.f32 %v1771, 0.2
  %v2738 = vmul.f32 %v1774, 0.2
  %v2739 = vmul.f32 %v1779, 0.2
  %v2740 = vmul.f32 %v1782, 0.2
  %v2741 = vmul.f32 %v1787, 0.2
  %v2742 = vmul.f32 %v1790, 0.2
  %v2743 = vmul.f32 %v1795, 0.2
  %v2744 = vmul.f32 %v1798, 0.2
  %v2745 = vmul.f32 %v1803, 0.2
  %v2746 = vmul.f32 %v1806, 0.2
  %v2747 = vmul.f32 %v1811, 0.2
  %v2748 = vmul.f32 %v1814, 0.2
  %v2749 = vmul.f32 %v1819, 0.2
  %v2750 = vmul.f32 %v1822, 0.2
  %v2751 = vmul.f32 %v1827, 0.2
  %v2752 = vmul.f32 %v1830, 0.2
  %v2753 = vmul.f32 %v1835, 0.2
  %v2754 = vmul.f32 %v1838, 0.2
  %v2755 = vmul.f32 %v1843, 0.2
  %v2756 = vmul.f32 %v1846, 0.2
  %v2757 = vmul.f32 %v1851, 0.2
  %v2758 = vmul.f32 %v1854, 0.2
  %v2759 = vmul.f32 %v1859, 0.2
  %v2760 = vmul.f32 %v1862, 0.2
  %v2761 = vmul.f32 %v1867, 0.2
  %v2762 = vmul.f32 %v1870, 0.2
  %v2763 = vmul.f32 %v1875, 0.2
  %v2764 = vmul.f32 %v1878, 0.2
  %v2765 = vmul.f32 %v1883, 0.2
  %v2766 = vmul.f32 %v1886, 0.2
  %v2767 = vmul.f32 %v1891, 0.2
  %v2768 = vmul.f32 %v1894, 0.2
  %v2769 = vmul.f32 %v1899, 0.2
  %v2770 = vmul.f32 %v1902, 0.2
  %v2771 = vmul.f32 %v1907, 0.2
  %v2772 = vmul.f32 %v1910, 0.2
  %v2773 = vmul.f32 %v1915, 0.2
  %v2774 = vmul.f32 %v1918, 0.2
  %v2775 = vmul.f32 %v1923, 0.2
  %v2776 = vmul.f32 %v1926, 0.2
  %v2777 = vmul.f32 %v1931, 0.2
  %v2778 = vmul.f32 %v1934, 0.2
  %v2779 = vmul.f32 %v1939, 0.2
  %v2780 = vmul.f32 %v1942, 0.2
  %v2781 = vmul.f32 %v1947, 0.2
  %v2782 = vmul.f32 %v1950, 0.2
  %v2783 = vmul.f32 %v1955, 0.2
  %v2784 = vmul.f32 %v1958, 0.2
  %v2785 = vmul.f32 %v1963, 0.2
  %v2786 = vmul.f32 %v1966, 0.2
  %v2787 = vmul.f32 %v1971, 0.2
  %v2788 = vmul.f32 %v1974, 0.2
  %v2789 = vmul.f32 %v1979, 0.2
  %v2790 = vmul.f32 %v1982, 0.2
  %v2791 = vmul.f32 %v1987, 0.2
  %v2792 = vmul.f32 %v1990, 0.2
  %v2793 = vmul.f32 %v1995, 0.2
  %v2794 = vmul.f32 %v1998, 0.2
  %v2795 = vmul.f32 %v2003, 0.2
  %v2796 = vmul.f32 %v2006, 0.2
  %v2797 = vmul.f32 %v2011, 0.2
  %v2798 = vmul.f32 %v2014, 0.2
  %v2799 = vmul.f32 %v2019, 0.2
  %v2800 = vmul.f32 %v2022, 0.2
  %v2801 = vmul.f32 %v2027, 0.2
  %v2802 = vmul.f32 %v2030, 0.2
  %v2803 = vmul.f32 %v2035, 0.2
  %v2804 = vmul.f32 %v2038, 0.2
  %v2805 = vmul.f32 %v2043, 0.2
  %v2806 = vmul.f32 %v2046, 0.2
  %v2807 = vmul.f32 %v2051, 0.2
  %v2808 = vmul.f32 %v2054, 0.2
  %v2809 = vmul.f32 %v2059, 0.2
  %v2810 = vmul.f32 %v2062, 0.2
  %v2811 = vmul.f32 %v2067, 0.2
  %v2812 = vmul.f32 %v2070, 0.2
  %v2813 = vmul.f32 %v2075, 0.2
  %v2814 = vmul.f32 %v2078, 0.2
  %v2815 = vmul.f32 %v2083, 0.2
  %v2816 = vmul.f32 %v2086, 0.2
  %v2817 = vmul.f32 %v2091, 0.2
  %v2818 = vmul.f32 %v2094, 0.2
  %v2819 = vmul.f32 %v2099, 0.2
  %v2820 = vmul.f32 %v2102, 0.2
  %v2821 = vmul.f32 %v2107, 0.2
  %v2822 = vmul.f32 %v2110, 0.2
  %v2823 = vmul.f32 %v2115, 0.2
  %v2824 = vmul.f32 %v2118, 0.2
  %v2825 = vmul.f32 %v2123, 0.2
  %v2826 = vmul.f32 %v2126, 0.2
  %v2827 = vmul.f32 %v2131, 0.2
  %v2828 = vmul.f32 %v2134, 0.2
  %v2829 = vmul.f32 %v2139, 0.2
  %v2830 = vmul.f32 %v2142, 0.2
  %v2831 = vmul.f32 %v2147, 0.2
  %v2832 = vmul.f32 %v2150, 0.2
  %v2833 = vmul.f32 %v2155, 0.2
  %v2834 = vmul.f32 %v2158, 0.2
  %v2835 = vmul.f32 %v2163, 0.2
  %v2836 = vmul.f32 %v2166, 0.2
  %v2837 = vmul.f32 %v2171, 0.2
  %v2838 = vmul.f32 %v2174, 0.2
  %v2839 = vmul.f32 %v2179, 0.2
  %v2840 = vmul.f32 %v2182, 0.2
  %v2841 = vmul.f32 %v2187, 0.2
  %v2842 = vmul.f32 %v2190, 0.2
  %v2843 = vmul.f32 %v2195, 0.2
  %v2844 = vmul.f32 %v2198, 0.2
  %v2845 = vmul.f32 %v2203, 0.2
  %v2846 = vmul.f32 %v2206, 0.2
  %v2847 = vmul.f32 %v2211, 0.2
  %v2848 = vmul.f32 %v2214, 0.2
  %v2849 = vmul.f32 %v2219, 0.2
  %v2850 = vmul.f32 %v2222, 0.2
  %v2851 = vmul.f32 %v2227, 0.2
  %v2852 = vmul.f32 %v2230, 0.2
  %v2853 = vmul.f32 %v2235, 0.2
  %v2854 = vmul.f32 %v2238, 0.2
  %v2855 = vmul.f32 %v2243, 0.2
  %v2856 = vmul.f32 %v2246, 0.2
  %v2857 = vmul.f32 %v2251, 0.2
  %v2858 = vmul.f32 %v2254, 0.2
  %v2859 = vmul.f32 %v2259, 0.2
  %v2860 = vmul.f32 %v2262, 0.2
  %v2861 = vmul.f32 %v2267, 0.2
  %v2862 = vmul.f32 %v2270, 0.2
  %v2863 = vmul.f32 %v2275, 0.2
  %v2864 = vmul.f32 %v2278, 0.2
  %v2865 = vmul.f32 %v2283, 0.2
  %v2866 = vmul.f32 %v2286, 0.2
  %v2867 = vmul.f32 %v2291, 0.2
  %v2868 = vmul.f32 %v2294, 0.2
  %v2869 = vmul.f32 %v2299, 0.2
  %v2870 = vmul.f32 %v2302, 0.2
  %v2871 = vmul.f32 %v2307, 0.2
  %v2872 = vmul.f32 %v2310, 0.2
  %v2873 = vmul.f32 %v2315, 0.2
  %v2874 = vmul.f32 %v2318, 0.2
  %v2875 = vmul.f32 %v2323, 0.2
  %v2876 = vmul.f32 %v2326, 0.2
  %v2877 = vmul.f32 %v2331, 0.2
  %v2878 = vmul.f32 %v2334, 0.2
  %v2879 = vmul.f32 %v2339, 0.2
  %v2880 = vmul.f32 %v2342, 0.2
  %v2881 = vmul.f32 %v2347, 0.2
  %v2882 = vmul.f32 %v2350, 0.2
  %v2883 = vmul.f32 %v2355, 0.2
  %v2884 = vmul.f32 %v2358, 0.2
  %v2885 = vmul.f32 %v2363, 0.2
  %v2886 = vmul.f32 %v2366, 0.2
  %v2887 = vmul.f32 %v2371, 0.2
  %v2888 = vmul.f32 %v2374, 0.2
  %v2889 = vsel %vm2377, %v1355, %v2633
  %v2890 = vsel %vm2378, %v1358, %v2634
  %v2891 = vsel %vm2379, %v1363, %v2635
  %v2892 = vsel %vm2380, %v1366, %v2636
  %v2893 = vsel %vm2381, %v1371, %v2637
  %v2894 = vsel %vm2382, %v1374, %v2638
  %v2895 = vsel %vm2383, %v1379, %v2639
  %v2896 = vsel %vm2384, %v1382, %v2640
  %v2897 = vsel %vm2385, %v1387, %v2641
  %v2898 = vsel %vm2386, %v1390, %v2642
  %v2899 = vsel %vm2387, %v1395, %v2643
  %v2900 = vsel %vm2388, %v1398, %v2644
  %v2901 = vsel %vm2389, %v1403, %v2645
  %v2902 = vsel %vm2390, %v1406, %v2646
  %v2903 = vsel %vm2391, %v1411, %v2647
  %v2904 = vsel %vm2392, %v1414, %v2648
  %v2905 = vsel %vm2393, %v1419, %v2649
  %v2906 = vsel %vm2394, %v1422, %v2650
  %v2907 = vsel %vm2395, %v1427, %v2651
  %v2908 = vsel %vm2396, %v1430, %v2652
  %v2909 = vsel %vm2397, %v1435, %v2653
  %v2910 = vsel %vm2398, %v1438, %v2654
  %v2911 = vsel %vm2399, %v1443, %v2655
  %v2912 = vsel %vm2400, %v1446, %v2656
  %v2913 = vsel %vm2401, %v1451, %v2657
  %v2914 = vsel %vm2402, %v1454, %v2658
  %v2915 = vsel %vm2403, %v1459, %v2659
  %v2916 = vsel %vm2404, %v1462, %v2660
  %v2917 = vsel %vm2405, %v1467, %v2661
  %v2918 = vsel %vm2406, %v1470, %v2662
  %v2919 = vsel %vm2407, %v1475, %v2663
  %v2920 = vsel %vm2408, %v1478, %v2664
  %v2921 = vsel %vm2409, %v1483, %v2665
  %v2922 = vsel %vm2410, %v1486, %v2666
  %v2923 = vsel %vm2411, %v1491, %v2667
  %v2924 = vsel %vm2412, %v1494, %v2668
  %v2925 = vsel %vm2413, %v1499, %v2669
  %v2926 = vsel %vm2414, %v1502, %v2670
  %v2927 = vsel %vm2415, %v1507, %v2671
  %v2928 = vsel %vm2416, %v1510, %v2672
  %v2929 = vsel %vm2417, %v1515, %v2673
  %v2930 = vsel %vm2418, %v1518, %v2674
  %v2931 = vsel %vm2419, %v1523, %v2675
  %v2932 = vsel %vm2420, %v1526, %v2676
  %v2933 = vsel %vm2421, %v1531, %v2677
  %v2934 = vsel %vm2422, %v1534, %v2678
  %v2935 = vsel %vm2423, %v1539, %v2679
  %v2936 = vsel %vm2424, %v1542, %v2680
  %v2937 = vsel %vm2425, %v1547, %v2681
  %v2938 = vsel %vm2426, %v1550, %v2682
  %v2939 = vsel %vm2427, %v1555, %v2683
  %v2940 = vsel %vm2428, %v1558, %v2684
  %v2941 = vsel %vm2429, %v1563, %v2685
  %v2942 = vsel %vm2430, %v1566, %v2686
  %v2943 = vsel %vm2431, %v1571, %v2687
  %v2944 = vsel %vm2432, %v1574, %v2688
  %v2945 = vsel %vm2433, %v1579, %v2689
  %v2946 = vsel %vm2434, %v1582, %v2690
  %v2947 = vsel %vm2435, %v1587, %v2691
  %v2948 = vsel %vm2436, %v1590, %v2692
  %v2949 = vsel %vm2437, %v1595, %v2693
  %v2950 = vsel %vm2438, %v1598, %v2694
  %v2951 = vsel %vm2439, %v1603, %v2695
  %v2952 = vsel %vm2440, %v1606, %v2696
  %v2953 = vsel %vm2441, %v1611, %v2697
  %v2954 = vsel %vm2442, %v1614, %v2698
  %v2955 = vsel %vm2443, %v1619, %v2699
  %v2956 = vsel %vm2444, %v1622, %v2700
  %v2957 = vsel %vm2445, %v1627, %v2701
  %v2958 = vsel %vm2446, %v1630, %v2702
  %v2959 = vsel %vm2447, %v1635, %v2703
  %v2960 = vsel %vm2448, %v1638, %v2704
  %v2961 = vsel %vm2449, %v1643, %v2705
  %v2962 = vsel %vm2450, %v1646, %v2706
  %v2963 = vsel %vm2451, %v1651, %v2707
  %v2964 = vsel %vm2452, %v1654, %v2708
  %v2965 = vsel %vm2453, %v1659, %v2709
  %v2966 = vsel %vm2454, %v1662, %v2710
  %v2967 = vsel %vm2455, %v1667, %v2711
  %v2968 = vsel %vm2456, %v1670, %v2712
  %v2969 = vsel %vm2457, %v1675, %v2713
  %v2970 = vsel %vm2458, %v1678, %v2714
  %v2971 = vsel %vm2459, %v1683, %v2715
  %v2972 = vsel %vm2460, %v1686, %v2716
  %v2973 = vsel %vm2461, %v1691, %v2717
  %v2974 = vsel %vm2462, %v1694, %v2718
  %v2975 = vsel %vm2463, %v1699, %v2719
  %v2976 = vsel %vm2464, %v1702, %v2720
  %v2977 = vsel %vm2465, %v1707, %v2721
  %v2978 = vsel %vm2466, %v1710, %v2722
  %v2979 = vsel %vm2467, %v1715, %v2723
  %v2980 = vsel %vm2468, %v1718, %v2724
  %v2981 = vsel %vm2469, %v1723, %v2725
  %v2982 = vsel %vm2470, %v1726, %v2726
  %v2983 = vsel %vm2471, %v1731, %v2727
  %v2984 = vsel %vm2472, %v1734, %v2728
  %v2985 = vsel %vm2473, %v1739, %v2729
  %v2986 = vsel %vm2474, %v1742, %v2730
  %v2987 = vsel %vm2475, %v1747, %v2731
  %v2988 = vsel %vm2476, %v1750, %v2732
  %v2989 = vsel %vm2477, %v1755, %v2733
  %v2990 = vsel %vm2478, %v1758, %v2734
  %v2991 = vsel %vm2479, %v1763, %v2735
  %v2992 = vsel %vm2480, %v1766, %v2736
  %v2993 = vsel %vm2481, %v1771, %v2737
  %v2994 = vsel %vm2482, %v1774, %v2738
  %v2995 = vsel %vm2483, %v1779, %v2739
  %v2996 = vsel %vm2484, %v1782, %v2740
  %v2997 = vsel %vm2485, %v1787, %v2741
  %v2998 = vsel %vm2486, %v1790, %v2742
  %v2999 = vsel %vm2487, %v1795, %v2743
  %v3000 = vsel %vm2488, %v1798, %v2744
  %v3001 = vsel %vm2489, %v1803, %v2745
  %v3002 = vsel %vm2490, %v1806, %v2746
  %v3003 = vsel %vm2491, %v1811, %v2747
  %v3004 = vsel %vm2492, %v1814, %v2748
  %v3005 = vsel %vm2493, %v1819, %v2749
  %v3006 = vsel %vm2494, %v1822, %v2750
  %v3007 = vsel %vm2495, %v1827, %v2751
  %v3008 = vsel %vm2496, %v1830, %v2752
  %v3009 = vsel %vm2497, %v1835, %v2753
  %v3010 = vsel %vm2498, %v1838, %v2754
  %v3011 = vsel %vm2499, %v1843, %v2755
  %v3012 = vsel %vm2500, %v1846, %v2756
  %v3013 = vsel %vm2501, %v1851, %v2757
  %v3014 = vsel %vm2502, %v1854, %v2758
  %v3015 = vsel %vm2503, %v1859, %v2759
  %v3016 = vsel %vm2504, %v1862, %v2760
  %v3017 = vsel %vm2505, %v1867, %v2761
  %v3018 = vsel %vm2506, %v1870, %v2762
  %v3019 = vsel %vm2507, %v1875, %v2763
  %v3020 = vsel %vm2508, %v1878, %v2764
  %v3021 = vsel %vm2509, %v1883, %v2765
  %v3022 = vsel %vm2510, %v1886, %v2766
  %v3023 = vsel %vm2511, %v1891, %v2767
  %v3024 = vsel %vm2512, %v1894, %v2768
  %v3025 = vsel %vm2513, %v1899, %v2769
  %v3026 = vsel %vm2514, %v1902, %v2770
  %v3027 = vsel %vm2515, %v1907, %v2771
  %v3028 = vsel %vm2516, %v1910, %v2772
  %v3029 = vsel %vm2517, %v1915, %v2773
  %v3030 = vsel %vm2518, %v1918, %v2774
  %v3031 = vsel %vm2519, %v1923, %v2775
  %v3032 = vsel %vm2520, %v1926, %v2776
  %v3033 = vsel %vm2521, %v1931, %v2777
  %v3034 = vsel %vm2522, %v1934, %v2778
  %v3035 = vsel %vm2523, %v1939, %v2779
  %v3036 = vsel %vm2524, %v1942, %v2780
  %v3037 = vsel %vm2525, %v1947, %v2781
  %v3038 = vsel %vm2526, %v1950, %v2782
  %v3039 = vsel %vm2527, %v1955, %v2783
  %v3040 = vsel %vm2528, %v1958, %v2784
  %v3041 = vsel %vm2529, %v1963, %v2785
  %v3042 = vsel %vm2530, %v1966, %v2786
  %v3043 = vsel %vm2531, %v1971, %v2787
  %v3044 = vsel %vm2532, %v1974, %v2788
  %v3045 = vsel %vm2533, %v1979, %v2789
  %v3046 = vsel %vm2534, %v1982, %v2790
  %v3047 = vsel %vm2535, %v1987, %v2791
  %v3048 = vsel %vm2536, %v1990, %v2792
  %v3049 = vsel %vm2537, %v1995, %v2793
  %v3050 = vsel %vm2538, %v1998, %v2794
  %v3051 = vsel %vm2539, %v2003, %v2795
  %v3052 = vsel %vm2540, %v2006, %v2796
  %v3053 = vsel %vm2541, %v2011, %v2797
  %v3054 = vsel %vm2542, %v2014, %v2798
  %v3055 = vsel %vm2543, %v2019, %v2799
  %v3056 = vsel %vm2544, %v2022, %v2800
  %v3057 = vsel %vm2545, %v2027, %v2801
  %v3058 = vsel %vm2546, %v2030, %v2802
  %v3059 = vsel %vm2547, %v2035, %v2803
  %v3060 = vsel %vm2548, %v2038, %v2804
  %v3061 = vsel %vm2549, %v2043, %v2805
  %v3062 = vsel %vm2550, %v2046, %v2806
  %v3063 = vsel %vm2551, %v2051, %v2807
  %v3064 = vsel %vm2552, %v2054, %v2808
  %v3065 = vsel %vm2553, %v2059, %v2809
  %v3066 = vsel %vm2554, %v2062, %v2810
  %v3067 = vsel %vm2555, %v2067, %v2811
  %v3068 = vsel %vm2556, %v2070, %v2812
  %v3069 = vsel %vm2557, %v2075, %v2813
  %v3070 = vsel %vm2558, %v2078, %v2814
  %v3071 = vsel %vm2559, %v2083, %v2815
  %v3072 = vsel %vm2560, %v2086, %v2816
  %v3073 = vsel %vm2561, %v2091, %v2817
  %v3074 = vsel %vm2562, %v2094, %v2818
  %v3075 = vsel %vm2563, %v2099, %v2819
  %v3076 = vsel %vm2564, %v2102, %v2820
  %v3077 = vsel %vm2565, %v2107, %v2821
  %v3078 = vsel %vm2566, %v2110, %v2822
  %v3079 = vsel %vm2567, %v2115, %v2823
  %v3080 = vsel %vm2568, %v2118, %v2824
  %v3081 = vsel %vm2569, %v2123, %v2825
  %v3082 = vsel %vm2570, %v2126, %v2826
  %v3083 = vsel %vm2571, %v2131, %v2827
  %v3084 = vsel %vm2572, %v2134, %v2828
  %v3085 = vsel %vm2573, %v2139, %v2829
  %v3086 = vsel %vm2574, %v2142, %v2830
  %v3087 = vsel %vm2575, %v2147, %v2831
  %v3088 = vsel %vm2576, %v2150, %v2832
  %v3089 = vsel %vm2577, %v2155, %v2833
  %v3090 = vsel %vm2578, %v2158, %v2834
  %v3091 = vsel %vm2579, %v2163, %v2835
  %v3092 = vsel %vm2580, %v2166, %v2836
  %v3093 = vsel %vm2581, %v2171, %v2837
  %v3094 = vsel %vm2582, %v2174, %v2838
  %v3095 = vsel %vm2583, %v2179, %v2839
  %v3096 = vsel %vm2584, %v2182, %v2840
  %v3097 = vsel %vm2585, %v2187, %v2841
  %v3098 = vsel %vm2586, %v2190, %v2842
  %v3099 = vsel %vm2587, %v2195, %v2843
  %v3100 = vsel %vm2588, %v2198, %v2844
  %v3101 = vsel %vm2589, %v2203, %v2845
  %v3102 = vsel %vm2590, %v2206, %v2846
  %v3103 = vsel %vm2591, %v2211, %v2847
  %v3104 = vsel %vm2592, %v2214, %v2848
  %v3105 = vsel %vm2593, %v2219, %v2849
  %v3106 = vsel %vm2594, %v2222, %v2850
  %v3107 = vsel %vm2595, %v2227, %v2851
  %v3108 = vsel %vm2596, %v2230, %v2852
  %v3109 = vsel %vm2597, %v2235, %v2853
  %v3110 = vsel %vm2598, %v2238, %v2854
  %v3111 = vsel %vm2599, %v2243, %v2855
  %v3112 = vsel %vm2600, %v2246, %v2856
  %v3113 = vsel %vm2601, %v2251, %v2857
  %v3114 = vsel %vm2602, %v2254, %v2858
  %v3115 = vsel %vm2603, %v2259, %v2859
  %v3116 = vsel %vm2604, %v2262, %v2860
  %v3117 = vsel %vm2605, %v2267, %v2861
  %v3118 = vsel %vm2606, %v2270, %v2862
  %v3119 = vsel %vm2607, %v2275, %v2863
  %v3120 = vsel %vm2608, %v2278, %v2864
  %v3121 = vsel %vm2609, %v2283, %v2865
  %v3122 = vsel %vm2610, %v2286, %v2866
  %v3123 = vsel %vm2611, %v2291, %v2867
  %v3124 = vsel %vm2612, %v2294, %v2868
  %v3125 = vsel %vm2613, %v2299, %v2869
  %v3126 = vsel %vm2614, %v2302, %v2870
  %v3127 = vsel %vm2615, %v2307, %v2871
  %v3128 = vsel %vm2616, %v2310, %v2872
  %v3129 = vsel %vm2617, %v2315, %v2873
  %v3130 = vsel %vm2618, %v2318, %v2874
  %v3131 = vsel %vm2619, %v2323, %v2875
  %v3132 = vsel %vm2620, %v2326, %v2876
  %v3133 = vsel %vm2621, %v2331, %v2877
  %v3134 = vsel %vm2622, %v2334, %v2878
  %v3135 = vsel %vm2623, %v2339, %v2879
  %v3136 = vsel %vm2624, %v2342, %v2880
  %v3137 = vsel %vm2625, %v2347, %v2881
  %v3138 = vsel %vm2626, %v2350, %v2882
  %v3139 = vsel %vm2627, %v2355, %v2883
  %v3140 = vsel %vm2628, %v2358, %v2884
  %v3141 = vsel %vm2629, %v2363, %v2885
  %v3142 = vsel %vm2630, %v2366, %v2886
  %v3143 = vsel %vm2631, %v2371, %v2887
  %v3144 = vsel %vm2632, %v2374, %v2888
  %v3145 = vpack.c.bf16 %v2890, %v2889
  %v3146 = vpack.c.bf16 %v2892, %v2891
  %v3147 = vpack.c.bf16 %v2894, %v2893
  %v3148 = vpack.c.bf16 %v2896, %v2895
  %v3149 = vpack.c.bf16 %v2898, %v2897
  %v3150 = vpack.c.bf16 %v2900, %v2899
  %v3151 = vpack.c.bf16 %v2902, %v2901
  %v3152 = vpack.c.bf16 %v2904, %v2903
  %v3153 = vpack.c.bf16 %v2906, %v2905
  %v3154 = vpack.c.bf16 %v2908, %v2907
  %v3155 = vpack.c.bf16 %v2910, %v2909
  %v3156 = vpack.c.bf16 %v2912, %v2911
  %v3157 = vpack.c.bf16 %v2914, %v2913
  %v3158 = vpack.c.bf16 %v2916, %v2915
  %v3159 = vpack.c.bf16 %v2918, %v2917
  %v3160 = vpack.c.bf16 %v2920, %v2919
  %v3161 = vpack.c.bf16 %v2922, %v2921
  %v3162 = vpack.c.bf16 %v2924, %v2923
  %v3163 = vpack.c.bf16 %v2926, %v2925
  %v3164 = vpack.c.bf16 %v2928, %v2927
  %v3165 = vpack.c.bf16 %v2930, %v2929
  %v3166 = vpack.c.bf16 %v2932, %v2931
  %v3167 = vpack.c.bf16 %v2934, %v2933
  %v3168 = vpack.c.bf16 %v2936, %v2935
  %v3169 = vpack.c.bf16 %v2938, %v2937
  %v3170 = vpack.c.bf16 %v2940, %v2939
  %v3171 = vpack.c.bf16 %v2942, %v2941
  %v3172 = vpack.c.bf16 %v2944, %v2943
  %v3173 = vpack.c.bf16 %v2946, %v2945
  %v3174 = vpack.c.bf16 %v2948, %v2947
  %v3175 = vpack.c.bf16 %v2950, %v2949
  %v3176 = vpack.c.bf16 %v2952, %v2951
  %v3177 = vpack.c.bf16 %v2954, %v2953
  %v3178 = vpack.c.bf16 %v2956, %v2955
  %v3179 = vpack.c.bf16 %v2958, %v2957
  %v3180 = vpack.c.bf16 %v2960, %v2959
  %v3181 = vpack.c.bf16 %v2962, %v2961
  %v3182 = vpack.c.bf16 %v2964, %v2963
  %v3183 = vpack.c.bf16 %v2966, %v2965
  %v3184 = vpack.c.bf16 %v2968, %v2967
  %v3185 = vpack.c.bf16 %v2970, %v2969
  %v3186 = vpack.c.bf16 %v2972, %v2971
  %v3187 = vpack.c.bf16 %v2974, %v2973
  %v3188 = vpack.c.bf16 %v2976, %v2975
  %v3189 = vpack.c.bf16 %v2978, %v2977
  %v3190 = vpack.c.bf16 %v2980, %v2979
  %v3191 = vpack.c.bf16 %v2982, %v2981
  %v3192 = vpack.c.bf16 %v2984, %v2983
  %v3193 = vpack.c.bf16 %v2986, %v2985
  %v3194 = vpack.c.bf16 %v2988, %v2987
  %v3195 = vpack.c.bf16 %v2990, %v2989
  %v3196 = vpack.c.bf16 %v2992, %v2991
  %v3197 = vpack.c.bf16 %v2994, %v2993
  %v3198 = vpack.c.bf16 %v2996, %v2995
  %v3199 = vpack.c.bf16 %v2998, %v2997
  %v3200 = vpack.c.bf16 %v3000, %v2999
  %v3201 = vpack.c.bf16 %v3002, %v3001
  %v3202 = vpack.c.bf16 %v3004, %v3003
  %v3203 = vpack.c.bf16 %v3006, %v3005
  %v3204 = vpack.c.bf16 %v3008, %v3007
  %v3205 = vpack.c.bf16 %v3010, %v3009
  %v3206 = vpack.c.bf16 %v3012, %v3011
  %v3207 = vpack.c.bf16 %v3014, %v3013
  %v3208 = vpack.c.bf16 %v3016, %v3015
  %v3209 = vpack.c.bf16 %v3018, %v3017
  %v3210 = vpack.c.bf16 %v3020, %v3019
  %v3211 = vpack.c.bf16 %v3022, %v3021
  %v3212 = vpack.c.bf16 %v3024, %v3023
  %v3213 = vpack.c.bf16 %v3026, %v3025
  %v3214 = vpack.c.bf16 %v3028, %v3027
  %v3215 = vpack.c.bf16 %v3030, %v3029
  %v3216 = vpack.c.bf16 %v3032, %v3031
  %v3217 = vpack.c.bf16 %v3034, %v3033
  %v3218 = vpack.c.bf16 %v3036, %v3035
  %v3219 = vpack.c.bf16 %v3038, %v3037
  %v3220 = vpack.c.bf16 %v3040, %v3039
  %v3221 = vpack.c.bf16 %v3042, %v3041
  %v3222 = vpack.c.bf16 %v3044, %v3043
  %v3223 = vpack.c.bf16 %v3046, %v3045
  %v3224 = vpack.c.bf16 %v3048, %v3047
  %v3225 = vpack.c.bf16 %v3050, %v3049
  %v3226 = vpack.c.bf16 %v3052, %v3051
  %v3227 = vpack.c.bf16 %v3054, %v3053
  %v3228 = vpack.c.bf16 %v3056, %v3055
  %v3229 = vpack.c.bf16 %v3058, %v3057
  %v3230 = vpack.c.bf16 %v3060, %v3059
  %v3231 = vpack.c.bf16 %v3062, %v3061
  %v3232 = vpack.c.bf16 %v3064, %v3063
  %v3233 = vpack.c.bf16 %v3066, %v3065
  %v3234 = vpack.c.bf16 %v3068, %v3067
  %v3235 = vpack.c.bf16 %v3070, %v3069
  %v3236 = vpack.c.bf16 %v3072, %v3071
  %v3237 = vpack.c.bf16 %v3074, %v3073
  %v3238 = vpack.c.bf16 %v3076, %v3075
  %v3239 = vpack.c.bf16 %v3078, %v3077
  %v3240 = vpack.c.bf16 %v3080, %v3079
  %v3241 = vpack.c.bf16 %v3082, %v3081
  %v3242 = vpack.c.bf16 %v3084, %v3083
  %v3243 = vpack.c.bf16 %v3086, %v3085
  %v3244 = vpack.c.bf16 %v3088, %v3087
  %v3245 = vpack.c.bf16 %v3090, %v3089
  %v3246 = vpack.c.bf16 %v3092, %v3091
  %v3247 = vpack.c.bf16 %v3094, %v3093
  %v3248 = vpack.c.bf16 %v3096, %v3095
  %v3249 = vpack.c.bf16 %v3098, %v3097
  %v3250 = vpack.c.bf16 %v3100, %v3099
  %v3251 = vpack.c.bf16 %v3102, %v3101
  %v3252 = vpack.c.bf16 %v3104, %v3103
  %v3253 = vpack.c.bf16 %v3106, %v3105
  %v3254 = vpack.c.bf16 %v3108, %v3107
  %v3255 = vpack.c.bf16 %v3110, %v3109
  %v3256 = vpack.c.bf16 %v3112, %v3111
  %v3257 = vpack.c.bf16 %v3114, %v3113
  %v3258 = vpack.c.bf16 %v3116, %v3115
  %v3259 = vpack.c.bf16 %v3118, %v3117
  %v3260 = vpack.c.bf16 %v3120, %v3119
  %v3261 = vpack.c.bf16 %v3122, %v3121
  %v3262 = vpack.c.bf16 %v3124, %v3123
  %v3263 = vpack.c.bf16 %v3126, %v3125
  %v3264 = vpack.c.bf16 %v3128, %v3127
  %v3265 = vpack.c.bf16 %v3130, %v3129
  %v3266 = vpack.c.bf16 %v3132, %v3131
  %v3267 = vpack.c.bf16 %v3134, %v3133
  %v3268 = vpack.c.bf16 %v3136, %v3135
  %v3269 = vpack.c.bf16 %v3138, %v3137
  %v3270 = vpack.c.bf16 %v3140, %v3139
  %v3271 = vpack.c.bf16 %v3142, %v3141
  %v3272 = vpack.c.bf16 %v3144, %v3143
  %v3401 = vunpack.c.l.b16 %v3145
  %v3402 = vunpack.c.h.b16 %v3145
  %v3403 = vunpack.c.l.b16 %v3146
  %v3404 = vunpack.c.h.b16 %v3146
  %v3405 = vunpack.c.l.b16 %v3147
  %v3406 = vunpack.c.h.b16 %v3147
  %v3407 = vunpack.c.l.b16 %v3148
  %v3408 = vunpack.c.h.b16 %v3148
  %v3409 = vunpack.c.l.b16 %v3149
  %v3410 = vunpack.c.h.b16 %v3149
  %v3411 = vunpack.c.l.b16 %v3150
  %v3412 = vunpack.c.h.b16 %v3150
  %v3413 = vunpack.c.l.b16 %v3151
  %v3414 = vunpack.c.h.b16 %v3151
  %v3415 = vunpack.c.l.b16 %v3152
  %v3416 = vunpack.c.h.b16 %v3152
  %v3417 = vunpack.c.l.b16 %v3153
  %v3418 = vunpack.c.h.b16 %v3153
  %v3419 = vunpack.c.l.b16 %v3154
  %v3420 = vunpack.c.h.b16 %v3154
  %v3421 = vunpack.c.l.b16 %v3155
  %v3422 = vunpack.c.h.b16 %v3155
  %v3423 = vunpack.c.l.b16 %v3156
  %v3424 = vunpack.c.h.b16 %v3156
  %v3425 = vunpack.c.l.b16 %v3157
  %v3426 = vunpack.c.h.b16 %v3157
  %v3427 = vunpack.c.l.b16 %v3158
  %v3428 = vunpack.c.h.b16 %v3158
  %v3429 = vunpack.c.l.b16 %v3159
  %v3430 = vunpack.c.h.b16 %v3159
  %v3431 = vunpack.c.l.b16 %v3160
  %v3432 = vunpack.c.h.b16 %v3160
  %v3433 = vunpack.c.l.b16 %v3161
  %v3434 = vunpack.c.h.b16 %v3161
  %v3435 = vunpack.c.l.b16 %v3162
  %v3436 = vunpack.c.h.b16 %v3162
  %v3437 = vunpack.c.l.b16 %v3163
  %v3438 = vunpack.c.h.b16 %v3163
  %v3439 = vunpack.c.l.b16 %v3164
  %v3440 = vunpack.c.h.b16 %v3164
  %v3441 = vunpack.c.l.b16 %v3165
  %v3442 = vunpack.c.h.b16 %v3165
  %v3443 = vunpack.c.l.b16 %v3166
  %v3444 = vunpack.c.h.b16 %v3166
  %v3445 = vunpack.c.l.b16 %v3167
  %v3446 = vunpack.c.h.b16 %v3167
  %v3447 = vunpack.c.l.b16 %v3168
  %v3448 = vunpack.c.h.b16 %v3168
  %v3449 = vunpack.c.l.b16 %v3169
  %v3450 = vunpack.c.h.b16 %v3169
  %v3451 = vunpack.c.l.b16 %v3170
  %v3452 = vunpack.c.h.b16 %v3170
  %v3453 = vunpack.c.l.b16 %v3171
  %v3454 = vunpack.c.h.b16 %v3171
  %v3455 = vunpack.c.l.b16 %v3172
  %v3456 = vunpack.c.h.b16 %v3172
  %v3457 = vunpack.c.l.b16 %v3173
  %v3458 = vunpack.c.h.b16 %v3173
  %v3459 = vunpack.c.l.b16 %v3174
  %v3460 = vunpack.c.h.b16 %v3174
  %v3461 = vunpack.c.l.b16 %v3175
  %v3462 = vunpack.c.h.b16 %v3175
  %v3463 = vunpack.c.l.b16 %v3176
  %v3464 = vunpack.c.h.b16 %v3176
  %v3465 = vunpack.c.l.b16 %v3177
  %v3466 = vunpack.c.h.b16 %v3177
  %v3467 = vunpack.c.l.b16 %v3178
  %v3468 = vunpack.c.h.b16 %v3178
  %v3469 = vunpack.c.l.b16 %v3179
  %v3470 = vunpack.c.h.b16 %v3179
  %v3471 = vunpack.c.l.b16 %v3180
  %v3472 = vunpack.c.h.b16 %v3180
  %v3473 = vunpack.c.l.b16 %v3181
  %v3474 = vunpack.c.h.b16 %v3181
  %v3475 = vunpack.c.l.b16 %v3182
  %v3476 = vunpack.c.h.b16 %v3182
  %v3477 = vunpack.c.l.b16 %v3183
  %v3478 = vunpack.c.h.b16 %v3183
  %v3479 = vunpack.c.l.b16 %v3184
  %v3480 = vunpack.c.h.b16 %v3184
  %v3481 = vunpack.c.l.b16 %v3185
  %v3482 = vunpack.c.h.b16 %v3185
  %v3483 = vunpack.c.l.b16 %v3186
  %v3484 = vunpack.c.h.b16 %v3186
  %v3485 = vunpack.c.l.b16 %v3187
  %v3486 = vunpack.c.h.b16 %v3187
  %v3487 = vunpack.c.l.b16 %v3188
  %v3488 = vunpack.c.h.b16 %v3188
  %v3489 = vunpack.c.l.b16 %v3189
  %v3490 = vunpack.c.h.b16 %v3189
  %v3491 = vunpack.c.l.b16 %v3190
  %v3492 = vunpack.c.h.b16 %v3190
  %v3493 = vunpack.c.l.b16 %v3191
  %v3494 = vunpack.c.h.b16 %v3191
  %v3495 = vunpack.c.l.b16 %v3192
  %v3496 = vunpack.c.h.b16 %v3192
  %v3497 = vunpack.c.l.b16 %v3193
  %v3498 = vunpack.c.h.b16 %v3193
  %v3499 = vunpack.c.l.b16 %v3194
  %v3500 = vunpack.c.h.b16 %v3194
  %v3501 = vunpack.c.l.b16 %v3195
  %v3502 = vunpack.c.h.b16 %v3195
  %v3503 = vunpack.c.l.b16 %v3196
  %v3504 = vunpack.c.h.b16 %v3196
  %v3505 = vunpack.c.l.b16 %v3197
  %v3506 = vunpack.c.h.b16 %v3197
  %v3507 = vunpack.c.l.b16 %v3198
  %v3508 = vunpack.c.h.b16 %v3198
  %v3509 = vunpack.c.l.b16 %v3199
  %v3510 = vunpack.c.h.b16 %v3199
  %v3511 = vunpack.c.l.b16 %v3200
  %v3512 = vunpack.c.h.b16 %v3200
  %v3513 = vunpack.c.l.b16 %v3201
  %v3514 = vunpack.c.h.b16 %v3201
  %v3515 = vunpack.c.l.b16 %v3202
  %v3516 = vunpack.c.h.b16 %v3202
  %v3517 = vunpack.c.l.b16 %v3203
  %v3518 = vunpack.c.h.b16 %v3203
  %v3519 = vunpack.c.l.b16 %v3204
  %v3520 = vunpack.c.h.b16 %v3204
  %v3521 = vunpack.c.l.b16 %v3205
  %v3522 = vunpack.c.h.b16 %v3205
  %v3523 = vunpack.c.l.b16 %v3206
  %v3524 = vunpack.c.h.b16 %v3206
  %v3525 = vunpack.c.l.b16 %v3207
  %v3526 = vunpack.c.h.b16 %v3207
  %v3527 = vunpack.c.l.b16 %v3208
  %v3528 = vunpack.c.h.b16 %v3208
  %v3529 = vunpack.c.l.b16 %v3209
  %v3530 = vunpack.c.h.b16 %v3209
  %v3531 = vunpack.c.l.b16 %v3210
  %v3532 = vunpack.c.h.b16 %v3210
  %v3533 = vunpack.c.l.b16 %v3211
  %v3534 = vunpack.c.h.b16 %v3211
  %v3535 = vunpack.c.l.b16 %v3212
  %v3536 = vunpack.c.h.b16 %v3212
  %v3537 = vunpack.c.l.b16 %v3213
  %v3538 = vunpack.c.h.b16 %v3213
  %v3539 = vunpack.c.l.b16 %v3214
  %v3540 = vunpack.c.h.b16 %v3214
  %v3541 = vunpack.c.l.b16 %v3215
  %v3542 = vunpack.c.h.b16 %v3215
  %v3543 = vunpack.c.l.b16 %v3216
  %v3544 = vunpack.c.h.b16 %v3216
  %v3545 = vunpack.c.l.b16 %v3217
  %v3546 = vunpack.c.h.b16 %v3217
  %v3547 = vunpack.c.l.b16 %v3218
  %v3548 = vunpack.c.h.b16 %v3218
  %v3549 = vunpack.c.l.b16 %v3219
  %v3550 = vunpack.c.h.b16 %v3219
  %v3551 = vunpack.c.l.b16 %v3220
  %v3552 = vunpack.c.h.b16 %v3220
  %v3553 = vunpack.c.l.b16 %v3221
  %v3554 = vunpack.c.h.b16 %v3221
  %v3555 = vunpack.c.l.b16 %v3222
  %v3556 = vunpack.c.h.b16 %v3222
  %v3557 = vunpack.c.l.b16 %v3223
  %v3558 = vunpack.c.h.b16 %v3223
  %v3559 = vunpack.c.l.b16 %v3224
  %v3560 = vunpack.c.h.b16 %v3224
  %v3561 = vunpack.c.l.b16 %v3225
  %v3562 = vunpack.c.h.b16 %v3225
  %v3563 = vunpack.c.l.b16 %v3226
  %v3564 = vunpack.c.h.b16 %v3226
  %v3565 = vunpack.c.l.b16 %v3227
  %v3566 = vunpack.c.h.b16 %v3227
  %v3567 = vunpack.c.l.b16 %v3228
  %v3568 = vunpack.c.h.b16 %v3228
  %v3569 = vunpack.c.l.b16 %v3229
  %v3570 = vunpack.c.h.b16 %v3229
  %v3571 = vunpack.c.l.b16 %v3230
  %v3572 = vunpack.c.h.b16 %v3230
  %v3573 = vunpack.c.l.b16 %v3231
  %v3574 = vunpack.c.h.b16 %v3231
  %v3575 = vunpack.c.l.b16 %v3232
  %v3576 = vunpack.c.h.b16 %v3232
  %v3577 = vunpack.c.l.b16 %v3233
  %v3578 = vunpack.c.h.b16 %v3233
  %v3579 = vunpack.c.l.b16 %v3234
  %v3580 = vunpack.c.h.b16 %v3234
  %v3581 = vunpack.c.l.b16 %v3235
  %v3582 = vunpack.c.h.b16 %v3235
  %v3583 = vunpack.c.l.b16 %v3236
  %v3584 = vunpack.c.h.b16 %v3236
  %v3585 = vunpack.c.l.b16 %v3237
  %v3586 = vunpack.c.h.b16 %v3237
  %v3587 = vunpack.c.l.b16 %v3238
  %v3588 = vunpack.c.h.b16 %v3238
  %v3589 = vunpack.c.l.b16 %v3239
  %v3590 = vunpack.c.h.b16 %v3239
  %v3591 = vunpack.c.l.b16 %v3240
  %v3592 = vunpack.c.h.b16 %v3240
  %v3593 = vunpack.c.l.b16 %v3241
  %v3594 = vunpack.c.h.b16 %v3241
  %v3595 = vunpack.c.l.b16 %v3242
  %v3596 = vunpack.c.h.b16 %v3242
  %v3597 = vunpack.c.l.b16 %v3243
  %v3598 = vunpack.c.h.b16 %v3243
  %v3599 = vunpack.c.l.b16 %v3244
  %v3600 = vunpack.c.h.b16 %v3244
  %v3601 = vunpack.c.l.b16 %v3245
  %v3602 = vunpack.c.h.b16 %v3245
  %v3603 = vunpack.c.l.b16 %v3246
  %v3604 = vunpack.c.h.b16 %v3246
  %v3605 = vunpack.c.l.b16 %v3247
  %v3606 = vunpack.c.h.b16 %v3247
  %v3607 = vunpack.c.l.b16 %v3248
  %v3608 = vunpack.c.h.b16 %v3248
  %v3609 = vunpack.c.l.b16 %v3249
  %v3610 = vunpack.c.h.b16 %v3249
  %v3611 = vunpack.c.l.b16 %v3250
  %v3612 = vunpack.c.h.b16 %v3250
  %v3613 = vunpack.c.l.b16 %v3251
  %v3614 = vunpack.c.h.b16 %v3251
  %v3615 = vunpack.c.l.b16 %v3252
  %v3616 = vunpack.c.h.b16 %v3252
  %v3617 = vunpack.c.l.b16 %v3253
  %v3618 = vunpack.c.h.b16 %v3253
  %v3619 = vunpack.c.l.b16 %v3254
  %v3620 = vunpack.c.h.b16 %v3254
  %v3621 = vunpack.c.l.b16 %v3255
  %v3622 = vunpack.c.h.b16 %v3255
  %v3623 = vunpack.c.l.b16 %v3256
  %v3624 = vunpack.c.h.b16 %v3256
  %v3625 = vunpack.c.l.b16 %v3257
  %v3626 = vunpack.c.h.b16 %v3257
  %v3627 = vunpack.c.l.b16 %v3258
  %v3628 = vunpack.c.h.b16 %v3258
  %v3629 = vunpack.c.l.b16 %v3259
  %v3630 = vunpack.c.h.b16 %v3259
  %v3631 = vunpack.c.l.b16 %v3260
  %v3632 = vunpack.c.h.b16 %v3260
  %v3633 = vunpack.c.l.b16 %v3261
  %v3634 = vunpack.c.h.b16 %v3261
  %v3635 = vunpack.c.l.b16 %v3262
  %v3636 = vunpack.c.h.b16 %v3262
  %v3637 = vunpack.c.l.b16 %v3263
  %v3638 = vunpack.c.h.b16 %v3263
  %v3639 = vunpack.c.l.b16 %v3264
  %v3640 = vunpack.c.h.b16 %v3264
  %v3641 = vunpack.c.l.b16 %v3265
  %v3642 = vunpack.c.h.b16 %v3265
  %v3643 = vunpack.c.l.b16 %v3266
  %v3644 = vunpack.c.h.b16 %v3266
  %v3645 = vunpack.c.l.b16 %v3267
  %v3646 = vunpack.c.h.b16 %v3267
  %v3647 = vunpack.c.l.b16 %v3268
  %v3648 = vunpack.c.h.b16 %v3268
  %v3649 = vunpack.c.l.b16 %v3269
  %v3650 = vunpack.c.h.b16 %v3269
  %v3651 = vunpack.c.l.b16 %v3270
  %v3652 = vunpack.c.h.b16 %v3270
  %v3653 = vunpack.c.l.b16 %v3271
  %v3654 = vunpack.c.h.b16 %v3271
  %v3655 = vunpack.c.l.b16 %v3272
  %v3656 = vunpack.c.h.b16 %v3272
  %v3657 = vpack.c.b16 %v3401, %v3401
  %v3658 = vpack.c.b16 %v3402, %v3402
  %v3659 = vpack.c.b16 %v3403, %v3403
  %v3660 = vpack.c.b16 %v3404, %v3404
  %v3661 = vpack.c.b16 %v3405, %v3405
  %v3662 = vpack.c.b16 %v3406, %v3406
  %v3663 = vpack.c.b16 %v3407, %v3407
  %v3664 = vpack.c.b16 %v3408, %v3408
  %v3665 = vpack.c.b16 %v3409, %v3409
  %v3666 = vpack.c.b16 %v3410, %v3410
  %v3667 = vpack.c.b16 %v3411, %v3411
  %v3668 = vpack.c.b16 %v3412, %v3412
  %v3669 = vpack.c.b16 %v3413, %v3413
  %v3670 = vpack.c.b16 %v3414, %v3414
  %v3671 = vpack.c.b16 %v3415, %v3415
  %v3672 = vpack.c.b16 %v3416, %v3416
  %v3673 = vpack.c.b16 %v3417, %v3417
  %v3674 = vpack.c.b16 %v3418, %v3418
  %v3675 = vpack.c.b16 %v3419, %v3419
  %v3676 = vpack.c.b16 %v3420, %v3420
  %v3677 = vpack.c.b16 %v3421, %v3421
  %v3678 = vpack.c.b16 %v3422, %v3422
  %v3679 = vpack.c.b16 %v3423, %v3423
  %v3680 = vpack.c.b16 %v3424, %v3424
  %v3681 = vpack.c.b16 %v3425, %v3425
  %v3682 = vpack.c.b16 %v3426, %v3426
  %v3683 = vpack.c.b16 %v3427, %v3427
  %v3684 = vpack.c.b16 %v3428, %v3428
  %v3685 = vpack.c.b16 %v3429, %v3429
  %v3686 = vpack.c.b16 %v3430, %v3430
  %v3687 = vpack.c.b16 %v3431, %v3431
  %v3688 = vpack.c.b16 %v3432, %v3432
  %v3689 = vpack.c.b16 %v3433, %v3433
  %v3690 = vpack.c.b16 %v3434, %v3434
  %v3691 = vpack.c.b16 %v3435, %v3435
  %v3692 = vpack.c.b16 %v3436, %v3436
  %v3693 = vpack.c.b16 %v3437, %v3437
  %v3694 = vpack.c.b16 %v3438, %v3438
  %v3695 = vpack.c.b16 %v3439, %v3439
  %v3696 = vpack.c.b16 %v3440, %v3440
  %v3697 = vpack.c.b16 %v3441, %v3441
  %v3698 = vpack.c.b16 %v3442, %v3442
  %v3699 = vpack.c.b16 %v3443, %v3443
  %v3700 = vpack.c.b16 %v3444, %v3444
  %v3701 = vpack.c.b16 %v3445, %v3445
  %v3702 = vpack.c.b16 %v3446, %v3446
  %v3703 = vpack.c.b16 %v3447, %v3447
  %v3704 = vpack.c.b16 %v3448, %v3448
  %v3705 = vpack.c.b16 %v3449, %v3449
  %v3706 = vpack.c.b16 %v3450, %v3450
  %v3707 = vpack.c.b16 %v3451, %v3451
  %v3708 = vpack.c.b16 %v3452, %v3452
  %v3709 = vpack.c.b16 %v3453, %v3453
  %v3710 = vpack.c.b16 %v3454, %v3454
  %v3711 = vpack.c.b16 %v3455, %v3455
  %v3712 = vpack.c.b16 %v3456, %v3456
  %v3713 = vpack.c.b16 %v3457, %v3457
  %v3714 = vpack.c.b16 %v3458, %v3458
  %v3715 = vpack.c.b16 %v3459, %v3459
  %v3716 = vpack.c.b16 %v3460, %v3460
  %v3717 = vpack.c.b16 %v3461, %v3461
  %v3718 = vpack.c.b16 %v3462, %v3462
  %v3719 = vpack.c.b16 %v3463, %v3463
  %v3720 = vpack.c.b16 %v3464, %v3464
  %v3721 = vpack.c.b16 %v3465, %v3465
  %v3722 = vpack.c.b16 %v3466, %v3466
  %v3723 = vpack.c.b16 %v3467, %v3467
  %v3724 = vpack.c.b16 %v3468, %v3468
  %v3725 = vpack.c.b16 %v3469, %v3469
  %v3726 = vpack.c.b16 %v3470, %v3470
  %v3727 = vpack.c.b16 %v3471, %v3471
  %v3728 = vpack.c.b16 %v3472, %v3472
  %v3729 = vpack.c.b16 %v3473, %v3473
  %v3730 = vpack.c.b16 %v3474, %v3474
  %v3731 = vpack.c.b16 %v3475, %v3475
  %v3732 = vpack.c.b16 %v3476, %v3476
  %v3733 = vpack.c.b16 %v3477, %v3477
  %v3734 = vpack.c.b16 %v3478, %v3478
  %v3735 = vpack.c.b16 %v3479, %v3479
  %v3736 = vpack.c.b16 %v3480, %v3480
  %v3737 = vpack.c.b16 %v3481, %v3481
  %v3738 = vpack.c.b16 %v3482, %v3482
  %v3739 = vpack.c.b16 %v3483, %v3483
  %v3740 = vpack.c.b16 %v3484, %v3484
  %v3741 = vpack.c.b16 %v3485, %v3485
  %v3742 = vpack.c.b16 %v3486, %v3486
  %v3743 = vpack.c.b16 %v3487, %v3487
  %v3744 = vpack.c.b16 %v3488, %v3488
  %v3745 = vpack.c.b16 %v3489, %v3489
  %v3746 = vpack.c.b16 %v3490, %v3490
  %v3747 = vpack.c.b16 %v3491, %v3491
  %v3748 = vpack.c.b16 %v3492, %v3492
  %v3749 = vpack.c.b16 %v3493, %v3493
  %v3750 = vpack.c.b16 %v3494, %v3494
  %v3751 = vpack.c.b16 %v3495, %v3495
  %v3752 = vpack.c.b16 %v3496, %v3496
  %v3753 = vpack.c.b16 %v3497, %v3497
  %v3754 = vpack.c.b16 %v3498, %v3498
  %v3755 = vpack.c.b16 %v3499, %v3499
  %v3756 = vpack.c.b16 %v3500, %v3500
  %v3757 = vpack.c.b16 %v3501, %v3501
  %v3758 = vpack.c.b16 %v3502, %v3502
  %v3759 = vpack.c.b16 %v3503, %v3503
  %v3760 = vpack.c.b16 %v3504, %v3504
  %v3761 = vpack.c.b16 %v3505, %v3505
  %v3762 = vpack.c.b16 %v3506, %v3506
  %v3763 = vpack.c.b16 %v3507, %v3507
  %v3764 = vpack.c.b16 %v3508, %v3508
  %v3765 = vpack.c.b16 %v3509, %v3509
  %v3766 = vpack.c.b16 %v3510, %v3510
  %v3767 = vpack.c.b16 %v3511, %v3511
  %v3768 = vpack.c.b16 %v3512, %v3512
  %v3769 = vpack.c.b16 %v3513, %v3513
  %v3770 = vpack.c.b16 %v3514, %v3514
  %v3771 = vpack.c.b16 %v3515, %v3515
  %v3772 = vpack.c.b16 %v3516, %v3516
  %v3773 = vpack.c.b16 %v3517, %v3517
  %v3774 = vpack.c.b16 %v3518, %v3518
  %v3775 = vpack.c.b16 %v3519, %v3519
  %v3776 = vpack.c.b16 %v3520, %v3520
  %v3777 = vpack.c.b16 %v3521, %v3521
  %v3778 = vpack.c.b16 %v3522, %v3522
  %v3779 = vpack.c.b16 %v3523, %v3523
  %v3780 = vpack.c.b16 %v3524, %v3524
  %v3781 = vpack.c.b16 %v3525, %v3525
  %v3782 = vpack.c.b16 %v3526, %v3526
  %v3783 = vpack.c.b16 %v3527, %v3527
  %v3784 = vpack.c.b16 %v3528, %v3528
  %v3785 = vpack.c.b16 %v3529, %v3529
  %v3786 = vpack.c.b16 %v3530, %v3530
  %v3787 = vpack.c.b16 %v3531, %v3531
  %v3788 = vpack.c.b16 %v3532, %v3532
  %v3789 = vpack.c.b16 %v3533, %v3533
  %v3790 = vpack.c.b16 %v3534, %v3534
  %v3791 = vpack.c.b16 %v3535, %v3535
  %v3792 = vpack.c.b16 %v3536, %v3536
  %v3793 = vpack.c.b16 %v3537, %v3537
  %v3794 = vpack.c.b16 %v3538, %v3538
  %v3795 = vpack.c.b16 %v3539, %v3539
  %v3796 = vpack.c.b16 %v3540, %v3540
  %v3797 = vpack.c.b16 %v3541, %v3541
  %v3798 = vpack.c.b16 %v3542, %v3542
  %v3799 = vpack.c.b16 %v3543, %v3543
  %v3800 = vpack.c.b16 %v3544, %v3544
  %v3801 = vpack.c.b16 %v3545, %v3545
  %v3802 = vpack.c.b16 %v3546, %v3546
  %v3803 = vpack.c.b16 %v3547, %v3547
  %v3804 = vpack.c.b16 %v3548, %v3548
  %v3805 = vpack.c.b16 %v3549, %v3549
  %v3806 = vpack.c.b16 %v3550, %v3550
  %v3807 = vpack.c.b16 %v3551, %v3551
  %v3808 = vpack.c.b16 %v3552, %v3552
  %v3809 = vpack.c.b16 %v3553, %v3553
  %v3810 = vpack.c.b16 %v3554, %v3554
  %v3811 = vpack.c.b16 %v3555, %v3555
  %v3812 = vpack.c.b16 %v3556, %v3556
  %v3813 = vpack.c.b16 %v3557, %v3557
  %v3814 = vpack.c.b16 %v3558, %v3558
  %v3815 = vpack.c.b16 %v3559, %v3559
  %v3816 = vpack.c.b16 %v3560, %v3560
  %v3817 = vpack.c.b16 %v3561, %v3561
  %v3818 = vpack.c.b16 %v3562, %v3562
  %v3819 = vpack.c.b16 %v3563, %v3563
  %v3820 = vpack.c.b16 %v3564, %v3564
  %v3821 = vpack.c.b16 %v3565, %v3565
  %v3822 = vpack.c.b16 %v3566, %v3566
  %v3823 = vpack.c.b16 %v3567, %v3567
  %v3824 = vpack.c.b16 %v3568, %v3568
  %v3825 = vpack.c.b16 %v3569, %v3569
  %v3826 = vpack.c.b16 %v3570, %v3570
  %v3827 = vpack.c.b16 %v3571, %v3571
  %v3828 = vpack.c.b16 %v3572, %v3572
  %v3829 = vpack.c.b16 %v3573, %v3573
  %v3830 = vpack.c.b16 %v3574, %v3574
  %v3831 = vpack.c.b16 %v3575, %v3575
  %v3832 = vpack.c.b16 %v3576, %v3576
  %v3833 = vpack.c.b16 %v3577, %v3577
  %v3834 = vpack.c.b16 %v3578, %v3578
  %v3835 = vpack.c.b16 %v3579, %v3579
  %v3836 = vpack.c.b16 %v3580, %v3580
  %v3837 = vpack.c.b16 %v3581, %v3581
  %v3838 = vpack.c.b16 %v3582, %v3582
  %v3839 = vpack.c.b16 %v3583, %v3583
  %v3840 = vpack.c.b16 %v3584, %v3584
  %v3841 = vpack.c.b16 %v3585, %v3585
  %v3842 = vpack.c.b16 %v3586, %v3586
  %v3843 = vpack.c.b16 %v3587, %v3587
  %v3844 = vpack.c.b16 %v3588, %v3588
  %v3845 = vpack.c.b16 %v3589, %v3589
  %v3846 = vpack.c.b16 %v3590, %v3590
  %v3847 = vpack.c.b16 %v3591, %v3591
  %v3848 = vpack.c.b16 %v3592, %v3592
  %v3849 = vpack.c.b16 %v3593, %v3593
  %v3850 = vpack.c.b16 %v3594, %v3594
  %v3851 = vpack.c.b16 %v3595, %v3595
  %v3852 = vpack.c.b16 %v3596, %v3596
  %v3853 = vpack.c.b16 %v3597, %v3597
  %v3854 = vpack.c.b16 %v3598, %v3598
  %v3855 = vpack.c.b16 %v3599, %v3599
  %v3856 = vpack.c.b16 %v3600, %v3600
  %v3857 = vpack.c.b16 %v3601, %v3601
  %v3858 = vpack.c.b16 %v3602, %v3602
  %v3859 = vpack.c.b16 %v3603, %v3603
  %v3860 = vpack.c.b16 %v3604, %v3604
  %v3861 = vpack.c.b16 %v3605, %v3605
  %v3862 = vpack.c.b16 %v3606, %v3606
  %v3863 = vpack.c.b16 %v3607, %v3607
  %v3864 = vpack.c.b16 %v3608, %v3608
  %v3865 = vpack.c.b16 %v3609, %v3609
  %v3866 = vpack.c.b16 %v3610, %v3610
  %v3867 = vpack.c.b16 %v3611, %v3611
  %v3868 = vpack.c.b16 %v3612, %v3612
  %v3869 = vpack.c.b16 %v3613, %v3613
  %v3870 = vpack.c.b16 %v3614, %v3614
  %v3871 = vpack.c.b16 %v3615, %v3615
  %v3872 = vpack.c.b16 %v3616, %v3616
  %v3873 = vpack.c.b16 %v3617, %v3617
  %v3874 = vpack.c.b16 %v3618, %v3618
  %v3875 = vpack.c.b16 %v3619, %v3619
  %v3876 = vpack.c.b16 %v3620, %v3620
  %v3877 = vpack.c.b16 %v3621, %v3621
  %v3878 = vpack.c.b16 %v3622, %v3622
  %v3879 = vpack.c.b16 %v3623, %v3623
  %v3880 = vpack.c.b16 %v3624, %v3624
  %v3881 = vpack.c.b16 %v3625, %v3625
  %v3882 = vpack.c.b16 %v3626, %v3626
  %v3883 = vpack.c.b16 %v3627, %v3627
  %v3884 = vpack.c.b16 %v3628, %v3628
  %v3885 = vpack.c.b16 %v3629, %v3629
  %v3886 = vpack.c.b16 %v3630, %v3630
  %v3887 = vpack.c.b16 %v3631, %v3631
  %v3888 = vpack.c.b16 %v3632, %v3632
  %v3889 = vpack.c.b16 %v3633, %v3633
  %v3890 = vpack.c.b16 %v3634, %v3634
  %v3891 = vpack.c.b16 %v3635, %v3635
  %v3892 = vpack.c.b16 %v3636, %v3636
  %v3893 = vpack.c.b16 %v3637, %v3637
  %v3894 = vpack.c.b16 %v3638, %v3638
  %v3895 = vpack.c.b16 %v3639, %v3639
  %v3896 = vpack.c.b16 %v3640, %v3640
  %v3897 = vpack.c.b16 %v3641, %v3641
  %v3898 = vpack.c.b16 %v3642, %v3642
  %v3899 = vpack.c.b16 %v3643, %v3643
  %v3900 = vpack.c.b16 %v3644, %v3644
  %v3901 = vpack.c.b16 %v3645, %v3645
  %v3902 = vpack.c.b16 %v3646, %v3646
  %v3903 = vpack.c.b16 %v3647, %v3647
  %v3904 = vpack.c.b16 %v3648, %v3648
  %v3905 = vpack.c.b16 %v3649, %v3649
  %v3906 = vpack.c.b16 %v3650, %v3650
  %v3907 = vpack.c.b16 %v3651, %v3651
  %v3908 = vpack.c.b16 %v3652, %v3652
  %v3909 = vpack.c.b16 %v3653, %v3653
  %v3910 = vpack.c.b16 %v3654, %v3654
  %v3911 = vpack.c.b16 %v3655, %v3655
  %v3912 = vpack.c.b16 %v3656, %v3656
  %vm4169 = vcmask 60416
  %4170 = vst.msk [vmem:[%s3] sm:$0xf] %vm4169, %v3657
  %4171 = vst.msk [vmem:[%s3 + $0x4] sm:$0xf] %vm4169, %v3658
  %4172 = vst.msk [vmem:[%s3 + $0x8] sm:$0xf] %vm4169, %v3659
  %4173 = vst.msk [vmem:[%s3 + $0xc] sm:$0xf] %vm4169, %v3660
  %4174 = vst.msk [vmem:[%s3 + $0x10] sm:$0xf] %vm4169, %v3661
  %4175 = vst.msk [vmem:[%s3 + $0x14] sm:$0xf] %vm4169, %v3662
  %4176 = vst.msk [vmem:[%s3 + $0x18] sm:$0xf] %vm4169, %v3663
  %4177 = vst.msk [vmem:[%s3 + $0x1c] sm:$0xf] %vm4169, %v3664
  %4178 = vst.msk [vmem:[%s3 + $0x20] sm:$0xf] %vm4169, %v3665
  %4179 = vst.msk [vmem:[%s3 + $0x24] sm:$0xf] %vm4169, %v3666
  %4180 = vst.msk [vmem:[%s3 + $0x28] sm:$0xf] %vm4169, %v3667
  %4181 = vst.msk [vmem:[%s3 + $0x2c] sm:$0xf] %vm4169, %v3668
  %4182 = vst.msk [vmem:[%s3 + $0x30] sm:$0xf] %vm4169, %v3669
  %4183 = vst.msk [vmem:[%s3 + $0x34] sm:$0xf] %vm4169, %v3670
  %4184 = vst.msk [vmem:[%s3 + $0x38] sm:$0xf] %vm4169, %v3671
  %4185 = vst.msk [vmem:[%s3 + $0x3c] sm:$0xf] %vm4169, %v3672
  %4186 = vst.msk [vmem:[%s3 + $0x40] sm:$0xf] %vm4169, %v3673
  %4187 = vst.msk [vmem:[%s3 + $0x44] sm:$0xf] %vm4169, %v3674
  %4188 = vst.msk [vmem:[%s3 + $0x48] sm:$0xf] %vm4169, %v3675
  %4189 = vst.msk [vmem:[%s3 + $0x4c] sm:$0xf] %vm4169, %v3676
  %4190 = vst.msk [vmem:[%s3 + $0x50] sm:$0xf] %vm4169, %v3677
  %4191 = vst.msk [vmem:[%s3 + $0x54] sm:$0xf] %vm4169, %v3678
  %4192 = vst.msk [vmem:[%s3 + $0x58] sm:$0xf] %vm4169, %v3679
  %4193 = vst.msk [vmem:[%s3 + $0x5c] sm:$0xf] %vm4169, %v3680
  %4194 = vst.msk [vmem:[%s3 + $0x60] sm:$0xf] %vm4169, %v3681
  %4195 = vst.msk [vmem:[%s3 + $0x64] sm:$0xf] %vm4169, %v3682
  %4196 = vst.msk [vmem:[%s3 + $0x68] sm:$0xf] %vm4169, %v3683
  %4197 = vst.msk [vmem:[%s3 + $0x6c] sm:$0xf] %vm4169, %v3684
  %4198 = vst.msk [vmem:[%s3 + $0x70] sm:$0xf] %vm4169, %v3685
  %4199 = vst.msk [vmem:[%s3 + $0x74] sm:$0xf] %vm4169, %v3686
  %4200 = vst.msk [vmem:[%s3 + $0x78] sm:$0xf] %vm4169, %v3687
  %4201 = vst.msk [vmem:[%s3 + $0x7c] sm:$0xf] %vm4169, %v3688
  %4202 = vst.msk [vmem:[%s3 + $0x80] sm:$0xf] %vm4169, %v3689
  %4203 = vst.msk [vmem:[%s3 + $0x84] sm:$0xf] %vm4169, %v3690
  %4204 = vst.msk [vmem:[%s3 + $0x88] sm:$0xf] %vm4169, %v3691
  %4205 = vst.msk [vmem:[%s3 + $0x8c] sm:$0xf] %vm4169, %v3692
  %4206 = vst.msk [vmem:[%s3 + $0x90] sm:$0xf] %vm4169, %v3693
  %4207 = vst.msk [vmem:[%s3 + $0x94] sm:$0xf] %vm4169, %v3694
  %4208 = vst.msk [vmem:[%s3 + $0x98] sm:$0xf] %vm4169, %v3695
  %4209 = vst.msk [vmem:[%s3 + $0x9c] sm:$0xf] %vm4169, %v3696
  %4210 = vst.msk [vmem:[%s3 + $0xa0] sm:$0xf] %vm4169, %v3697
  %4211 = vst.msk [vmem:[%s3 + $0xa4] sm:$0xf] %vm4169, %v3698
  %4212 = vst.msk [vmem:[%s3 + $0xa8] sm:$0xf] %vm4169, %v3699
  %4213 = vst.msk [vmem:[%s3 + $0xac] sm:$0xf] %vm4169, %v3700
  %4214 = vst.msk [vmem:[%s3 + $0xb0] sm:$0xf] %vm4169, %v3701
  %4215 = vst.msk [vmem:[%s3 + $0xb4] sm:$0xf] %vm4169, %v3702
  %4216 = vst.msk [vmem:[%s3 + $0xb8] sm:$0xf] %vm4169, %v3703
  %4217 = vst.msk [vmem:[%s3 + $0xbc] sm:$0xf] %vm4169, %v3704
  %4218 = vst.msk [vmem:[%s3 + $0xc0] sm:$0xf] %vm4169, %v3705
  %4219 = vst.msk [vmem:[%s3 + $0xc4] sm:$0xf] %vm4169, %v3706
  %4220 = vst.msk [vmem:[%s3 + $0xc8] sm:$0xf] %vm4169, %v3707
  %4221 = vst.msk [vmem:[%s3 + $0xcc] sm:$0xf] %vm4169, %v3708
  %4222 = vst.msk [vmem:[%s3 + $0xd0] sm:$0xf] %vm4169, %v3709
  %4223 = vst.msk [vmem:[%s3 + $0xd4] sm:$0xf] %vm4169, %v3710
  %4224 = vst.msk [vmem:[%s3 + $0xd8] sm:$0xf] %vm4169, %v3711
  %4225 = vst.msk [vmem:[%s3 + $0xdc] sm:$0xf] %vm4169, %v3712
  %4226 = vst.msk [vmem:[%s3 + $0xe0] sm:$0xf] %vm4169, %v3713
  %4227 = vst.msk [vmem:[%s3 + $0xe4] sm:$0xf] %vm4169, %v3714
  %4228 = vst.msk [vmem:[%s3 + $0xe8] sm:$0xf] %vm4169, %v3715
  %4229 = vst.msk [vmem:[%s3 + $0xec] sm:$0xf] %vm4169, %v3716
  %4230 = vst.msk [vmem:[%s3 + $0xf0] sm:$0xf] %vm4169, %v3717
  %4231 = vst.msk [vmem:[%s3 + $0xf4] sm:$0xf] %vm4169, %v3718
  %4232 = vst.msk [vmem:[%s3 + $0xf8] sm:$0xf] %vm4169, %v3719
  %4233 = vst.msk [vmem:[%s3 + $0xfc] sm:$0xf] %vm4169, %v3720
  %4234 = vst.msk [vmem:[%s3 + $0x100] sm:$0xf] %vm4169, %v3721
  %4235 = vst.msk [vmem:[%s3 + $0x104] sm:$0xf] %vm4169, %v3722
  %4236 = vst.msk [vmem:[%s3 + $0x108] sm:$0xf] %vm4169, %v3723
  %4237 = vst.msk [vmem:[%s3 + $0x10c] sm:$0xf] %vm4169, %v3724
  %4238 = vst.msk [vmem:[%s3 + $0x110] sm:$0xf] %vm4169, %v3725
  %4239 = vst.msk [vmem:[%s3 + $0x114] sm:$0xf] %vm4169, %v3726
  %4240 = vst.msk [vmem:[%s3 + $0x118] sm:$0xf] %vm4169, %v3727
  %4241 = vst.msk [vmem:[%s3 + $0x11c] sm:$0xf] %vm4169, %v3728
  %4242 = vst.msk [vmem:[%s3 + $0x120] sm:$0xf] %vm4169, %v3729
  %4243 = vst.msk [vmem:[%s3 + $0x124] sm:$0xf] %vm4169, %v3730
  %4244 = vst.msk [vmem:[%s3 + $0x128] sm:$0xf] %vm4169, %v3731
  %4245 = vst.msk [vmem:[%s3 + $0x12c] sm:$0xf] %vm4169, %v3732
  %4246 = vst.msk [vmem:[%s3 + $0x130] sm:$0xf] %vm4169, %v3733
  %4247 = vst.msk [vmem:[%s3 + $0x134] sm:$0xf] %vm4169, %v3734
  %4248 = vst.msk [vmem:[%s3 + $0x138] sm:$0xf] %vm4169, %v3735
  %4249 = vst.msk [vmem:[%s3 + $0x13c] sm:$0xf] %vm4169, %v3736
  %4250 = vst.msk [vmem:[%s3 + $0x140] sm:$0xf] %vm4169, %v3737
  %4251 = vst.msk [vmem:[%s3 + $0x144] sm:$0xf] %vm4169, %v3738
  %4252 = vst.msk [vmem:[%s3 + $0x148] sm:$0xf] %vm4169, %v3739
  %4253 = vst.msk [vmem:[%s3 + $0x14c] sm:$0xf] %vm4169, %v3740
  %4254 = vst.msk [vmem:[%s3 + $0x150] sm:$0xf] %vm4169, %v3741
  %4255 = vst.msk [vmem:[%s3 + $0x154] sm:$0xf] %vm4169, %v3742
  %4256 = vst.msk [vmem:[%s3 + $0x158] sm:$0xf] %vm4169, %v3743
  %4257 = vst.msk [vmem:[%s3 + $0x15c] sm:$0xf] %vm4169, %v3744
  %4258 = vst.msk [vmem:[%s3 + $0x160] sm:$0xf] %vm4169, %v3745
  %4259 = vst.msk [vmem:[%s3 + $0x164] sm:$0xf] %vm4169, %v3746
  %4260 = vst.msk [vmem:[%s3 + $0x168] sm:$0xf] %vm4169, %v3747
  %4261 = vst.msk [vmem:[%s3 + $0x16c] sm:$0xf] %vm4169, %v3748
  %4262 = vst.msk [vmem:[%s3 + $0x170] sm:$0xf] %vm4169, %v3749
  %4263 = vst.msk [vmem:[%s3 + $0x174] sm:$0xf] %vm4169, %v3750
  %4264 = vst.msk [vmem:[%s3 + $0x178] sm:$0xf] %vm4169, %v3751
  %4265 = vst.msk [vmem:[%s3 + $0x17c] sm:$0xf] %vm4169, %v3752
  %4266 = vst.msk [vmem:[%s3 + $0x180] sm:$0xf] %vm4169, %v3753
  %4267 = vst.msk [vmem:[%s3 + $0x184] sm:$0xf] %vm4169, %v3754
  %4268 = vst.msk [vmem:[%s3 + $0x188] sm:$0xf] %vm4169, %v3755
  %4269 = vst.msk [vmem:[%s3 + $0x18c] sm:$0xf] %vm4169, %v3756
  %4270 = vst.msk [vmem:[%s3 + $0x190] sm:$0xf] %vm4169, %v3757
  %4271 = vst.msk [vmem:[%s3 + $0x194] sm:$0xf] %vm4169, %v3758
  %4272 = vst.msk [vmem:[%s3 + $0x198] sm:$0xf] %vm4169, %v3759
  %4273 = vst.msk [vmem:[%s3 + $0x19c] sm:$0xf] %vm4169, %v3760
  %4274 = vst.msk [vmem:[%s3 + $0x1a0] sm:$0xf] %vm4169, %v3761
  %4275 = vst.msk [vmem:[%s3 + $0x1a4] sm:$0xf] %vm4169, %v3762
  %4276 = vst.msk [vmem:[%s3 + $0x1a8] sm:$0xf] %vm4169, %v3763
  %4277 = vst.msk [vmem:[%s3 + $0x1ac] sm:$0xf] %vm4169, %v3764
  %4278 = vst.msk [vmem:[%s3 + $0x1b0] sm:$0xf] %vm4169, %v3765
  %4279 = vst.msk [vmem:[%s3 + $0x1b4] sm:$0xf] %vm4169, %v3766
  %4280 = vst.msk [vmem:[%s3 + $0x1b8] sm:$0xf] %vm4169, %v3767
  %4281 = vst.msk [vmem:[%s3 + $0x1bc] sm:$0xf] %vm4169, %v3768
  %4282 = vst.msk [vmem:[%s3 + $0x1c0] sm:$0xf] %vm4169, %v3769
  %4283 = vst.msk [vmem:[%s3 + $0x1c4] sm:$0xf] %vm4169, %v3770
  %4284 = vst.msk [vmem:[%s3 + $0x1c8] sm:$0xf] %vm4169, %v3771
  %4285 = vst.msk [vmem:[%s3 + $0x1cc] sm:$0xf] %vm4169, %v3772
  %4286 = vst.msk [vmem:[%s3 + $0x1d0] sm:$0xf] %vm4169, %v3773
  %4287 = vst.msk [vmem:[%s3 + $0x1d4] sm:$0xf] %vm4169, %v3774
  %4288 = vst.msk [vmem:[%s3 + $0x1d8] sm:$0xf] %vm4169, %v3775
  %4289 = vst.msk [vmem:[%s3 + $0x1dc] sm:$0xf] %vm4169, %v3776
  %4290 = vst.msk [vmem:[%s3 + $0x1e0] sm:$0xf] %vm4169, %v3777
  %4291 = vst.msk [vmem:[%s3 + $0x1e4] sm:$0xf] %vm4169, %v3778
  %4292 = vst.msk [vmem:[%s3 + $0x1e8] sm:$0xf] %vm4169, %v3779
  %4293 = vst.msk [vmem:[%s3 + $0x1ec] sm:$0xf] %vm4169, %v3780
  %4294 = vst.msk [vmem:[%s3 + $0x1f0] sm:$0xf] %vm4169, %v3781
  %4295 = vst.msk [vmem:[%s3 + $0x1f4] sm:$0xf] %vm4169, %v3782
  %4296 = vst.msk [vmem:[%s3 + $0x1f8] sm:$0xf] %vm4169, %v3783
  %4297 = vst.msk [vmem:[%s3 + $0x1fc] sm:$0xf] %vm4169, %v3784
  %4298 = vst.msk [vmem:[%s3 + $0x200] sm:$0xf] %vm4169, %v3785
  %4299 = vst.msk [vmem:[%s3 + $0x204] sm:$0xf] %vm4169, %v3786
  %4300 = vst.msk [vmem:[%s3 + $0x208] sm:$0xf] %vm4169, %v3787
  %4301 = vst.msk [vmem:[%s3 + $0x20c] sm:$0xf] %vm4169, %v3788
  %4302 = vst.msk [vmem:[%s3 + $0x210] sm:$0xf] %vm4169, %v3789
  %4303 = vst.msk [vmem:[%s3 + $0x214] sm:$0xf] %vm4169, %v3790
  %4304 = vst.msk [vmem:[%s3 + $0x218] sm:$0xf] %vm4169, %v3791
  %4305 = vst.msk [vmem:[%s3 + $0x21c] sm:$0xf] %vm4169, %v3792
  %4306 = vst.msk [vmem:[%s3 + $0x220] sm:$0xf] %vm4169, %v3793
  %4307 = vst.msk [vmem:[%s3 + $0x224] sm:$0xf] %vm4169, %v3794
  %4308 = vst.msk [vmem:[%s3 + $0x228] sm:$0xf] %vm4169, %v3795
  %4309 = vst.msk [vmem:[%s3 + $0x22c] sm:$0xf] %vm4169, %v3796
  %4310 = vst.msk [vmem:[%s3 + $0x230] sm:$0xf] %vm4169, %v3797
  %4311 = vst.msk [vmem:[%s3 + $0x234] sm:$0xf] %vm4169, %v3798
  %4312 = vst.msk [vmem:[%s3 + $0x238] sm:$0xf] %vm4169, %v3799
  %4313 = vst.msk [vmem:[%s3 + $0x23c] sm:$0xf] %vm4169, %v3800
  %4314 = vst.msk [vmem:[%s3 + $0x240] sm:$0xf] %vm4169, %v3801
  %4315 = vst.msk [vmem:[%s3 + $0x244] sm:$0xf] %vm4169, %v3802
  %4316 = vst.msk [vmem:[%s3 + $0x248] sm:$0xf] %vm4169, %v3803
  %4317 = vst.msk [vmem:[%s3 + $0x24c] sm:$0xf] %vm4169, %v3804
  %4318 = vst.msk [vmem:[%s3 + $0x250] sm:$0xf] %vm4169, %v3805
  %4319 = vst.msk [vmem:[%s3 + $0x254] sm:$0xf] %vm4169, %v3806
  %4320 = vst.msk [vmem:[%s3 + $0x258] sm:$0xf] %vm4169, %v3807
  %4321 = vst.msk [vmem:[%s3 + $0x25c] sm:$0xf] %vm4169, %v3808
  %4322 = vst.msk [vmem:[%s3 + $0x260] sm:$0xf] %vm4169, %v3809
  %4323 = vst.msk [vmem:[%s3 + $0x264] sm:$0xf] %vm4169, %v3810
  %4324 = vst.msk [vmem:[%s3 + $0x268] sm:$0xf] %vm4169, %v3811
  %4325 = vst.msk [vmem:[%s3 + $0x26c] sm:$0xf] %vm4169, %v3812
  %4326 = vst.msk [vmem:[%s3 + $0x270] sm:$0xf] %vm4169, %v3813
  %4327 = vst.msk [vmem:[%s3 + $0x274] sm:$0xf] %vm4169, %v3814
  %4328 = vst.msk [vmem:[%s3 + $0x278] sm:$0xf] %vm4169, %v3815
  %4329 = vst.msk [vmem:[%s3 + $0x27c] sm:$0xf] %vm4169, %v3816
  %4330 = vst.msk [vmem:[%s3 + $0x280] sm:$0xf] %vm4169, %v3817
  %4331 = vst.msk [vmem:[%s3 + $0x284] sm:$0xf] %vm4169, %v3818
  %4332 = vst.msk [vmem:[%s3 + $0x288] sm:$0xf] %vm4169, %v3819
  %4333 = vst.msk [vmem:[%s3 + $0x28c] sm:$0xf] %vm4169, %v3820
  %4334 = vst.msk [vmem:[%s3 + $0x290] sm:$0xf] %vm4169, %v3821
  %4335 = vst.msk [vmem:[%s3 + $0x294] sm:$0xf] %vm4169, %v3822
  %4336 = vst.msk [vmem:[%s3 + $0x298] sm:$0xf] %vm4169, %v3823
  %4337 = vst.msk [vmem:[%s3 + $0x29c] sm:$0xf] %vm4169, %v3824
  %4338 = vst.msk [vmem:[%s3 + $0x2a0] sm:$0xf] %vm4169, %v3825
  %4339 = vst.msk [vmem:[%s3 + $0x2a4] sm:$0xf] %vm4169, %v3826
  %4340 = vst.msk [vmem:[%s3 + $0x2a8] sm:$0xf] %vm4169, %v3827
  %4341 = vst.msk [vmem:[%s3 + $0x2ac] sm:$0xf] %vm4169, %v3828
  %4342 = vst.msk [vmem:[%s3 + $0x2b0] sm:$0xf] %vm4169, %v3829
  %4343 = vst.msk [vmem:[%s3 + $0x2b4] sm:$0xf] %vm4169, %v3830
  %4344 = vst.msk [vmem:[%s3 + $0x2b8] sm:$0xf] %vm4169, %v3831
  %4345 = vst.msk [vmem:[%s3 + $0x2bc] sm:$0xf] %vm4169, %v3832
  %4346 = vst.msk [vmem:[%s3 + $0x2c0] sm:$0xf] %vm4169, %v3833
  %4347 = vst.msk [vmem:[%s3 + $0x2c4] sm:$0xf] %vm4169, %v3834
  %4348 = vst.msk [vmem:[%s3 + $0x2c8] sm:$0xf] %vm4169, %v3835
  %4349 = vst.msk [vmem:[%s3 + $0x2cc] sm:$0xf] %vm4169, %v3836
  %4350 = vst.msk [vmem:[%s3 + $0x2d0] sm:$0xf] %vm4169, %v3837
  %4351 = vst.msk [vmem:[%s3 + $0x2d4] sm:$0xf] %vm4169, %v3838
  %4352 = vst.msk [vmem:[%s3 + $0x2d8] sm:$0xf] %vm4169, %v3839
  %4353 = vst.msk [vmem:[%s3 + $0x2dc] sm:$0xf] %vm4169, %v3840
  %4354 = vst.msk [vmem:[%s3 + $0x2e0] sm:$0xf] %vm4169, %v3841
  %4355 = vst.msk [vmem:[%s3 + $0x2e4] sm:$0xf] %vm4169, %v3842
  %4356 = vst.msk [vmem:[%s3 + $0x2e8] sm:$0xf] %vm4169, %v3843
  %4357 = vst.msk [vmem:[%s3 + $0x2ec] sm:$0xf] %vm4169, %v3844
  %4358 = vst.msk [vmem:[%s3 + $0x2f0] sm:$0xf] %vm4169, %v3845
  %4359 = vst.msk [vmem:[%s3 + $0x2f4] sm:$0xf] %vm4169, %v3846
  %4360 = vst.msk [vmem:[%s3 + $0x2f8] sm:$0xf] %vm4169, %v3847
  %4361 = vst.msk [vmem:[%s3 + $0x2fc] sm:$0xf] %vm4169, %v3848
  %4362 = vst.msk [vmem:[%s3 + $0x300] sm:$0xf] %vm4169, %v3849
  %4363 = vst.msk [vmem:[%s3 + $0x304] sm:$0xf] %vm4169, %v3850
  %4364 = vst.msk [vmem:[%s3 + $0x308] sm:$0xf] %vm4169, %v3851
  %4365 = vst.msk [vmem:[%s3 + $0x30c] sm:$0xf] %vm4169, %v3852
  %4366 = vst.msk [vmem:[%s3 + $0x310] sm:$0xf] %vm4169, %v3853
  %4367 = vst.msk [vmem:[%s3 + $0x314] sm:$0xf] %vm4169, %v3854
  %4368 = vst.msk [vmem:[%s3 + $0x318] sm:$0xf] %vm4169, %v3855
  %4369 = vst.msk [vmem:[%s3 + $0x31c] sm:$0xf] %vm4169, %v3856
  %4370 = vst.msk [vmem:[%s3 + $0x320] sm:$0xf] %vm4169, %v3857
  %4371 = vst.msk [vmem:[%s3 + $0x324] sm:$0xf] %vm4169, %v3858
  %4372 = vst.msk [vmem:[%s3 + $0x328] sm:$0xf] %vm4169, %v3859
  %4373 = vst.msk [vmem:[%s3 + $0x32c] sm:$0xf] %vm4169, %v3860
  %4374 = vst.msk [vmem:[%s3 + $0x330] sm:$0xf] %vm4169, %v3861
  %4375 = vst.msk [vmem:[%s3 + $0x334] sm:$0xf] %vm4169, %v3862
  %4376 = vst.msk [vmem:[%s3 + $0x338] sm:$0xf] %vm4169, %v3863
  %4377 = vst.msk [vmem:[%s3 + $0x33c] sm:$0xf] %vm4169, %v3864
  %4378 = vst.msk [vmem:[%s3 + $0x340] sm:$0xf] %vm4169, %v3865
  %4379 = vst.msk [vmem:[%s3 + $0x344] sm:$0xf] %vm4169, %v3866
  %4380 = vst.msk [vmem:[%s3 + $0x348] sm:$0xf] %vm4169, %v3867
  %4381 = vst.msk [vmem:[%s3 + $0x34c] sm:$0xf] %vm4169, %v3868
  %4382 = vst.msk [vmem:[%s3 + $0x350] sm:$0xf] %vm4169, %v3869
  %4383 = vst.msk [vmem:[%s3 + $0x354] sm:$0xf] %vm4169, %v3870
  %4384 = vst.msk [vmem:[%s3 + $0x358] sm:$0xf] %vm4169, %v3871
  %4385 = vst.msk [vmem:[%s3 + $0x35c] sm:$0xf] %vm4169, %v3872
  %4386 = vst.msk [vmem:[%s3 + $0x360] sm:$0xf] %vm4169, %v3873
  %4387 = vst.msk [vmem:[%s3 + $0x364] sm:$0xf] %vm4169, %v3874
  %4388 = vst.msk [vmem:[%s3 + $0x368] sm:$0xf] %vm4169, %v3875
  %4389 = vst.msk [vmem:[%s3 + $0x36c] sm:$0xf] %vm4169, %v3876
  %4390 = vst.msk [vmem:[%s3 + $0x370] sm:$0xf] %vm4169, %v3877
  %4391 = vst.msk [vmem:[%s3 + $0x374] sm:$0xf] %vm4169, %v3878
  %4392 = vst.msk [vmem:[%s3 + $0x378] sm:$0xf] %vm4169, %v3879
  %4393 = vst.msk [vmem:[%s3 + $0x37c] sm:$0xf] %vm4169, %v3880
  %4394 = vst.msk [vmem:[%s3 + $0x380] sm:$0xf] %vm4169, %v3881
  %4395 = vst.msk [vmem:[%s3 + $0x384] sm:$0xf] %vm4169, %v3882
  %4396 = vst.msk [vmem:[%s3 + $0x388] sm:$0xf] %vm4169, %v3883
  %4397 = vst.msk [vmem:[%s3 + $0x38c] sm:$0xf] %vm4169, %v3884
  %4398 = vst.msk [vmem:[%s3 + $0x390] sm:$0xf] %vm4169, %v3885
  %4399 = vst.msk [vmem:[%s3 + $0x394] sm:$0xf] %vm4169, %v3886
  %4400 = vst.msk [vmem:[%s3 + $0x398] sm:$0xf] %vm4169, %v3887
  %4401 = vst.msk [vmem:[%s3 + $0x39c] sm:$0xf] %vm4169, %v3888
  %4402 = vst.msk [vmem:[%s3 + $0x3a0] sm:$0xf] %vm4169, %v3889
  %4403 = vst.msk [vmem:[%s3 + $0x3a4] sm:$0xf] %vm4169, %v3890
  %4404 = vst.msk [vmem:[%s3 + $0x3a8] sm:$0xf] %vm4169, %v3891
  %4405 = vst.msk [vmem:[%s3 + $0x3ac] sm:$0xf] %vm4169, %v3892
  %4406 = vst.msk [vmem:[%s3 + $0x3b0] sm:$0xf] %vm4169, %v3893
  %4407 = vst.msk [vmem:[%s3 + $0x3b4] sm:$0xf] %vm4169, %v3894
  %4408 = vst.msk [vmem:[%s3 + $0x3b8] sm:$0xf] %vm4169, %v3895
  %4409 = vst.msk [vmem:[%s3 + $0x3bc] sm:$0xf] %vm4169, %v3896
  %4410 = vst.msk [vmem:[%s3 + $0x3c0] sm:$0xf] %vm4169, %v3897
  %4411 = vst.msk [vmem:[%s3 + $0x3c4] sm:$0xf] %vm4169, %v3898
  %4412 = vst.msk [vmem:[%s3 + $0x3c8] sm:$0xf] %vm4169, %v3899
  %4413 = vst.msk [vmem:[%s3 + $0x3cc] sm:$0xf] %vm4169, %v3900
  %4414 = vst.msk [vmem:[%s3 + $0x3d0] sm:$0xf] %vm4169, %v3901
  %4415 = vst.msk [vmem:[%s3 + $0x3d4] sm:$0xf] %vm4169, %v3902
  %4416 = vst.msk [vmem:[%s3 + $0x3d8] sm:$0xf] %vm4169, %v3903
  %4417 = vst.msk [vmem:[%s3 + $0x3dc] sm:$0xf] %vm4169, %v3904
  %4418 = vst.msk [vmem:[%s3 + $0x3e0] sm:$0xf] %vm4169, %v3905
  %4419 = vst.msk [vmem:[%s3 + $0x3e4] sm:$0xf] %vm4169, %v3906
  %4420 = vst.msk [vmem:[%s3 + $0x3e8] sm:$0xf] %vm4169, %v3907
  %4421 = vst.msk [vmem:[%s3 + $0x3ec] sm:$0xf] %vm4169, %v3908
  %4422 = vst.msk [vmem:[%s3 + $0x3f0] sm:$0xf] %vm4169, %v3909
  %4423 = vst.msk [vmem:[%s3 + $0x3f4] sm:$0xf] %vm4169, %v3910
  %4424 = vst.msk [vmem:[%s3 + $0x3f8] sm:$0xf] %vm4169, %v3911
  %4425 = vst.msk [vmem:[%s3 + $0x3fc] sm:$0xf] %vm4169, %v3912
  // Predicated region
  $region14: #{netD_forward.6} parent=0 // pred_check
    _
  $region15: #{netD_forward.6} parent=0 // pred_check_branch
    %4427 = sbr.rel (0) target = $region17
  $region16: #{netD_forward.6} parent=0 // pred_region
    _
  $region17: #{netD_forward.6} parent=0 // pred_fallthru
    _
  // Predicated region
  $region18: #{netD_forward.6} parent=0 // pred_check
    _
  $region19: #{netD_forward.6} parent=0 // pred_check_branch
    %4429 = sbr.rel (0) target = $region21
  $region20: #{netD_forward.6} parent=0 // pred_region
    _
  $region21: #{netD_forward.6} parent=0 // pred_fallthru
    _

// kernel: netD_forward.7
$region0: #{netD_forward.7}
  #allocation0 [shape = 'u32[]', space=smem, size = 0x4, offset = 0x4, fixed_abs, tag = 'smem constant byte address 0x4 - core index']
  #allocation1 [shape = 'u32[144,128]{1,0:T(1,128)}', space=vmem, size = 0x12000, scoped, tag = 'internal scratch']
  %s0 = inlined_call_operand.vmem [shape: bf16[512,128], index: 0, kind: input, shape index: {}]
  %s1 = inlined_call_operand.vmem [shape: bf16[128,16], index: 1, kind: input, shape index: {}]
  %s2 = inlined_call_operand.vmem [shape: f32[1,128], index: 2, kind: input, shape index: {}]
  %s3 = inlined_call_operand.vmem [shape: bf16[512,16], index: 3, kind: output, shape index: {0}]
  %s4 = inlined_call_operand.vmem [shape: f32[1,8,16], index: 4, kind: output, shape index: {1}]
  %s5 = inlined_call_operand.vmem [shape: f32[1,8,16], index: 5, kind: output, shape index: {2}]
  %6 = xla_tuple %s3, %s4, %s5
  %s7 = sld [smem:[#allocation0]]
  $region38: #{netD_forward.7} parent=0
    _
  %s9 = ssub.s32 1, %s7
  %s10 = scalar_select 0, %s9, %s7
  // Predicated region
  $region2: #{netD_forward.7} parent=0 // pred_check
    _
  $region3: #{netD_forward.7} parent=0 // pred_check_branch
    %12 = sbr.rel (0) target = $region5
  $region4: #{netD_forward.7} parent=0 // pred_region
    _
  $region5: #{netD_forward.7} parent=0 // pred_fallthru
    _
  // Predicated region
  $region6: #{netD_forward.7} parent=0 // pred_check
    _
  $region7: #{netD_forward.7} parent=0 // pred_check_branch
    %14 = sbr.rel (0) target = $region9
  $region8: #{netD_forward.7} parent=0 // pred_region
    _
  $region9: #{netD_forward.7} parent=0 // pred_fallthru
    _
  // Predicated region
  $region10: #{netD_forward.7} parent=0 // pred_check
    _
  $region11: #{netD_forward.7} parent=0 // pred_check_branch
    %16 = sbr.rel (0) target = $region13
  $region12: #{netD_forward.7} parent=0 // pred_region
    _
  $region13: #{netD_forward.7} parent=0 // pred_fallthru
    _
  %v18 = vld [vmem:[%s0] sm:$0xf]
  %v19 = vld [vmem:[%s0 + $0x4] sm:$0xf]
  %v20 = vld [vmem:[%s0 + $0x8] sm:$0xf]
  %v21 = vld [vmem:[%s0 + $0xc] sm:$0xf]
  %v22 = vld [vmem:[%s0 + $0x10] sm:$0xf]
  %v23 = vld [vmem:[%s0 + $0x14] sm:$0xf]
  %v24 = vld [vmem:[%s0 + $0x18] sm:$0xf]
  %v25 = vld [vmem:[%s0 + $0x1c] sm:$0xf]
  %v26 = vld [vmem:[%s0 + $0x20] sm:$0xf]
  %v27 = vld [vmem:[%s0 + $0x24] sm:$0xf]
  %v28 = vld [vmem:[%s0 + $0x28] sm:$0xf]
  %v29 = vld [vmem:[%s0 + $0x2c] sm:$0xf]
  %v30 = vld [vmem:[%s0 + $0x30] sm:$0xf]
  %v31 = vld [vmem:[%s0 + $0x34] sm:$0xf]
  %v32 = vld [vmem:[%s0 + $0x38] sm:$0xf]
  %v33 = vld [vmem:[%s0 + $0x3c] sm:$0xf]
  %v34 = vld [vmem:[%s0 + $0x40] sm:$0xf]
  %v35 = vld [vmem:[%s0 + $0x44] sm:$0xf]
  %v36 = vld [vmem:[%s0 + $0x48] sm:$0xf]
  %v37 = vld [vmem:[%s0 + $0x4c] sm:$0xf]
  %v38 = vld [vmem:[%s0 + $0x50] sm:$0xf]
  %v39 = vld [vmem:[%s0 + $0x54] sm:$0xf]
  %v40 = vld [vmem:[%s0 + $0x58] sm:$0xf]
  %v41 = vld [vmem:[%s0 + $0x5c] sm:$0xf]
  %v42 = vld [vmem:[%s0 + $0x60] sm:$0xf]
  %v43 = vld [vmem:[%s0 + $0x64] sm:$0xf]
  %v44 = vld [vmem:[%s0 + $0x68] sm:$0xf]
  %v45 = vld [vmem:[%s0 + $0x6c] sm:$0xf]
  %v46 = vld [vmem:[%s0 + $0x70] sm:$0xf]
  %v47 = vld [vmem:[%s0 + $0x74] sm:$0xf]
  %v48 = vld [vmem:[%s0 + $0x78] sm:$0xf]
  %v49 = vld [vmem:[%s0 + $0x7c] sm:$0xf]
  %v50 = vld [vmem:[%s0 + $0x80] sm:$0xf]
  %v51 = vld [vmem:[%s0 + $0x84] sm:$0xf]
  %v52 = vld [vmem:[%s0 + $0x88] sm:$0xf]
  %v53 = vld [vmem:[%s0 + $0x8c] sm:$0xf]
  %v54 = vld [vmem:[%s0 + $0x90] sm:$0xf]
  %v55 = vld [vmem:[%s0 + $0x94] sm:$0xf]
  %v56 = vld [vmem:[%s0 + $0x98] sm:$0xf]
  %v57 = vld [vmem:[%s0 + $0x9c] sm:$0xf]
  %v58 = vld [vmem:[%s0 + $0xa0] sm:$0xf]
  %v59 = vld [vmem:[%s0 + $0xa4] sm:$0xf]
  %v60 = vld [vmem:[%s0 + $0xa8] sm:$0xf]
  %v61 = vld [vmem:[%s0 + $0xac] sm:$0xf]
  %v62 = vld [vmem:[%s0 + $0xb0] sm:$0xf]
  %v63 = vld [vmem:[%s0 + $0xb4] sm:$0xf]
  %v64 = vld [vmem:[%s0 + $0xb8] sm:$0xf]
  %v65 = vld [vmem:[%s0 + $0xbc] sm:$0xf]
  %v66 = vld [vmem:[%s0 + $0xc0] sm:$0xf]
  %v67 = vld [vmem:[%s0 + $0xc4] sm:$0xf]
  %v68 = vld [vmem:[%s0 + $0xc8] sm:$0xf]
  %v69 = vld [vmem:[%s0 + $0xcc] sm:$0xf]
  %v70 = vld [vmem:[%s0 + $0xd0] sm:$0xf]
  %v71 = vld [vmem:[%s0 + $0xd4] sm:$0xf]
  %v72 = vld [vmem:[%s0 + $0xd8] sm:$0xf]
  %v73 = vld [vmem:[%s0 + $0xdc] sm:$0xf]
  %v74 = vld [vmem:[%s0 + $0xe0] sm:$0xf]
  %v75 = vld [vmem:[%s0 + $0xe4] sm:$0xf]
  %v76 = vld [vmem:[%s0 + $0xe8] sm:$0xf]
  %v77 = vld [vmem:[%s0 + $0xec] sm:$0xf]
  %v78 = vld [vmem:[%s0 + $0xf0] sm:$0xf]
  %v79 = vld [vmem:[%s0 + $0xf4] sm:$0xf]
  %v80 = vld [vmem:[%s0 + $0xf8] sm:$0xf]
  %v81 = vld [vmem:[%s0 + $0xfc] sm:$0xf]
  %v82 = vld [vmem:[%s1] sm:$0xf]
  %v83 = vld [vmem:[%s1 + $0x4] sm:$0xf]
  %v84 = vld [vmem:[%s1 + $0x8] sm:$0xf]
  %v85 = vld [vmem:[%s1 + $0xc] sm:$0xf]
  %v86 = vld [vmem:[%s1 + $0x10] sm:$0xf]
  %v87 = vld [vmem:[%s1 + $0x14] sm:$0xf]
  %v88 = vld [vmem:[%s1 + $0x18] sm:$0xf]
  %v89 = vld [vmem:[%s1 + $0x1c] sm:$0xf]
  %v90 = vld [vmem:[%s1 + $0x20] sm:$0xf]
  %v91 = vld [vmem:[%s1 + $0x24] sm:$0xf]
  %v92 = vld [vmem:[%s1 + $0x28] sm:$0xf]
  %v93 = vld [vmem:[%s1 + $0x2c] sm:$0xf]
  %v94 = vld [vmem:[%s1 + $0x30] sm:$0xf]
  %v95 = vld [vmem:[%s1 + $0x34] sm:$0xf]
  %v96 = vld [vmem:[%s1 + $0x38] sm:$0xf]
  %v97 = vld [vmem:[%s1 + $0x3c] sm:$0xf]
  %v162 = vunpack.c.l.b16 %v18
  %v163 = vunpack.c.l.b16 %v19
  %v164 = vunpack.c.l.b16 %v20
  %v165 = vunpack.c.l.b16 %v21
  %v166 = vunpack.c.l.b16 %v22
  %v167 = vunpack.c.l.b16 %v23
  %v168 = vunpack.c.l.b16 %v24
  %v169 = vunpack.c.l.b16 %v25
  %v170 = vunpack.c.l.b16 %v26
  %v171 = vunpack.c.l.b16 %v27
  %v172 = vunpack.c.l.b16 %v28
  %v173 = vunpack.c.l.b16 %v29
  %v174 = vunpack.c.l.b16 %v30
  %v175 = vunpack.c.l.b16 %v31
  %v176 = vunpack.c.l.b16 %v32
  %v177 = vunpack.c.l.b16 %v33
  %v178 = vunpack.c.l.b16 %v34
  %v179 = vunpack.c.l.b16 %v35
  %v180 = vunpack.c.l.b16 %v36
  %v181 = vunpack.c.l.b16 %v37
  %v182 = vunpack.c.l.b16 %v38
  %v183 = vunpack.c.l.b16 %v39
  %v184 = vunpack.c.l.b16 %v40
  %v185 = vunpack.c.l.b16 %v41
  %v186 = vunpack.c.l.b16 %v42
  %v187 = vunpack.c.l.b16 %v43
  %v188 = vunpack.c.l.b16 %v44
  %v189 = vunpack.c.l.b16 %v45
  %v190 = vunpack.c.l.b16 %v46
  %v191 = vunpack.c.l.b16 %v47
  %v192 = vunpack.c.l.b16 %v48
  %v193 = vunpack.c.l.b16 %v49
  %v194 = vunpack.c.l.b16 %v50
  %v195 = vunpack.c.l.b16 %v51
  %v196 = vunpack.c.l.b16 %v52
  %v197 = vunpack.c.l.b16 %v53
  %v198 = vunpack.c.l.b16 %v54
  %v199 = vunpack.c.l.b16 %v55
  %v200 = vunpack.c.l.b16 %v56
  %v201 = vunpack.c.l.b16 %v57
  %v202 = vunpack.c.l.b16 %v58
  %v203 = vunpack.c.l.b16 %v59
  %v204 = vunpack.c.l.b16 %v60
  %v205 = vunpack.c.l.b16 %v61
  %v206 = vunpack.c.l.b16 %v62
  %v207 = vunpack.c.l.b16 %v63
  %v208 = vunpack.c.l.b16 %v64
  %v209 = vunpack.c.l.b16 %v65
  %v210 = vunpack.c.l.b16 %v66
  %v211 = vunpack.c.l.b16 %v67
  %v212 = vunpack.c.l.b16 %v68
  %v213 = vunpack.c.l.b16 %v69
  %v214 = vunpack.c.l.b16 %v70
  %v215 = vunpack.c.l.b16 %v71
  %v216 = vunpack.c.l.b16 %v72
  %v217 = vunpack.c.l.b16 %v73
  %v218 = vunpack.c.l.b16 %v74
  %v219 = vunpack.c.l.b16 %v75
  %v220 = vunpack.c.l.b16 %v76
  %v221 = vunpack.c.l.b16 %v77
  %v222 = vunpack.c.l.b16 %v78
  %v223 = vunpack.c.l.b16 %v79
  %v224 = vunpack.c.l.b16 %v80
  %v225 = vunpack.c.l.b16 %v81
  %v226 = vpack.c.b16 %v163, %v162
  %v227 = vpack.c.b16 %v165, %v164
  %v228 = vpack.c.b16 %v167, %v166
  %v229 = vpack.c.b16 %v169, %v168
  %v230 = vpack.c.b16 %v171, %v170
  %v231 = vpack.c.b16 %v173, %v172
  %v232 = vpack.c.b16 %v175, %v174
  %v233 = vpack.c.b16 %v177, %v176
  %v234 = vpack.c.b16 %v179, %v178
  %v235 = vpack.c.b16 %v181, %v180
  %v236 = vpack.c.b16 %v183, %v182
  %v237 = vpack.c.b16 %v185, %v184
  %v238 = vpack.c.b16 %v187, %v186
  %v239 = vpack.c.b16 %v189, %v188
  %v240 = vpack.c.b16 %v191, %v190
  %v241 = vpack.c.b16 %v193, %v192
  %v242 = vpack.c.b16 %v195, %v194
  %v243 = vpack.c.b16 %v197, %v196
  %v244 = vpack.c.b16 %v199, %v198
  %v245 = vpack.c.b16 %v201, %v200
  %v246 = vpack.c.b16 %v203, %v202
  %v247 = vpack.c.b16 %v205, %v204
  %v248 = vpack.c.b16 %v207, %v206
  %v249 = vpack.c.b16 %v209, %v208
  %v250 = vpack.c.b16 %v211, %v210
  %v251 = vpack.c.b16 %v213, %v212
  %v252 = vpack.c.b16 %v215, %v214
  %v253 = vpack.c.b16 %v217, %v216
  %v254 = vpack.c.b16 %v219, %v218
  %v255 = vpack.c.b16 %v221, %v220
  %v256 = vpack.c.b16 %v223, %v222
  %v257 = vpack.c.b16 %v225, %v224
  %v306 = vunpack.c.l.b16 %v82
  %v307 = vunpack.c.l.b16 %v83
  %v308 = vunpack.c.l.b16 %v84
  %v309 = vunpack.c.l.b16 %v85
  %v310 = vunpack.c.l.b16 %v86
  %v311 = vunpack.c.l.b16 %v87
  %v312 = vunpack.c.l.b16 %v88
  %v313 = vunpack.c.l.b16 %v89
  %v314 = vunpack.c.l.b16 %v90
  %v315 = vunpack.c.l.b16 %v91
  %v316 = vunpack.c.l.b16 %v92
  %v317 = vunpack.c.l.b16 %v93
  %v318 = vunpack.c.l.b16 %v94
  %v319 = vunpack.c.l.b16 %v95
  %v320 = vunpack.c.l.b16 %v96
  %v321 = vunpack.c.l.b16 %v97
  %v322 = vpack.c.b16 %v307, %v306
  %v323 = vpack.c.b16 %v309, %v308
  %v324 = vpack.c.b16 %v311, %v310
  %v325 = vpack.c.b16 %v313, %v312
  %v326 = vpack.c.b16 %v315, %v314
  %v327 = vpack.c.b16 %v317, %v316
  %v328 = vpack.c.b16 %v319, %v318
  %v329 = vpack.c.b16 %v321, %v320
  %338 = vmatprep.subr.bf16.mxu0 0
  %339 = vmatpush1.bf16.msra.mxu0 %v329
  %340 = vmatprep.subr.bf16.mxu0 0
  %341 = vmatpush1.bf16.msra.mxu0 %v328
  %342 = vmatprep.subr.bf16.mxu0 0
  %343 = vmatpush1.bf16.msra.mxu0 %v327
  %344 = vmatprep.subr.bf16.mxu0 0
  %345 = vmatpush1.bf16.msra.mxu0 %v326
  %346 = vmatprep.subr.bf16.mxu0 0
  %347 = vmatpush1.bf16.msra.mxu0 %v325
  %348 = vmatprep.subr.bf16.mxu0 0
  %349 = vmatpush1.bf16.msra.mxu0 %v324
  %350 = vmatprep.subr.bf16.mxu0 0
  %351 = vmatpush1.bf16.msra.mxu0 %v323
  %352 = vmatprep.subr.bf16.mxu0 0
  %353 = vmatpush1.bf16.msra.mxu0 %v322
  %354 = vmatprep.subr.bf16.mxu0 0
  %355 = vmatpush2.bf16.msra.mxu0 0
  %356 = vmatprep.subr.bf16.mxu0 0
  %357 = vmatpush2.bf16.msra.mxu0 0
  %358 = vmatprep.subr.bf16.mxu0 0
  %359 = vmatpush2.bf16.msra.mxu0 0
  %360 = vmatprep.subr.bf16.mxu0 0
  %361 = vmatpush2.bf16.msra.mxu0 0
  %362 = vmatprep.subr.bf16.mxu0 0
  %363 = vmatpush2.bf16.msra.mxu0 0
  %364 = vmatprep.subr.bf16.mxu0 0
  %365 = vmatpush2.bf16.msra.mxu0 0
  %366 = vmatprep.subr.bf16.mxu0 0
  %367 = vmatpush2.bf16.msra.mxu0 0
  %368 = vmatprep.subr.bf16.mxu0 0
  %369 = vmatpush2.bf16.msra.mxu0 0
  %370 = vmatprep.mubr.bf16.mxu0 0
  %371 = vmatmul.mubr.bf16.gmra.mxu0 %v226
  %v372 = vpop.f32.mrf.mxu0
  %v373 = vadd.f32 0.0, %v372
  %v374 = vpop.f32.mrf.mxu0
  %v375 = vpop.f32.mrf.mxu0
  %v376 = vadd.f32 0.0, %v375
  %v377 = vpop.f32.mrf.mxu0
  %378 = vmatprep.mubr.bf16.mxu0 0
  %379 = vmatmul.mubr.bf16.gmra.mxu0 %v227
  %v380 = vpop.f32.mrf.mxu0
  %v381 = vadd.f32 0.0, %v380
  %v382 = vpop.f32.mrf.mxu0
  %v383 = vpop.f32.mrf.mxu0
  %v384 = vadd.f32 0.0, %v383
  %v385 = vpop.f32.mrf.mxu0
  %386 = vmatprep.mubr.bf16.mxu0 0
  %387 = vmatmul.mubr.bf16.gmra.mxu0 %v228
  %v388 = vpop.f32.mrf.mxu0
  %v389 = vadd.f32 0.0, %v388
  %v390 = vpop.f32.mrf.mxu0
  %v391 = vpop.f32.mrf.mxu0
  %v392 = vadd.f32 0.0, %v391
  %v393 = vpop.f32.mrf.mxu0
  %394 = vmatprep.mubr.bf16.mxu0 0
  %395 = vmatmul.mubr.bf16.gmra.mxu0 %v229
  %v396 = vpop.f32.mrf.mxu0
  %v397 = vadd.f32 0.0, %v396
  %v398 = vpop.f32.mrf.mxu0
  %v399 = vpop.f32.mrf.mxu0
  %v400 = vadd.f32 0.0, %v399
  %v401 = vpop.f32.mrf.mxu0
  %402 = vmatprep.mubr.bf16.mxu0 0
  %403 = vmatmul.mubr.bf16.gmra.mxu0 %v230
  %v404 = vpop.f32.mrf.mxu0
  %v405 = vadd.f32 0.0, %v404
  %v406 = vpop.f32.mrf.mxu0
  %v407 = vpop.f32.mrf.mxu0
  %v408 = vadd.f32 0.0, %v407
  %v409 = vpop.f32.mrf.mxu0
  %410 = vmatprep.mubr.bf16.mxu0 0
  %411 = vmatmul.mubr.bf16.gmra.mxu0 %v231
  %v412 = vpop.f32.mrf.mxu0
  %v413 = vadd.f32 0.0, %v412
  %v414 = vpop.f32.mrf.mxu0
  %v415 = vpop.f32.mrf.mxu0
  %v416 = vadd.f32 0.0, %v415
  %v417 = vpop.f32.mrf.mxu0
  %418 = vmatprep.mubr.bf16.mxu0 0
  %419 = vmatmul.mubr.bf16.gmra.mxu0 %v232
  %v420 = vpop.f32.mrf.mxu0
  %v421 = vadd.f32 0.0, %v420
  %v422 = vpop.f32.mrf.mxu0
  %v423 = vpop.f32.mrf.mxu0
  %v424 = vadd.f32 0.0, %v423
  %v425 = vpop.f32.mrf.mxu0
  %426 = vmatprep.mubr.bf16.mxu0 0
  %427 = vmatmul.mubr.bf16.gmra.mxu0 %v233
  %v428 = vpop.f32.mrf.mxu0
  %v429 = vadd.f32 0.0, %v428
  %v430 = vpop.f32.mrf.mxu0
  %v431 = vpop.f32.mrf.mxu0
  %v432 = vadd.f32 0.0, %v431
  %v433 = vpop.f32.mrf.mxu0
  %434 = vmatprep.mubr.bf16.mxu0 0
  %435 = vmatmul.mubr.bf16.gmra.mxu0 %v234
  %v436 = vpop.f32.mrf.mxu0
  %v437 = vadd.f32 0.0, %v436
  %v438 = vpop.f32.mrf.mxu0
  %v439 = vpop.f32.mrf.mxu0
  %v440 = vadd.f32 0.0, %v439
  %v441 = vpop.f32.mrf.mxu0
  %442 = vmatprep.mubr.bf16.mxu0 0
  %443 = vmatmul.mubr.bf16.gmra.mxu0 %v235
  %v444 = vpop.f32.mrf.mxu0
  %v445 = vadd.f32 0.0, %v444
  %v446 = vpop.f32.mrf.mxu0
  %v447 = vpop.f32.mrf.mxu0
  %v448 = vadd.f32 0.0, %v447
  %v449 = vpop.f32.mrf.mxu0
  %450 = vmatprep.mubr.bf16.mxu0 0
  %451 = vmatmul.mubr.bf16.gmra.mxu0 %v236
  %v452 = vpop.f32.mrf.mxu0
  %v453 = vadd.f32 0.0, %v452
  %v454 = vpop.f32.mrf.mxu0
  %v455 = vpop.f32.mrf.mxu0
  %v456 = vadd.f32 0.0, %v455
  %v457 = vpop.f32.mrf.mxu0
  %458 = vmatprep.mubr.bf16.mxu0 0
  %459 = vmatmul.mubr.bf16.gmra.mxu0 %v237
  %v460 = vpop.f32.mrf.mxu0
  %v461 = vadd.f32 0.0, %v460
  %v462 = vpop.f32.mrf.mxu0
  %v463 = vpop.f32.mrf.mxu0
  %v464 = vadd.f32 0.0, %v463
  %v465 = vpop.f32.mrf.mxu0
  %466 = vmatprep.mubr.bf16.mxu0 0
  %467 = vmatmul.mubr.bf16.gmra.mxu0 %v238
  %v468 = vpop.f32.mrf.mxu0
  %v469 = vadd.f32 0.0, %v468
  %v470 = vpop.f32.mrf.mxu0
  %v471 = vpop.f32.mrf.mxu0
  %v472 = vadd.f32 0.0, %v471
  %v473 = vpop.f32.mrf.mxu0
  %474 = vmatprep.mubr.bf16.mxu0 0
  %475 = vmatmul.mubr.bf16.gmra.mxu0 %v239
  %v476 = vpop.f32.mrf.mxu0
  %v477 = vadd.f32 0.0, %v476
  %v478 = vpop.f32.mrf.mxu0
  %v479 = vpop.f32.mrf.mxu0
  %v480 = vadd.f32 0.0, %v479
  %v481 = vpop.f32.mrf.mxu0
  %482 = vmatprep.mubr.bf16.mxu0 0
  %483 = vmatmul.mubr.bf16.gmra.mxu0 %v240
  %v484 = vpop.f32.mrf.mxu0
  %v485 = vadd.f32 0.0, %v484
  %v486 = vpop.f32.mrf.mxu0
  %v487 = vpop.f32.mrf.mxu0
  %v488 = vadd.f32 0.0, %v487
  %v489 = vpop.f32.mrf.mxu0
  %490 = vmatprep.mubr.bf16.mxu0 0
  %491 = vmatmul.mubr.bf16.gmra.mxu0 %v241
  %v492 = vpop.f32.mrf.mxu0
  %v493 = vadd.f32 0.0, %v492
  %v494 = vpop.f32.mrf.mxu0
  %v495 = vpop.f32.mrf.mxu0
  %v496 = vadd.f32 0.0, %v495
  %v497 = vpop.f32.mrf.mxu0
  %498 = vmatprep.mubr.bf16.mxu0 0
  %499 = vmatmul.mubr.bf16.gmra.mxu0 %v242
  %v500 = vpop.f32.mrf.mxu0
  %v501 = vadd.f32 0.0, %v500
  %v502 = vpop.f32.mrf.mxu0
  %v503 = vpop.f32.mrf.mxu0
  %v504 = vadd.f32 0.0, %v503
  %v505 = vpop.f32.mrf.mxu0
  %506 = vmatprep.mubr.bf16.mxu0 0
  %507 = vmatmul.mubr.bf16.gmra.mxu0 %v243
  %v508 = vpop.f32.mrf.mxu0
  %v509 = vadd.f32 0.0, %v508
  %v510 = vpop.f32.mrf.mxu0
  %v511 = vpop.f32.mrf.mxu0
  %v512 = vadd.f32 0.0, %v511
  %v513 = vpop.f32.mrf.mxu0
  %514 = vmatprep.mubr.bf16.mxu0 0
  %515 = vmatmul.mubr.bf16.gmra.mxu0 %v244
  %v516 = vpop.f32.mrf.mxu0
  %v517 = vadd.f32 0.0, %v516
  %v518 = vpop.f32.mrf.mxu0
  %v519 = vpop.f32.mrf.mxu0
  %v520 = vadd.f32 0.0, %v519
  %v521 = vpop.f32.mrf.mxu0
  %522 = vmatprep.mubr.bf16.mxu0 0
  %523 = vmatmul.mubr.bf16.gmra.mxu0 %v245
  %v524 = vpop.f32.mrf.mxu0
  %v525 = vadd.f32 0.0, %v524
  %v526 = vpop.f32.mrf.mxu0
  %v527 = vpop.f32.mrf.mxu0
  %v528 = vadd.f32 0.0, %v527
  %v529 = vpop.f32.mrf.mxu0
  %530 = vmatprep.mubr.bf16.mxu0 0
  %531 = vmatmul.mubr.bf16.gmra.mxu0 %v246
  %v532 = vpop.f32.mrf.mxu0
  %v533 = vadd.f32 0.0, %v532
  %v534 = vpop.f32.mrf.mxu0
  %v535 = vpop.f32.mrf.mxu0
  %v536 = vadd.f32 0.0, %v535
  %v537 = vpop.f32.mrf.mxu0
  %538 = vmatprep.mubr.bf16.mxu0 0
  %539 = vmatmul.mubr.bf16.gmra.mxu0 %v247
  %v540 = vpop.f32.mrf.mxu0
  %v541 = vadd.f32 0.0, %v540
  %v542 = vpop.f32.mrf.mxu0
  %v543 = vpop.f32.mrf.mxu0
  %v544 = vadd.f32 0.0, %v543
  %v545 = vpop.f32.mrf.mxu0
  %546 = vmatprep.mubr.bf16.mxu0 0
  %547 = vmatmul.mubr.bf16.gmra.mxu0 %v248
  %v548 = vpop.f32.mrf.mxu0
  %v549 = vadd.f32 0.0, %v548
  %v550 = vpop.f32.mrf.mxu0
  %v551 = vpop.f32.mrf.mxu0
  %v552 = vadd.f32 0.0, %v551
  %v553 = vpop.f32.mrf.mxu0
  %554 = vmatprep.mubr.bf16.mxu0 0
  %555 = vmatmul.mubr.bf16.gmra.mxu0 %v249
  %v556 = vpop.f32.mrf.mxu0
  %v557 = vadd.f32 0.0, %v556
  %v558 = vpop.f32.mrf.mxu0
  %v559 = vpop.f32.mrf.mxu0
  %v560 = vadd.f32 0.0, %v559
  %v561 = vpop.f32.mrf.mxu0
  %562 = vmatprep.mubr.bf16.mxu0 0
  %563 = vmatmul.mubr.bf16.gmra.mxu0 %v250
  %v564 = vpop.f32.mrf.mxu0
  %v565 = vadd.f32 0.0, %v564
  %v566 = vpop.f32.mrf.mxu0
  %v567 = vpop.f32.mrf.mxu0
  %v568 = vadd.f32 0.0, %v567
  %v569 = vpop.f32.mrf.mxu0
  %570 = vmatprep.mubr.bf16.mxu0 0
  %571 = vmatmul.mubr.bf16.gmra.mxu0 %v251
  %v572 = vpop.f32.mrf.mxu0
  %v573 = vadd.f32 0.0, %v572
  %v574 = vpop.f32.mrf.mxu0
  %v575 = vpop.f32.mrf.mxu0
  %v576 = vadd.f32 0.0, %v575
  %v577 = vpop.f32.mrf.mxu0
  %578 = vmatprep.mubr.bf16.mxu0 0
  %579 = vmatmul.mubr.bf16.gmra.mxu0 %v252
  %v580 = vpop.f32.mrf.mxu0
  %v581 = vadd.f32 0.0, %v580
  %v582 = vpop.f32.mrf.mxu0
  %v583 = vpop.f32.mrf.mxu0
  %v584 = vadd.f32 0.0, %v583
  %v585 = vpop.f32.mrf.mxu0
  %586 = vmatprep.mubr.bf16.mxu0 0
  %587 = vmatmul.mubr.bf16.gmra.mxu0 %v253
  %v588 = vpop.f32.mrf.mxu0
  %v589 = vadd.f32 0.0, %v588
  %v590 = vpop.f32.mrf.mxu0
  %v591 = vpop.f32.mrf.mxu0
  %v592 = vadd.f32 0.0, %v591
  %v593 = vpop.f32.mrf.mxu0
  %594 = vmatprep.mubr.bf16.mxu0 0
  %595 = vmatmul.mubr.bf16.gmra.mxu0 %v254
  %v596 = vpop.f32.mrf.mxu0
  %v597 = vadd.f32 0.0, %v596
  %v598 = vpop.f32.mrf.mxu0
  %v599 = vpop.f32.mrf.mxu0
  %v600 = vadd.f32 0.0, %v599
  %v601 = vpop.f32.mrf.mxu0
  %602 = vmatprep.mubr.bf16.mxu0 0
  %603 = vmatmul.mubr.bf16.gmra.mxu0 %v255
  %v604 = vpop.f32.mrf.mxu0
  %v605 = vadd.f32 0.0, %v604
  %v606 = vpop.f32.mrf.mxu0
  %v607 = vpop.f32.mrf.mxu0
  %v608 = vadd.f32 0.0, %v607
  %v609 = vpop.f32.mrf.mxu0
  %610 = vmatprep.mubr.bf16.mxu0 0
  %611 = vmatmul.mubr.bf16.gmra.mxu0 %v256
  %v612 = vpop.f32.mrf.mxu0
  %v613 = vadd.f32 0.0, %v612
  %v614 = vpop.f32.mrf.mxu0
  %v615 = vpop.f32.mrf.mxu0
  %v616 = vadd.f32 0.0, %v615
  %v617 = vpop.f32.mrf.mxu0
  %618 = vmatprep.mubr.bf16.mxu0 0
  %619 = vmatmul.mubr.bf16.gmra.mxu0 %v257
  %v620 = vpop.f32.mrf.mxu0
  %v621 = vadd.f32 0.0, %v620
  %v622 = vpop.f32.mrf.mxu0
  %v623 = vpop.f32.mrf.mxu0
  %v624 = vadd.f32 0.0, %v623
  %v625 = vpop.f32.mrf.mxu0
  %626 = vdwg.mxu0
  %vm627 = vcmask 130048
  %v628 = vsel %vm627, %v373, 0.0
  %v629 = vsel %vm627, %v376, 0.0
  %v630 = vadd.f32 %v628, %v629
  %v631 = vsel %vm627, %v381, 0.0
  %v632 = vadd.f32 %v630, %v631
  %v633 = vsel %vm627, %v384, 0.0
  %v634 = vadd.f32 %v632, %v633
  %v635 = vsel %vm627, %v389, 0.0
  %v636 = vadd.f32 %v634, %v635
  %v637 = vsel %vm627, %v392, 0.0
  %v638 = vadd.f32 %v636, %v637
  %v639 = vsel %vm627, %v397, 0.0
  %v640 = vadd.f32 %v638, %v639
  %v641 = vsel %vm627, %v400, 0.0
  %v642 = vadd.f32 %v640, %v641
  %v643 = vsel %vm627, %v405, 0.0
  %v644 = vadd.f32 %v642, %v643
  %v645 = vsel %vm627, %v408, 0.0
  %v646 = vadd.f32 %v644, %v645
  %v647 = vsel %vm627, %v413, 0.0
  %v648 = vadd.f32 %v646, %v647
  %v649 = vsel %vm627, %v416, 0.0
  %v650 = vadd.f32 %v648, %v649
  %v651 = vsel %vm627, %v421, 0.0
  %v652 = vadd.f32 %v650, %v651
  %v653 = vsel %vm627, %v424, 0.0
  %v654 = vadd.f32 %v652, %v653
  %v655 = vsel %vm627, %v429, 0.0
  %v656 = vadd.f32 %v654, %v655
  %v657 = vsel %vm627, %v432, 0.0
  %v658 = vadd.f32 %v656, %v657
  %v659 = vsel %vm627, %v437, 0.0
  %v660 = vadd.f32 %v658, %v659
  %v661 = vsel %vm627, %v440, 0.0
  %v662 = vadd.f32 %v660, %v661
  %v663 = vsel %vm627, %v445, 0.0
  %v664 = vadd.f32 %v662, %v663
  %v665 = vsel %vm627, %v448, 0.0
  %v666 = vadd.f32 %v664, %v665
  %v667 = vsel %vm627, %v453, 0.0
  %v668 = vadd.f32 %v666, %v667
  %v669 = vsel %vm627, %v456, 0.0
  %v670 = vadd.f32 %v668, %v669
  %v671 = vsel %vm627, %v461, 0.0
  %v672 = vadd.f32 %v670, %v671
  %v673 = vsel %vm627, %v464, 0.0
  %v674 = vadd.f32 %v672, %v673
  %v675 = vsel %vm627, %v469, 0.0
  %v676 = vadd.f32 %v674, %v675
  %v677 = vsel %vm627, %v472, 0.0
  %v678 = vadd.f32 %v676, %v677
  %v679 = vsel %vm627, %v477, 0.0
  %v680 = vadd.f32 %v678, %v679
  %v681 = vsel %vm627, %v480, 0.0
  %v682 = vadd.f32 %v680, %v681
  %v683 = vsel %vm627, %v485, 0.0
  %v684 = vadd.f32 %v682, %v683
  %v685 = vsel %vm627, %v488, 0.0
  %v686 = vadd.f32 %v684, %v685
  %v687 = vsel %vm627, %v493, 0.0
  %v688 = vadd.f32 %v686, %v687
  %v689 = vsel %vm627, %v496, 0.0
  %v690 = vadd.f32 %v688, %v689
  %v691 = vsel %vm627, %v501, 0.0
  %v692 = vadd.f32 %v690, %v691
  %v693 = vsel %vm627, %v504, 0.0
  %v694 = vadd.f32 %v692, %v693
  %v695 = vsel %vm627, %v509, 0.0
  %v696 = vadd.f32 %v694, %v695
  %v697 = vsel %vm627, %v512, 0.0
  %v698 = vadd.f32 %v696, %v697
  %v699 = vsel %vm627, %v517, 0.0
  %v700 = vadd.f32 %v698, %v699
  %v701 = vsel %vm627, %v520, 0.0
  %v702 = vadd.f32 %v700, %v701
  %v703 = vsel %vm627, %v525, 0.0
  %v704 = vadd.f32 %v702, %v703
  %v705 = vsel %vm627, %v528, 0.0
  %v706 = vadd.f32 %v704, %v705
  %v707 = vsel %vm627, %v533, 0.0
  %v708 = vadd.f32 %v706, %v707
  %v709 = vsel %vm627, %v536, 0.0
  %v710 = vadd.f32 %v708, %v709
  %v711 = vsel %vm627, %v541, 0.0
  %v712 = vadd.f32 %v710, %v711
  %v713 = vsel %vm627, %v544, 0.0
  %v714 = vadd.f32 %v712, %v713
  %v715 = vsel %vm627, %v549, 0.0
  %v716 = vadd.f32 %v714, %v715
  %v717 = vsel %vm627, %v552, 0.0
  %v718 = vadd.f32 %v716, %v717
  %v719 = vsel %vm627, %v557, 0.0
  %v720 = vadd.f32 %v718, %v719
  %v721 = vsel %vm627, %v560, 0.0
  %v722 = vadd.f32 %v720, %v721
  %v723 = vsel %vm627, %v565, 0.0
  %v724 = vadd.f32 %v722, %v723
  %v725 = vsel %vm627, %v568, 0.0
  %v726 = vadd.f32 %v724, %v725
  %v727 = vsel %vm627, %v573, 0.0
  %v728 = vadd.f32 %v726, %v727
  %v729 = vsel %vm627, %v576, 0.0
  %v730 = vadd.f32 %v728, %v729
  %v731 = vsel %vm627, %v581, 0.0
  %v732 = vadd.f32 %v730, %v731
  %v733 = vsel %vm627, %v584, 0.0
  %v734 = vadd.f32 %v732, %v733
  %v735 = vsel %vm627, %v589, 0.0
  %v736 = vadd.f32 %v734, %v735
  %v737 = vsel %vm627, %v592, 0.0
  %v738 = vadd.f32 %v736, %v737
  %v739 = vsel %vm627, %v597, 0.0
  %v740 = vadd.f32 %v738, %v739
  %v741 = vsel %vm627, %v600, 0.0
  %v742 = vadd.f32 %v740, %v741
  %v743 = vsel %vm627, %v605, 0.0
  %v744 = vadd.f32 %v742, %v743
  %v745 = vsel %vm627, %v608, 0.0
  %v746 = vadd.f32 %v744, %v745
  %v747 = vsel %vm627, %v613, 0.0
  %v748 = vadd.f32 %v746, %v747
  %v749 = vsel %vm627, %v616, 0.0
  %v750 = vadd.f32 %v748, %v749
  %v751 = vsel %vm627, %v621, 0.0
  %v752 = vadd.f32 %v750, %v751
  %v753 = vsel %vm627, %v624, 0.0
  %v754 = vadd.f32 %v752, %v753
  %v755 = vrot.slane %v754, 4
  %v756 = vadd.f32 %v754, %v755
  %v757 = vrot.slane %v756, 2
  %v758 = vadd.f32 %v756, %v757
  %v759 = vrot.slane %v758, 1
  %v760 = vadd.f32 %v758, %v759
  %v761 = vmul.f32 %v373, %v373
  %v762 = vmul.f32 %v376, %v376
  %v763 = vmul.f32 %v381, %v381
  %v764 = vmul.f32 %v384, %v384
  %v765 = vmul.f32 %v389, %v389
  %v766 = vmul.f32 %v392, %v392
  %v767 = vmul.f32 %v397, %v397
  %v768 = vmul.f32 %v400, %v400
  %v769 = vmul.f32 %v405, %v405
  %v770 = vmul.f32 %v408, %v408
  %v771 = vmul.f32 %v413, %v413
  %v772 = vmul.f32 %v416, %v416
  %v773 = vmul.f32 %v421, %v421
  %v774 = vmul.f32 %v424, %v424
  %v775 = vmul.f32 %v429, %v429
  %v776 = vmul.f32 %v432, %v432
  %v777 = vmul.f32 %v437, %v437
  %v778 = vmul.f32 %v440, %v440
  %v779 = vmul.f32 %v445, %v445
  %v780 = vmul.f32 %v448, %v448
  %v781 = vmul.f32 %v453, %v453
  %v782 = vmul.f32 %v456, %v456
  %v783 = vmul.f32 %v461, %v461
  %v784 = vmul.f32 %v464, %v464
  %v785 = vmul.f32 %v469, %v469
  %v786 = vmul.f32 %v472, %v472
  %v787 = vmul.f32 %v477, %v477
  %v788 = vmul.f32 %v480, %v480
  %v789 = vmul.f32 %v485, %v485
  %v790 = vmul.f32 %v488, %v488
  %v791 = vmul.f32 %v493, %v493
  %v792 = vmul.f32 %v496, %v496
  %v793 = vmul.f32 %v501, %v501
  %v794 = vmul.f32 %v504, %v504
  %v795 = vmul.f32 %v509, %v509
  %v796 = vmul.f32 %v512, %v512
  %v797 = vmul.f32 %v517, %v517
  %v798 = vmul.f32 %v520, %v520
  %v799 = vmul.f32 %v525, %v525
  %v800 = vmul.f32 %v528, %v528
  %v801 = vmul.f32 %v533, %v533
  %v802 = vmul.f32 %v536, %v536
  %v803 = vmul.f32 %v541, %v541
  %v804 = vmul.f32 %v544, %v544
  %v805 = vmul.f32 %v549, %v549
  %v806 = vmul.f32 %v552, %v552
  %v807 = vmul.f32 %v557, %v557
  %v808 = vmul.f32 %v560, %v560
  %v809 = vmul.f32 %v565, %v565
  %v810 = vmul.f32 %v568, %v568
  %v811 = vmul.f32 %v573, %v573
  %v812 = vmul.f32 %v576, %v576
  %v813 = vmul.f32 %v581, %v581
  %v814 = vmul.f32 %v584, %v584
  %v815 = vmul.f32 %v589, %v589
  %v816 = vmul.f32 %v592, %v592
  %v817 = vmul.f32 %v597, %v597
  %v818 = vmul.f32 %v600, %v600
  %v819 = vmul.f32 %v605, %v605
  %v820 = vmul.f32 %v608, %v608
  %v821 = vmul.f32 %v613, %v613
  %v822 = vmul.f32 %v616, %v616
  %v823 = vmul.f32 %v621, %v621
  %v824 = vmul.f32 %v624, %v624
  %v825 = vsel %vm627, %v761, 0.0
  %v826 = vsel %vm627, %v762, 0.0
  %v827 = vadd.f32 %v825, %v826
  %v828 = vsel %vm627, %v763, 0.0
  %v829 = vadd.f32 %v827, %v828
  %v830 = vsel %vm627, %v764, 0.0
  %v831 = vadd.f32 %v829, %v830
  %v832 = vsel %vm627, %v765, 0.0
  %v833 = vadd.f32 %v831, %v832
  %v834 = vsel %vm627, %v766, 0.0
  %v835 = vadd.f32 %v833, %v834
  %v836 = vsel %vm627, %v767, 0.0
  %v837 = vadd.f32 %v835, %v836
  %v838 = vsel %vm627, %v768, 0.0
  %v839 = vadd.f32 %v837, %v838
  %v840 = vsel %vm627, %v769, 0.0
  %v841 = vadd.f32 %v839, %v840
  %v842 = vsel %vm627, %v770, 0.0
  %v843 = vadd.f32 %v841, %v842
  %v844 = vsel %vm627, %v771, 0.0
  %v845 = vadd.f32 %v843, %v844
  %v846 = vsel %vm627, %v772, 0.0
  %v847 = vadd.f32 %v845, %v846
  %v848 = vsel %vm627, %v773, 0.0
  %v849 = vadd.f32 %v847, %v848
  %v850 = vsel %vm627, %v774, 0.0
  %v851 = vadd.f32 %v849, %v850
  %v852 = vsel %vm627, %v775, 0.0
  %v853 = vadd.f32 %v851, %v852
  %v854 = vsel %vm627, %v776, 0.0
  %v855 = vadd.f32 %v853, %v854
  %v856 = vsel %vm627, %v777, 0.0
  %v857 = vadd.f32 %v855, %v856
  %v858 = vsel %vm627, %v778, 0.0
  %v859 = vadd.f32 %v857, %v858
  %v860 = vsel %vm627, %v779, 0.0
  %v861 = vadd.f32 %v859, %v860
  %v862 = vsel %vm627, %v780, 0.0
  %v863 = vadd.f32 %v861, %v862
  %v864 = vsel %vm627, %v781, 0.0
  %v865 = vadd.f32 %v863, %v864
  %v866 = vsel %vm627, %v782, 0.0
  %v867 = vadd.f32 %v865, %v866
  %v868 = vsel %vm627, %v783, 0.0
  %v869 = vadd.f32 %v867, %v868
  %v870 = vsel %vm627, %v784, 0.0
  %v871 = vadd.f32 %v869, %v870
  %v872 = vsel %vm627, %v785, 0.0
  %v873 = vadd.f32 %v871, %v872
  %v874 = vsel %vm627, %v786, 0.0
  %v875 = vadd.f32 %v873, %v874
  %v876 = vsel %vm627, %v787, 0.0
  %v877 = vadd.f32 %v875, %v876
  %v878 = vsel %vm627, %v788, 0.0
  %v879 = vadd.f32 %v877, %v878
  %v880 = vsel %vm627, %v789, 0.0
  %v881 = vadd.f32 %v879, %v880
  %v882 = vsel %vm627, %v790, 0.0
  %v883 = vadd.f32 %v881, %v882
  %v884 = vsel %vm627, %v791, 0.0
  %v885 = vadd.f32 %v883, %v884
  %v886 = vsel %vm627, %v792, 0.0
  %v887 = vadd.f32 %v885, %v886
  %v888 = vsel %vm627, %v793, 0.0
  %v889 = vadd.f32 %v887, %v888
  %v890 = vsel %vm627, %v794, 0.0
  %v891 = vadd.f32 %v889, %v890
  %v892 = vsel %vm627, %v795, 0.0
  %v893 = vadd.f32 %v891, %v892
  %v894 = vsel %vm627, %v796, 0.0
  %v895 = vadd.f32 %v893, %v894
  %v896 = vsel %vm627, %v797, 0.0
  %v897 = vadd.f32 %v895, %v896
  %v898 = vsel %vm627, %v798, 0.0
  %v899 = vadd.f32 %v897, %v898
  %v900 = vsel %vm627, %v799, 0.0
  %v901 = vadd.f32 %v899, %v900
  %v902 = vsel %vm627, %v800, 0.0
  %v903 = vadd.f32 %v901, %v902
  %v904 = vsel %vm627, %v801, 0.0
  %v905 = vadd.f32 %v903, %v904
  %v906 = vsel %vm627, %v802, 0.0
  %v907 = vadd.f32 %v905, %v906
  %v908 = vsel %vm627, %v803, 0.0
  %v909 = vadd.f32 %v907, %v908
  %v910 = vsel %vm627, %v804, 0.0
  %v911 = vadd.f32 %v909, %v910
  %v912 = vsel %vm627, %v805, 0.0
  %v913 = vadd.f32 %v911, %v912
  %v914 = vsel %vm627, %v806, 0.0
  %v915 = vadd.f32 %v913, %v914
  %v916 = vsel %vm627, %v807, 0.0
  %v917 = vadd.f32 %v915, %v916
  %v918 = vsel %vm627, %v808, 0.0
  %v919 = vadd.f32 %v917, %v918
  %v920 = vsel %vm627, %v809, 0.0
  %v921 = vadd.f32 %v919, %v920
  %v922 = vsel %vm627, %v810, 0.0
  %v923 = vadd.f32 %v921, %v922
  %v924 = vsel %vm627, %v811, 0.0
  %v925 = vadd.f32 %v923, %v924
  %v926 = vsel %vm627, %v812, 0.0
  %v927 = vadd.f32 %v925, %v926
  %v928 = vsel %vm627, %v813, 0.0
  %v929 = vadd.f32 %v927, %v928
  %v930 = vsel %vm627, %v814, 0.0
  %v931 = vadd.f32 %v929, %v930
  %v932 = vsel %vm627, %v815, 0.0
  %v933 = vadd.f32 %v931, %v932
  %v934 = vsel %vm627, %v816, 0.0
  %v935 = vadd.f32 %v933, %v934
  %v936 = vsel %vm627, %v817, 0.0
  %v937 = vadd.f32 %v935, %v936
  %v938 = vsel %vm627, %v818, 0.0
  %v939 = vadd.f32 %v937, %v938
  %v940 = vsel %vm627, %v819, 0.0
  %v941 = vadd.f32 %v939, %v940
  %v942 = vsel %vm627, %v820, 0.0
  %v943 = vadd.f32 %v941, %v942
  %v944 = vsel %vm627, %v821, 0.0
  %v945 = vadd.f32 %v943, %v944
  %v946 = vsel %vm627, %v822, 0.0
  %v947 = vadd.f32 %v945, %v946
  %v948 = vsel %vm627, %v823, 0.0
  %v949 = vadd.f32 %v947, %v948
  %v950 = vsel %vm627, %v824, 0.0
  %v951 = vadd.f32 %v949, %v950
  %v952 = vrot.slane %v951, 4
  %v953 = vadd.f32 %v951, %v952
  %v954 = vrot.slane %v953, 2
  %v955 = vadd.f32 %v953, %v954
  %v956 = vrot.slane %v955, 1
  %v957 = vadd.f32 %v955, %v956
  %958 = vst.msk [vmem:[%s4] sm:$0xff] %vm627, %v760
  %959 = vst.msk [vmem:[%s5] sm:$0xff] %vm627, %v957
  %v960 = vpack.c.bf16 %v376, %v373
  %v961 = vpack.c.bf16 %v384, %v381
  %v962 = vpack.c.bf16 %v392, %v389
  %v963 = vpack.c.bf16 %v400, %v397
  %v964 = vpack.c.bf16 %v408, %v405
  %v965 = vpack.c.bf16 %v416, %v413
  %v966 = vpack.c.bf16 %v424, %v421
  %v967 = vpack.c.bf16 %v432, %v429
  %v968 = vpack.c.bf16 %v440, %v437
  %v969 = vpack.c.bf16 %v448, %v445
  %v970 = vpack.c.bf16 %v456, %v453
  %v971 = vpack.c.bf16 %v464, %v461
  %v972 = vpack.c.bf16 %v472, %v469
  %v973 = vpack.c.bf16 %v480, %v477
  %v974 = vpack.c.bf16 %v488, %v485
  %v975 = vpack.c.bf16 %v496, %v493
  %v976 = vpack.c.bf16 %v504, %v501
  %v977 = vpack.c.bf16 %v512, %v509
  %v978 = vpack.c.bf16 %v520, %v517
  %v979 = vpack.c.bf16 %v528, %v525
  %v980 = vpack.c.bf16 %v536, %v533
  %v981 = vpack.c.bf16 %v544, %v541
  %v982 = vpack.c.bf16 %v552, %v549
  %v983 = vpack.c.bf16 %v560, %v557
  %v984 = vpack.c.bf16 %v568, %v565
  %v985 = vpack.c.bf16 %v576, %v573
  %v986 = vpack.c.bf16 %v584, %v581
  %v987 = vpack.c.bf16 %v592, %v589
  %v988 = vpack.c.bf16 %v600, %v597
  %v989 = vpack.c.bf16 %v608, %v605
  %v990 = vpack.c.bf16 %v616, %v613
  %v991 = vpack.c.bf16 %v624, %v621
  %v1024 = vunpack.c.l.b16 %v960
  %v1025 = vunpack.c.h.b16 %v960
  %v1026 = vunpack.c.l.b16 %v961
  %v1027 = vunpack.c.h.b16 %v961
  %v1028 = vunpack.c.l.b16 %v962
  %v1029 = vunpack.c.h.b16 %v962
  %v1030 = vunpack.c.l.b16 %v963
  %v1031 = vunpack.c.h.b16 %v963
  %v1032 = vunpack.c.l.b16 %v964
  %v1033 = vunpack.c.h.b16 %v964
  %v1034 = vunpack.c.l.b16 %v965
  %v1035 = vunpack.c.h.b16 %v965
  %v1036 = vunpack.c.l.b16 %v966
  %v1037 = vunpack.c.h.b16 %v966
  %v1038 = vunpack.c.l.b16 %v967
  %v1039 = vunpack.c.h.b16 %v967
  %v1040 = vunpack.c.l.b16 %v968
  %v1041 = vunpack.c.h.b16 %v968
  %v1042 = vunpack.c.l.b16 %v969
  %v1043 = vunpack.c.h.b16 %v969
  %v1044 = vunpack.c.l.b16 %v970
  %v1045 = vunpack.c.h.b16 %v970
  %v1046 = vunpack.c.l.b16 %v971
  %v1047 = vunpack.c.h.b16 %v971
  %v1048 = vunpack.c.l.b16 %v972
  %v1049 = vunpack.c.h.b16 %v972
  %v1050 = vunpack.c.l.b16 %v973
  %v1051 = vunpack.c.h.b16 %v973
  %v1052 = vunpack.c.l.b16 %v974
  %v1053 = vunpack.c.h.b16 %v974
  %v1054 = vunpack.c.l.b16 %v975
  %v1055 = vunpack.c.h.b16 %v975
  %v1056 = vunpack.c.l.b16 %v976
  %v1057 = vunpack.c.h.b16 %v976
  %v1058 = vunpack.c.l.b16 %v977
  %v1059 = vunpack.c.h.b16 %v977
  %v1060 = vunpack.c.l.b16 %v978
  %v1061 = vunpack.c.h.b16 %v978
  %v1062 = vunpack.c.l.b16 %v979
  %v1063 = vunpack.c.h.b16 %v979
  %v1064 = vunpack.c.l.b16 %v980
  %v1065 = vunpack.c.h.b16 %v980
  %v1066 = vunpack.c.l.b16 %v981
  %v1067 = vunpack.c.h.b16 %v981
  %v1068 = vunpack.c.l.b16 %v982
  %v1069 = vunpack.c.h.b16 %v982
  %v1070 = vunpack.c.l.b16 %v983
  %v1071 = vunpack.c.h.b16 %v983
  %v1072 = vunpack.c.l.b16 %v984
  %v1073 = vunpack.c.h.b16 %v984
  %v1074 = vunpack.c.l.b16 %v985
  %v1075 = vunpack.c.h.b16 %v985
  %v1076 = vunpack.c.l.b16 %v986
  %v1077 = vunpack.c.h.b16 %v986
  %v1078 = vunpack.c.l.b16 %v987
  %v1079 = vunpack.c.h.b16 %v987
  %v1080 = vunpack.c.l.b16 %v988
  %v1081 = vunpack.c.h.b16 %v988
  %v1082 = vunpack.c.l.b16 %v989
  %v1083 = vunpack.c.h.b16 %v989
  %v1084 = vunpack.c.l.b16 %v990
  %v1085 = vunpack.c.h.b16 %v990
  %v1086 = vunpack.c.l.b16 %v991
  %v1087 = vunpack.c.h.b16 %v991
  %v1088 = vpack.c.b16 %v1024, %v1024
  %v1089 = vpack.c.b16 %v1025, %v1025
  %v1090 = vpack.c.b16 %v1026, %v1026
  %v1091 = vpack.c.b16 %v1027, %v1027
  %v1092 = vpack.c.b16 %v1028, %v1028
  %v1093 = vpack.c.b16 %v1029, %v1029
  %v1094 = vpack.c.b16 %v1030, %v1030
  %v1095 = vpack.c.b16 %v1031, %v1031
  %v1096 = vpack.c.b16 %v1032, %v1032
  %v1097 = vpack.c.b16 %v1033, %v1033
  %v1098 = vpack.c.b16 %v1034, %v1034
  %v1099 = vpack.c.b16 %v1035, %v1035
  %v1100 = vpack.c.b16 %v1036, %v1036
  %v1101 = vpack.c.b16 %v1037, %v1037
  %v1102 = vpack.c.b16 %v1038, %v1038
  %v1103 = vpack.c.b16 %v1039, %v1039
  %v1104 = vpack.c.b16 %v1040, %v1040
  %v1105 = vpack.c.b16 %v1041, %v1041
  %v1106 = vpack.c.b16 %v1042, %v1042
  %v1107 = vpack.c.b16 %v1043, %v1043
  %v1108 = vpack.c.b16 %v1044, %v1044
  %v1109 = vpack.c.b16 %v1045, %v1045
  %v1110 = vpack.c.b16 %v1046, %v1046
  %v1111 = vpack.c.b16 %v1047, %v1047
  %v1112 = vpack.c.b16 %v1048, %v1048
  %v1113 = vpack.c.b16 %v1049, %v1049
  %v1114 = vpack.c.b16 %v1050, %v1050
  %v1115 = vpack.c.b16 %v1051, %v1051
  %v1116 = vpack.c.b16 %v1052, %v1052
  %v1117 = vpack.c.b16 %v1053, %v1053
  %v1118 = vpack.c.b16 %v1054, %v1054
  %v1119 = vpack.c.b16 %v1055, %v1055
  %v1120 = vpack.c.b16 %v1056, %v1056
  %v1121 = vpack.c.b16 %v1057, %v1057
  %v1122 = vpack.c.b16 %v1058, %v1058
  %v1123 = vpack.c.b16 %v1059, %v1059
  %v1124 = vpack.c.b16 %v1060, %v1060
  %v1125 = vpack.c.b16 %v1061, %v1061
  %v1126 = vpack.c.b16 %v1062, %v1062
  %v1127 = vpack.c.b16 %v1063, %v1063
  %v1128 = vpack.c.b16 %v1064, %v1064
  %v1129 = vpack.c.b16 %v1065, %v1065
  %v1130 = vpack.c.b16 %v1066, %v1066
  %v1131 = vpack.c.b16 %v1067, %v1067
  %v1132 = vpack.c.b16 %v1068, %v1068
  %v1133 = vpack.c.b16 %v1069, %v1069
  %v1134 = vpack.c.b16 %v1070, %v1070
  %v1135 = vpack.c.b16 %v1071, %v1071
  %v1136 = vpack.c.b16 %v1072, %v1072
  %v1137 = vpack.c.b16 %v1073, %v1073
  %v1138 = vpack.c.b16 %v1074, %v1074
  %v1139 = vpack.c.b16 %v1075, %v1075
  %v1140 = vpack.c.b16 %v1076, %v1076
  %v1141 = vpack.c.b16 %v1077, %v1077
  %v1142 = vpack.c.b16 %v1078, %v1078
  %v1143 = vpack.c.b16 %v1079, %v1079
  %v1144 = vpack.c.b16 %v1080, %v1080
  %v1145 = vpack.c.b16 %v1081, %v1081
  %v1146 = vpack.c.b16 %v1082, %v1082
  %v1147 = vpack.c.b16 %v1083, %v1083
  %v1148 = vpack.c.b16 %v1084, %v1084
  %v1149 = vpack.c.b16 %v1085, %v1085
  %v1150 = vpack.c.b16 %v1086, %v1086
  %v1151 = vpack.c.b16 %v1087, %v1087
  %vm1216 = vcmask 125952
  %1217 = vst.msk [vmem:[%s3] sm:$0xf] %vm1216, %v1088
  %1218 = vst.msk [vmem:[%s3 + $0x4] sm:$0xf] %vm1216, %v1089
  %1219 = vst.msk [vmem:[%s3 + $0x8] sm:$0xf] %vm1216, %v1090
  %1220 = vst.msk [vmem:[%s3 + $0xc] sm:$0xf] %vm1216, %v1091
  %1221 = vst.msk [vmem:[%s3 + $0x10] sm:$0xf] %vm1216, %v1092
  %1222 = vst.msk [vmem:[%s3 + $0x14] sm:$0xf] %vm1216, %v1093
  %1223 = vst.msk [vmem:[%s3 + $0x18] sm:$0xf] %vm1216, %v1094
  %1224 = vst.msk [vmem:[%s3 + $0x1c] sm:$0xf] %vm1216, %v1095
  %1225 = vst.msk [vmem:[%s3 + $0x20] sm:$0xf] %vm1216, %v1096
  %1226 = vst.msk [vmem:[%s3 + $0x24] sm:$0xf] %vm1216, %v1097
  %1227 = vst.msk [vmem:[%s3 + $0x28] sm:$0xf] %vm1216, %v1098
  %1228 = vst.msk [vmem:[%s3 + $0x2c] sm:$0xf] %vm1216, %v1099
  %1229 = vst.msk [vmem:[%s3 + $0x30] sm:$0xf] %vm1216, %v1100
  %1230 = vst.msk [vmem:[%s3 + $0x34] sm:$0xf] %vm1216, %v1101
  %1231 = vst.msk [vmem:[%s3 + $0x38] sm:$0xf] %vm1216, %v1102
  %1232 = vst.msk [vmem:[%s3 + $0x3c] sm:$0xf] %vm1216, %v1103
  %1233 = vst.msk [vmem:[%s3 + $0x40] sm:$0xf] %vm1216, %v1104
  %1234 = vst.msk [vmem:[%s3 + $0x44] sm:$0xf] %vm1216, %v1105
  %1235 = vst.msk [vmem:[%s3 + $0x48] sm:$0xf] %vm1216, %v1106
  %1236 = vst.msk [vmem:[%s3 + $0x4c] sm:$0xf] %vm1216, %v1107
  %1237 = vst.msk [vmem:[%s3 + $0x50] sm:$0xf] %vm1216, %v1108
  %1238 = vst.msk [vmem:[%s3 + $0x54] sm:$0xf] %vm1216, %v1109
  %1239 = vst.msk [vmem:[%s3 + $0x58] sm:$0xf] %vm1216, %v1110
  %1240 = vst.msk [vmem:[%s3 + $0x5c] sm:$0xf] %vm1216, %v1111
  %1241 = vst.msk [vmem:[%s3 + $0x60] sm:$0xf] %vm1216, %v1112
  %1242 = vst.msk [vmem:[%s3 + $0x64] sm:$0xf] %vm1216, %v1113
  %1243 = vst.msk [vmem:[%s3 + $0x68] sm:$0xf] %vm1216, %v1114
  %1244 = vst.msk [vmem:[%s3 + $0x6c] sm:$0xf] %vm1216, %v1115
  %1245 = vst.msk [vmem:[%s3 + $0x70] sm:$0xf] %vm1216, %v1116
  %1246 = vst.msk [vmem:[%s3 + $0x74] sm:$0xf] %vm1216, %v1117
  %1247 = vst.msk [vmem:[%s3 + $0x78] sm:$0xf] %vm1216, %v1118
  %1248 = vst.msk [vmem:[%s3 + $0x7c] sm:$0xf] %vm1216, %v1119
  %1249 = vst.msk [vmem:[%s3 + $0x80] sm:$0xf] %vm1216, %v1120
  %1250 = vst.msk [vmem:[%s3 + $0x84] sm:$0xf] %vm1216, %v1121
  %1251 = vst.msk [vmem:[%s3 + $0x88] sm:$0xf] %vm1216, %v1122
  %1252 = vst.msk [vmem:[%s3 + $0x8c] sm:$0xf] %vm1216, %v1123
  %1253 = vst.msk [vmem:[%s3 + $0x90] sm:$0xf] %vm1216, %v1124
  %1254 = vst.msk [vmem:[%s3 + $0x94] sm:$0xf] %vm1216, %v1125
  %1255 = vst.msk [vmem:[%s3 + $0x98] sm:$0xf] %vm1216, %v1126
  %1256 = vst.msk [vmem:[%s3 + $0x9c] sm:$0xf] %vm1216, %v1127
  %1257 = vst.msk [vmem:[%s3 + $0xa0] sm:$0xf] %vm1216, %v1128
  %1258 = vst.msk [vmem:[%s3 + $0xa4] sm:$0xf] %vm1216, %v1129
  %1259 = vst.msk [vmem:[%s3 + $0xa8] sm:$0xf] %vm1216, %v1130
  %1260 = vst.msk [vmem:[%s3 + $0xac] sm:$0xf] %vm1216, %v1131
  %1261 = vst.msk [vmem:[%s3 + $0xb0] sm:$0xf] %vm1216, %v1132
  %1262 = vst.msk [vmem:[%s3 + $0xb4] sm:$0xf] %vm1216, %v1133
  %1263 = vst.msk [vmem:[%s3 + $0xb8] sm:$0xf] %vm1216, %v1134
  %1264 = vst.msk [vmem:[%s3 + $0xbc] sm:$0xf] %vm1216, %v1135
  %1265 = vst.msk [vmem:[%s3 + $0xc0] sm:$0xf] %vm1216, %v1136
  %1266 = vst.msk [vmem:[%s3 + $0xc4] sm:$0xf] %vm1216, %v1137
  %1267 = vst.msk [vmem:[%s3 + $0xc8] sm:$0xf] %vm1216, %v1138
  %1268 = vst.msk [vmem:[%s3 + $0xcc] sm:$0xf] %vm1216, %v1139
  %1269 = vst.msk [vmem:[%s3 + $0xd0] sm:$0xf] %vm1216, %v1140
  %1270 = vst.msk [vmem:[%s3 + $0xd4] sm:$0xf] %vm1216, %v1141
  %1271 = vst.msk [vmem:[%s3 + $0xd8] sm:$0xf] %vm1216, %v1142
  %1272 = vst.msk [vmem:[%s3 + $0xdc] sm:$0xf] %vm1216, %v1143
  %1273 = vst.msk [vmem:[%s3 + $0xe0] sm:$0xf] %vm1216, %v1144
  %1274 = vst.msk [vmem:[%s3 + $0xe4] sm:$0xf] %vm1216, %v1145
  %1275 = vst.msk [vmem:[%s3 + $0xe8] sm:$0xf] %vm1216, %v1146
  %1276 = vst.msk [vmem:[%s3 + $0xec] sm:$0xf] %vm1216, %v1147
  %1277 = vst.msk [vmem:[%s3 + $0xf0] sm:$0xf] %vm1216, %v1148
  %1278 = vst.msk [vmem:[%s3 + $0xf4] sm:$0xf] %vm1216, %v1149
  %1279 = vst.msk [vmem:[%s3 + $0xf8] sm:$0xf] %vm1216, %v1150
  %1280 = vst.msk [vmem:[%s3 + $0xfc] sm:$0xf] %vm1216, %v1151
  // Predicated region
  $region14: #{netD_forward.7} parent=0 // pred_check
    _
  $region15: #{netD_forward.7} parent=0 // pred_check_branch
    %1282 = sbr.rel (0) target = $region17
  $region16: #{netD_forward.7} parent=0 // pred_region
    _
  $region17: #{netD_forward.7} parent=0 // pred_fallthru
    _
  // Predicated region
  $region18: #{netD_forward.7} parent=0 // pred_check
    _
  $region19: #{netD_forward.7} parent=0 // pred_check_branch
    %1284 = sbr.rel (0) target = $region21
  $region20: #{netD_forward.7} parent=0 // pred_region
    _
  $region21: #{netD_forward.7} parent=0 // pred_fallthru
    _
  // Predicated region
  $region22: #{netD_forward.7} parent=0 // pred_check
    _
  $region23: #{netD_forward.7} parent=0 // pred_check_branch
    %1286 = sbr.rel (0) target = $region25
  $region24: #{netD_forward.7} parent=0 // pred_region
    _
  $region25: #{netD_forward.7} parent=0 // pred_fallthru
    _
  // Predicated region
  $region26: #{netD_forward.7} parent=0 // pred_check
    _
  $region27: #{netD_forward.7} parent=0 // pred_check_branch
    %1288 = sbr.rel (0) target = $region29
  $region28: #{netD_forward.7} parent=0 // pred_region
    _
  $region29: #{netD_forward.7} parent=0 // pred_fallthru
    _
  // Predicated region
  $region30: #{netD_forward.7} parent=0 // pred_check
    _
  $region31: #{netD_forward.7} parent=0 // pred_check_branch
    %1290 = sbr.rel (0) target = $region33
  $region32: #{netD_forward.7} parent=0 // pred_region
    _
  $region33: #{netD_forward.7} parent=0 // pred_fallthru
    _
  // Predicated region
  $region34: #{netD_forward.7} parent=0 // pred_check
    _
  $region35: #{netD_forward.7} parent=0 // pred_check_branch
    %1292 = sbr.rel (0) target = $region37
  $region36: #{netD_forward.7} parent=0 // pred_region
    _
  $region37: #{netD_forward.7} parent=0 // pred_fallthru
    _

// kernel: tile.23
$region0: #{tile.23}
  #allocation0 [shape = 's32[1]{0}', space=sflag, size = 0x4, scoped, tag = 'scoped memory for tile.23']
  %s0 = inlined_call_operand.vmem [shape: f32[16], index: 0, kind: input, shape index: {}]
  %s1 = inlined_call_operand.vmem [shape: f32[16,16], index: 1, kind: output, shape index: {}]
  // Predicated region
  $region2: #{tile.23} parent=0 // pred_check
    _
  $region3: #{tile.23} parent=0 // pred_check_branch
    %3 = sbr.rel (0) target = $region5
  $region4: #{tile.23} parent=0 // pred_region
    _
  $region5: #{tile.23} parent=0 // pred_fallthru
    _
  %v4 = vld [vmem:[%s0] ss:$0 sm:$0xff]
  %5 = vst [vmem:[%s1] sm:$0xff] %v4
  %s6 = scalar_lea.vmem %s1, 8
  %7 = vst [vmem:[%s6] sm:$0xff] %v4

// kernel: tile.24
$region0: #{tile.24}
  %s0 = inlined_call_operand.vmem [shape: f32[16,16], index: 0, kind: input, shape index: {}]
  %s1 = inlined_call_operand.vmem [shape: f32[1,256], index: 1, kind: output, shape index: {}]
  $region1: #{tile.24} parent=0
    #allocation0 [shape = 'u8[8192]{0}', space=vmem, size = 0x2000, scoped, tag = 'scoped mem for output reshape']
    %s2 = smov 3
    %v3 = vld [vmem:[%s0] ss:$8 sm:%s2]
    %vm4 = vcmask 130048
    %5 = vst.msk [vmem:[#allocation0] ss:$8 sm:$0x3] %vm4, %v3
    %s6 = scalar_lea.vmem %s0, 7
    %s7 = smov 3
    %v8 = vld [vmem:[%s6] ss:$8 sm:%s7]
    %9 = vrot.lane.b32.xlu0 %v8, 112
    %v10 = vpop.permute.xlu0 %9
    %vm11 = vcmask 1048448
    %12 = vst.msk [vmem:[#allocation0] ss:$8 sm:$0x3] %vm11, %v10
    %s13 = scalar_lea.vmem %s0, 6
    %s14 = smov 3
    %v15 = vld [vmem:[%s13] ss:$8 sm:%s14]
    %16 = vrot.lane.b32.xlu0 %v15, 96
    %v17 = vpop.permute.xlu0 %16
    %vm18 = vcmask 917248
    %19 = vst.msk [vmem:[#allocation0] ss:$8 sm:$0x3] %vm18, %v17
    %s20 = scalar_lea.vmem %s0, 5
    %s21 = smov 3
    %v22 = vld [vmem:[%s20] ss:$8 sm:%s21]
    %23 = vrot.lane.b32.xlu0 %v22, 80
    %v24 = vpop.permute.xlu0 %23
    %vm25 = vcmask 786048
    %26 = vst.msk [vmem:[#allocation0] ss:$8 sm:$0x3] %vm25, %v24
    %s27 = scalar_lea.vmem %s0, 4
    %s28 = smov 3
    %v29 = vld [vmem:[%s27] ss:$8 sm:%s28]
    %30 = vrot.lane.b32.xlu0 %v29, 64
    %v31 = vpop.permute.xlu0 %30
    %vm32 = vcmask 654848
    %33 = vst.msk [vmem:[#allocation0] ss:$8 sm:$0x3] %vm32, %v31
    %s34 = scalar_lea.vmem %s0, 3
    %s35 = smov 3
    %v36 = vld [vmem:[%s34] ss:$8 sm:%s35]
    %37 = vrot.lane.b32.xlu0 %v36, 48
    %v38 = vpop.permute.xlu0 %37
    %vm39 = vcmask 523648
    %40 = vst.msk [vmem:[#allocation0] ss:$8 sm:$0x3] %vm39, %v38
    %s41 = scalar_lea.vmem %s0, 2
    %s42 = smov 3
    %v43 = vld [vmem:[%s41] ss:$8 sm:%s42]
    %44 = vrot.lane.b32.xlu0 %v43, 32
    %v45 = vpop.permute.xlu0 %44
    %vm46 = vcmask 392448
    %47 = vst.msk [vmem:[#allocation0] ss:$8 sm:$0x3] %vm46, %v45
    %s48 = scalar_lea.vmem %s0, 1
    %s49 = smov 3
    %v50 = vld [vmem:[%s48] ss:$8 sm:%s49]
    %51 = vrot.lane.b32.xlu0 %v50, 16
    %v52 = vpop.permute.xlu0 %51
    %vm53 = vcmask 261248
    %54 = vst.msk [vmem:[#allocation0] ss:$8 sm:$0x3] %vm53, %v52
    %s56 = sshll.u32 1, 1
    %s57 = ssub.s32 %s56, 1
    %v59 = vld [vmem:[#allocation0] sm:%s57]
    %s60 = sshll.u32 1, 1
    %s61 = ssub.s32 %s60, 1
    %62 = vst [vmem:[%s1] sm:%s61] %v59
    %s63 = scalar_lea.vmem [#allocation0], 8
    %v64 = vld [vmem:[%s63] sm:%s57]
    %s65 = sshll.u32 1, 1
    %s66 = ssub.s32 %s65, 1
    %s67 = scalar_lea.vmem %s1, 1
    %68 = vst [vmem:[%s67] sm:%s66] %v64

// kernel: netD_forward.8
$region0: #{netD_forward.8}
  #allocation0 [shape = 'u32[]', space=smem, size = 0x4, offset = 0x4, fixed_abs, tag = 'smem constant byte address 0x4 - core index']
  #allocation1 [shape = 'u32[144,128]{1,0:T(1,128)}', space=vmem, size = 0x12000, scoped, tag = 'internal scratch']
  %s0 = inlined_call_operand.vmem [shape: bf16[128,256], index: 0, kind: input, shape index: {}]
  %s1 = inlined_call_operand.vmem [shape: bf16[256,32], index: 1, kind: input, shape index: {}]
  %s2 = inlined_call_operand.vmem [shape: f32[1,256], index: 2, kind: input, shape index: {}]
  %s3 = inlined_call_operand.vmem [shape: bf16[128,32], index: 3, kind: output, shape index: {0}]
  %s4 = inlined_call_operand.vmem [shape: f32[1,8,32], index: 4, kind: output, shape index: {1}]
  %s5 = inlined_call_operand.vmem [shape: f32[1,8,32], index: 5, kind: output, shape index: {2}]
  %6 = xla_tuple %s3, %s4, %s5
  %s7 = sld [smem:[#allocation0]]
  $region38: #{netD_forward.8} parent=0
    _
  %s9 = ssub.s32 1, %s7
  %s10 = scalar_select 0, %s9, %s7
  // Predicated region
  $region2: #{netD_forward.8} parent=0 // pred_check
    _
  $region3: #{netD_forward.8} parent=0 // pred_check_branch
    %12 = sbr.rel (0) target = $region5
  $region4: #{netD_forward.8} parent=0 // pred_region
    _
  $region5: #{netD_forward.8} parent=0 // pred_fallthru
    _
  // Predicated region
  $region6: #{netD_forward.8} parent=0 // pred_check
    _
  $region7: #{netD_forward.8} parent=0 // pred_check_branch
    %14 = sbr.rel (0) target = $region9
  $region8: #{netD_forward.8} parent=0 // pred_region
    _
  $region9: #{netD_forward.8} parent=0 // pred_fallthru
    _
  // Predicated region
  $region10: #{netD_forward.8} parent=0 // pred_check
    _
  $region11: #{netD_forward.8} parent=0 // pred_check_branch
    %16 = sbr.rel (0) target = $region13
  $region12: #{netD_forward.8} parent=0 // pred_region
    _
  $region13: #{netD_forward.8} parent=0 // pred_fallthru
    _
  %v18 = vld [vmem:[%s0] sm:$0xff]
  %v19 = vld [vmem:[%s0 + $0x8] sm:$0xff]
  %v20 = vld [vmem:[%s0 + $0x10] sm:$0xff]
  %v21 = vld [vmem:[%s0 + $0x18] sm:$0xff]
  %v22 = vld [vmem:[%s0 + $0x20] sm:$0xff]
  %v23 = vld [vmem:[%s0 + $0x28] sm:$0xff]
  %v24 = vld [vmem:[%s0 + $0x30] sm:$0xff]
  %v25 = vld [vmem:[%s0 + $0x38] sm:$0xff]
  %v26 = vld [vmem:[%s0 + $0x40] sm:$0xff]
  %v27 = vld [vmem:[%s0 + $0x48] sm:$0xff]
  %v28 = vld [vmem:[%s0 + $0x50] sm:$0xff]
  %v29 = vld [vmem:[%s0 + $0x58] sm:$0xff]
  %v30 = vld [vmem:[%s0 + $0x60] sm:$0xff]
  %v31 = vld [vmem:[%s0 + $0x68] sm:$0xff]
  %v32 = vld [vmem:[%s0 + $0x70] sm:$0xff]
  %v33 = vld [vmem:[%s0 + $0x78] sm:$0xff]
  %v34 = vunpack.c.l.bf16 %v18
  %v35 = vunpack.c.h.bf16 %v18
  %v36 = vunpack.c.l.bf16 %v19
  %v37 = vunpack.c.h.bf16 %v19
  %v38 = vunpack.c.l.bf16 %v20
  %v39 = vunpack.c.h.bf16 %v20
  %v40 = vunpack.c.l.bf16 %v21
  %v41 = vunpack.c.h.bf16 %v21
  %v42 = vunpack.c.l.bf16 %v22
  %v43 = vunpack.c.h.bf16 %v22
  %v44 = vunpack.c.l.bf16 %v23
  %v45 = vunpack.c.h.bf16 %v23
  %v46 = vunpack.c.l.bf16 %v24
  %v47 = vunpack.c.h.bf16 %v24
  %v48 = vunpack.c.l.bf16 %v25
  %v49 = vunpack.c.h.bf16 %v25
  %v50 = vunpack.c.l.bf16 %v26
  %v51 = vunpack.c.h.bf16 %v26
  %v52 = vunpack.c.l.bf16 %v27
  %v53 = vunpack.c.h.bf16 %v27
  %v54 = vunpack.c.l.bf16 %v28
  %v55 = vunpack.c.h.bf16 %v28
  %v56 = vunpack.c.l.bf16 %v29
  %v57 = vunpack.c.h.bf16 %v29
  %v58 = vunpack.c.l.bf16 %v30
  %v59 = vunpack.c.h.bf16 %v30
  %v60 = vunpack.c.l.bf16 %v31
  %v61 = vunpack.c.h.bf16 %v31
  %v62 = vunpack.c.l.bf16 %v32
  %v63 = vunpack.c.h.bf16 %v32
  %v64 = vunpack.c.l.bf16 %v33
  %v65 = vunpack.c.h.bf16 %v33
  %v66 = vld [vmem:[%s2] sm:$0x3]
  %v68 = vlaneseq
  %v69 = vshrl.u32 %v68, 7
  %v70 = vsub.s32 0, %v69
  %v71 = vrot.slane %v66, %v70
  %v72 = vlaneseq
  %v73 = vshrl.u32 %v72, 7
  %v74 = vsub.s32 1, %v73
  %v75 = vrot.slane %v66, %v74
  %v78 = vmul.f32 %v34, %v71
  %v79 = vmul.f32 %v35, %v75
  %v80 = vmul.f32 %v36, %v71
  %v81 = vmul.f32 %v37, %v75
  %v82 = vmul.f32 %v38, %v71
  %v83 = vmul.f32 %v39, %v75
  %v84 = vmul.f32 %v40, %v71
  %v85 = vmul.f32 %v41, %v75
  %v86 = vmul.f32 %v42, %v71
  %v87 = vmul.f32 %v43, %v75
  %v88 = vmul.f32 %v44, %v71
  %v89 = vmul.f32 %v45, %v75
  %v90 = vmul.f32 %v46, %v71
  %v91 = vmul.f32 %v47, %v75
  %v92 = vmul.f32 %v48, %v71
  %v93 = vmul.f32 %v49, %v75
  %v94 = vmul.f32 %v50, %v71
  %v95 = vmul.f32 %v51, %v75
  %v96 = vmul.f32 %v52, %v71
  %v97 = vmul.f32 %v53, %v75
  %v98 = vmul.f32 %v54, %v71
  %v99 = vmul.f32 %v55, %v75
  %v100 = vmul.f32 %v56, %v71
  %v101 = vmul.f32 %v57, %v75
  %v102 = vmul.f32 %v58, %v71
  %v103 = vmul.f32 %v59, %v75
  %v104 = vmul.f32 %v60, %v71
  %v105 = vmul.f32 %v61, %v75
  %v106 = vmul.f32 %v62, %v71
  %v107 = vmul.f32 %v63, %v75
  %v108 = vmul.f32 %v64, %v71
  %v109 = vmul.f32 %v65, %v75
  %vm110 = vcmp.gt.f32.partialorder %v78, 0.0
  %vm111 = vcmp.gt.f32.partialorder %v79, 0.0
  %vm112 = vcmp.gt.f32.partialorder %v80, 0.0
  %vm113 = vcmp.gt.f32.partialorder %v81, 0.0
  %vm114 = vcmp.gt.f32.partialorder %v82, 0.0
  %vm115 = vcmp.gt.f32.partialorder %v83, 0.0
  %vm116 = vcmp.gt.f32.partialorder %v84, 0.0
  %vm117 = vcmp.gt.f32.partialorder %v85, 0.0
  %vm118 = vcmp.gt.f32.partialorder %v86, 0.0
  %vm119 = vcmp.gt.f32.partialorder %v87, 0.0
  %vm120 = vcmp.gt.f32.partialorder %v88, 0.0
  %vm121 = vcmp.gt.f32.partialorder %v89, 0.0
  %vm122 = vcmp.gt.f32.partialorder %v90, 0.0
  %vm123 = vcmp.gt.f32.partialorder %v91, 0.0
  %vm124 = vcmp.gt.f32.partialorder %v92, 0.0
  %vm125 = vcmp.gt.f32.partialorder %v93, 0.0
  %vm126 = vcmp.gt.f32.partialorder %v94, 0.0
  %vm127 = vcmp.gt.f32.partialorder %v95, 0.0
  %vm128 = vcmp.gt.f32.partialorder %v96, 0.0
  %vm129 = vcmp.gt.f32.partialorder %v97, 0.0
  %vm130 = vcmp.gt.f32.partialorder %v98, 0.0
  %vm131 = vcmp.gt.f32.partialorder %v99, 0.0
  %vm132 = vcmp.gt.f32.partialorder %v100, 0.0
  %vm133 = vcmp.gt.f32.partialorder %v101, 0.0
  %vm134 = vcmp.gt.f32.partialorder %v102, 0.0
  %vm135 = vcmp.gt.f32.partialorder %v103, 0.0
  %vm136 = vcmp.gt.f32.partialorder %v104, 0.0
  %vm137 = vcmp.gt.f32.partialorder %v105, 0.0
  %vm138 = vcmp.gt.f32.partialorder %v106, 0.0
  %vm139 = vcmp.gt.f32.partialorder %v107, 0.0
  %vm140 = vcmp.gt.f32.partialorder %v108, 0.0
  %vm141 = vcmp.gt.f32.partialorder %v109, 0.0
  %v142 = vmul.f32 %v78, 0.2
  %v143 = vmul.f32 %v79, 0.2
  %v144 = vmul.f32 %v80, 0.2
  %v145 = vmul.f32 %v81, 0.2
  %v146 = vmul.f32 %v82, 0.2
  %v147 = vmul.f32 %v83, 0.2
  %v148 = vmul.f32 %v84, 0.2
  %v149 = vmul.f32 %v85, 0.2
  %v150 = vmul.f32 %v86, 0.2
  %v151 = vmul.f32 %v87, 0.2
  %v152 = vmul.f32 %v88, 0.2
  %v153 = vmul.f32 %v89, 0.2
  %v154 = vmul.f32 %v90, 0.2
  %v155 = vmul.f32 %v91, 0.2
  %v156 = vmul.f32 %v92, 0.2
  %v157 = vmul.f32 %v93, 0.2
  %v158 = vmul.f32 %v94, 0.2
  %v159 = vmul.f32 %v95, 0.2
  %v160 = vmul.f32 %v96, 0.2
  %v161 = vmul.f32 %v97, 0.2
  %v162 = vmul.f32 %v98, 0.2
  %v163 = vmul.f32 %v99, 0.2
  %v164 = vmul.f32 %v100, 0.2
  %v165 = vmul.f32 %v101, 0.2
  %v166 = vmul.f32 %v102, 0.2
  %v167 = vmul.f32 %v103, 0.2
  %v168 = vmul.f32 %v104, 0.2
  %v169 = vmul.f32 %v105, 0.2
  %v170 = vmul.f32 %v106, 0.2
  %v171 = vmul.f32 %v107, 0.2
  %v172 = vmul.f32 %v108, 0.2
  %v173 = vmul.f32 %v109, 0.2
  %v174 = vsel %vm110, %v78, %v142
  %v175 = vsel %vm111, %v79, %v143
  %v176 = vsel %vm112, %v80, %v144
  %v177 = vsel %vm113, %v81, %v145
  %v178 = vsel %vm114, %v82, %v146
  %v179 = vsel %vm115, %v83, %v147
  %v180 = vsel %vm116, %v84, %v148
  %v181 = vsel %vm117, %v85, %v149
  %v182 = vsel %vm118, %v86, %v150
  %v183 = vsel %vm119, %v87, %v151
  %v184 = vsel %vm120, %v88, %v152
  %v185 = vsel %vm121, %v89, %v153
  %v186 = vsel %vm122, %v90, %v154
  %v187 = vsel %vm123, %v91, %v155
  %v188 = vsel %vm124, %v92, %v156
  %v189 = vsel %vm125, %v93, %v157
  %v190 = vsel %vm126, %v94, %v158
  %v191 = vsel %vm127, %v95, %v159
  %v192 = vsel %vm128, %v96, %v160
  %v193 = vsel %vm129, %v97, %v161
  %v194 = vsel %vm130, %v98, %v162
  %v195 = vsel %vm131, %v99, %v163
  %v196 = vsel %vm132, %v100, %v164
  %v197 = vsel %vm133, %v101, %v165
  %v198 = vsel %vm134, %v102, %v166
  %v199 = vsel %vm135, %v103, %v167
  %v200 = vsel %vm136, %v104, %v168
  %v201 = vsel %vm137, %v105, %v169
  %v202 = vsel %vm138, %v106, %v170
  %v203 = vsel %vm139, %v107, %v171
  %v204 = vsel %vm140, %v108, %v172
  %v205 = vsel %vm141, %v109, %v173
  %v206 = vpack.c.bf16 %v176, %v174
  %v207 = vpack.c.bf16 %v177, %v175
  %v208 = vpack.c.bf16 %v180, %v178
  %v209 = vpack.c.bf16 %v181, %v179
  %v210 = vpack.c.bf16 %v184, %v182
  %v211 = vpack.c.bf16 %v185, %v183
  %v212 = vpack.c.bf16 %v188, %v186
  %v213 = vpack.c.bf16 %v189, %v187
  %v214 = vpack.c.bf16 %v192, %v190
  %v215 = vpack.c.bf16 %v193, %v191
  %v216 = vpack.c.bf16 %v196, %v194
  %v217 = vpack.c.bf16 %v197, %v195
  %v218 = vpack.c.bf16 %v200, %v198
  %v219 = vpack.c.bf16 %v201, %v199
  %v220 = vpack.c.bf16 %v204, %v202
  %v221 = vpack.c.bf16 %v205, %v203
  %v222 = vld [vmem:[%s1] sm:$0xf]
  %v223 = vld [vmem:[%s1 + $0x4] sm:$0xf]
  %v224 = vld [vmem:[%s1 + $0x8] sm:$0xf]
  %v225 = vld [vmem:[%s1 + $0xc] sm:$0xf]
  %v226 = vld [vmem:[%s1 + $0x10] sm:$0xf]
  %v227 = vld [vmem:[%s1 + $0x14] sm:$0xf]
  %v228 = vld [vmem:[%s1 + $0x18] sm:$0xf]
  %v229 = vld [vmem:[%s1 + $0x1c] sm:$0xf]
  %v230 = vld [vmem:[%s1 + $0x20] sm:$0xf]
  %v231 = vld [vmem:[%s1 + $0x24] sm:$0xf]
  %v232 = vld [vmem:[%s1 + $0x28] sm:$0xf]
  %v233 = vld [vmem:[%s1 + $0x2c] sm:$0xf]
  %v234 = vld [vmem:[%s1 + $0x30] sm:$0xf]
  %v235 = vld [vmem:[%s1 + $0x34] sm:$0xf]
  %v236 = vld [vmem:[%s1 + $0x38] sm:$0xf]
  %v237 = vld [vmem:[%s1 + $0x3c] sm:$0xf]
  %v238 = vld [vmem:[%s1 + $0x40] sm:$0xf]
  %v239 = vld [vmem:[%s1 + $0x44] sm:$0xf]
  %v240 = vld [vmem:[%s1 + $0x48] sm:$0xf]
  %v241 = vld [vmem:[%s1 + $0x4c] sm:$0xf]
  %v242 = vld [vmem:[%s1 + $0x50] sm:$0xf]
  %v243 = vld [vmem:[%s1 + $0x54] sm:$0xf]
  %v244 = vld [vmem:[%s1 + $0x58] sm:$0xf]
  %v245 = vld [vmem:[%s1 + $0x5c] sm:$0xf]
  %v246 = vld [vmem:[%s1 + $0x60] sm:$0xf]
  %v247 = vld [vmem:[%s1 + $0x64] sm:$0xf]
  %v248 = vld [vmem:[%s1 + $0x68] sm:$0xf]
  %v249 = vld [vmem:[%s1 + $0x6c] sm:$0xf]
  %v250 = vld [vmem:[%s1 + $0x70] sm:$0xf]
  %v251 = vld [vmem:[%s1 + $0x74] sm:$0xf]
  %v252 = vld [vmem:[%s1 + $0x78] sm:$0xf]
  %v253 = vld [vmem:[%s1 + $0x7c] sm:$0xf]
  %v286 = vunpack.c.l.b16 %v222
  %v287 = vunpack.c.l.b16 %v223
  %v288 = vunpack.c.l.b16 %v224
  %v289 = vunpack.c.l.b16 %v225
  %v290 = vunpack.c.l.b16 %v226
  %v291 = vunpack.c.l.b16 %v227
  %v292 = vunpack.c.l.b16 %v228
  %v293 = vunpack.c.l.b16 %v229
  %v294 = vunpack.c.l.b16 %v230
  %v295 = vunpack.c.l.b16 %v231
  %v296 = vunpack.c.l.b16 %v232
  %v297 = vunpack.c.l.b16 %v233
  %v298 = vunpack.c.l.b16 %v234
  %v299 = vunpack.c.l.b16 %v235
  %v300 = vunpack.c.l.b16 %v236
  %v301 = vunpack.c.l.b16 %v237
  %v302 = vunpack.c.l.b16 %v238
  %v303 = vunpack.c.l.b16 %v239
  %v304 = vunpack.c.l.b16 %v240
  %v305 = vunpack.c.l.b16 %v241
  %v306 = vunpack.c.l.b16 %v242
  %v307 = vunpack.c.l.b16 %v243
  %v308 = vunpack.c.l.b16 %v244
  %v309 = vunpack.c.l.b16 %v245
  %v310 = vunpack.c.l.b16 %v246
  %v311 = vunpack.c.l.b16 %v247
  %v312 = vunpack.c.l.b16 %v248
  %v313 = vunpack.c.l.b16 %v249
  %v314 = vunpack.c.l.b16 %v250
  %v315 = vunpack.c.l.b16 %v251
  %v316 = vunpack.c.l.b16 %v252
  %v317 = vunpack.c.l.b16 %v253
  %v318 = vpack.c.b16 %v287, %v286
  %v319 = vpack.c.b16 %v289, %v288
  %v320 = vpack.c.b16 %v291, %v290
  %v321 = vpack.c.b16 %v293, %v292
  %v322 = vpack.c.b16 %v295, %v294
  %v323 = vpack.c.b16 %v297, %v296
  %v324 = vpack.c.b16 %v299, %v298
  %v325 = vpack.c.b16 %v301, %v300
  %v326 = vpack.c.b16 %v303, %v302
  %v327 = vpack.c.b16 %v305, %v304
  %v328 = vpack.c.b16 %v307, %v306
  %v329 = vpack.c.b16 %v309, %v308
  %v330 = vpack.c.b16 %v311, %v310
  %v331 = vpack.c.b16 %v313, %v312
  %v332 = vpack.c.b16 %v315, %v314
  %v333 = vpack.c.b16 %v317, %v316
  %350 = vmatprep.subr.bf16.mxu0 0
  %351 = vmatpush1.bf16.msra.mxu0 %v325
  %352 = vmatprep.subr.bf16.mxu0 0
  %353 = vmatpush1.bf16.msra.mxu0 %v324
  %354 = vmatprep.subr.bf16.mxu0 0
  %355 = vmatpush1.bf16.msra.mxu0 %v323
  %356 = vmatprep.subr.bf16.mxu0 0
  %357 = vmatpush1.bf16.msra.mxu0 %v322
  %358 = vmatprep.subr.bf16.mxu0 0
  %359 = vmatpush1.bf16.msra.mxu0 %v321
  %360 = vmatprep.subr.bf16.mxu0 0
  %361 = vmatpush1.bf16.msra.mxu0 %v320
  %362 = vmatprep.subr.bf16.mxu0 0
  %363 = vmatpush1.bf16.msra.mxu0 %v319
  %364 = vmatprep.subr.bf16.mxu0 0
  %365 = vmatpush1.bf16.msra.mxu0 %v318
  %366 = vmatprep.subr.bf16.mxu0 0
  %367 = vmatpush2.bf16.msra.mxu0 %v333
  %368 = vmatprep.subr.bf16.mxu0 0
  %369 = vmatpush2.bf16.msra.mxu0 %v332
  %370 = vmatprep.subr.bf16.mxu0 0
  %371 = vmatpush2.bf16.msra.mxu0 %v331
  %372 = vmatprep.subr.bf16.mxu0 0
  %373 = vmatpush2.bf16.msra.mxu0 %v330
  %374 = vmatprep.subr.bf16.mxu0 0
  %375 = vmatpush2.bf16.msra.mxu0 %v329
  %376 = vmatprep.subr.bf16.mxu0 0
  %377 = vmatpush2.bf16.msra.mxu0 %v328
  %378 = vmatprep.subr.bf16.mxu0 0
  %379 = vmatpush2.bf16.msra.mxu0 %v327
  %380 = vmatprep.subr.bf16.mxu0 0
  %381 = vmatpush2.bf16.msra.mxu0 %v326
  %382 = vmatprep.mubr.bf16.mxu0 %v207
  %383 = vmatmul.mubr.bf16.gmra.mxu0 %v206
  %v384 = vpop.f32.mrf.mxu0
  %v385 = vadd.f32 0.0, %v384
  %v386 = vpop.f32.mrf.mxu0
  %v387 = vpop.f32.mrf.mxu0
  %v388 = vadd.f32 0.0, %v387
  %v389 = vpop.f32.mrf.mxu0
  %390 = vmatprep.mubr.bf16.mxu0 %v209
  %391 = vmatmul.mubr.bf16.gmra.mxu0 %v208
  %v392 = vpop.f32.mrf.mxu0
  %v393 = vadd.f32 0.0, %v392
  %v394 = vpop.f32.mrf.mxu0
  %v395 = vpop.f32.mrf.mxu0
  %v396 = vadd.f32 0.0, %v395
  %v397 = vpop.f32.mrf.mxu0
  %398 = vmatprep.mubr.bf16.mxu0 %v211
  %399 = vmatmul.mubr.bf16.gmra.mxu0 %v210
  %v400 = vpop.f32.mrf.mxu0
  %v401 = vadd.f32 0.0, %v400
  %v402 = vpop.f32.mrf.mxu0
  %v403 = vpop.f32.mrf.mxu0
  %v404 = vadd.f32 0.0, %v403
  %v405 = vpop.f32.mrf.mxu0
  %406 = vmatprep.mubr.bf16.mxu0 %v213
  %407 = vmatmul.mubr.bf16.gmra.mxu0 %v212
  %v408 = vpop.f32.mrf.mxu0
  %v409 = vadd.f32 0.0, %v408
  %v410 = vpop.f32.mrf.mxu0
  %v411 = vpop.f32.mrf.mxu0
  %v412 = vadd.f32 0.0, %v411
  %v413 = vpop.f32.mrf.mxu0
  %414 = vmatprep.mubr.bf16.mxu0 %v215
  %415 = vmatmul.mubr.bf16.gmra.mxu0 %v214
  %v416 = vpop.f32.mrf.mxu0
  %v417 = vadd.f32 0.0, %v416
  %v418 = vpop.f32.mrf.mxu0
  %v419 = vpop.f32.mrf.mxu0
  %v420 = vadd.f32 0.0, %v419
  %v421 = vpop.f32.mrf.mxu0
  %422 = vmatprep.mubr.bf16.mxu0 %v217
  %423 = vmatmul.mubr.bf16.gmra.mxu0 %v216
  %v424 = vpop.f32.mrf.mxu0
  %v425 = vadd.f32 0.0, %v424
  %v426 = vpop.f32.mrf.mxu0
  %v427 = vpop.f32.mrf.mxu0
  %v428 = vadd.f32 0.0, %v427
  %v429 = vpop.f32.mrf.mxu0
  %430 = vmatprep.mubr.bf16.mxu0 %v219
  %431 = vmatmul.mubr.bf16.gmra.mxu0 %v218
  %v432 = vpop.f32.mrf.mxu0
  %v433 = vadd.f32 0.0, %v432
  %v434 = vpop.f32.mrf.mxu0
  %v435 = vpop.f32.mrf.mxu0
  %v436 = vadd.f32 0.0, %v435
  %v437 = vpop.f32.mrf.mxu0
  %438 = vmatprep.mubr.bf16.mxu0 %v221
  %439 = vmatmul.mubr.bf16.gmra.mxu0 %v220
  %v440 = vpop.f32.mrf.mxu0
  %v441 = vadd.f32 0.0, %v440
  %v442 = vpop.f32.mrf.mxu0
  %v443 = vpop.f32.mrf.mxu0
  %v444 = vadd.f32 0.0, %v443
  %v445 = vpop.f32.mrf.mxu0
  %446 = vdwg.mxu0
  %vm447 = vcmask 261120
  %v448 = vsel %vm447, %v385, 0.0
  %v449 = vsel %vm447, %v388, 0.0
  %v450 = vadd.f32 %v448, %v449
  %v451 = vsel %vm447, %v393, 0.0
  %v452 = vadd.f32 %v450, %v451
  %v453 = vsel %vm447, %v396, 0.0
  %v454 = vadd.f32 %v452, %v453
  %v455 = vsel %vm447, %v401, 0.0
  %v456 = vadd.f32 %v454, %v455
  %v457 = vsel %vm447, %v404, 0.0
  %v458 = vadd.f32 %v456, %v457
  %v459 = vsel %vm447, %v409, 0.0
  %v460 = vadd.f32 %v458, %v459
  %v461 = vsel %vm447, %v412, 0.0
  %v462 = vadd.f32 %v460, %v461
  %v463 = vsel %vm447, %v417, 0.0
  %v464 = vadd.f32 %v462, %v463
  %v465 = vsel %vm447, %v420, 0.0
  %v466 = vadd.f32 %v464, %v465
  %v467 = vsel %vm447, %v425, 0.0
  %v468 = vadd.f32 %v466, %v467
  %v469 = vsel %vm447, %v428, 0.0
  %v470 = vadd.f32 %v468, %v469
  %v471 = vsel %vm447, %v433, 0.0
  %v472 = vadd.f32 %v470, %v471
  %v473 = vsel %vm447, %v436, 0.0
  %v474 = vadd.f32 %v472, %v473
  %v475 = vsel %vm447, %v441, 0.0
  %v476 = vadd.f32 %v474, %v475
  %v477 = vsel %vm447, %v444, 0.0
  %v478 = vadd.f32 %v476, %v477
  %v479 = vrot.slane %v478, 4
  %v480 = vadd.f32 %v478, %v479
  %v481 = vrot.slane %v480, 2
  %v482 = vadd.f32 %v480, %v481
  %v483 = vrot.slane %v482, 1
  %v484 = vadd.f32 %v482, %v483
  %v485 = vmul.f32 %v385, %v385
  %v486 = vmul.f32 %v388, %v388
  %v487 = vmul.f32 %v393, %v393
  %v488 = vmul.f32 %v396, %v396
  %v489 = vmul.f32 %v401, %v401
  %v490 = vmul.f32 %v404, %v404
  %v491 = vmul.f32 %v409, %v409
  %v492 = vmul.f32 %v412, %v412
  %v493 = vmul.f32 %v417, %v417
  %v494 = vmul.f32 %v420, %v420
  %v495 = vmul.f32 %v425, %v425
  %v496 = vmul.f32 %v428, %v428
  %v497 = vmul.f32 %v433, %v433
  %v498 = vmul.f32 %v436, %v436
  %v499 = vmul.f32 %v441, %v441
  %v500 = vmul.f32 %v444, %v444
  %v501 = vsel %vm447, %v485, 0.0
  %v502 = vsel %vm447, %v486, 0.0
  %v503 = vadd.f32 %v501, %v502
  %v504 = vsel %vm447, %v487, 0.0
  %v505 = vadd.f32 %v503, %v504
  %v506 = vsel %vm447, %v488, 0.0
  %v507 = vadd.f32 %v505, %v506
  %v508 = vsel %vm447, %v489, 0.0
  %v509 = vadd.f32 %v507, %v508
  %v510 = vsel %vm447, %v490, 0.0
  %v511 = vadd.f32 %v509, %v510
  %v512 = vsel %vm447, %v491, 0.0
  %v513 = vadd.f32 %v511, %v512
  %v514 = vsel %vm447, %v492, 0.0
  %v515 = vadd.f32 %v513, %v514
  %v516 = vsel %vm447, %v493, 0.0
  %v517 = vadd.f32 %v515, %v516
  %v518 = vsel %vm447, %v494, 0.0
  %v519 = vadd.f32 %v517, %v518
  %v520 = vsel %vm447, %v495, 0.0
  %v521 = vadd.f32 %v519, %v520
  %v522 = vsel %vm447, %v496, 0.0
  %v523 = vadd.f32 %v521, %v522
  %v524 = vsel %vm447, %v497, 0.0
  %v525 = vadd.f32 %v523, %v524
  %v526 = vsel %vm447, %v498, 0.0
  %v527 = vadd.f32 %v525, %v526
  %v528 = vsel %vm447, %v499, 0.0
  %v529 = vadd.f32 %v527, %v528
  %v530 = vsel %vm447, %v500, 0.0
  %v531 = vadd.f32 %v529, %v530
  %v532 = vrot.slane %v531, 4
  %v533 = vadd.f32 %v531, %v532
  %v534 = vrot.slane %v533, 2
  %v535 = vadd.f32 %v533, %v534
  %v536 = vrot.slane %v535, 1
  %v537 = vadd.f32 %v535, %v536
  %538 = vst.msk [vmem:[%s4] sm:$0xff] %vm447, %v484
  %539 = vst.msk [vmem:[%s5] sm:$0xff] %vm447, %v537
  %v540 = vpack.c.bf16 %v388, %v385
  %v541 = vpack.c.bf16 %v396, %v393
  %v542 = vpack.c.bf16 %v404, %v401
  %v543 = vpack.c.bf16 %v412, %v409
  %v544 = vpack.c.bf16 %v420, %v417
  %v545 = vpack.c.bf16 %v428, %v425
  %v546 = vpack.c.bf16 %v436, %v433
  %v547 = vpack.c.bf16 %v444, %v441
  %v556 = vunpack.c.l.b16 %v540
  %v557 = vunpack.c.h.b16 %v540
  %v558 = vunpack.c.l.b16 %v541
  %v559 = vunpack.c.h.b16 %v541
  %v560 = vunpack.c.l.b16 %v542
  %v561 = vunpack.c.h.b16 %v542
  %v562 = vunpack.c.l.b16 %v543
  %v563 = vunpack.c.h.b16 %v543
  %v564 = vunpack.c.l.b16 %v544
  %v565 = vunpack.c.h.b16 %v544
  %v566 = vunpack.c.l.b16 %v545
  %v567 = vunpack.c.h.b16 %v545
  %v568 = vunpack.c.l.b16 %v546
  %v569 = vunpack.c.h.b16 %v546
  %v570 = vunpack.c.l.b16 %v547
  %v571 = vunpack.c.h.b16 %v547
  %v572 = vpack.c.b16 %v556, %v556
  %v573 = vpack.c.b16 %v557, %v557
  %v574 = vpack.c.b16 %v558, %v558
  %v575 = vpack.c.b16 %v559, %v559
  %v576 = vpack.c.b16 %v560, %v560
  %v577 = vpack.c.b16 %v561, %v561
  %v578 = vpack.c.b16 %v562, %v562
  %v579 = vpack.c.b16 %v563, %v563
  %v580 = vpack.c.b16 %v564, %v564
  %v581 = vpack.c.b16 %v565, %v565
  %v582 = vpack.c.b16 %v566, %v566
  %v583 = vpack.c.b16 %v567, %v567
  %v584 = vpack.c.b16 %v568, %v568
  %v585 = vpack.c.b16 %v569, %v569
  %v586 = vpack.c.b16 %v570, %v570
  %v587 = vpack.c.b16 %v571, %v571
  %vm604 = vcmask 257024
  %605 = vst.msk [vmem:[%s3] sm:$0xf] %vm604, %v572
  %606 = vst.msk [vmem:[%s3 + $0x4] sm:$0xf] %vm604, %v573
  %607 = vst.msk [vmem:[%s3 + $0x8] sm:$0xf] %vm604, %v574
  %608 = vst.msk [vmem:[%s3 + $0xc] sm:$0xf] %vm604, %v575
  %609 = vst.msk [vmem:[%s3 + $0x10] sm:$0xf] %vm604, %v576
  %610 = vst.msk [vmem:[%s3 + $0x14] sm:$0xf] %vm604, %v577
  %611 = vst.msk [vmem:[%s3 + $0x18] sm:$0xf] %vm604, %v578
  %612 = vst.msk [vmem:[%s3 + $0x1c] sm:$0xf] %vm604, %v579
  %613 = vst.msk [vmem:[%s3 + $0x20] sm:$0xf] %vm604, %v580
  %614 = vst.msk [vmem:[%s3 + $0x24] sm:$0xf] %vm604, %v581
  %615 = vst.msk [vmem:[%s3 + $0x28] sm:$0xf] %vm604, %v582
  %616 = vst.msk [vmem:[%s3 + $0x2c] sm:$0xf] %vm604, %v583
  %617 = vst.msk [vmem:[%s3 + $0x30] sm:$0xf] %vm604, %v584
  %618 = vst.msk [vmem:[%s3 + $0x34] sm:$0xf] %vm604, %v585
  %619 = vst.msk [vmem:[%s3 + $0x38] sm:$0xf] %vm604, %v586
  %620 = vst.msk [vmem:[%s3 + $0x3c] sm:$0xf] %vm604, %v587
  // Predicated region
  $region14: #{netD_forward.8} parent=0 // pred_check
    _
  $region15: #{netD_forward.8} parent=0 // pred_check_branch
    %622 = sbr.rel (0) target = $region17
  $region16: #{netD_forward.8} parent=0 // pred_region
    _
  $region17: #{netD_forward.8} parent=0 // pred_fallthru
    _
  // Predicated region
  $region18: #{netD_forward.8} parent=0 // pred_check
    _
  $region19: #{netD_forward.8} parent=0 // pred_check_branch
    %624 = sbr.rel (0) target = $region21
  $region20: #{netD_forward.8} parent=0 // pred_region
    _
  $region21: #{netD_forward.8} parent=0 // pred_fallthru
    _
  // Predicated region
  $region22: #{netD_forward.8} parent=0 // pred_check
    _
  $region23: #{netD_forward.8} parent=0 // pred_check_branch
    %626 = sbr.rel (0) target = $region25
  $region24: #{netD_forward.8} parent=0 // pred_region
    _
  $region25: #{netD_forward.8} parent=0 // pred_fallthru
    _
  // Predicated region
  $region26: #{netD_forward.8} parent=0 // pred_check
    _
  $region27: #{netD_forward.8} parent=0 // pred_check_branch
    %628 = sbr.rel (0) target = $region29
  $region28: #{netD_forward.8} parent=0 // pred_region
    _
  $region29: #{netD_forward.8} parent=0 // pred_fallthru
    _
  // Predicated region
  $region30: #{netD_forward.8} parent=0 // pred_check
    _
  $region31: #{netD_forward.8} parent=0 // pred_check_branch
    %630 = sbr.rel (0) target = $region33
  $region32: #{netD_forward.8} parent=0 // pred_region
    _
  $region33: #{netD_forward.8} parent=0 // pred_fallthru
    _
  // Predicated region
  $region34: #{netD_forward.8} parent=0 // pred_check
    _
  $region35: #{netD_forward.8} parent=0 // pred_check_branch
    %632 = sbr.rel (0) target = $region37
  $region36: #{netD_forward.8} parent=0 // pred_region
    _
  $region37: #{netD_forward.8} parent=0 // pred_fallthru
    _

// kernel: tile.28
$region0: #{tile.28}
  #allocation0 [shape = 's32[1]{0}', space=sflag, size = 0x4, scoped, tag = 'scoped memory for tile.28']
  %s0 = inlined_call_operand.vmem [shape: f32[32], index: 0, kind: input, shape index: {}]
  %s1 = inlined_call_operand.vmem [shape: f32[16,32], index: 1, kind: output, shape index: {}]
  // Predicated region
  $region2: #{tile.28} parent=0 // pred_check
    _
  $region3: #{tile.28} parent=0 // pred_check_branch
    %3 = sbr.rel (0) target = $region5
  $region4: #{tile.28} parent=0 // pred_region
    _
  $region5: #{tile.28} parent=0 // pred_fallthru
    _
  %v4 = vld [vmem:[%s0] ss:$0 sm:$0xff]
  %5 = vst [vmem:[%s1] sm:$0xff] %v4
  %s6 = scalar_lea.vmem %s1, 8
  %7 = vst [vmem:[%s6] sm:$0xff] %v4

// kernel: tile.29
$region0: #{tile.29}
  %s0 = inlined_call_operand.vmem [shape: f32[16,32], index: 0, kind: input, shape index: {}]
  %s1 = inlined_call_operand.vmem [shape: f32[1,512], index: 1, kind: output, shape index: {}]
  $region1: #{tile.29} parent=0
    #allocation0 [shape = 'u8[16384]{0}', space=vmem, size = 0x4000, scoped, tag = 'scoped mem for output reshape']
    %v2 = vld [vmem:[%s0] ss:$4 sm:$0xf]
    %vm3 = vcmask 261120
    %4 = vst.msk [vmem:[#allocation0] ss:$8 sm:$0xf] %vm3, %v2
    %s5 = scalar_lea.vmem %s0, 3
    %v6 = vld [vmem:[%s5] ss:$4 sm:$0xf]
    %7 = vrot.lane.b32.xlu0 %v6, 96
    %v8 = vpop.permute.xlu0 %7
    %vm9 = vcmask 1048320
    %10 = vst.msk [vmem:[#allocation0] ss:$8 sm:$0xf] %vm9, %v8
    %s11 = scalar_lea.vmem %s0, 2
    %v12 = vld [vmem:[%s11] ss:$4 sm:$0xf]
    %13 = vrot.lane.b32.xlu0 %v12, 64
    %v14 = vpop.permute.xlu0 %13
    %vm15 = vcmask 785920
    %16 = vst.msk [vmem:[#allocation0] ss:$8 sm:$0xf] %vm15, %v14
    %s17 = scalar_lea.vmem %s0, 1
    %v18 = vld [vmem:[%s17] ss:$4 sm:$0xf]
    %19 = vrot.lane.b32.xlu0 %v18, 32
    %v20 = vpop.permute.xlu0 %19
    %vm21 = vcmask 523520
    %22 = vst.msk [vmem:[#allocation0] ss:$8 sm:$0xf] %vm21, %v20
    %s24 = sshll.u32 1, 1
    %s25 = ssub.s32 %s24, 1
    %v27 = vld [vmem:[#allocation0] sm:%s25]
    %s28 = sshll.u32 1, 1
    %s29 = ssub.s32 %s28, 1
    %30 = vst [vmem:[%s1] sm:%s29] %v27
    %s31 = scalar_lea.vmem [#allocation0], 8
    %v32 = vld [vmem:[%s31] sm:%s25]
    %s33 = sshll.u32 1, 1
    %s34 = ssub.s32 %s33, 1
    %s35 = scalar_lea.vmem %s1, 1
    %36 = vst [vmem:[%s35] sm:%s34] %v32
    %s37 = scalar_lea.vmem [#allocation0], 16
    %v38 = vld [vmem:[%s37] sm:%s25]
    %s39 = sshll.u32 1, 1
    %s40 = ssub.s32 %s39, 1
    %s41 = smul.addr 1, 2
    %s42 = scalar_lea.vmem %s1, %s41
    %43 = vst [vmem:[%s42] sm:%s40] %v38
    %s44 = scalar_lea.vmem [#allocation0], 24
    %v45 = vld [vmem:[%s44] sm:%s25]
    %s46 = sshll.u32 1, 1
    %s47 = ssub.s32 %s46, 1
    %s48 = smul.addr 1, 3
    %s49 = scalar_lea.vmem %s1, %s48
    %50 = vst [vmem:[%s49] sm:%s47] %v45

// kernel: tile.33
$region0: #{tile.33}
  #allocation0 [shape = 's32[1]{0}', space=sflag, size = 0x4, scoped, tag = 'scoped memory for tile.33']
  %s0 = inlined_call_operand.vmem [shape: f32[64], index: 0, kind: input, shape index: {}]
  %s1 = inlined_call_operand.vmem [shape: f32[9,64], index: 1, kind: output, shape index: {}]
  // Predicated region
  $region2: #{tile.33} parent=0 // pred_check
    _
  $region3: #{tile.33} parent=0 // pred_check_branch
    %3 = sbr.rel (0) target = $region5
  $region4: #{tile.33} parent=0 // pred_region
    _
  $region5: #{tile.33} parent=0 // pred_fallthru
    _
  %v4 = vld [vmem:[%s0] ss:$0 sm:$0xff]
  %5 = vst [vmem:[%s1] sm:$0xff] %v4
  %s6 = scalar_lea.vmem %s1, 8
  %7 = vst [vmem:[%s6] sm:$0xff] %v4

// kernel: tile.34
$region0: #{tile.34}
  %s0 = inlined_call_operand.vmem [shape: f32[9,64], index: 0, kind: input, shape index: {}]
  %s1 = inlined_call_operand.vmem [shape: f32[1,576], index: 1, kind: output, shape index: {}]
  $region1: #{tile.34} parent=0
    #allocation0 [shape = 'u8[20480]{0}', space=vmem, size = 0x5000, scoped, tag = 'scoped mem for output reshape']
    %v2 = vld [vmem:[%s0] ss:$2 sm:$0x1f]
    %vm3 = vcmask 523264
    %4 = vst.msk [vmem:[#allocation0] ss:$8 sm:$0xf] %vm3, %v2
    %s5 = scalar_lea.vmem [#allocation0], 28
    %6 = vst.msk [vmem:[%s5] sm:$0x10] %vm3, %v2
    %s7 = scalar_lea.vmem %s0, 1
    %v8 = vld [vmem:[%s7] ss:$2 sm:$0xf]
    %9 = vrot.lane.b32.xlu0 %v8, 64
    %v10 = vpop.permute.xlu0 %9
    %vm11 = vcmask 1048064
    %12 = vst.msk [vmem:[#allocation0] ss:$8 sm:$0xf] %vm11, %v10
    %s14 = sshll.u32 1, 1
    %s15 = ssub.s32 %s14, 1
    %v17 = vld [vmem:[#allocation0] sm:%s15]
    %s18 = sshll.u32 1, 1
    %s19 = ssub.s32 %s18, 1
    %20 = vst [vmem:[%s1] sm:%s19] %v17
    %s21 = scalar_lea.vmem [#allocation0], 8
    %v22 = vld [vmem:[%s21] sm:%s15]
    %s23 = sshll.u32 1, 1
    %s24 = ssub.s32 %s23, 1
    %s25 = scalar_lea.vmem %s1, 1
    %26 = vst [vmem:[%s25] sm:%s24] %v22
    %s27 = scalar_lea.vmem [#allocation0], 16
    %v28 = vld [vmem:[%s27] sm:%s15]
    %s29 = sshll.u32 1, 1
    %s30 = ssub.s32 %s29, 1
    %s31 = smul.addr 1, 2
    %s32 = scalar_lea.vmem %s1, %s31
    %33 = vst [vmem:[%s32] sm:%s30] %v28
    %s34 = scalar_lea.vmem [#allocation0], 24
    %v35 = vld [vmem:[%s34] sm:%s15]
    %s36 = sshll.u32 1, 1
    %s37 = ssub.s32 %s36, 1
    %s38 = smul.addr 1, 3
    %s39 = scalar_lea.vmem %s1, %s38
    %40 = vst [vmem:[%s39] sm:%s37] %v35
    %s41 = scalar_lea.vmem [#allocation0], 32
    %v42 = vld [vmem:[%s41] sm:%s15]
    %s43 = sshll.u32 1, 1
    %s44 = ssub.s32 %s43, 1
    %s45 = smul.addr 1, 4
    %s46 = scalar_lea.vmem %s1, %s45
    %47 = vst [vmem:[%s46] sm:%s44] %v42

// kernel: netD_forward.9
$region0: #{netD_forward.9}
  #allocation0 [shape = 'u32[]', space=smem, size = 0x4, offset = 0x4, fixed_abs, tag = 'smem constant byte address 0x4 - core index']
  #allocation1 [shape = 'u32[144,128]{1,0:T(1,128)}', space=vmem, size = 0x12000, scoped, tag = 'internal scratch']
  %s0 = inlined_call_operand.vmem [shape: bf16[32,512], index: 0, kind: input, shape index: {}]
  %s1 = inlined_call_operand.vmem [shape: bf16[512,64], index: 1, kind: input, shape index: {}]
  %s2 = inlined_call_operand.vmem [shape: f32[1,512], index: 2, kind: input, shape index: {}]
  %s3 = inlined_call_operand.vmem [shape: bf16[32,64], index: 3, kind: output, shape index: {0}]
  %s4 = inlined_call_operand.vmem [shape: f32[1,8,64], index: 4, kind: output, shape index: {1}]
  %s5 = inlined_call_operand.vmem [shape: f32[1,8,64], index: 5, kind: output, shape index: {2}]
  %6 = xla_tuple %s3, %s4, %s5
  %s7 = sld [smem:[#allocation0]]
  $region38: #{netD_forward.9} parent=0
    _
  %s9 = ssub.s32 1, %s7
  %s10 = scalar_select 0, %s9, %s7
  // Predicated region
  $region2: #{netD_forward.9} parent=0 // pred_check
    _
  $region3: #{netD_forward.9} parent=0 // pred_check_branch
    %12 = sbr.rel (0) target = $region5
  $region4: #{netD_forward.9} parent=0 // pred_region
    _
  $region5: #{netD_forward.9} parent=0 // pred_fallthru
    _
  // Predicated region
  $region6: #{netD_forward.9} parent=0 // pred_check
    _
  $region7: #{netD_forward.9} parent=0 // pred_check_branch
    %14 = sbr.rel (0) target = $region9
  $region8: #{netD_forward.9} parent=0 // pred_region
    _
  $region9: #{netD_forward.9} parent=0 // pred_fallthru
    _
  // Predicated region
  $region10: #{netD_forward.9} parent=0 // pred_check
    _
  $region11: #{netD_forward.9} parent=0 // pred_check_branch
    %16 = sbr.rel (0) target = $region13
  $region12: #{netD_forward.9} parent=0 // pred_region
    _
  $region13: #{netD_forward.9} parent=0 // pred_fallthru
    _
  %v18 = vld [vmem:[%s0] sm:$0xff]
  %v19 = vld [vmem:[%s0 + $0x8] sm:$0xff]
  %v20 = vld [vmem:[%s0 + $0x10] sm:$0xff]
  %v21 = vld [vmem:[%s0 + $0x18] sm:$0xff]
  %v22 = vld [vmem:[%s0 + $0x20] sm:$0xff]
  %v23 = vld [vmem:[%s0 + $0x28] sm:$0xff]
  %v24 = vld [vmem:[%s0 + $0x30] sm:$0xff]
  %v25 = vld [vmem:[%s0 + $0x38] sm:$0xff]
  %v26 = vunpack.c.l.bf16 %v18
  %v27 = vunpack.c.h.bf16 %v18
  %v28 = vunpack.c.l.bf16 %v19
  %v29 = vunpack.c.h.bf16 %v19
  %v30 = vunpack.c.l.bf16 %v20
  %v31 = vunpack.c.h.bf16 %v20
  %v32 = vunpack.c.l.bf16 %v21
  %v33 = vunpack.c.h.bf16 %v21
  %v34 = vunpack.c.l.bf16 %v22
  %v35 = vunpack.c.h.bf16 %v22
  %v36 = vunpack.c.l.bf16 %v23
  %v37 = vunpack.c.h.bf16 %v23
  %v38 = vunpack.c.l.bf16 %v24
  %v39 = vunpack.c.h.bf16 %v24
  %v40 = vunpack.c.l.bf16 %v25
  %v41 = vunpack.c.h.bf16 %v25
  %v42 = vld [vmem:[%s2] sm:$0xf]
  %v44 = vlaneseq
  %v45 = vshrl.u32 %v44, 7
  %v46 = vsub.s32 0, %v45
  %v47 = vrot.slane %v42, %v46
  %v48 = vlaneseq
  %v49 = vshrl.u32 %v48, 7
  %v50 = vsub.s32 1, %v49
  %v51 = vrot.slane %v42, %v50
  %v52 = vlaneseq
  %v53 = vshrl.u32 %v52, 7
  %v54 = vsub.s32 2, %v53
  %v55 = vrot.slane %v42, %v54
  %v56 = vlaneseq
  %v57 = vshrl.u32 %v56, 7
  %v58 = vsub.s32 3, %v57
  %v59 = vrot.slane %v42, %v58
  %v64 = vmul.f32 %v26, %v47
  %v65 = vmul.f32 %v27, %v51
  %v66 = vmul.f32 %v28, %v55
  %v67 = vmul.f32 %v29, %v59
  %v68 = vmul.f32 %v30, %v47
  %v69 = vmul.f32 %v31, %v51
  %v70 = vmul.f32 %v32, %v55
  %v71 = vmul.f32 %v33, %v59
  %v72 = vmul.f32 %v34, %v47
  %v73 = vmul.f32 %v35, %v51
  %v74 = vmul.f32 %v36, %v55
  %v75 = vmul.f32 %v37, %v59
  %v76 = vmul.f32 %v38, %v47
  %v77 = vmul.f32 %v39, %v51
  %v78 = vmul.f32 %v40, %v55
  %v79 = vmul.f32 %v41, %v59
  %vm80 = vcmp.gt.f32.partialorder %v64, 0.0
  %vm81 = vcmp.gt.f32.partialorder %v65, 0.0
  %vm82 = vcmp.gt.f32.partialorder %v66, 0.0
  %vm83 = vcmp.gt.f32.partialorder %v67, 0.0
  %vm84 = vcmp.gt.f32.partialorder %v68, 0.0
  %vm85 = vcmp.gt.f32.partialorder %v69, 0.0
  %vm86 = vcmp.gt.f32.partialorder %v70, 0.0
  %vm87 = vcmp.gt.f32.partialorder %v71, 0.0
  %vm88 = vcmp.gt.f32.partialorder %v72, 0.0
  %vm89 = vcmp.gt.f32.partialorder %v73, 0.0
  %vm90 = vcmp.gt.f32.partialorder %v74, 0.0
  %vm91 = vcmp.gt.f32.partialorder %v75, 0.0
  %vm92 = vcmp.gt.f32.partialorder %v76, 0.0
  %vm93 = vcmp.gt.f32.partialorder %v77, 0.0
  %vm94 = vcmp.gt.f32.partialorder %v78, 0.0
  %vm95 = vcmp.gt.f32.partialorder %v79, 0.0
  %v96 = vmul.f32 %v64, 0.2
  %v97 = vmul.f32 %v65, 0.2
  %v98 = vmul.f32 %v66, 0.2
  %v99 = vmul.f32 %v67, 0.2
  %v100 = vmul.f32 %v68, 0.2
  %v101 = vmul.f32 %v69, 0.2
  %v102 = vmul.f32 %v70, 0.2
  %v103 = vmul.f32 %v71, 0.2
  %v104 = vmul.f32 %v72, 0.2
  %v105 = vmul.f32 %v73, 0.2
  %v106 = vmul.f32 %v74, 0.2
  %v107 = vmul.f32 %v75, 0.2
  %v108 = vmul.f32 %v76, 0.2
  %v109 = vmul.f32 %v77, 0.2
  %v110 = vmul.f32 %v78, 0.2
  %v111 = vmul.f32 %v79, 0.2
  %v112 = vsel %vm80, %v64, %v96
  %v113 = vsel %vm81, %v65, %v97
  %v114 = vsel %vm82, %v66, %v98
  %v115 = vsel %vm83, %v67, %v99
  %v116 = vsel %vm84, %v68, %v100
  %v117 = vsel %vm85, %v69, %v101
  %v118 = vsel %vm86, %v70, %v102
  %v119 = vsel %vm87, %v71, %v103
  %v120 = vsel %vm88, %v72, %v104
  %v121 = vsel %vm89, %v73, %v105
  %v122 = vsel %vm90, %v74, %v106
  %v123 = vsel %vm91, %v75, %v107
  %v124 = vsel %vm92, %v76, %v108
  %v125 = vsel %vm93, %v77, %v109
  %v126 = vsel %vm94, %v78, %v110
  %v127 = vsel %vm95, %v79, %v111
  %v128 = vpack.c.bf16 %v116, %v112
  %v129 = vpack.c.bf16 %v117, %v113
  %v130 = vpack.c.bf16 %v118, %v114
  %v131 = vpack.c.bf16 %v119, %v115
  %v132 = vpack.c.bf16 %v124, %v120
  %v133 = vpack.c.bf16 %v125, %v121
  %v134 = vpack.c.bf16 %v126, %v122
  %v135 = vpack.c.bf16 %v127, %v123
  %v136 = vld [vmem:[%s1] sm:$0xf]
  %v137 = vld [vmem:[%s1 + $0x4] sm:$0xf]
  %v138 = vld [vmem:[%s1 + $0x8] sm:$0xf]
  %v139 = vld [vmem:[%s1 + $0xc] sm:$0xf]
  %v140 = vld [vmem:[%s1 + $0x10] sm:$0xf]
  %v141 = vld [vmem:[%s1 + $0x14] sm:$0xf]
  %v142 = vld [vmem:[%s1 + $0x18] sm:$0xf]
  %v143 = vld [vmem:[%s1 + $0x1c] sm:$0xf]
  %v144 = vld [vmem:[%s1 + $0x20] sm:$0xf]
  %v145 = vld [vmem:[%s1 + $0x24] sm:$0xf]
  %v146 = vld [vmem:[%s1 + $0x28] sm:$0xf]
  %v147 = vld [vmem:[%s1 + $0x2c] sm:$0xf]
  %v148 = vld [vmem:[%s1 + $0x30] sm:$0xf]
  %v149 = vld [vmem:[%s1 + $0x34] sm:$0xf]
  %v150 = vld [vmem:[%s1 + $0x38] sm:$0xf]
  %v151 = vld [vmem:[%s1 + $0x3c] sm:$0xf]
  %v152 = vld [vmem:[%s1 + $0x40] sm:$0xf]
  %v153 = vld [vmem:[%s1 + $0x44] sm:$0xf]
  %v154 = vld [vmem:[%s1 + $0x48] sm:$0xf]
  %v155 = vld [vmem:[%s1 + $0x4c] sm:$0xf]
  %v156 = vld [vmem:[%s1 + $0x50] sm:$0xf]
  %v157 = vld [vmem:[%s1 + $0x54] sm:$0xf]
  %v158 = vld [vmem:[%s1 + $0x58] sm:$0xf]
  %v159 = vld [vmem:[%s1 + $0x5c] sm:$0xf]
  %v160 = vld [vmem:[%s1 + $0x60] sm:$0xf]
  %v161 = vld [vmem:[%s1 + $0x64] sm:$0xf]
  %v162 = vld [vmem:[%s1 + $0x68] sm:$0xf]
  %v163 = vld [vmem:[%s1 + $0x6c] sm:$0xf]
  %v164 = vld [vmem:[%s1 + $0x70] sm:$0xf]
  %v165 = vld [vmem:[%s1 + $0x74] sm:$0xf]
  %v166 = vld [vmem:[%s1 + $0x78] sm:$0xf]
  %v167 = vld [vmem:[%s1 + $0x7c] sm:$0xf]
  %v168 = vld [vmem:[%s1 + $0x80] sm:$0xf]
  %v169 = vld [vmem:[%s1 + $0x84] sm:$0xf]
  %v170 = vld [vmem:[%s1 + $0x88] sm:$0xf]
  %v171 = vld [vmem:[%s1 + $0x8c] sm:$0xf]
  %v172 = vld [vmem:[%s1 + $0x90] sm:$0xf]
  %v173 = vld [vmem:[%s1 + $0x94] sm:$0xf]
  %v174 = vld [vmem:[%s1 + $0x98] sm:$0xf]
  %v175 = vld [vmem:[%s1 + $0x9c] sm:$0xf]
  %v176 = vld [vmem:[%s1 + $0xa0] sm:$0xf]
  %v177 = vld [vmem:[%s1 + $0xa4] sm:$0xf]
  %v178 = vld [vmem:[%s1 + $0xa8] sm:$0xf]
  %v179 = vld [vmem:[%s1 + $0xac] sm:$0xf]
  %v180 = vld [vmem:[%s1 + $0xb0] sm:$0xf]
  %v181 = vld [vmem:[%s1 + $0xb4] sm:$0xf]
  %v182 = vld [vmem:[%s1 + $0xb8] sm:$0xf]
  %v183 = vld [vmem:[%s1 + $0xbc] sm:$0xf]
  %v184 = vld [vmem:[%s1 + $0xc0] sm:$0xf]
  %v185 = vld [vmem:[%s1 + $0xc4] sm:$0xf]
  %v186 = vld [vmem:[%s1 + $0xc8] sm:$0xf]
  %v187 = vld [vmem:[%s1 + $0xcc] sm:$0xf]
  %v188 = vld [vmem:[%s1 + $0xd0] sm:$0xf]
  %v189 = vld [vmem:[%s1 + $0xd4] sm:$0xf]
  %v190 = vld [vmem:[%s1 + $0xd8] sm:$0xf]
  %v191 = vld [vmem:[%s1 + $0xdc] sm:$0xf]
  %v192 = vld [vmem:[%s1 + $0xe0] sm:$0xf]
  %v193 = vld [vmem:[%s1 + $0xe4] sm:$0xf]
  %v194 = vld [vmem:[%s1 + $0xe8] sm:$0xf]
  %v195 = vld [vmem:[%s1 + $0xec] sm:$0xf]
  %v196 = vld [vmem:[%s1 + $0xf0] sm:$0xf]
  %v197 = vld [vmem:[%s1 + $0xf4] sm:$0xf]
  %v198 = vld [vmem:[%s1 + $0xf8] sm:$0xf]
  %v199 = vld [vmem:[%s1 + $0xfc] sm:$0xf]
  %v264 = vunpack.c.l.b16 %v136
  %v265 = vunpack.c.l.b16 %v137
  %v266 = vunpack.c.l.b16 %v138
  %v267 = vunpack.c.l.b16 %v139
  %v268 = vunpack.c.l.b16 %v140
  %v269 = vunpack.c.l.b16 %v141
  %v270 = vunpack.c.l.b16 %v142
  %v271 = vunpack.c.l.b16 %v143
  %v272 = vunpack.c.l.b16 %v144
  %v273 = vunpack.c.l.b16 %v145
  %v274 = vunpack.c.l.b16 %v146
  %v275 = vunpack.c.l.b16 %v147
  %v276 = vunpack.c.l.b16 %v148
  %v277 = vunpack.c.l.b16 %v149
  %v278 = vunpack.c.l.b16 %v150
  %v279 = vunpack.c.l.b16 %v151
  %v280 = vunpack.c.l.b16 %v152
  %v281 = vunpack.c.l.b16 %v153
  %v282 = vunpack.c.l.b16 %v154
  %v283 = vunpack.c.l.b16 %v155
  %v284 = vunpack.c.l.b16 %v156
  %v285 = vunpack.c.l.b16 %v157
  %v286 = vunpack.c.l.b16 %v158
  %v287 = vunpack.c.l.b16 %v159
  %v288 = vunpack.c.l.b16 %v160
  %v289 = vunpack.c.l.b16 %v161
  %v290 = vunpack.c.l.b16 %v162
  %v291 = vunpack.c.l.b16 %v163
  %v292 = vunpack.c.l.b16 %v164
  %v293 = vunpack.c.l.b16 %v165
  %v294 = vunpack.c.l.b16 %v166
  %v295 = vunpack.c.l.b16 %v167
  %v296 = vunpack.c.l.b16 %v168
  %v297 = vunpack.c.l.b16 %v169
  %v298 = vunpack.c.l.b16 %v170
  %v299 = vunpack.c.l.b16 %v171
  %v300 = vunpack.c.l.b16 %v172
  %v301 = vunpack.c.l.b16 %v173
  %v302 = vunpack.c.l.b16 %v174
  %v303 = vunpack.c.l.b16 %v175
  %v304 = vunpack.c.l.b16 %v176
  %v305 = vunpack.c.l.b16 %v177
  %v306 = vunpack.c.l.b16 %v178
  %v307 = vunpack.c.l.b16 %v179
  %v308 = vunpack.c.l.b16 %v180
  %v309 = vunpack.c.l.b16 %v181
  %v310 = vunpack.c.l.b16 %v182
  %v311 = vunpack.c.l.b16 %v183
  %v312 = vunpack.c.l.b16 %v184
  %v313 = vunpack.c.l.b16 %v185
  %v314 = vunpack.c.l.b16 %v186
  %v315 = vunpack.c.l.b16 %v187
  %v316 = vunpack.c.l.b16 %v188
  %v317 = vunpack.c.l.b16 %v189
  %v318 = vunpack.c.l.b16 %v190
  %v319 = vunpack.c.l.b16 %v191
  %v320 = vunpack.c.l.b16 %v192
  %v321 = vunpack.c.l.b16 %v193
  %v322 = vunpack.c.l.b16 %v194
  %v323 = vunpack.c.l.b16 %v195
  %v324 = vunpack.c.l.b16 %v196
  %v325 = vunpack.c.l.b16 %v197
  %v326 = vunpack.c.l.b16 %v198
  %v327 = vunpack.c.l.b16 %v199
  %v328 = vpack.c.b16 %v265, %v264
  %v329 = vpack.c.b16 %v267, %v266
  %v330 = vpack.c.b16 %v269, %v268
  %v331 = vpack.c.b16 %v271, %v270
  %v332 = vpack.c.b16 %v273, %v272
  %v333 = vpack.c.b16 %v275, %v274
  %v334 = vpack.c.b16 %v277, %v276
  %v335 = vpack.c.b16 %v279, %v278
  %v336 = vpack.c.b16 %v281, %v280
  %v337 = vpack.c.b16 %v283, %v282
  %v338 = vpack.c.b16 %v285, %v284
  %v339 = vpack.c.b16 %v287, %v286
  %v340 = vpack.c.b16 %v289, %v288
  %v341 = vpack.c.b16 %v291, %v290
  %v342 = vpack.c.b16 %v293, %v292
  %v343 = vpack.c.b16 %v295, %v294
  %v344 = vpack.c.b16 %v297, %v296
  %v345 = vpack.c.b16 %v299, %v298
  %v346 = vpack.c.b16 %v301, %v300
  %v347 = vpack.c.b16 %v303, %v302
  %v348 = vpack.c.b16 %v305, %v304
  %v349 = vpack.c.b16 %v307, %v306
  %v350 = vpack.c.b16 %v309, %v308
  %v351 = vpack.c.b16 %v311, %v310
  %v352 = vpack.c.b16 %v313, %v312
  %v353 = vpack.c.b16 %v315, %v314
  %v354 = vpack.c.b16 %v317, %v316
  %v355 = vpack.c.b16 %v319, %v318
  %v356 = vpack.c.b16 %v321, %v320
  %v357 = vpack.c.b16 %v323, %v322
  %v358 = vpack.c.b16 %v325, %v324
  %v359 = vpack.c.b16 %v327, %v326
  %392 = vmatprep.subr.bf16.mxu0 0
  %393 = vmatpush1.bf16.msra.mxu0 %v335
  %394 = vmatprep.subr.bf16.mxu0 0
  %395 = vmatpush1.bf16.msra.mxu0 %v334
  %396 = vmatprep.subr.bf16.mxu0 0
  %397 = vmatpush1.bf16.msra.mxu0 %v333
  %398 = vmatprep.subr.bf16.mxu0 0
  %399 = vmatpush1.bf16.msra.mxu0 %v332
  %400 = vmatprep.subr.bf16.mxu0 0
  %401 = vmatpush1.bf16.msra.mxu0 %v331
  %402 = vmatprep.subr.bf16.mxu0 0
  %403 = vmatpush1.bf16.msra.mxu0 %v330
  %404 = vmatprep.subr.bf16.mxu0 0
  %405 = vmatpush1.bf16.msra.mxu0 %v329
  %406 = vmatprep.subr.bf16.mxu0 0
  %407 = vmatpush1.bf16.msra.mxu0 %v328
  %408 = vmatprep.subr.bf16.mxu0 0
  %409 = vmatpush2.bf16.msra.mxu0 %v343
  %410 = vmatprep.subr.bf16.mxu0 0
  %411 = vmatpush2.bf16.msra.mxu0 %v342
  %412 = vmatprep.subr.bf16.mxu0 0
  %413 = vmatpush2.bf16.msra.mxu0 %v341
  %414 = vmatprep.subr.bf16.mxu0 0
  %415 = vmatpush2.bf16.msra.mxu0 %v340
  %416 = vmatprep.subr.bf16.mxu0 0
  %417 = vmatpush2.bf16.msra.mxu0 %v339
  %418 = vmatprep.subr.bf16.mxu0 0
  %419 = vmatpush2.bf16.msra.mxu0 %v338
  %420 = vmatprep.subr.bf16.mxu0 0
  %421 = vmatpush2.bf16.msra.mxu0 %v337
  %422 = vmatprep.subr.bf16.mxu0 0
  %423 = vmatpush2.bf16.msra.mxu0 %v336
  %424 = vmatprep.mubr.bf16.mxu0 %v129
  %425 = vmatmul.mubr.bf16.gmra.mxu0 %v128
  %v426 = vpop.f32.mrf.mxu0
  %v427 = vadd.f32 0.0, %v426
  %v428 = vpop.f32.mrf.mxu0
  %v429 = vpop.f32.mrf.mxu0
  %v430 = vadd.f32 0.0, %v429
  %v431 = vpop.f32.mrf.mxu0
  %432 = vmatprep.mubr.bf16.mxu0 %v133
  %433 = vmatmul.mubr.bf16.gmra.mxu0 %v132
  %v434 = vpop.f32.mrf.mxu0
  %v435 = vadd.f32 0.0, %v434
  %v436 = vpop.f32.mrf.mxu0
  %v437 = vpop.f32.mrf.mxu0
  %v438 = vadd.f32 0.0, %v437
  %v439 = vpop.f32.mrf.mxu0
  %440 = vdwg.mxu0
  %441 = vmatprep.subr.bf16.mxu0 0
  %442 = vmatpush1.bf16.msra.mxu0 %v351
  %443 = vmatprep.subr.bf16.mxu0 0
  %444 = vmatpush1.bf16.msra.mxu0 %v350
  %445 = vmatprep.subr.bf16.mxu0 0
  %446 = vmatpush1.bf16.msra.mxu0 %v349
  %447 = vmatprep.subr.bf16.mxu0 0
  %448 = vmatpush1.bf16.msra.mxu0 %v348
  %449 = vmatprep.subr.bf16.mxu0 0
  %450 = vmatpush1.bf16.msra.mxu0 %v347
  %451 = vmatprep.subr.bf16.mxu0 0
  %452 = vmatpush1.bf16.msra.mxu0 %v346
  %453 = vmatprep.subr.bf16.mxu0 0
  %454 = vmatpush1.bf16.msra.mxu0 %v345
  %455 = vmatprep.subr.bf16.mxu0 0
  %456 = vmatpush1.bf16.msra.mxu0 %v344
  %457 = vmatprep.subr.bf16.mxu0 0
  %458 = vmatpush2.bf16.msra.mxu0 %v359
  %459 = vmatprep.subr.bf16.mxu0 0
  %460 = vmatpush2.bf16.msra.mxu0 %v358
  %461 = vmatprep.subr.bf16.mxu0 0
  %462 = vmatpush2.bf16.msra.mxu0 %v357
  %463 = vmatprep.subr.bf16.mxu0 0
  %464 = vmatpush2.bf16.msra.mxu0 %v356
  %465 = vmatprep.subr.bf16.mxu0 0
  %466 = vmatpush2.bf16.msra.mxu0 %v355
  %467 = vmatprep.subr.bf16.mxu0 0
  %468 = vmatpush2.bf16.msra.mxu0 %v354
  %469 = vmatprep.subr.bf16.mxu0 0
  %470 = vmatpush2.bf16.msra.mxu0 %v353
  %471 = vmatprep.subr.bf16.mxu0 0
  %472 = vmatpush2.bf16.msra.mxu0 %v352
  %473 = vmatprep.mubr.bf16.mxu0 %v131
  %474 = vmatmul.mubr.bf16.gmra.mxu0 %v130
  %v475 = vpop.f32.mrf.mxu0
  %v476 = vadd.f32 %v427, %v475
  %v477 = vpop.f32.mrf.mxu0
  %v478 = vpop.f32.mrf.mxu0
  %v479 = vadd.f32 %v430, %v478
  %v480 = vpop.f32.mrf.mxu0
  %481 = vmatprep.mubr.bf16.mxu0 %v135
  %482 = vmatmul.mubr.bf16.gmra.mxu0 %v134
  %v483 = vpop.f32.mrf.mxu0
  %v484 = vadd.f32 %v435, %v483
  %v485 = vpop.f32.mrf.mxu0
  %v486 = vpop.f32.mrf.mxu0
  %v487 = vadd.f32 %v438, %v486
  %v488 = vpop.f32.mrf.mxu0
  %489 = vdwg.mxu0
  %vm490 = vcmask 523264
  %v491 = vsel %vm490, %v476, 0.0
  %v492 = vsel %vm490, %v479, 0.0
  %v493 = vadd.f32 %v491, %v492
  %v494 = vsel %vm490, %v484, 0.0
  %v495 = vadd.f32 %v493, %v494
  %v496 = vsel %vm490, %v487, 0.0
  %v497 = vadd.f32 %v495, %v496
  %v498 = vrot.slane %v497, 4
  %v499 = vadd.f32 %v497, %v498
  %v500 = vrot.slane %v499, 2
  %v501 = vadd.f32 %v499, %v500
  %v502 = vrot.slane %v501, 1
  %v503 = vadd.f32 %v501, %v502
  %v504 = vmul.f32 %v476, %v476
  %v505 = vmul.f32 %v479, %v479
  %v506 = vmul.f32 %v484, %v484
  %v507 = vmul.f32 %v487, %v487
  %v508 = vsel %vm490, %v504, 0.0
  %v509 = vsel %vm490, %v505, 0.0
  %v510 = vadd.f32 %v508, %v509
  %v511 = vsel %vm490, %v506, 0.0
  %v512 = vadd.f32 %v510, %v511
  %v513 = vsel %vm490, %v507, 0.0
  %v514 = vadd.f32 %v512, %v513
  %v515 = vrot.slane %v514, 4
  %v516 = vadd.f32 %v514, %v515
  %v517 = vrot.slane %v516, 2
  %v518 = vadd.f32 %v516, %v517
  %v519 = vrot.slane %v518, 1
  %v520 = vadd.f32 %v518, %v519
  %521 = vst.msk [vmem:[%s4] sm:$0xff] %vm490, %v503
  %522 = vst.msk [vmem:[%s5] sm:$0xff] %vm490, %v520
  %v523 = vpack.c.bf16 %v479, %v476
  %v524 = vpack.c.bf16 %v487, %v484
  %v527 = vunpack.c.l.b16 %v523
  %v528 = vunpack.c.h.b16 %v523
  %v529 = vunpack.c.l.b16 %v524
  %v530 = vunpack.c.h.b16 %v524
  %v531 = vpack.c.b16 %v527, %v527
  %v532 = vpack.c.b16 %v528, %v528
  %v533 = vpack.c.b16 %v529, %v529
  %v534 = vpack.c.b16 %v530, %v530
  %vm539 = vcmask 519168
  %540 = vst.msk [vmem:[%s3] sm:$0xf] %vm539, %v531
  %541 = vst.msk [vmem:[%s3 + $0x4] sm:$0xf] %vm539, %v532
  %542 = vst.msk [vmem:[%s3 + $0x8] sm:$0xf] %vm539, %v533
  %543 = vst.msk [vmem:[%s3 + $0xc] sm:$0xf] %vm539, %v534
  // Predicated region
  $region14: #{netD_forward.9} parent=0 // pred_check
    _
  $region15: #{netD_forward.9} parent=0 // pred_check_branch
    %545 = sbr.rel (0) target = $region17
  $region16: #{netD_forward.9} parent=0 // pred_region
    _
  $region17: #{netD_forward.9} parent=0 // pred_fallthru
    _
  // Predicated region
  $region18: #{netD_forward.9} parent=0 // pred_check
    _
  $region19: #{netD_forward.9} parent=0 // pred_check_branch
    %547 = sbr.rel (0) target = $region21
  $region20: #{netD_forward.9} parent=0 // pred_region
    _
  $region21: #{netD_forward.9} parent=0 // pred_fallthru
    _
  // Predicated region
  $region22: #{netD_forward.9} parent=0 // pred_check
    _
  $region23: #{netD_forward.9} parent=0 // pred_check_branch
    %549 = sbr.rel (0) target = $region25
  $region24: #{netD_forward.9} parent=0 // pred_region
    _
  $region25: #{netD_forward.9} parent=0 // pred_fallthru
    _
  // Predicated region
  $region26: #{netD_forward.9} parent=0 // pred_check
    _
  $region27: #{netD_forward.9} parent=0 // pred_check_branch
    %551 = sbr.rel (0) target = $region29
  $region28: #{netD_forward.9} parent=0 // pred_region
    _
  $region29: #{netD_forward.9} parent=0 // pred_fallthru
    _
  // Predicated region
  $region30: #{netD_forward.9} parent=0 // pred_check
    _
  $region31: #{netD_forward.9} parent=0 // pred_check_branch
    %553 = sbr.rel (0) target = $region33
  $region32: #{netD_forward.9} parent=0 // pred_region
    _
  $region33: #{netD_forward.9} parent=0 // pred_fallthru
    _
  // Predicated region
  $region34: #{netD_forward.9} parent=0 // pred_check
    _
  $region35: #{netD_forward.9} parent=0 // pred_check_branch
    %555 = sbr.rel (0) target = $region37
  $region36: #{netD_forward.9} parent=0 // pred_region
    _
  $region37: #{netD_forward.9} parent=0 // pred_fallthru
    _

// kernel: tile.38
$region0: #{tile.38}
  #allocation0 [shape = 's32[1]{0}', space=sflag, size = 0x4, scoped, tag = 'scoped memory for tile.38']
  %s0 = inlined_call_operand.vmem [shape: f32[64], index: 0, kind: input, shape index: {}]
  %s1 = inlined_call_operand.vmem [shape: f32[16,64], index: 1, kind: output, shape index: {}]
  // Predicated region
  $region2: #{tile.38} parent=0 // pred_check
    _
  $region3: #{tile.38} parent=0 // pred_check_branch
    %3 = sbr.rel (0) target = $region5
  $region4: #{tile.38} parent=0 // pred_region
    _
  $region5: #{tile.38} parent=0 // pred_fallthru
    _
  %v4 = vld [vmem:[%s0] ss:$0 sm:$0xff]
  %5 = vst [vmem:[%s1] sm:$0xff] %v4
  %s6 = scalar_lea.vmem %s1, 8
  %7 = vst [vmem:[%s6] sm:$0xff] %v4

// kernel: tile.39
$region0: #{tile.39}
  %s0 = inlined_call_operand.vmem [shape: f32[16,64], index: 0, kind: input, shape index: {}]
  %s1 = inlined_call_operand.vmem [shape: f32[1,1024], index: 1, kind: output, shape index: {}]
  $region1: #{tile.39} parent=0
    #allocation0 [shape = 'u8[32768]{0}', space=vmem, size = 0x8000, scoped, tag = 'scoped mem for output reshape']
    %v2 = vld [vmem:[%s0] ss:$2 sm:$0xff]
    %vm3 = vcmask 523264
    %4 = vst.msk [vmem:[#allocation0] ss:$8 sm:$0xf] %vm3, %v2
    %5 = vst.msk [vmem:[#allocation0] ss:$8 sm:$0xf0] %vm3, %v2
    %s6 = scalar_lea.vmem %s0, 1
    %v7 = vld [vmem:[%s6] ss:$2 sm:$0xff]
    %8 = vrot.lane.b32.xlu0 %v7, 64
    %v9 = vpop.permute.xlu0 %8
    %vm10 = vcmask 1048064
    %11 = vst.msk [vmem:[#allocation0] ss:$8 sm:$0xf] %vm10, %v9
    %12 = vst.msk [vmem:[#allocation0] ss:$8 sm:$0xf0] %vm10, %v9
    %s14 = sshll.u32 1, 1
    %s15 = ssub.s32 %s14, 1
    %v17 = vld [vmem:[#allocation0] sm:%s15]
    %s18 = sshll.u32 1, 1
    %s19 = ssub.s32 %s18, 1
    %20 = vst [vmem:[%s1] sm:%s19] %v17
    %s21 = scalar_lea.vmem [#allocation0], 8
    %v22 = vld [vmem:[%s21] sm:%s15]
    %s23 = sshll.u32 1, 1
    %s24 = ssub.s32 %s23, 1
    %s25 = scalar_lea.vmem %s1, 1
    %26 = vst [vmem:[%s25] sm:%s24] %v22
    %s27 = scalar_lea.vmem [#allocation0], 16
    %v28 = vld [vmem:[%s27] sm:%s15]
    %s29 = sshll.u32 1, 1
    %s30 = ssub.s32 %s29, 1
    %s31 = smul.addr 1, 2
    %s32 = scalar_lea.vmem %s1, %s31
    %33 = vst [vmem:[%s32] sm:%s30] %v28
    %s34 = scalar_lea.vmem [#allocation0], 24
    %v35 = vld [vmem:[%s34] sm:%s15]
    %s36 = sshll.u32 1, 1
    %s37 = ssub.s32 %s36, 1
    %s38 = smul.addr 1, 3
    %s39 = scalar_lea.vmem %s1, %s38
    %40 = vst [vmem:[%s39] sm:%s37] %v35
    %s41 = scalar_lea.vmem [#allocation0], 32
    %v42 = vld [vmem:[%s41] sm:%s15]
    %s43 = sshll.u32 1, 1
    %s44 = ssub.s32 %s43, 1
    %s45 = smul.addr 1, 4
    %s46 = scalar_lea.vmem %s1, %s45
    %47 = vst [vmem:[%s46] sm:%s44] %v42
    %s48 = scalar_lea.vmem [#allocation0], 40
    %v49 = vld [vmem:[%s48] sm:%s15]
    %s50 = sshll.u32 1, 1
    %s51 = ssub.s32 %s50, 1
    %s52 = smul.addr 1, 5
    %s53 = scalar_lea.vmem %s1, %s52
    %54 = vst [vmem:[%s53] sm:%s51] %v49
    %s55 = scalar_lea.vmem [#allocation0], 48
    %v56 = vld [vmem:[%s55] sm:%s15]
    %s57 = sshll.u32 1, 1
    %s58 = ssub.s32 %s57, 1
    %s59 = smul.addr 1, 6
    %s60 = scalar_lea.vmem %s1, %s59
    %61 = vst [vmem:[%s60] sm:%s58] %v56
    %s62 = scalar_lea.vmem [#allocation0], 56
    %v63 = vld [vmem:[%s62] sm:%s15]
    %s64 = sshll.u32 1, 1
    %s65 = ssub.s32 %s64, 1
    %s66 = smul.addr 1, 7
    %s67 = scalar_lea.vmem %s1, %s66
    %68 = vst [vmem:[%s67] sm:%s65] %v63

// kernel: netD_forward.10
$region0: #{netD_forward.10}
  #allocation0 [shape = 'u32[]', space=smem, size = 0x4, offset = 0x4, fixed_abs, tag = 'smem constant byte address 0x4 - core index']
  #allocation1 [shape = 'u32[144,128]{1,0:T(1,128)}', space=vmem, size = 0x12000, scoped, tag = 'internal scratch']
  %s0 = inlined_call_operand.vmem [shape: bf16[32,576], index: 0, kind: input, shape index: {}]
  %s1 = inlined_call_operand.vmem [shape: bf16[576,64], index: 1, kind: input, shape index: {}]
  %s2 = inlined_call_operand.vmem [shape: f32[1,576], index: 2, kind: input, shape index: {}]
  %s3 = inlined_call_operand.vmem [shape: bf16[32,64], index: 3, kind: output, shape index: {0}]
  %s4 = inlined_call_operand.vmem [shape: f32[1,8,64], index: 4, kind: output, shape index: {1}]
  %s5 = inlined_call_operand.vmem [shape: f32[1,8,64], index: 5, kind: output, shape index: {2}]
  %6 = xla_tuple %s3, %s4, %s5
  %s7 = sld [smem:[#allocation0]]
  $region38: #{netD_forward.10} parent=0
    _
  %s9 = ssub.s32 1, %s7
  %s10 = scalar_select 0, %s9, %s7
  // Predicated region
  $region2: #{netD_forward.10} parent=0 // pred_check
    _
  $region3: #{netD_forward.10} parent=0 // pred_check_branch
    %12 = sbr.rel (0) target = $region5
  $region4: #{netD_forward.10} parent=0 // pred_region
    _
  $region5: #{netD_forward.10} parent=0 // pred_fallthru
    _
  // Predicated region
  $region6: #{netD_forward.10} parent=0 // pred_check
    _
  $region7: #{netD_forward.10} parent=0 // pred_check_branch
    %14 = sbr.rel (0) target = $region9
  $region8: #{netD_forward.10} parent=0 // pred_region
    _
  $region9: #{netD_forward.10} parent=0 // pred_fallthru
    _
  // Predicated region
  $region10: #{netD_forward.10} parent=0 // pred_check
    _
  $region11: #{netD_forward.10} parent=0 // pred_check_branch
    %16 = sbr.rel (0) target = $region13
  $region12: #{netD_forward.10} parent=0 // pred_region
    _
  $region13: #{netD_forward.10} parent=0 // pred_fallthru
    _
  %v18 = vld [vmem:[%s0] sm:$0xff]
  %v19 = vld [vmem:[%s0 + $0x8] sm:$0xff]
  %v20 = vld [vmem:[%s0 + $0x10] sm:$0xf]
  %v21 = vld [vmem:[%s0 + $0x14] sm:$0xff]
  %v22 = vld [vmem:[%s0 + $0x1c] sm:$0xff]
  %v23 = vld [vmem:[%s0 + $0x24] sm:$0xf]
  %v24 = vld [vmem:[%s0 + $0x28] sm:$0xff]
  %v25 = vld [vmem:[%s0 + $0x30] sm:$0xff]
  %v26 = vld [vmem:[%s0 + $0x38] sm:$0xf]
  %v27 = vld [vmem:[%s0 + $0x3c] sm:$0xff]
  %v28 = vld [vmem:[%s0 + $0x44] sm:$0xff]
  %v29 = vld [vmem:[%s0 + $0x4c] sm:$0xf]
  %v30 = vunpack.c.l.bf16 %v18
  %v31 = vunpack.c.h.bf16 %v18
  %v32 = vunpack.c.l.bf16 %v19
  %v33 = vunpack.c.h.bf16 %v19
  %v34 = vunpack.c.l.bf16 %v20
  %v35 = vunpack.c.l.bf16 %v21
  %v36 = vunpack.c.h.bf16 %v21
  %v37 = vunpack.c.l.bf16 %v22
  %v38 = vunpack.c.h.bf16 %v22
  %v39 = vunpack.c.l.bf16 %v23
  %v40 = vunpack.c.l.bf16 %v24
  %v41 = vunpack.c.h.bf16 %v24
  %v42 = vunpack.c.l.bf16 %v25
  %v43 = vunpack.c.h.bf16 %v25
  %v44 = vunpack.c.l.bf16 %v26
  %v45 = vunpack.c.l.bf16 %v27
  %v46 = vunpack.c.h.bf16 %v27
  %v47 = vunpack.c.l.bf16 %v28
  %v48 = vunpack.c.h.bf16 %v28
  %v49 = vunpack.c.l.bf16 %v29
  %v50 = vld [vmem:[%s2] sm:$0x1f]
  %v52 = vlaneseq
  %v53 = vshrl.u32 %v52, 7
  %v54 = vsub.s32 0, %v53
  %v55 = vrot.slane %v50, %v54
  %v56 = vlaneseq
  %v57 = vshrl.u32 %v56, 7
  %v58 = vsub.s32 1, %v57
  %v59 = vrot.slane %v50, %v58
  %v60 = vlaneseq
  %v61 = vshrl.u32 %v60, 7
  %v62 = vsub.s32 2, %v61
  %v63 = vrot.slane %v50, %v62
  %v64 = vlaneseq
  %v65 = vshrl.u32 %v64, 7
  %v66 = vsub.s32 3, %v65
  %v67 = vrot.slane %v50, %v66
  %v68 = vlaneseq
  %v69 = vshrl.u32 %v68, 7
  %v70 = vsub.s32 4, %v69
  %v71 = vrot.slane %v50, %v70
  %v77 = vmul.f32 %v30, %v55
  %v78 = vmul.f32 %v31, %v59
  %v79 = vmul.f32 %v32, %v63
  %v80 = vmul.f32 %v33, %v67
  %v81 = vmul.f32 %v34, %v71
  %v82 = vmul.f32 %v35, %v55
  %v83 = vmul.f32 %v36, %v59
  %v84 = vmul.f32 %v37, %v63
  %v85 = vmul.f32 %v38, %v67
  %v86 = vmul.f32 %v39, %v71
  %v87 = vmul.f32 %v40, %v55
  %v88 = vmul.f32 %v41, %v59
  %v89 = vmul.f32 %v42, %v63
  %v90 = vmul.f32 %v43, %v67
  %v91 = vmul.f32 %v44, %v71
  %v92 = vmul.f32 %v45, %v55
  %v93 = vmul.f32 %v46, %v59
  %v94 = vmul.f32 %v47, %v63
  %v95 = vmul.f32 %v48, %v67
  %v96 = vmul.f32 %v49, %v71
  %vm97 = vcmp.gt.f32.partialorder %v77, 0.0
  %vm98 = vcmp.gt.f32.partialorder %v78, 0.0
  %vm99 = vcmp.gt.f32.partialorder %v79, 0.0
  %vm100 = vcmp.gt.f32.partialorder %v80, 0.0
  %vm101 = vcmp.gt.f32.partialorder %v81, 0.0
  %vm102 = vcmp.gt.f32.partialorder %v82, 0.0
  %vm103 = vcmp.gt.f32.partialorder %v83, 0.0
  %vm104 = vcmp.gt.f32.partialorder %v84, 0.0
  %vm105 = vcmp.gt.f32.partialorder %v85, 0.0
  %vm106 = vcmp.gt.f32.partialorder %v86, 0.0
  %vm107 = vcmp.gt.f32.partialorder %v87, 0.0
  %vm108 = vcmp.gt.f32.partialorder %v88, 0.0
  %vm109 = vcmp.gt.f32.partialorder %v89, 0.0
  %vm110 = vcmp.gt.f32.partialorder %v90, 0.0
  %vm111 = vcmp.gt.f32.partialorder %v91, 0.0
  %vm112 = vcmp.gt.f32.partialorder %v92, 0.0
  %vm113 = vcmp.gt.f32.partialorder %v93, 0.0
  %vm114 = vcmp.gt.f32.partialorder %v94, 0.0
  %vm115 = vcmp.gt.f32.partialorder %v95, 0.0
  %vm116 = vcmp.gt.f32.partialorder %v96, 0.0
  %v117 = vmul.f32 %v77, 0.2
  %v118 = vmul.f32 %v78, 0.2
  %v119 = vmul.f32 %v79, 0.2
  %v120 = vmul.f32 %v80, 0.2
  %v121 = vmul.f32 %v81, 0.2
  %v122 = vmul.f32 %v82, 0.2
  %v123 = vmul.f32 %v83, 0.2
  %v124 = vmul.f32 %v84, 0.2
  %v125 = vmul.f32 %v85, 0.2
  %v126 = vmul.f32 %v86, 0.2
  %v127 = vmul.f32 %v87, 0.2
  %v128 = vmul.f32 %v88, 0.2
  %v129 = vmul.f32 %v89, 0.2
  %v130 = vmul.f32 %v90, 0.2
  %v131 = vmul.f32 %v91, 0.2
  %v132 = vmul.f32 %v92, 0.2
  %v133 = vmul.f32 %v93, 0.2
  %v134 = vmul.f32 %v94, 0.2
  %v135 = vmul.f32 %v95, 0.2
  %v136 = vmul.f32 %v96, 0.2
  %v137 = vsel %vm97, %v77, %v117
  %v138 = vsel %vm98, %v78, %v118
  %v139 = vsel %vm99, %v79, %v119
  %v140 = vsel %vm100, %v80, %v120
  %v141 = vsel %vm101, %v81, %v121
  %v142 = vsel %vm102, %v82, %v122
  %v143 = vsel %vm103, %v83, %v123
  %v144 = vsel %vm104, %v84, %v124
  %v145 = vsel %vm105, %v85, %v125
  %v146 = vsel %vm106, %v86, %v126
  %v147 = vsel %vm107, %v87, %v127
  %v148 = vsel %vm108, %v88, %v128
  %v149 = vsel %vm109, %v89, %v129
  %v150 = vsel %vm110, %v90, %v130
  %v151 = vsel %vm111, %v91, %v131
  %v152 = vsel %vm112, %v92, %v132
  %v153 = vsel %vm113, %v93, %v133
  %v154 = vsel %vm114, %v94, %v134
  %v155 = vsel %vm115, %v95, %v135
  %v156 = vsel %vm116, %v96, %v136
  %v157 = vpack.c.bf16 %v142, %v137
  %v158 = vpack.c.bf16 %v143, %v138
  %v159 = vpack.c.bf16 %v144, %v139
  %v160 = vpack.c.bf16 %v145, %v140
  %v161 = vpack.c.bf16 %v146, %v141
  %v162 = vpack.c.bf16 %v152, %v147
  %v163 = vpack.c.bf16 %v153, %v148
  %v164 = vpack.c.bf16 %v154, %v149
  %v165 = vpack.c.bf16 %v155, %v150
  %v166 = vpack.c.bf16 %v156, %v151
  %v167 = vld [vmem:[%s1] sm:$0xf]
  %v168 = vld [vmem:[%s1 + $0x4] sm:$0xf]
  %v169 = vld [vmem:[%s1 + $0x8] sm:$0xf]
  %v170 = vld [vmem:[%s1 + $0xc] sm:$0xf]
  %v171 = vld [vmem:[%s1 + $0x10] sm:$0xf]
  %v172 = vld [vmem:[%s1 + $0x14] sm:$0xf]
  %v173 = vld [vmem:[%s1 + $0x18] sm:$0xf]
  %v174 = vld [vmem:[%s1 + $0x1c] sm:$0xf]
  %v175 = vld [vmem:[%s1 + $0x20] sm:$0xf]
  %v176 = vld [vmem:[%s1 + $0x24] sm:$0xf]
  %v177 = vld [vmem:[%s1 + $0x28] sm:$0xf]
  %v178 = vld [vmem:[%s1 + $0x2c] sm:$0xf]
  %v179 = vld [vmem:[%s1 + $0x30] sm:$0xf]
  %v180 = vld [vmem:[%s1 + $0x34] sm:$0xf]
  %v181 = vld [vmem:[%s1 + $0x38] sm:$0xf]
  %v182 = vld [vmem:[%s1 + $0x3c] sm:$0xf]
  %v183 = vld [vmem:[%s1 + $0x40] sm:$0xf]
  %v184 = vld [vmem:[%s1 + $0x44] sm:$0xf]
  %v185 = vld [vmem:[%s1 + $0x48] sm:$0xf]
  %v186 = vld [vmem:[%s1 + $0x4c] sm:$0xf]
  %v187 = vld [vmem:[%s1 + $0x50] sm:$0xf]
  %v188 = vld [vmem:[%s1 + $0x54] sm:$0xf]
  %v189 = vld [vmem:[%s1 + $0x58] sm:$0xf]
  %v190 = vld [vmem:[%s1 + $0x5c] sm:$0xf]
  %v191 = vld [vmem:[%s1 + $0x60] sm:$0xf]
  %v192 = vld [vmem:[%s1 + $0x64] sm:$0xf]
  %v193 = vld [vmem:[%s1 + $0x68] sm:$0xf]
  %v194 = vld [vmem:[%s1 + $0x6c] sm:$0xf]
  %v195 = vld [vmem:[%s1 + $0x70] sm:$0xf]
  %v196 = vld [vmem:[%s1 + $0x74] sm:$0xf]
  %v197 = vld [vmem:[%s1 + $0x78] sm:$0xf]
  %v198 = vld [vmem:[%s1 + $0x7c] sm:$0xf]
  %v199 = vld [vmem:[%s1 + $0x80] sm:$0xf]
  %v200 = vld [vmem:[%s1 + $0x84] sm:$0xf]
  %v201 = vld [vmem:[%s1 + $0x88] sm:$0xf]
  %v202 = vld [vmem:[%s1 + $0x8c] sm:$0xf]
  %v203 = vld [vmem:[%s1 + $0x90] sm:$0xf]
  %v204 = vld [vmem:[%s1 + $0x94] sm:$0xf]
  %v205 = vld [vmem:[%s1 + $0x98] sm:$0xf]
  %v206 = vld [vmem:[%s1 + $0x9c] sm:$0xf]
  %v207 = vld [vmem:[%s1 + $0xa0] sm:$0xf]
  %v208 = vld [vmem:[%s1 + $0xa4] sm:$0xf]
  %v209 = vld [vmem:[%s1 + $0xa8] sm:$0xf]
  %v210 = vld [vmem:[%s1 + $0xac] sm:$0xf]
  %v211 = vld [vmem:[%s1 + $0xb0] sm:$0xf]
  %v212 = vld [vmem:[%s1 + $0xb4] sm:$0xf]
  %v213 = vld [vmem:[%s1 + $0xb8] sm:$0xf]
  %v214 = vld [vmem:[%s1 + $0xbc] sm:$0xf]
  %v215 = vld [vmem:[%s1 + $0xc0] sm:$0xf]
  %v216 = vld [vmem:[%s1 + $0xc4] sm:$0xf]
  %v217 = vld [vmem:[%s1 + $0xc8] sm:$0xf]
  %v218 = vld [vmem:[%s1 + $0xcc] sm:$0xf]
  %v219 = vld [vmem:[%s1 + $0xd0] sm:$0xf]
  %v220 = vld [vmem:[%s1 + $0xd4] sm:$0xf]
  %v221 = vld [vmem:[%s1 + $0xd8] sm:$0xf]
  %v222 = vld [vmem:[%s1 + $0xdc] sm:$0xf]
  %v223 = vld [vmem:[%s1 + $0xe0] sm:$0xf]
  %v224 = vld [vmem:[%s1 + $0xe4] sm:$0xf]
  %v225 = vld [vmem:[%s1 + $0xe8] sm:$0xf]
  %v226 = vld [vmem:[%s1 + $0xec] sm:$0xf]
  %v227 = vld [vmem:[%s1 + $0xf0] sm:$0xf]
  %v228 = vld [vmem:[%s1 + $0xf4] sm:$0xf]
  %v229 = vld [vmem:[%s1 + $0xf8] sm:$0xf]
  %v230 = vld [vmem:[%s1 + $0xfc] sm:$0xf]
  %v231 = vld [vmem:[%s1 + $0x100] sm:$0xf]
  %v232 = vld [vmem:[%s1 + $0x104] sm:$0xf]
  %v233 = vld [vmem:[%s1 + $0x108] sm:$0xf]
  %v234 = vld [vmem:[%s1 + $0x10c] sm:$0xf]
  %v235 = vld [vmem:[%s1 + $0x110] sm:$0xf]
  %v236 = vld [vmem:[%s1 + $0x114] sm:$0xf]
  %v237 = vld [vmem:[%s1 + $0x118] sm:$0xf]
  %v238 = vld [vmem:[%s1 + $0x11c] sm:$0xf]
  %v311 = vunpack.c.l.b16 %v167
  %v312 = vunpack.c.l.b16 %v168
  %v313 = vunpack.c.l.b16 %v169
  %v314 = vunpack.c.l.b16 %v170
  %v315 = vunpack.c.l.b16 %v171
  %v316 = vunpack.c.l.b16 %v172
  %v317 = vunpack.c.l.b16 %v173
  %v318 = vunpack.c.l.b16 %v174
  %v319 = vunpack.c.l.b16 %v175
  %v320 = vunpack.c.l.b16 %v176
  %v321 = vunpack.c.l.b16 %v177
  %v322 = vunpack.c.l.b16 %v178
  %v323 = vunpack.c.l.b16 %v179
  %v324 = vunpack.c.l.b16 %v180
  %v325 = vunpack.c.l.b16 %v181
  %v326 = vunpack.c.l.b16 %v182
  %v327 = vunpack.c.l.b16 %v183
  %v328 = vunpack.c.l.b16 %v184
  %v329 = vunpack.c.l.b16 %v185
  %v330 = vunpack.c.l.b16 %v186
  %v331 = vunpack.c.l.b16 %v187
  %v332 = vunpack.c.l.b16 %v188
  %v333 = vunpack.c.l.b16 %v189
  %v334 = vunpack.c.l.b16 %v190
  %v335 = vunpack.c.l.b16 %v191
  %v336 = vunpack.c.l.b16 %v192
  %v337 = vunpack.c.l.b16 %v193
  %v338 = vunpack.c.l.b16 %v194
  %v339 = vunpack.c.l.b16 %v195
  %v340 = vunpack.c.l.b16 %v196
  %v341 = vunpack.c.l.b16 %v197
  %v342 = vunpack.c.l.b16 %v198
  %v343 = vunpack.c.l.b16 %v199
  %v344 = vunpack.c.l.b16 %v200
  %v345 = vunpack.c.l.b16 %v201
  %v346 = vunpack.c.l.b16 %v202
  %v347 = vunpack.c.l.b16 %v203
  %v348 = vunpack.c.l.b16 %v204
  %v349 = vunpack.c.l.b16 %v205
  %v350 = vunpack.c.l.b16 %v206
  %v351 = vunpack.c.l.b16 %v207
  %v352 = vunpack.c.l.b16 %v208
  %v353 = vunpack.c.l.b16 %v209
  %v354 = vunpack.c.l.b16 %v210
  %v355 = vunpack.c.l.b16 %v211
  %v356 = vunpack.c.l.b16 %v212
  %v357 = vunpack.c.l.b16 %v213
  %v358 = vunpack.c.l.b16 %v214
  %v359 = vunpack.c.l.b16 %v215
  %v360 = vunpack.c.l.b16 %v216
  %v361 = vunpack.c.l.b16 %v217
  %v362 = vunpack.c.l.b16 %v218
  %v363 = vunpack.c.l.b16 %v219
  %v364 = vunpack.c.l.b16 %v220
  %v365 = vunpack.c.l.b16 %v221
  %v366 = vunpack.c.l.b16 %v222
  %v367 = vunpack.c.l.b16 %v223
  %v368 = vunpack.c.l.b16 %v224
  %v369 = vunpack.c.l.b16 %v225
  %v370 = vunpack.c.l.b16 %v226
  %v371 = vunpack.c.l.b16 %v227
  %v372 = vunpack.c.l.b16 %v228
  %v373 = vunpack.c.l.b16 %v229
  %v374 = vunpack.c.l.b16 %v230
  %v375 = vunpack.c.l.b16 %v231
  %v376 = vunpack.c.l.b16 %v232
  %v377 = vunpack.c.l.b16 %v233
  %v378 = vunpack.c.l.b16 %v234
  %v379 = vunpack.c.l.b16 %v235
  %v380 = vunpack.c.l.b16 %v236
  %v381 = vunpack.c.l.b16 %v237
  %v382 = vunpack.c.l.b16 %v238
  %v383 = vpack.c.b16 %v312, %v311
  %v384 = vpack.c.b16 %v314, %v313
  %v385 = vpack.c.b16 %v316, %v315
  %v386 = vpack.c.b16 %v318, %v317
  %v387 = vpack.c.b16 %v320, %v319
  %v388 = vpack.c.b16 %v322, %v321
  %v389 = vpack.c.b16 %v324, %v323
  %v390 = vpack.c.b16 %v326, %v325
  %v391 = vpack.c.b16 %v328, %v327
  %v392 = vpack.c.b16 %v330, %v329
  %v393 = vpack.c.b16 %v332, %v331
  %v394 = vpack.c.b16 %v334, %v333
  %v395 = vpack.c.b16 %v336, %v335
  %v396 = vpack.c.b16 %v338, %v337
  %v397 = vpack.c.b16 %v340, %v339
  %v398 = vpack.c.b16 %v342, %v341
  %v399 = vpack.c.b16 %v344, %v343
  %v400 = vpack.c.b16 %v346, %v345
  %v401 = vpack.c.b16 %v348, %v347
  %v402 = vpack.c.b16 %v350, %v349
  %v403 = vpack.c.b16 %v352, %v351
  %v404 = vpack.c.b16 %v354, %v353
  %v405 = vpack.c.b16 %v356, %v355
  %v406 = vpack.c.b16 %v358, %v357
  %v407 = vpack.c.b16 %v360, %v359
  %v408 = vpack.c.b16 %v362, %v361
  %v409 = vpack.c.b16 %v364, %v363
  %v410 = vpack.c.b16 %v366, %v365
  %v411 = vpack.c.b16 %v368, %v367
  %v412 = vpack.c.b16 %v370, %v369
  %v413 = vpack.c.b16 %v372, %v371
  %v414 = vpack.c.b16 %v374, %v373
  %v415 = vpack.c.b16 %v376, %v375
  %v416 = vpack.c.b16 %v378, %v377
  %v417 = vpack.c.b16 %v380, %v379
  %v418 = vpack.c.b16 %v382, %v381
  %vm455 = vcmask 523264
  %v457 = vsel %vm455, %v161, 0
  %v460 = vsel %vm455, %v166, 0
  %462 = vmatprep.subr.bf16.mxu0 0
  %463 = vmatpush1.bf16.msra.mxu0 %v390
  %464 = vmatprep.subr.bf16.mxu0 0
  %465 = vmatpush1.bf16.msra.mxu0 %v389
  %466 = vmatprep.subr.bf16.mxu0 0
  %467 = vmatpush1.bf16.msra.mxu0 %v388
  %468 = vmatprep.subr.bf16.mxu0 0
  %469 = vmatpush1.bf16.msra.mxu0 %v387
  %470 = vmatprep.subr.bf16.mxu0 0
  %471 = vmatpush1.bf16.msra.mxu0 %v386
  %472 = vmatprep.subr.bf16.mxu0 0
  %473 = vmatpush1.bf16.msra.mxu0 %v385
  %474 = vmatprep.subr.bf16.mxu0 0
  %475 = vmatpush1.bf16.msra.mxu0 %v384
  %476 = vmatprep.subr.bf16.mxu0 0
  %477 = vmatpush1.bf16.msra.mxu0 %v383
  %478 = vmatprep.subr.bf16.mxu0 0
  %479 = vmatpush2.bf16.msra.mxu0 %v398
  %480 = vmatprep.subr.bf16.mxu0 0
  %481 = vmatpush2.bf16.msra.mxu0 %v397
  %482 = vmatprep.subr.bf16.mxu0 0
  %483 = vmatpush2.bf16.msra.mxu0 %v396
  %484 = vmatprep.subr.bf16.mxu0 0
  %485 = vmatpush2.bf16.msra.mxu0 %v395
  %486 = vmatprep.subr.bf16.mxu0 0
  %487 = vmatpush2.bf16.msra.mxu0 %v394
  %488 = vmatprep.subr.bf16.mxu0 0
  %489 = vmatpush2.bf16.msra.mxu0 %v393
  %490 = vmatprep.subr.bf16.mxu0 0
  %491 = vmatpush2.bf16.msra.mxu0 %v392
  %492 = vmatprep.subr.bf16.mxu0 0
  %493 = vmatpush2.bf16.msra.mxu0 %v391
  %494 = vmatprep.mubr.bf16.mxu0 %v158
  %495 = vmatmul.mubr.bf16.gmra.mxu0 %v157
  %v496 = vpop.f32.mrf.mxu0
  %v497 = vadd.f32 0.0, %v496
  %v498 = vpop.f32.mrf.mxu0
  %v499 = vpop.f32.mrf.mxu0
  %v500 = vadd.f32 0.0, %v499
  %v501 = vpop.f32.mrf.mxu0
  %502 = vmatprep.mubr.bf16.mxu0 %v163
  %503 = vmatmul.mubr.bf16.gmra.mxu0 %v162
  %v504 = vpop.f32.mrf.mxu0
  %v505 = vadd.f32 0.0, %v504
  %v506 = vpop.f32.mrf.mxu0
  %v507 = vpop.f32.mrf.mxu0
  %v508 = vadd.f32 0.0, %v507
  %v509 = vpop.f32.mrf.mxu0
  %510 = vdwg.mxu0
  %511 = vmatprep.subr.bf16.mxu0 0
  %512 = vmatpush1.bf16.msra.mxu0 %v406
  %513 = vmatprep.subr.bf16.mxu0 0
  %514 = vmatpush1.bf16.msra.mxu0 %v405
  %515 = vmatprep.subr.bf16.mxu0 0
  %516 = vmatpush1.bf16.msra.mxu0 %v404
  %517 = vmatprep.subr.bf16.mxu0 0
  %518 = vmatpush1.bf16.msra.mxu0 %v403
  %519 = vmatprep.subr.bf16.mxu0 0
  %520 = vmatpush1.bf16.msra.mxu0 %v402
  %521 = vmatprep.subr.bf16.mxu0 0
  %522 = vmatpush1.bf16.msra.mxu0 %v401
  %523 = vmatprep.subr.bf16.mxu0 0
  %524 = vmatpush1.bf16.msra.mxu0 %v400
  %525 = vmatprep.subr.bf16.mxu0 0
  %526 = vmatpush1.bf16.msra.mxu0 %v399
  %527 = vmatprep.subr.bf16.mxu0 0
  %528 = vmatpush2.bf16.msra.mxu0 %v414
  %529 = vmatprep.subr.bf16.mxu0 0
  %530 = vmatpush2.bf16.msra.mxu0 %v413
  %531 = vmatprep.subr.bf16.mxu0 0
  %532 = vmatpush2.bf16.msra.mxu0 %v412
  %533 = vmatprep.subr.bf16.mxu0 0
  %534 = vmatpush2.bf16.msra.mxu0 %v411
  %535 = vmatprep.subr.bf16.mxu0 0
  %536 = vmatpush2.bf16.msra.mxu0 %v410
  %537 = vmatprep.subr.bf16.mxu0 0
  %538 = vmatpush2.bf16.msra.mxu0 %v409
  %539 = vmatprep.subr.bf16.mxu0 0
  %540 = vmatpush2.bf16.msra.mxu0 %v408
  %541 = vmatprep.subr.bf16.mxu0 0
  %542 = vmatpush2.bf16.msra.mxu0 %v407
  %543 = vmatprep.mubr.bf16.mxu0 %v160
  %544 = vmatmul.mubr.bf16.gmra.mxu0 %v159
  %v545 = vpop.f32.mrf.mxu0
  %v546 = vadd.f32 %v497, %v545
  %v547 = vpop.f32.mrf.mxu0
  %v548 = vpop.f32.mrf.mxu0
  %v549 = vadd.f32 %v500, %v548
  %v550 = vpop.f32.mrf.mxu0
  %551 = vmatprep.mubr.bf16.mxu0 %v165
  %552 = vmatmul.mubr.bf16.gmra.mxu0 %v164
  %v553 = vpop.f32.mrf.mxu0
  %v554 = vadd.f32 %v505, %v553
  %v555 = vpop.f32.mrf.mxu0
  %v556 = vpop.f32.mrf.mxu0
  %v557 = vadd.f32 %v508, %v556
  %v558 = vpop.f32.mrf.mxu0
  %559 = vdwg.mxu0
  %560 = vmatprep.subr.bf16.mxu0 0
  %561 = vmatpush1.bf16.msra.mxu0 0
  %562 = vmatprep.subr.bf16.mxu0 0
  %563 = vmatpush1.bf16.msra.mxu0 0
  %564 = vmatprep.subr.bf16.mxu0 0
  %565 = vmatpush1.bf16.msra.mxu0 0
  %566 = vmatprep.subr.bf16.mxu0 0
  %567 = vmatpush1.bf16.msra.mxu0 0
  %568 = vmatprep.subr.bf16.mxu0 0
  %569 = vmatpush1.bf16.msra.mxu0 %v418
  %570 = vmatprep.subr.bf16.mxu0 0
  %571 = vmatpush1.bf16.msra.mxu0 %v417
  %572 = vmatprep.subr.bf16.mxu0 0
  %573 = vmatpush1.bf16.msra.mxu0 %v416
  %574 = vmatprep.subr.bf16.mxu0 0
  %575 = vmatpush1.bf16.msra.mxu0 %v415
  %576 = vmatprep.subr.bf16.mxu0 0
  %577 = vmatpush2.bf16.msra.mxu0 0
  %578 = vmatprep.subr.bf16.mxu0 0
  %579 = vmatpush2.bf16.msra.mxu0 0
  %580 = vmatprep.subr.bf16.mxu0 0
  %581 = vmatpush2.bf16.msra.mxu0 0
  %582 = vmatprep.subr.bf16.mxu0 0
  %583 = vmatpush2.bf16.msra.mxu0 0
  %584 = vmatprep.subr.bf16.mxu0 0
  %585 = vmatpush2.bf16.msra.mxu0 0
  %586 = vmatprep.subr.bf16.mxu0 0
  %587 = vmatpush2.bf16.msra.mxu0 0
  %588 = vmatprep.subr.bf16.mxu0 0
  %589 = vmatpush2.bf16.msra.mxu0 0
  %590 = vmatprep.subr.bf16.mxu0 0
  %591 = vmatpush2.bf16.msra.mxu0 0
  %592 = vmatprep.mubr.bf16.mxu0 0
  %593 = vmatmul.mubr.bf16.gmra.mxu0 %v457
  %v594 = vpop.f32.mrf.mxu0
  %v595 = vadd.f32 %v546, %v594
  %v596 = vpop.f32.mrf.mxu0
  %v597 = vpop.f32.mrf.mxu0
  %v598 = vadd.f32 %v549, %v597
  %v599 = vpop.f32.mrf.mxu0
  %600 = vmatprep.mubr.bf16.mxu0 0
  %601 = vmatmul.mubr.bf16.gmra.mxu0 %v460
  %v602 = vpop.f32.mrf.mxu0
  %v603 = vadd.f32 %v554, %v602
  %v604 = vpop.f32.mrf.mxu0
  %v605 = vpop.f32.mrf.mxu0
  %v606 = vadd.f32 %v557, %v605
  %v607 = vpop.f32.mrf.mxu0
  %608 = vdwg.mxu0
  %v609 = vsel %vm455, %v595, 0.0
  %v610 = vsel %vm455, %v598, 0.0
  %v611 = vadd.f32 %v609, %v610
  %v612 = vsel %vm455, %v603, 0.0
  %v613 = vadd.f32 %v611, %v612
  %v614 = vsel %vm455, %v606, 0.0
  %v615 = vadd.f32 %v613, %v614
  %v616 = vrot.slane %v615, 4
  %v617 = vadd.f32 %v615, %v616
  %v618 = vrot.slane %v617, 2
  %v619 = vadd.f32 %v617, %v618
  %v620 = vrot.slane %v619, 1
  %v621 = vadd.f32 %v619, %v620
  %v622 = vmul.f32 %v595, %v595
  %v623 = vmul.f32 %v598, %v598
  %v624 = vmul.f32 %v603, %v603
  %v625 = vmul.f32 %v606, %v606
  %v626 = vsel %vm455, %v622, 0.0
  %v627 = vsel %vm455, %v623, 0.0
  %v628 = vadd.f32 %v626, %v627
  %v629 = vsel %vm455, %v624, 0.0
  %v630 = vadd.f32 %v628, %v629
  %v631 = vsel %vm455, %v625, 0.0
  %v632 = vadd.f32 %v630, %v631
  %v633 = vrot.slane %v632, 4
  %v634 = vadd.f32 %v632, %v633
  %v635 = vrot.slane %v634, 2
  %v636 = vadd.f32 %v634, %v635
  %v637 = vrot.slane %v636, 1
  %v638 = vadd.f32 %v636, %v637
  %639 = vst.msk [vmem:[%s4] sm:$0xff] %vm455, %v621
  %640 = vst.msk [vmem:[%s5] sm:$0xff] %vm455, %v638
  %v641 = vpack.c.bf16 %v598, %v595
  %v642 = vpack.c.bf16 %v606, %v603
  %v645 = vunpack.c.l.b16 %v641
  %v646 = vunpack.c.h.b16 %v641
  %v647 = vunpack.c.l.b16 %v642
  %v648 = vunpack.c.h.b16 %v642
  %v649 = vpack.c.b16 %v645, %v645
  %v650 = vpack.c.b16 %v646, %v646
  %v651 = vpack.c.b16 %v647, %v647
  %v652 = vpack.c.b16 %v648, %v648
  %vm657 = vcmask 519168
  %658 = vst.msk [vmem:[%s3] sm:$0xf] %vm657, %v649
  %659 = vst.msk [vmem:[%s3 + $0x4] sm:$0xf] %vm657, %v650
  %660 = vst.msk [vmem:[%s3 + $0x8] sm:$0xf] %vm657, %v651
  %661 = vst.msk [vmem:[%s3 + $0xc] sm:$0xf] %vm657, %v652
  // Predicated region
  $region14: #{netD_forward.10} parent=0 // pred_check
    _
  $region15: #{netD_forward.10} parent=0 // pred_check_branch
    %663 = sbr.rel (0) target = $region17
  $region16: #{netD_forward.10} parent=0 // pred_region
    _
  $region17: #{netD_forward.10} parent=0 // pred_fallthru
    _
  // Predicated region
  $region18: #{netD_forward.10} parent=0 // pred_check
    _
  $region19: #{netD_forward.10} parent=0 // pred_check_branch
    %665 = sbr.rel (0) target = $region21
  $region20: #{netD_forward.10} parent=0 // pred_region
    _
  $region21: #{netD_forward.10} parent=0 // pred_fallthru
    _
  // Predicated region
  $region22: #{netD_forward.10} parent=0 // pred_check
    _
  $region23: #{netD_forward.10} parent=0 // pred_check_branch
    %667 = sbr.rel (0) target = $region25
  $region24: #{netD_forward.10} parent=0 // pred_region
    _
  $region25: #{netD_forward.10} parent=0 // pred_fallthru
    _
  // Predicated region
  $region26: #{netD_forward.10} parent=0 // pred_check
    _
  $region27: #{netD_forward.10} parent=0 // pred_check_branch
    %669 = sbr.rel (0) target = $region29
  $region28: #{netD_forward.10} parent=0 // pred_region
    _
  $region29: #{netD_forward.10} parent=0 // pred_fallthru
    _
  // Predicated region
  $region30: #{netD_forward.10} parent=0 // pred_check
    _
  $region31: #{netD_forward.10} parent=0 // pred_check_branch
    %671 = sbr.rel (0) target = $region33
  $region32: #{netD_forward.10} parent=0 // pred_region
    _
  $region33: #{netD_forward.10} parent=0 // pred_fallthru
    _
  // Predicated region
  $region34: #{netD_forward.10} parent=0 // pred_check
    _
  $region35: #{netD_forward.10} parent=0 // pred_check_branch
    %673 = sbr.rel (0) target = $region37
  $region36: #{netD_forward.10} parent=0 // pred_region
    _
  $region37: #{netD_forward.10} parent=0 // pred_fallthru
    _

// kernel: netD_forward.11
$region0: #{netD_forward.11}
  #allocation0 [shape = 'u32[]', space=smem, size = 0x4, offset = 0x4, fixed_abs, tag = 'smem constant byte address 0x4 - core index']
  #allocation1 [shape = 'u32[144,128]{1,0:T(1,128)}', space=vmem, size = 0x12000, scoped, tag = 'internal scratch']
  %s0 = inlined_call_operand.vmem [shape: bf16[8,1024], index: 0, kind: input, shape index: {}]
  %s1 = inlined_call_operand.vmem [shape: bf16[1,1024], index: 1, kind: input, shape index: {}]
  %s2 = inlined_call_operand.vmem [shape: f32[1,1024], index: 2, kind: input, shape index: {}]
  %s3 = inlined_call_operand.vmem [shape: f32[8,1], index: 3, kind: output, shape index: {}]
  %s4 = sld [smem:[#allocation0]]
  $region22: #{netD_forward.11} parent=0
    _
  %s6 = ssub.s32 1, %s4
  %s7 = scalar_select 0, %s6, %s4
  // Predicated region
  $region2: #{netD_forward.11} parent=0 // pred_check
    _
  $region3: #{netD_forward.11} parent=0 // pred_check_branch
    %9 = sbr.rel (0) target = $region5
  $region4: #{netD_forward.11} parent=0 // pred_region
    _
  $region5: #{netD_forward.11} parent=0 // pred_fallthru
    _
  // Predicated region
  $region6: #{netD_forward.11} parent=0 // pred_check
    _
  $region7: #{netD_forward.11} parent=0 // pred_check_branch
    %11 = sbr.rel (0) target = $region9
  $region8: #{netD_forward.11} parent=0 // pred_region
    _
  $region9: #{netD_forward.11} parent=0 // pred_fallthru
    _
  // Predicated region
  $region10: #{netD_forward.11} parent=0 // pred_check
    _
  $region11: #{netD_forward.11} parent=0 // pred_check_branch
    %13 = sbr.rel (0) target = $region13
  $region12: #{netD_forward.11} parent=0 // pred_region
    _
  $region13: #{netD_forward.11} parent=0 // pred_fallthru
    _
  %v14 = vld [vmem:[%s0] sm:$0xff]
  %v15 = vld [vmem:[%s0 + $0x8] sm:$0xff]
  %v16 = vld [vmem:[%s0 + $0x10] sm:$0xff]
  %v17 = vld [vmem:[%s0 + $0x18] sm:$0xff]
  %v18 = vunpack.c.l.bf16 %v14
  %v19 = vunpack.c.h.bf16 %v14
  %v20 = vunpack.c.l.bf16 %v15
  %v21 = vunpack.c.h.bf16 %v15
  %v22 = vunpack.c.l.bf16 %v16
  %v23 = vunpack.c.h.bf16 %v16
  %v24 = vunpack.c.l.bf16 %v17
  %v25 = vunpack.c.h.bf16 %v17
  %v26 = vld [vmem:[%s2] sm:$0xff]
  %v28 = vlaneseq
  %v29 = vshrl.u32 %v28, 7
  %v30 = vsub.s32 0, %v29
  %v31 = vrot.slane %v26, %v30
  %v32 = vlaneseq
  %v33 = vshrl.u32 %v32, 7
  %v34 = vsub.s32 1, %v33
  %v35 = vrot.slane %v26, %v34
  %v36 = vlaneseq
  %v37 = vshrl.u32 %v36, 7
  %v38 = vsub.s32 2, %v37
  %v39 = vrot.slane %v26, %v38
  %v40 = vlaneseq
  %v41 = vshrl.u32 %v40, 7
  %v42 = vsub.s32 3, %v41
  %v43 = vrot.slane %v26, %v42
  %v44 = vlaneseq
  %v45 = vshrl.u32 %v44, 7
  %v46 = vsub.s32 4, %v45
  %v47 = vrot.slane %v26, %v46
  %v48 = vlaneseq
  %v49 = vshrl.u32 %v48, 7
  %v50 = vsub.s32 5, %v49
  %v51 = vrot.slane %v26, %v50
  %v52 = vlaneseq
  %v53 = vshrl.u32 %v52, 7
  %v54 = vsub.s32 6, %v53
  %v55 = vrot.slane %v26, %v54
  %v56 = vlaneseq
  %v57 = vshrl.u32 %v56, 7
  %v58 = vsub.s32 7, %v57
  %v59 = vrot.slane %v26, %v58
  %v68 = vmul.f32 %v18, %v31
  %v69 = vmul.f32 %v19, %v35
  %v70 = vmul.f32 %v20, %v39
  %v71 = vmul.f32 %v21, %v43
  %v72 = vmul.f32 %v22, %v47
  %v73 = vmul.f32 %v23, %v51
  %v74 = vmul.f32 %v24, %v55
  %v75 = vmul.f32 %v25, %v59
  %vm76 = vcmp.gt.f32.partialorder %v68, 0.0
  %vm77 = vcmp.gt.f32.partialorder %v69, 0.0
  %vm78 = vcmp.gt.f32.partialorder %v70, 0.0
  %vm79 = vcmp.gt.f32.partialorder %v71, 0.0
  %vm80 = vcmp.gt.f32.partialorder %v72, 0.0
  %vm81 = vcmp.gt.f32.partialorder %v73, 0.0
  %vm82 = vcmp.gt.f32.partialorder %v74, 0.0
  %vm83 = vcmp.gt.f32.partialorder %v75, 0.0
  %v84 = vmul.f32 %v68, 0.2
  %v85 = vmul.f32 %v69, 0.2
  %v86 = vmul.f32 %v70, 0.2
  %v87 = vmul.f32 %v71, 0.2
  %v88 = vmul.f32 %v72, 0.2
  %v89 = vmul.f32 %v73, 0.2
  %v90 = vmul.f32 %v74, 0.2
  %v91 = vmul.f32 %v75, 0.2
  %v92 = vsel %vm76, %v68, %v84
  %v93 = vsel %vm77, %v69, %v85
  %v94 = vsel %vm78, %v70, %v86
  %v95 = vsel %vm79, %v71, %v87
  %v96 = vsel %vm80, %v72, %v88
  %v97 = vsel %vm81, %v73, %v89
  %v98 = vsel %vm82, %v74, %v90
  %v99 = vsel %vm83, %v75, %v91
  %v100 = vld [vmem:[%s1] sm:$0xff]
  %v101 = vunpack.c.l.bf16 %v100
  %v102 = vunpack.c.h.bf16 %v100
  %v105 = vlaneseq
  %v106 = vshrl.u32 %v105, 7
  %v107 = vsub.s32 0, %v106
  %v108 = vrot.slane %v101, %v107
  %v109 = vlaneseq
  %v110 = vshrl.u32 %v109, 7
  %v111 = vsub.s32 2, %v110
  %v112 = vrot.slane %v101, %v111
  %v113 = vlaneseq
  %v114 = vshrl.u32 %v113, 7
  %v115 = vsub.s32 4, %v114
  %v116 = vrot.slane %v101, %v115
  %v117 = vlaneseq
  %v118 = vshrl.u32 %v117, 7
  %v119 = vsub.s32 6, %v118
  %v120 = vrot.slane %v101, %v119
  %v121 = vlaneseq
  %v122 = vshrl.u32 %v121, 7
  %v123 = vsub.s32 0, %v122
  %v124 = vrot.slane %v102, %v123
  %v125 = vlaneseq
  %v126 = vshrl.u32 %v125, 7
  %v127 = vsub.s32 2, %v126
  %v128 = vrot.slane %v102, %v127
  %v129 = vlaneseq
  %v130 = vshrl.u32 %v129, 7
  %v131 = vsub.s32 4, %v130
  %v132 = vrot.slane %v102, %v131
  %v133 = vlaneseq
  %v134 = vshrl.u32 %v133, 7
  %v135 = vsub.s32 6, %v134
  %v136 = vrot.slane %v102, %v135
  %v145 = vlaneseq
  %v146 = vshrl.u32 %v145, 7
  %v147 = vsub.s32 0, %v146
  %v148 = vrot.slane %v108, %v147
  %v149 = vlaneseq
  %v150 = vshrl.u32 %v149, 7
  %v151 = vsub.s32 0, %v150
  %v152 = vrot.slane %v112, %v151
  %v153 = vlaneseq
  %v154 = vshrl.u32 %v153, 7
  %v155 = vsub.s32 0, %v154
  %v156 = vrot.slane %v116, %v155
  %v157 = vlaneseq
  %v158 = vshrl.u32 %v157, 7
  %v159 = vsub.s32 0, %v158
  %v160 = vrot.slane %v120, %v159
  %v161 = vlaneseq
  %v162 = vshrl.u32 %v161, 7
  %v163 = vsub.s32 0, %v162
  %v164 = vrot.slane %v124, %v163
  %v165 = vlaneseq
  %v166 = vshrl.u32 %v165, 7
  %v167 = vsub.s32 0, %v166
  %v168 = vrot.slane %v128, %v167
  %v169 = vlaneseq
  %v170 = vshrl.u32 %v169, 7
  %v171 = vsub.s32 0, %v170
  %v172 = vrot.slane %v132, %v171
  %v173 = vlaneseq
  %v174 = vshrl.u32 %v173, 7
  %v175 = vsub.s32 0, %v174
  %v176 = vrot.slane %v136, %v175
  %v177 = vmul.f32 %v92, %v148
  %v178 = vmul.f32 %v93, %v152
  %v179 = vmul.f32 %v94, %v156
  %v180 = vmul.f32 %v95, %v160
  %v181 = vmul.f32 %v96, %v164
  %v182 = vmul.f32 %v97, %v168
  %v183 = vmul.f32 %v98, %v172
  %v184 = vmul.f32 %v99, %v176
  %v185 = vadd.f32 %v177, %v178
  %v186 = vadd.f32 %v185, %v179
  %v187 = vadd.f32 %v186, %v180
  %v188 = vadd.f32 %v187, %v181
  %v189 = vadd.f32 %v188, %v182
  %v190 = vadd.f32 %v189, %v183
  %v191 = vadd.f32 %v190, %v184
  %192 = vadd.xlane.f32.xlu0 %v191
  %v193 = vpop.xlane.xlu0 %192
  %v194 = vsub.f32 0.0, %v193
  %v195 = vmul.f32 %v194, 1.442695
  %v196 = vpow.pop %v195
  %v197 = vadd.f32 %v196, 1.0
  %v198 = vrcp.pop %v197
  %v199 = vmul.f32 1.0, %v198
  %vm200 = vcmask 7168
  %201 = vst.msk [vmem:[%s3] sm:$0xff] %vm200, %v199
  // Predicated region
  $region14: #{netD_forward.11} parent=0 // pred_check
    _
  $region15: #{netD_forward.11} parent=0 // pred_check_branch
    %203 = sbr.rel (0) target = $region17
  $region16: #{netD_forward.11} parent=0 // pred_region
    _
  $region17: #{netD_forward.11} parent=0 // pred_fallthru
    _
  // Predicated region
  $region18: #{netD_forward.11} parent=0 // pred_check
    _
  $region19: #{netD_forward.11} parent=0 // pred_check_branch
    %205 = sbr.rel (0) target = $region21
  $region20: #{netD_forward.11} parent=0 // pred_region
    _
  $region21: #{netD_forward.11} parent=0 // pred_fallthru
    _

</llo_original>
